<compile_context>
chip_gen: v6e
topology: v6e:2x2x1
jax: 0.10.0
libtpu: 0.0.40
codegen_flags: <defaults>
</compile_context>

<pallas_src>
import functools

import numpy as np
import jax
import jax.numpy as jnp
from jax import lax
from jax.experimental import pallas as pl
from jax.experimental.pallas import tpu as pltpu


TAPS = tuple((si, sj) for si in (-1, 0, 1) for sj in (-1, 0, 1))


# ---------------------------------------------------------------------------
# host-side weight packing (done once, reused across forward passes)
# ---------------------------------------------------------------------------
def _k9(w):
    """(O, I, 3, 3) conv weight -> (O, 9*I) im2col weight, tap-major columns."""
    o, i = w.shape[0], w.shape[1]
    return jnp.transpose(w, (0, 2, 3, 1)).reshape(o, 9 * i)


def _pack_rows(entries, dtype, row_align):
    """Stack 2-D arrays vertically (zero padded to a common width).

    Returns (packed (rows, width), {name: (row_offset, rows, cols)}).
    """
    width = max(int(a.shape[1]) for _, a in entries)
    offs, blocks, n = {}, [], 0
    for name, a in entries:
        a = jnp.asarray(a, jnp.float32)
        r, c = a.shape
        offs[name] = (n, r, c)
        blocks.append(jnp.pad(a, ((0, 0), (0, width - c))))
        n += r
        pad = (-n) % row_align
        if pad:
            blocks.append(jnp.zeros((pad, width), jnp.float32))
            n += pad
    return jnp.concatenate(blocks, axis=0).astype(dtype), offs


class FDSCBPacked:
    """Kernel-ready FDSCB parameters."""

    def __init__(self, wpack, woffs, bpack, boffs, n_feat, compute_dtype, fused):
        self.wpack = wpack
        self.woffs = woffs
        self.bpack = bpack
        self.boffs = boffs
        self.n_feat = n_feat
        self.compute_dtype = compute_dtype
        self.fused = fused


def pack_fdscb_params(p, n_feat, compute_dtype=jnp.bfloat16,
                      fuse_pairs="auto", mxu_k=256):
    """Pack weights for the kernel.  mxu_k: MXU contraction depth gate for the
    block-diagonal fusion (256 on v6e/v7x, 128 on v5e)."""
    C, C2, C4 = n_feat, n_feat // 2, n_feat // 4
    fused = (9 * (C2 + C4) <= mxu_k) if fuse_pairs == "auto" else bool(fuse_pairs)

    w11 = p['c11_w'][:, :, 0, 0]
    w12 = p['c12_w'][:, :, 0, 0]
    # ConvTranspose2d(k=2, s=2): sub-pixel block (ky,kx) of the upsampled image
    # is a plain 1x1 conv with tap (ky,kx); fuse all 4 blocks into one matmul.
    wup = jnp.transpose(p['up_w'], (2, 3, 1, 0)).reshape(4 * C4, C2)
    # depthwise 3x3 followed by pointwise 1x1 folded into one (C4, 9*C4) weight
    dwk = jnp.transpose(p['dw_w'], (2, 3, 0, 1)).reshape(9, C4)      # [tap, c]
    pc2 = p['pc_w'][:, :, 0, 0]                                      # [o, c]
    wdwpc = (pc2[:, None, :] * dwk[None, :, :]).reshape(C4, 9 * C4)
    w31, w32, w33 = _k9(p['c31_w']), _k9(p['c32_w']), _k9(p['c33_w'])

    w_entries = [('w11', w11), ('w12', w12), ('wup', wup),
                 ('wdn', _k9(p['down_w']))]
    if fused:
        # block-diagonal fusion of the two independent small-matmul pairs
        zt = jnp.zeros((C2, 9 * C4), jnp.float32)
        zb = jnp.zeros((C4, 9 * C2), jnp.float32)
        wd1 = jnp.concatenate([jnp.concatenate([w31, zt], axis=1),
                               jnp.concatenate([zb, wdwpc], axis=1)], axis=0)
        wd2 = jnp.concatenate([jnp.concatenate([w32, zt], axis=1),
                               jnp.concatenate([zb, w33], axis=1)], axis=0)
        w_entries += [('wd1', wd1), ('wd2', wd2)]
    else:
        w_entries += [('w31', w31), ('w32', w32),
                      ('wdwpc', wdwpc), ('w33', w33)]

    b_entries = [('b11', p['c11_b']), ('b12', p['c12_b']),
                 ('bdn', p['down_b']), ('bup', jnp.tile(p['up_b'], 4)),
                 ('bca1', p['ca1_b']), ('bca2', p['ca2_b'])]
    if fused:
        b_entries += [('bd1', jnp.concatenate([p['c31_b'], p['pc_b']])),
                      ('bd2', jnp.concatenate([p['c32_b'], p['c33_b']]))]
    else:
        b_entries += [('b31', p['c31_b']), ('b32', p['c32_b']),
                      ('bpc', p['pc_b']), ('b33', p['c33_b'])]
    b_entries = [(n, jnp.asarray(b, jnp.float32).reshape(-1, 1))
                 for n, b in b_entries]
    # CA 1x1 weights stay in the f32 slab (review: no bf16 rounding; tiny dots
    # are done in f32 inside the kernel).
    b_entries += [('wca1', p['ca1_w'][:, :, 0, 0]),
                  ('wca2', p['ca2_w'][:, :, 0, 0])]

    wpack, woffs = _pack_rows(w_entries, compute_dtype, row_align=16)
    bpack, boffs = _pack_rows(b_entries, jnp.float32, row_align=8)
    return FDSCBPacked(wpack, woffs, bpack, boffs, n_feat, compute_dtype, fused)


# ---------------------------------------------------------------------------
# the Pallas kernel (one batch element per grid step)
# ---------------------------------------------------------------------------
def _fdscb_kernel(x_ref, w_ref, b_ref, m_ref, out_ref, scr_ref, *,
                  W, HW, HWp, n_feat, woffs, boffs, cdtype, padded, fused):
    f32 = jnp.float32
    C = n_feat
    C2, C4 = C // 2, C // 4
    prec = (lax.Precision.HIGHEST
            if np.dtype(cdtype) == np.dtype(np.float32) else None)

    def wv(name):                       # packed weight slice (compute dtype)
        o, r, c = woffs[name]
        return w_ref[o:o + r, :c]

    def bv(name):                       # packed bias / CA-weight slice (f32)
        o, r, c = boffs[name]
        return b_ref[o:o + r, :c]

    def mm(wname, rhs):                 # one MXU matmul, f32 accumulation
        return jnp.dot(wv(wname), rhs, precision=prec,
                       preferred_element_type=f32)

    def mm_scr(wname, rows):            # matmul against the im2col scratch
        return jnp.dot(wv(wname), scr_ref[0:rows, :], precision=prec,
                       preferred_element_type=f32)

    def mrow(si, sj):                   # combined boundary mask for tap (si,sj)
        k = (si + 1) * 3 + (sj + 1)
        return m_ref[k:k + 1, :]

    def shifted(src, si, sj):
        """out[:, p] = src[:, p + si*W + sj] if that tap is inside the image, else 0.

        pltpu.roll runs on the (otherwise idle) XLU; the single combined mask
        zeroes wrapped lanes, out-of-image rows/cols and pad lanes at once.
        """
        d = si * W + sj
        t = pltpu.roll(src, (-d) % HWp, axis=1) if d % HWp else src
        if si == 0 and sj == 0 and not padded:
            return t
        return t * mrow(si, sj)

    def fill_taps(base, src, cin):
        """Write the 9 tap slabs of a 3x3/pad=1 conv on src (f32 (cin, HWp))
        into the shared scratch rows [base, base + 9*cin)."""
        for t, (si, sj) in enumerate(TAPS):
            scr_ref[base + t * cin: base + (t + 1) * cin, :] = (
                shifted(src, si, sj).astype(cdtype))

    # -- c11 (1x1) and channel split -----------------------------------------
    y1 = mm('w11', x_ref[...].astype(cdtype)) + bv('b11')       # (C, HWp) f32
    x1, x2, x3 = y1[:C2], y1[C2:C2 + C4], y1[C2 + C4:]

    # -- up: ConvTranspose2d(C2->C4, k=2, s=2) + ReLU, all 4 sub-pixel blocks
    #    of the 2x image in one matmul (block k in rows [k*C4, (k+1)*C4)) -----
    b_all = jnp.maximum(mm('wup', x1.astype(cdtype)) + bv('bup'), 0.0)

    # -- down: stride-2 3x3 (pad=1) on the never-materialized upsample,
    #    folded onto the blocks; taps assembled in the shared scratch ---------
    tapmap = ((1, -1), (0, 0), (1, 0))       # conv tap dy/dx -> (block, shift)
    for dy in range(3):
        ky, si = tapmap[dy]
        for dx in range(3):
            kx, sj = tapmap[dx]
            blk = ky * 2 + kx
            g = dy * 3 + dx
            scr_ref[g * C4:(g + 1) * C4, :] = (
                shifted(b_all[blk * C4:(blk + 1) * C4], si, sj).astype(cdtype))
    y3 = mm_scr('wdn', 9 * C4) + bv('bdn') + x1

    if fused:
        # one block-diagonal matmul for {c31(x1), pc(dw(x2))} ...
        fill_taps(0, x1, C2)
        fill_taps(9 * C2, x2, C4)
        z = mm_scr('wd1', 9 * (C2 + C4)) + bv('bd1')
        y4 = z[:C2] * jax.nn.sigmoid(y3)
        y6r = jnp.maximum(z[C2:], 0.0)
        # ... and one for {c32(y4), c33(relu(y6))}
        fill_taps(0, y4, C2)
        fill_taps(9 * C2, y6r, C4)
        zz = mm_scr('wd2', 9 * (C2 + C4)) + bv('bd2')
        y5, y7 = zz[:C2], zz[C2:]
    else:
        fill_taps(0, x1, C2)
        y4 = (mm_scr('w31', 9 * C2) + bv('b31')) * jax.nn.sigmoid(y3)
        fill_taps(0, y4, C2)
        y5 = mm_scr('w32', 9 * C2) + bv('b32')
        fill_taps(0, x2, C4)
        y6r = jnp.maximum(mm_scr('wdwpc', 9 * C4) + bv('bpc'), 0.0)
        fill_taps(0, y6r, C4)
        y7 = mm_scr('w33', 9 * C4) + bv('b33')

    # -- CALayer: global avg pool -> 1x1 -> ReLU -> 1x1 -> sigmoid -> scale ---
    if padded:
        avg = jnp.sum(y7 * mrow(0, 0), axis=1, keepdims=True) * (1.0 / HW)
    else:
        avg = jnp.sum(y7, axis=1, keepdims=True) * (1.0 / HW)
    ca_t = jnp.maximum(
        jnp.dot(bv('wca1'), avg, precision=lax.Precision.HIGHEST,
                preferred_element_type=f32) + bv('bca1'), 0.0)
    ca_s = jax.nn.sigmoid(
        jnp.dot(bv('wca2'), ca_t, precision=lax.Precision.HIGHEST,
                preferred_element_type=f32) + bv('bca2'))
    y8 = y7 * ca_s

    # -- y9 = concat([y5, y8, x3]) assembled in the scratch; y10 = c12(y9);
    #    residual (x re-read from the VMEM-resident input block) --------------
    scr_ref[0:C2, :] = y5.astype(cdtype)
    scr_ref[C2:C2 + C4, :] = y8.astype(cdtype)
    scr_ref[C2 + C4:C, :] = x3.astype(cdtype)
    out_ref[...] = x_ref[...] + mm_scr('w12', C) + bv('b12')


# ---------------------------------------------------------------------------
# wrapper: NCHW in / NCHW out
# ---------------------------------------------------------------------------
def _build_masks(H, W, HWp):
    """9 combined masks (one per 3x3 tap (si,sj)): 1 iff lane < H*W and the tap
    pixel (i+si, j+sj) is inside the image.  Used after pltpu.roll."""
    p = np.arange(HWp)
    i, j = p // W, p % W
    valid = p < H * W
    rows = []
    for si in (-1, 0, 1):
        for sj in (-1, 0, 1):
            ok = (valid & (i + si >= 0) & (i + si <= H - 1)
                  & (j + sj >= 0) & (j + sj <= W - 1))
            rows.append(ok)
    return jnp.asarray(np.stack(rows).astype(np.float32))


def fdscb_pallas(x, packed: FDSCBPacked):
    N, C, H, W = x.shape
    n_feat = packed.n_feat
    assert C == n_feat
    C2, C4 = n_feat // 2, n_feat // 4
    HW = H * W
    HWp = ((HW + 127) // 128) * 128          # lane-dense stores
    padded = HWp != HW
    cdtype = packed.compute_dtype

    xf = x.reshape(N, C, HW)
    if xf.dtype != jnp.float32:
        xf = xf.astype(jnp.float32)
    if padded:                                # skipped when HW % 128 == 0
        xf = jnp.pad(xf, ((0, 0), (0, 0), (0, HWp - HW)))
    masks = _build_masks(H, W, HWp)

    scr_rows = 9 * (C2 + C4) if packed.fused else 9 * C2

    kernel = functools.partial(
        _fdscb_kernel, W=W, HW=HW, HWp=HWp, n_feat=n_feat,
        woffs=packed.woffs, boffs=packed.boffs,
        cdtype=cdtype, padded=padded, fused=packed.fused)

    def full(a):
        nd = a.ndim
        return pl.BlockSpec(a.shape, lambda n: (0,) * nd)

    # explicit scoped-VMEM budget (v5e default is only 16 MiB); capped at the
    # v7x physical 64 MiB so the same setting is valid on all generations.
    cd_bytes = jnp.dtype(cdtype).itemsize
    blk = C * HWp * 4
    est = (4 * blk                                           # 2x in + 2x out
           + 2 * (packed.wpack.size * cd_bytes
                  + packed.bpack.size * 4 + masks.size * 4)  # weights/masks
           + scr_rows * HWp * cd_bytes                       # im2col scratch
           + 10 * C * HWp * 4)                               # live f32 temps
    vmem_limit = int(min(max(est, 16 * 2**20), 64 * 2**20))

    out = pl.pallas_call(
        kernel,
        out_shape=jax.ShapeDtypeStruct((N, C, HWp), jnp.float32),
        grid_spec=pltpu.PrefetchScalarGridSpec(
            num_scalar_prefetch=0,
            grid=(N,),
            in_specs=[pl.BlockSpec((None, C, HWp), lambda n: (n, 0, 0)),
                      full(packed.wpack), full(packed.bpack), full(masks)],
            out_specs=pl.BlockSpec((None, C, HWp), lambda n: (n, 0, 0)),
            scratch_shapes=[pltpu.VMEM((scr_rows, HWp), cdtype)]),
        compiler_params=pltpu.CompilerParams(
            dimension_semantics=("parallel",),
            vmem_limit_bytes=vmem_limit),
    )(xf, packed.wpack, packed.bpack, masks)

    if padded:
        out = out[:, :, :HW]
    return out.reshape(N, C, H, W)


# ---------------------------------------------------------------------------
# parameter init (PyTorch __init__ shapes)
# ---------------------------------------------------------------------------
def init_fdscb_params(key, n_feat):
    C, C2, C4 = n_feat, n_feat // 2, n_feat // 4
    C4r = C4 // 4
    shapes = {
        'c11_w': (C, C, 1, 1), 'c11_b': (C,),
        'c12_w': (C, C, 1, 1), 'c12_b': (C,),
        'c31_w': (C2, C2, 3, 3), 'c31_b': (C2,),
        'c32_w': (C2, C2, 3, 3), 'c32_b': (C2,),
        'c33_w': (C4, C4, 3, 3), 'c33_b': (C4,),
        'up_w': (C2, C4, 2, 2), 'up_b': (C4,),        # ConvTranspose2d (in,out,kh,kw)
        'down_w': (C2, C4, 3, 3), 'down_b': (C2,),
        'dw_w': (C4, 1, 3, 3),                        # depthwise, no bias
        'pc_w': (C4, C4, 1, 1), 'pc_b': (C4,),
        'ca1_w': (C4r, C4, 1, 1), 'ca1_b': (C4r,),
        'ca2_w': (C4, C4r, 1, 1), 'ca2_b': (C4,),
    }
    keys = jax.random.split(key, len(shapes))
    return {name: 0.1 * jax.random.normal(k, shp, jnp.float32)
            for (name, shp), k in zip(shapes.items(), keys)}


# ---------------------------------------------------------------------------
# plain-JAX reference (mirrors the PyTorch forward exactly)
# ---------------------------------------------------------------------------
def fdscb_reference(x, p, n_feat):
    C, C2, C4 = n_feat, n_feat // 2, n_feat // 4
    hp = lax.Precision.HIGHEST
    dn = ('NCHW', 'OIHW', 'NCHW')

    def conv(a, w, b=None, stride=1, pad=0, groups=1):
        y = lax.conv_general_dilated(a, w, (stride, stride),
                                     ((pad, pad), (pad, pad)),
                                     dimension_numbers=dn,
                                     feature_group_count=groups,
                                     precision=hp)
        return y if b is None else y + b.reshape(1, -1, 1, 1)

    y1 = conv(x, p['c11_w'], p['c11_b'])
    x1, x2, x3 = y1[:, :C2], y1[:, C2:C2 + C4], y1[:, C2 + C4:]
    # ConvTranspose2d(k=2,s=2,p=0) == lhs-dilated conv with flipped/swapped kernel
    wt = jnp.flip(jnp.transpose(p['up_w'], (1, 0, 2, 3)), axis=(2, 3))
    y2 = lax.conv_general_dilated(x1, wt, (1, 1), ((1, 1), (1, 1)),
                                  lhs_dilation=(2, 2), dimension_numbers=dn,
                                  precision=hp) + p['up_b'].reshape(1, -1, 1, 1)
    y2 = jax.nn.relu(y2)
    y3 = conv(y2, p['down_w'], p['down_b'], stride=2, pad=1) + x1
    y4 = conv(x1, p['c31_w'], p['c31_b'], pad=1) * jax.nn.sigmoid(y3)
    y5 = conv(y4, p['c32_w'], p['c32_b'], pad=1)
    y6 = conv(conv(x2, p['dw_w'], None, pad=1, groups=C4), p['pc_w'], p['pc_b'])
    y7 = conv(jax.nn.relu(y6), p['c33_w'], p['c33_b'], pad=1)
    avg = jnp.mean(y7, axis=(2, 3), keepdims=True)
    t = jax.nn.relu(conv(avg, p['ca1_w'], p['ca1_b']))
    s = jax.nn.sigmoid(conv(t, p['ca2_w'], p['ca2_b']))
    y8 = y7 * s
    y9 = jnp.concatenate([y5, y8, x3], axis=1)
    y10 = conv(y9, p['c12_w'], p['c12_b'])
    return x + y10


if __name__ == "__main__":
    n_feat = 16          # small but consistent (C4 divisible by the CA reduction)
    key = jax.random.PRNGKey(0)
    kx, kp, kx2 = jax.random.split(key, 3)
    params = init_fdscb_params(kp, n_feat)

    # 16x16 (HW % 128 == 0, no pad path), f32 MXU, fused block-diagonal matmuls
    x = jax.random.normal(kx, (2, n_feat, 16, 16), jnp.float32)
    ref = fdscb_reference(x, params, n_feat)
    packed_f32 = pack_fdscb_params(params, n_feat, jnp.float32)
    out_f32 = jax.block_until_ready(fdscb_pallas(x, packed_f32))
    assert out_f32.shape == x.shape and out_f32.dtype == jnp.float32
    np.testing.assert_allclose(np.asarray(out_f32), np.asarray(ref),
                               atol=2e-3, rtol=2e-3)

    # bf16 MXU operands (f32 accumulation), un-fused matmul path
    # (the path a real n_feat=64 model takes, where 9*(C2+C4) > MXU depth).
    packed_bf16 = pack_fdscb_params(params, n_feat, jnp.bfloat16,
                                    fuse_pairs=False)
    out_bf16 = jax.block_until_ready(fdscb_pallas(x, packed_bf16))
    assert out_bf16.shape == x.shape and out_bf16.dtype == jnp.float32
    np.testing.assert_allclose(np.asarray(out_bf16), np.asarray(ref),
                               atol=2e-2, rtol=2e-2)

    # 12x12: exercises the HW % 128 != 0 (padded-lane + combined-mask) path.
    x2 = jax.random.normal(kx2, (2, n_feat, 12, 12), jnp.float32)
    ref2 = fdscb_reference(x2, params, n_feat)
    out2 = jax.block_until_ready(fdscb_pallas(x2, packed_f32))
    np.testing.assert_allclose(np.asarray(out2), np.asarray(ref2),
                               atol=2e-3, rtol=2e-3)

    print("KERNEL_OK")
</pallas_src>

<mosaic_0001>
module attributes {stable_mosaic.version = 11 : i64} {
  func.func @_fdscb_kernel(%arg0: i32, %arg1: memref<1x16x256xf32, #tpu.memory_space<vmem>>, %arg2: memref<96x108xf32, #tpu.memory_space<vmem>>, %arg3: memref<120x4xf32, #tpu.memory_space<vmem>>, %arg4: memref<9x256xf32, #tpu.memory_space<vmem>>, %arg5: memref<1x16x256xf32, #tpu.memory_space<vmem>>, %arg6: memref<108x256xf32, #tpu.memory_space<vmem>>) attributes {dimension_semantics = [#tpu.dimension_semantics<parallel>], iteration_bounds = array<i64: 2>, scalar_prefetch = 0 : i64, scratch_operands = 1 : i64, tpu.core_type = #tpu.core_type<tc>, window_params = [{transform_indices = @transform_0, window_bounds = array<i64: 1, 16, 256>}, {pipeline_mode = #tpu.pipeline_mode<synchronous>, transform_indices = @transform_1, window_bounds = array<i64: 96, 108>}, {pipeline_mode = #tpu.pipeline_mode<synchronous>, transform_indices = @transform_2, window_bounds = array<i64: 120, 4>}, {pipeline_mode = #tpu.pipeline_mode<synchronous>, transform_indices = @transform_3, window_bounds = array<i64: 9, 256>}, {transform_indices = @transform_4, window_bounds = array<i64: 1, 16, 256>}]} {
    %c0 = arith.constant 0 : index
    %c0_0 = arith.constant 0 : index
    %c0_1 = arith.constant 0 : index
    %0 = vector.load %arg1[%c0, %c0_0, %c0_1] : memref<1x16x256xf32, #tpu.memory_space<vmem>>, vector<1x16x256xf32>
    %1 = vector.shape_cast %0 : vector<1x16x256xf32> to vector<16x256xf32>
    %c0_2 = arith.constant 0 : index
    %c0_3 = arith.constant 0 : index
    %2 = vector.load %arg2[%c0_2, %c0_3] : memref<96x108xf32, #tpu.memory_space<vmem>>, vector<16x16xf32>
    %cst = arith.constant dense<0.000000e+00> : vector<16x256xf32>
    %3 = tpu.matmul %2, %1, %cst {dimension_numbers = #tpu.dot_dimension_numbers<[1], [0], [0], [1], [0, 0, 1, 1], [], []>, precision = #tpu.contract_precision<fp32>} : vector<16x16xf32>, vector<16x256xf32>, vector<16x256xf32> -> vector<16x256xf32>
    %c0_4 = arith.constant 0 : index
    %c0_5 = arith.constant 0 : index
    %4 = vector.load %arg3[%c0_4, %c0_5] : memref<120x4xf32, #tpu.memory_space<vmem>>, vector<16x1xf32>
    %5 = vector.broadcast %4 : vector<16x1xf32> to vector<16x256xf32>
    %6 = arith.addf %3, %5 : vector<16x256xf32>
    %7 = vector.extract_strided_slice %6 {offsets = [0, 0], sizes = [8, 256], strides = [1, 1]} : vector<16x256xf32> to vector<8x256xf32>
    %8 = vector.extract_strided_slice %6 {offsets = [8, 0], sizes = [4, 256], strides = [1, 1]} : vector<16x256xf32> to vector<4x256xf32>
    %9 = vector.extract_strided_slice %6 {offsets = [12, 0], sizes = [4, 256], strides = [1, 1]} : vector<16x256xf32> to vector<4x256xf32>
    %c32 = arith.constant 32 : index
    %c0_6 = arith.constant 0 : index
    %10 = vector.load %arg2[%c32, %c0_6] : memref<96x108xf32, #tpu.memory_space<vmem>>, vector<16x8xf32>
    %cst_7 = arith.constant dense<0.000000e+00> : vector<16x256xf32>
    %11 = tpu.matmul %10, %7, %cst_7 {dimension_numbers = #tpu.dot_dimension_numbers<[1], [0], [0], [1], [0, 0, 1, 1], [], []>, precision = #tpu.contract_precision<fp32>} : vector<16x8xf32>, vector<8x256xf32>, vector<16x256xf32> -> vector<16x256xf32>
    %c40 = arith.constant 40 : index
    %c0_8 = arith.constant 0 : index
    %12 = vector.load %arg3[%c40, %c0_8] : memref<120x4xf32, #tpu.memory_space<vmem>>, vector<16x1xf32>
    %13 = vector.broadcast %12 : vector<16x1xf32> to vector<16x256xf32>
    %14 = arith.addf %11, %13 : vector<16x256xf32>
    %cst_9 = arith.constant 0.000000e+00 : f32
    %15 = vector.broadcast %cst_9 : f32 to vector<16x256xf32>
    %16 = arith.maximumf %14, %15 : vector<16x256xf32>
    %17 = vector.extract_strided_slice %16 {offsets = [12, 0], sizes = [4, 256], strides = [1, 1]} : vector<16x256xf32> to vector<4x256xf32>
    %c17_i32 = arith.constant 17 : i32
    %18 = tpu.dynamic_rotate %17 by %c17_i32 dim 1 : vector<4x256xf32>, i32 -> vector<4x256xf32>
    %c0_10 = arith.constant 0 : index
    %c0_11 = arith.constant 0 : index
    %19 = vector.load %arg4[%c0_10, %c0_11] : memref<9x256xf32, #tpu.memory_space<vmem>>, vector<1x256xf32>
    %20 = vector.broadcast %19 : vector<1x256xf32> to vector<4x256xf32>
    %21 = arith.mulf %18, %20 : vector<4x256xf32>
    %c0_12 = arith.constant 0 : index
    %c0_13 = arith.constant 0 : index
    %22 = vector.load %arg6[%c0_12, %c0_13] : memref<108x256xf32, #tpu.memory_space<vmem>>, vector<4x256xf32>
    tpu.vector_store %arg6[%c0_12, %c0_13], %21 {strides = array<i32>} : memref<108x256xf32, #tpu.memory_space<vmem>>, vector<4x256xf32>,
    %23 = vector.extract_strided_slice %16 {offsets = [8, 0], sizes = [4, 256], strides = [1, 1]} : vector<16x256xf32> to vector<4x256xf32>
    %c16_i32 = arith.constant 16 : i32
    %24 = tpu.dynamic_rotate %23 by %c16_i32 dim 1 : vector<4x256xf32>, i32 -> vector<4x256xf32>
    %c1 = arith.constant 1 : index
    %c0_14 = arith.constant 0 : index
    %25 = vector.load %arg4[%c1, %c0_14] : memref<9x256xf32, #tpu.memory_space<vmem>>, vector<1x256xf32>
    %26 = vector.broadcast %25 : vector<1x256xf32> to vector<4x256xf32>
    %27 = arith.mulf %24, %26 : vector<4x256xf32>
    %c4 = arith.constant 4 : index
    %c0_15 = arith.constant 0 : index
    %28 = vector.load %arg6[%c4, %c0_15] : memref<108x256xf32, #tpu.memory_space<vmem>>, vector<4x256xf32>
    tpu.vector_store %arg6[%c4, %c0_15], %27 {strides = array<i32>} : memref<108x256xf32, #tpu.memory_space<vmem>>, vector<4x256xf32>,
    %29 = vector.extract_strided_slice %16 {offsets = [12, 0], sizes = [4, 256], strides = [1, 1]} : vector<16x256xf32> to vector<4x256xf32>
    %c16_i32_16 = arith.constant 16 : i32
    %30 = tpu.dynamic_rotate %29 by %c16_i32_16 dim 1 : vector<4x256xf32>, i32 -> vector<4x256xf32>
    %c1_17 = arith.constant 1 : index
    %c0_18 = arith.constant 0 : index
    %31 = vector.load %arg4[%c1_17, %c0_18] : memref<9x256xf32, #tpu.memory_space<vmem>>, vector<1x256xf32>
    %32 = vector.broadcast %31 : vector<1x256xf32> to vector<4x256xf32>
    %33 = arith.mulf %30, %32 : vector<4x256xf32>
    %c8 = arith.constant 8 : index
    %c0_19 = arith.constant 0 : index
    %34 = vector.load %arg6[%c8, %c0_19] : memref<108x256xf32, #tpu.memory_space<vmem>>, vector<4x256xf32>
    tpu.vector_store %arg6[%c8, %c0_19], %33 {strides = array<i32>} : memref<108x256xf32, #tpu.memory_space<vmem>>, vector<4x256xf32>,
    %35 = vector.extract_strided_slice %16 {offsets = [4, 0], sizes = [4, 256], strides = [1, 1]} : vector<16x256xf32> to vector<4x256xf32>
    %c1_i32 = arith.constant 1 : i32
    %36 = tpu.dynamic_rotate %35 by %c1_i32 dim 1 : vector<4x256xf32>, i32 -> vector<4x256xf32>
    %c3 = arith.constant 3 : index
    %c0_20 = arith.constant 0 : index
    %37 = vector.load %arg4[%c3, %c0_20] : memref<9x256xf32, #tpu.memory_space<vmem>>, vector<1x256xf32>
    %38 = vector.broadcast %37 : vector<1x256xf32> to vector<4x256xf32>
    %39 = arith.mulf %36, %38 : vector<4x256xf32>
    %c12 = arith.constant 12 : index
    %c0_21 = arith.constant 0 : index
    %40 = vector.load %arg6[%c12, %c0_21] : memref<108x256xf32, #tpu.memory_space<vmem>>, vector<4x256xf32>
    tpu.vector_store %arg6[%c12, %c0_21], %39 {strides = array<i32>} : memref<108x256xf32, #tpu.memory_space<vmem>>, vector<4x256xf32>,
    %41 = vector.extract_strided_slice %16 {offsets = [0, 0], sizes = [4, 256], strides = [1, 1]} : vector<16x256xf32> to vector<4x256xf32>
    %c16 = arith.constant 16 : index
    %c0_22 = arith.constant 0 : index
    %42 = vector.load %arg6[%c16, %c0_22] : memref<108x256xf32, #tpu.memory_space<vmem>>, vector<4x256xf32>
    tpu.vector_store %arg6[%c16, %c0_22], %41 {strides = array<i32>} : memref<108x256xf32, #tpu.memory_space<vmem>>, vector<4x256xf32>,
    %43 = vector.extract_strided_slice %16 {offsets = [4, 0], sizes = [4, 256], strides = [1, 1]} : vector<16x256xf32> to vector<4x256xf32>
    %c20 = arith.constant 20 : index
    %c0_23 = arith.constant 0 : index
    %44 = vector.load %arg6[%c20, %c0_23] : memref<108x256xf32, #tpu.memory_space<vmem>>, vector<4x256xf32>
    tpu.vector_store %arg6[%c20, %c0_23], %43 {strides = array<i32>} : memref<108x256xf32, #tpu.memory_space<vmem>>, vector<4x256xf32>,
    %45 = vector.extract_strided_slice %16 {offsets = [12, 0], sizes = [4, 256], strides = [1, 1]} : vector<16x256xf32> to vector<4x256xf32>
    %c1_i32_24 = arith.constant 1 : i32
    %46 = tpu.dynamic_rotate %45 by %c1_i32_24 dim 1 : vector<4x256xf32>, i32 -> vector<4x256xf32>
    %c3_25 = arith.constant 3 : index
    %c0_26 = arith.constant 0 : index
    %47 = vector.load %arg4[%c3_25, %c0_26] : memref<9x256xf32, #tpu.memory_space<vmem>>, vector<1x256xf32>
    %48 = vector.broadcast %47 : vector<1x256xf32> to vector<4x256xf32>
    %49 = arith.mulf %46, %48 : vector<4x256xf32>
    %c24 = arith.constant 24 : index
    %c0_27 = arith.constant 0 : index
    %50 = vector.load %arg6[%c24, %c0_27] : memref<108x256xf32, #tpu.memory_space<vmem>>, vector<4x256xf32>
    tpu.vector_store %arg6[%c24, %c0_27], %49 {strides = array<i32>} : memref<108x256xf32, #tpu.memory_space<vmem>>, vector<4x256xf32>,
    %51 = vector.extract_strided_slice %16 {offsets = [8, 0], sizes = [4, 256], strides = [1, 1]} : vector<16x256xf32> to vector<4x256xf32>
    %c28 = arith.constant 28 : index
    %c0_28 = arith.constant 0 : index
    %52 = vector.load %arg6[%c28, %c0_28] : memref<108x256xf32, #tpu.memory_space<vmem>>, vector<4x256xf32>
    tpu.vector_store %arg6[%c28, %c0_28], %51 {strides = array<i32>} : memref<108x256xf32, #tpu.memory_space<vmem>>, vector<4x256xf32>,
    %53 = vector.extract_strided_slice %16 {offsets = [12, 0], sizes = [4, 256], strides = [1, 1]} : vector<16x256xf32> to vector<4x256xf32>
    %c32_29 = arith.constant 32 : index
    %c0_30 = arith.constant 0 : index
    %54 = vector.load %arg6[%c32_29, %c0_30] : memref<108x256xf32, #tpu.memory_space<vmem>>, vector<4x256xf32>
    tpu.vector_store %arg6[%c32_29, %c0_30], %53 {strides = array<i32>} : memref<108x256xf32, #tpu.memory_space<vmem>>, vector<4x256xf32>,
    %c48 = arith.constant 48 : index
    %c0_31 = arith.constant 0 : index
    %55 = vector.load %arg2[%c48, %c0_31] : memref<96x108xf32, #tpu.memory_space<vmem>>, vector<8x36xf32>
    %c0_32 = arith.constant 0 : index
    %c0_33 = arith.constant 0 : index
    %56 = vector.load %arg6[%c0_32, %c0_33] : memref<108x256xf32, #tpu.memory_space<vmem>>, vector<36x256xf32>
    %cst_34 = arith.constant dense<0.000000e+00> : vector<8x256xf32>
    %57 = tpu.matmul %55, %56, %cst_34 {dimension_numbers = #tpu.dot_dimension_numbers<[1], [0], [0], [1], [0, 0, 1, 1], [], []>, precision = #tpu.contract_precision<fp32>} : vector<8x36xf32>, vector<36x256xf32>, vector<8x256xf32> -> vector<8x256xf32>
    %c32_35 = arith.constant 32 : index
    %c0_36 = arith.constant 0 : index
    %58 = vector.load %arg3[%c32_35, %c0_36] : memref<120x4xf32, #tpu.memory_space<vmem>>, vector<8x1xf32>
    %59 = vector.broadcast %58 : vector<8x1xf32> to vector<8x256xf32>
    %60 = arith.addf %57, %59 : vector<8x256xf32>
    %61 = arith.addf %60, %7 : vector<8x256xf32>
    %c17_i32_37 = arith.constant 17 : i32
    %62 = tpu.dynamic_rotate %7 by %c17_i32_37 dim 1 : vector<8x256xf32>, i32 -> vector<8x256xf32>
    %c0_38 = arith.constant 0 : index
    %c0_39 = arith.constant 0 : index
    %63 = vector.load %arg4[%c0_38, %c0_39] : memref<9x256xf32, #tpu.memory_space<vmem>>, vector<1x256xf32>
    %64 = vector.broadcast %63 : vector<1x256xf32> to vector<8x256xf32>
    %65 = arith.mulf %62, %64 : vector<8x256xf32>
    %c0_40 = arith.constant 0 : index
    %c0_41 = arith.constant 0 : index
    %66 = vector.load %arg6[%c0_40, %c0_41] : memref<108x256xf32, #tpu.memory_space<vmem>>, vector<8x256xf32>
    tpu.vector_store %arg6[%c0_40, %c0_41], %65 {strides = array<i32>} : memref<108x256xf32, #tpu.memory_space<vmem>>, vector<8x256xf32>,
    %c16_i32_42 = arith.constant 16 : i32
    %67 = tpu.dynamic_rotate %7 by %c16_i32_42 dim 1 : vector<8x256xf32>, i32 -> vector<8x256xf32>
    %c1_43 = arith.constant 1 : index
    %c0_44 = arith.constant 0 : index
    %68 = vector.load %arg4[%c1_43, %c0_44] : memref<9x256xf32, #tpu.memory_space<vmem>>, vector<1x256xf32>
    %69 = vector.broadcast %68 : vector<1x256xf32> to vector<8x256xf32>
    %70 = arith.mulf %67, %69 : vector<8x256xf32>
    %c8_45 = arith.constant 8 : index
    %c0_46 = arith.constant 0 : index
    %71 = vector.load %arg6[%c8_45, %c0_46] : memref<108x256xf32, #tpu.memory_space<vmem>>, vector<8x256xf32>
    tpu.vector_store %arg6[%c8_45, %c0_46], %70 {strides = array<i32>} : memref<108x256xf32, #tpu.memory_space<vmem>>, vector<8x256xf32>,
    %c15_i32 = arith.constant 15 : i32
    %72 = tpu.dynamic_rotate %7 by %c15_i32 dim 1 : vector<8x256xf32>, i32 -> vector<8x256xf32>
    %c2 = arith.constant 2 : index
    %c0_47 = arith.constant 0 : index
    %73 = vector.load %arg4[%c2, %c0_47] : memref<9x256xf32, #tpu.memory_space<vmem>>, vector<1x256xf32>
    %74 = vector.broadcast %73 : vector<1x256xf32> to vector<8x256xf32>
    %75 = arith.mulf %72, %74 : vector<8x256xf32>
    %c16_48 = arith.constant 16 : index
    %c0_49 = arith.constant 0 : index
    %76 = vector.load %arg6[%c16_48, %c0_49] : memref<108x256xf32, #tpu.memory_space<vmem>>, vector<8x256xf32>
    tpu.vector_store %arg6[%c16_48, %c0_49], %75 {strides = array<i32>} : memref<108x256xf32, #tpu.memory_space<vmem>>, vector<8x256xf32>,
    %c1_i32_50 = arith.constant 1 : i32
    %77 = tpu.dynamic_rotate %7 by %c1_i32_50 dim 1 : vector<8x256xf32>, i32 -> vector<8x256xf32>
    %c3_51 = arith.constant 3 : index
    %c0_52 = arith.constant 0 : index
    %78 = vector.load %arg4[%c3_51, %c0_52] : memref<9x256xf32, #tpu.memory_space<vmem>>, vector<1x256xf32>
    %79 = vector.broadcast %78 : vector<1x256xf32> to vector<8x256xf32>
    %80 = arith.mulf %77, %79 : vector<8x256xf32>
    %c24_53 = arith.constant 24 : index
    %c0_54 = arith.constant 0 : index
    %81 = vector.load %arg6[%c24_53, %c0_54] : memref<108x256xf32, #tpu.memory_space<vmem>>, vector<8x256xf32>
    tpu.vector_store %arg6[%c24_53, %c0_54], %80 {strides = array<i32>} : memref<108x256xf32, #tpu.memory_space<vmem>>, vector<8x256xf32>,
    %c32_55 = arith.constant 32 : index
    %c0_56 = arith.constant 0 : index
    %82 = vector.load %arg6[%c32_55, %c0_56] : memref<108x256xf32, #tpu.memory_space<vmem>>, vector<8x256xf32>
    tpu.vector_store %arg6[%c32_55, %c0_56], %7 {strides = array<i32>} : memref<108x256xf32, #tpu.memory_space<vmem>>, vector<8x256xf32>,
    %c255_i32 = arith.constant 255 : i32
    %83 = tpu.dynamic_rotate %7 by %c255_i32 dim 1 : vector<8x256xf32>, i32 -> vector<8x256xf32>
    %c5 = arith.constant 5 : index
    %c0_57 = arith.constant 0 : index
    %84 = vector.load %arg4[%c5, %c0_57] : memref<9x256xf32, #tpu.memory_space<vmem>>, vector<1x256xf32>
    %85 = vector.broadcast %84 : vector<1x256xf32> to vector<8x256xf32>
    %86 = arith.mulf %83, %85 : vector<8x256xf32>
    %c40_58 = arith.constant 40 : index
    %c0_59 = arith.constant 0 : index
    %87 = vector.load %arg6[%c40_58, %c0_59] : memref<108x256xf32, #tpu.memory_space<vmem>>, vector<8x256xf32>
    tpu.vector_store %arg6[%c40_58, %c0_59], %86 {strides = array<i32>} : memref<108x256xf32, #tpu.memory_space<vmem>>, vector<8x256xf32>,
    %c241_i32 = arith.constant 241 : i32
    %88 = tpu.dynamic_rotate %7 by %c241_i32 dim 1 : vector<8x256xf32>, i32 -> vector<8x256xf32>
    %c6 = arith.constant 6 : index
    %c0_60 = arith.constant 0 : index
    %89 = vector.load %arg4[%c6, %c0_60] : memref<9x256xf32, #tpu.memory_space<vmem>>, vector<1x256xf32>
    %90 = vector.broadcast %89 : vector<1x256xf32> to vector<8x256xf32>
    %91 = arith.mulf %88, %90 : vector<8x256xf32>
    %c48_61 = arith.constant 48 : index
    %c0_62 = arith.constant 0 : index
    %92 = vector.load %arg6[%c48_61, %c0_62] : memref<108x256xf32, #tpu.memory_space<vmem>>, vector<8x256xf32>
    tpu.vector_store %arg6[%c48_61, %c0_62], %91 {strides = array<i32>} : memref<108x256xf32, #tpu.memory_space<vmem>>, vector<8x256xf32>,
    %c240_i32 = arith.constant 240 : i32
    %93 = tpu.dynamic_rotate %7 by %c240_i32 dim 1 : vector<8x256xf32>, i32 -> vector<8x256xf32>
    %c7 = arith.constant 7 : index
    %c0_63 = arith.constant 0 : index
    %94 = vector.load %arg4[%c7, %c0_63] : memref<9x256xf32, #tpu.memory_space<vmem>>, vector<1x256xf32>
    %95 = vector.broadcast %94 : vector<1x256xf32> to vector<8x256xf32>
    %96 = arith.mulf %93, %95 : vector<8x256xf32>
    %c56 = arith.constant 56 : index
    %c0_64 = arith.constant 0 : index
    %97 = vector.load %arg6[%c56, %c0_64] : memref<108x256xf32, #tpu.memory_space<vmem>>, vector<8x256xf32>
    tpu.vector_store %arg6[%c56, %c0_64], %96 {strides = array<i32>} : memref<108x256xf32, #tpu.memory_space<vmem>>, vector<8x256xf32>,
    %c239_i32 = arith.constant 239 : i32
    %98 = tpu.dynamic_rotate %7 by %c239_i32 dim 1 : vector<8x256xf32>, i32 -> vector<8x256xf32>
    %c8_65 = arith.constant 8 : index
    %c0_66 = arith.constant 0 : index
    %99 = vector.load %arg4[%c8_65, %c0_66] : memref<9x256xf32, #tpu.memory_space<vmem>>, vector<1x256xf32>
    %100 = vector.broadcast %99 : vector<1x256xf32> to vector<8x256xf32>
    %101 = arith.mulf %98, %100 : vector<8x256xf32>
    %c64 = arith.constant 64 : index
    %c0_67 = arith.constant 0 : index
    %102 = vector.load %arg6[%c64, %c0_67] : memref<108x256xf32, #tpu.memory_space<vmem>>, vector<8x256xf32>
    tpu.vector_store %arg6[%c64, %c0_67], %101 {strides = array<i32>} : memref<108x256xf32, #tpu.memory_space<vmem>>, vector<8x256xf32>,
    %c17_i32_68 = arith.constant 17 : i32
    %103 = tpu.dynamic_rotate %8 by %c17_i32_68 dim 1 : vector<4x256xf32>, i32 -> vector<4x256xf32>
    %c0_69 = arith.constant 0 : index
    %c0_70 = arith.constant 0 : index
    %104 = vector.load %arg4[%c0_69, %c0_70] : memref<9x256xf32, #tpu.memory_space<vmem>>, vector<1x256xf32>
    %105 = vector.broadcast %104 : vector<1x256xf32> to vector<4x256xf32>
    %106 = arith.mulf %103, %105 : vector<4x256xf32>
    %c72 = arith.constant 72 : index
    %c0_71 = arith.constant 0 : index
    %107 = vector.load %arg6[%c72, %c0_71] : memref<108x256xf32, #tpu.memory_space<vmem>>, vector<4x256xf32>
    tpu.vector_store %arg6[%c72, %c0_71], %106 {strides = array<i32>} : memref<108x256xf32, #tpu.memory_space<vmem>>, vector<4x256xf32>,
    %c16_i32_72 = arith.constant 16 : i32
    %108 = tpu.dynamic_rotate %8 by %c16_i32_72 dim 1 : vector<4x256xf32>, i32 -> vector<4x256xf32>
    %c1_73 = arith.constant 1 : index
    %c0_74 = arith.constant 0 : index
    %109 = vector.load %arg4[%c1_73, %c0_74] : memref<9x256xf32, #tpu.memory_space<vmem>>, vector<1x256xf32>
    %110 = vector.broadcast %109 : vector<1x256xf32> to vector<4x256xf32>
    %111 = arith.mulf %108, %110 : vector<4x256xf32>
    %c76 = arith.constant 76 : index
    %c0_75 = arith.constant 0 : index
    %112 = vector.load %arg6[%c76, %c0_75] : memref<108x256xf32, #tpu.memory_space<vmem>>, vector<4x256xf32>
    tpu.vector_store %arg6[%c76, %c0_75], %111 {strides = array<i32>} : memref<108x256xf32, #tpu.memory_space<vmem>>, vector<4x256xf32>,
    %c15_i32_76 = arith.constant 15 : i32
    %113 = tpu.dynamic_rotate %8 by %c15_i32_76 dim 1 : vector<4x256xf32>, i32 -> vector<4x256xf32>
    %c2_77 = arith.constant 2 : index
    %c0_78 = arith.constant 0 : index
    %114 = vector.load %arg4[%c2_77, %c0_78] : memref<9x256xf32, #tpu.memory_space<vmem>>, vector<1x256xf32>
    %115 = vector.broadcast %114 : vector<1x256xf32> to vector<4x256xf32>
    %116 = arith.mulf %113, %115 : vector<4x256xf32>
    %c80 = arith.constant 80 : index
    %c0_79 = arith.constant 0 : index
    %117 = vector.load %arg6[%c80, %c0_79] : memref<108x256xf32, #tpu.memory_space<vmem>>, vector<4x256xf32>
    tpu.vector_store %arg6[%c80, %c0_79], %116 {strides = array<i32>} : memref<108x256xf32, #tpu.memory_space<vmem>>, vector<4x256xf32>,
    %c1_i32_80 = arith.constant 1 : i32
    %118 = tpu.dynamic_rotate %8 by %c1_i32_80 dim 1 : vector<4x256xf32>, i32 -> vector<4x256xf32>
    %c3_81 = arith.constant 3 : index
    %c0_82 = arith.constant 0 : index
    %119 = vector.load %arg4[%c3_81, %c0_82] : memref<9x256xf32, #tpu.memory_space<vmem>>, vector<1x256xf32>
    %120 = vector.broadcast %119 : vector<1x256xf32> to vector<4x256xf32>
    %121 = arith.mulf %118, %120 : vector<4x256xf32>
    %c84 = arith.constant 84 : index
    %c0_83 = arith.constant 0 : index
    %122 = vector.load %arg6[%c84, %c0_83] : memref<108x256xf32, #tpu.memory_space<vmem>>, vector<4x256xf32>
    tpu.vector_store %arg6[%c84, %c0_83], %121 {strides = array<i32>} : memref<108x256xf32, #tpu.memory_space<vmem>>, vector<4x256xf32>,
    %c88 = arith.constant 88 : index
    %c0_84 = arith.constant 0 : index
    %123 = vector.load %arg6[%c88, %c0_84] : memref<108x256xf32, #tpu.memory_space<vmem>>, vector<4x256xf32>
    tpu.vector_store %arg6[%c88, %c0_84], %8 {strides = array<i32>} : memref<108x256xf32, #tpu.memory_space<vmem>>, vector<4x256xf32>,
    %c255_i32_85 = arith.constant 255 : i32
    %124 = tpu.dynamic_rotate %8 by %c255_i32_85 dim 1 : vector<4x256xf32>, i32 -> vector<4x256xf32>
    %c5_86 = arith.constant 5 : index
    %c0_87 = arith.constant 0 : index
    %125 = vector.load %arg4[%c5_86, %c0_87] : memref<9x256xf32, #tpu.memory_space<vmem>>, vector<1x256xf32>
    %126 = vector.broadcast %125 : vector<1x256xf32> to vector<4x256xf32>
    %127 = arith.mulf %124, %126 : vector<4x256xf32>
    %c92 = arith.constant 92 : index
    %c0_88 = arith.constant 0 : index
    %128 = vector.load %arg6[%c92, %c0_88] : memref<108x256xf32, #tpu.memory_space<vmem>>, vector<4x256xf32>
    tpu.vector_store %arg6[%c92, %c0_88], %127 {strides = array<i32>} : memref<108x256xf32, #tpu.memory_space<vmem>>, vector<4x256xf32>,
    %c241_i32_89 = arith.constant 241 : i32
    %129 = tpu.dynamic_rotate %8 by %c241_i32_89 dim 1 : vector<4x256xf32>, i32 -> vector<4x256xf32>
    %c6_90 = arith.constant 6 : index
    %c0_91 = arith.constant 0 : index
    %130 = vector.load %arg4[%c6_90, %c0_91] : memref<9x256xf32, #tpu.memory_space<vmem>>, vector<1x256xf32>
    %131 = vector.broadcast %130 : vector<1x256xf32> to vector<4x256xf32>
    %132 = arith.mulf %129, %131 : vector<4x256xf32>
    %c96 = arith.constant 96 : index
    %c0_92 = arith.constant 0 : index
    %133 = vector.load %arg6[%c96, %c0_92] : memref<108x256xf32, #tpu.memory_space<vmem>>, vector<4x256xf32>
    tpu.vector_store %arg6[%c96, %c0_92], %132 {strides = array<i32>} : memref<108x256xf32, #tpu.memory_space<vmem>>, vector<4x256xf32>,
    %c240_i32_93 = arith.constant 240 : i32
    %134 = tpu.dynamic_rotate %8 by %c240_i32_93 dim 1 : vector<4x256xf32>, i32 -> vector<4x256xf32>
    %c7_94 = arith.constant 7 : index
    %c0_95 = arith.constant 0 : index
    %135 = vector.load %arg4[%c7_94, %c0_95] : memref<9x256xf32, #tpu.memory_space<vmem>>, vector<1x256xf32>
    %136 = vector.broadcast %135 : vector<1x256xf32> to vector<4x256xf32>
    %137 = arith.mulf %134, %136 : vector<4x256xf32>
    %c100 = arith.constant 100 : index
    %c0_96 = arith.constant 0 : index
    %138 = vector.load %arg6[%c100, %c0_96] : memref<108x256xf32, #tpu.memory_space<vmem>>, vector<4x256xf32>
    tpu.vector_store %arg6[%c100, %c0_96], %137 {strides = array<i32>} : memref<108x256xf32, #tpu.memory_space<vmem>>, vector<4x256xf32>,
    %c239_i32_97 = arith.constant 239 : i32
    %139 = tpu.dynamic_rotate %8 by %c239_i32_97 dim 1 : vector<4x256xf32>, i32 -> vector<4x256xf32>
    %c8_98 = arith.constant 8 : index
    %c0_99 = arith.constant 0 : index
    %140 = vector.load %arg4[%c8_98, %c0_99] : memref<9x256xf32, #tpu.memory_space<vmem>>, vector<1x256xf32>
    %141 = vector.broadcast %140 : vector<1x256xf32> to vector<4x256xf32>
    %142 = arith.mulf %139, %141 : vector<4x256xf32>
    %c104 = arith.constant 104 : index
    %c0_100 = arith.constant 0 : index
    %143 = vector.load %arg6[%c104, %c0_100] : memref<108x256xf32, #tpu.memory_space<vmem>>, vector<4x256xf32>
    tpu.vector_store %arg6[%c104, %c0_100], %142 {strides = array<i32>} : memref<108x256xf32, #tpu.memory_space<vmem>>, vector<4x256xf32>,
    %c64_101 = arith.constant 64 : index
    %c0_102 = arith.constant 0 : index
    %144 = vector.load %arg2[%c64_101, %c0_102] : memref<96x108xf32, #tpu.memory_space<vmem>>, vector<12x108xf32>
    %c0_103 = arith.constant 0 : index
    %c0_104 = arith.constant 0 : index
    %145 = vector.load %arg6[%c0_103, %c0_104] : memref<108x256xf32, #tpu.memory_space<vmem>>, vector<108x256xf32>
    %cst_105 = arith.constant dense<0.000000e+00> : vector<12x256xf32>
    %146 = tpu.matmul %144, %145, %cst_105 {dimension_numbers = #tpu.dot_dimension_numbers<[1], [0], [0], [1], [0, 0, 1, 1], [], []>, precision = #tpu.contract_precision<fp32>} : vector<12x108xf32>, vector<108x256xf32>, vector<12x256xf32> -> vector<12x256xf32>
    %c72_106 = arith.constant 72 : index
    %c0_107 = arith.constant 0 : index
    %147 = vector.load %arg3[%c72_106, %c0_107] : memref<120x4xf32, #tpu.memory_space<vmem>>, vector<12x1xf32>
    %148 = vector.broadcast %147 : vector<12x1xf32> to vector<12x256xf32>
    %149 = arith.addf %146, %148 : vector<12x256xf32>
    %150 = vector.extract_strided_slice %149 {offsets = [0, 0], sizes = [8, 256], strides = [1, 1]} : vector<12x256xf32> to vector<8x256xf32>
    %151 = arith.negf %61 : vector<8x256xf32>
    %152 = math.exp %151 : vector<8x256xf32>
    %cst_108 = arith.constant 1.000000e+00 : f32
    %153 = vector.broadcast %cst_108 : f32 to vector<8x256xf32>
    %154 = arith.addf %153, %152 : vector<8x256xf32>
    %155 = arith.divf %153, %154 : vector<8x256xf32>
    %156 = arith.mulf %150, %155 : vector<8x256xf32>
    %157 = vector.extract_strided_slice %149 {offsets = [8, 0], sizes = [4, 256], strides = [1, 1]} : vector<12x256xf32> to vector<4x256xf32>
    %cst_109 = arith.constant 0.000000e+00 : f32
    %158 = vector.broadcast %cst_109 : f32 to vector<4x256xf32>
    %159 = arith.maximumf %157, %158 : vector<4x256xf32>
    %c17_i32_110 = arith.constant 17 : i32
    %160 = tpu.dynamic_rotate %156 by %c17_i32_110 dim 1 : vector<8x256xf32>, i32 -> vector<8x256xf32>
    %c0_111 = arith.constant 0 : index
    %c0_112 = arith.constant 0 : index
    %161 = vector.load %arg4[%c0_111, %c0_112] : memref<9x256xf32, #tpu.memory_space<vmem>>, vector<1x256xf32>
    %162 = vector.broadcast %161 : vector<1x256xf32> to vector<8x256xf32>
    %163 = arith.mulf %160, %162 : vector<8x256xf32>
    %c0_113 = arith.constant 0 : index
    %c0_114 = arith.constant 0 : index
    %164 = vector.load %arg6[%c0_113, %c0_114] : memref<108x256xf32, #tpu.memory_space<vmem>>, vector<8x256xf32>
    tpu.vector_store %arg6[%c0_113, %c0_114], %163 {strides = array<i32>} : memref<108x256xf32, #tpu.memory_space<vmem>>, vector<8x256xf32>,
    %c16_i32_115 = arith.constant 16 : i32
    %165 = tpu.dynamic_rotate %156 by %c16_i32_115 dim 1 : vector<8x256xf32>, i32 -> vector<8x256xf32>
    %c1_116 = arith.constant 1 : index
    %c0_117 = arith.constant 0 : index
    %166 = vector.load %arg4[%c1_116, %c0_117] : memref<9x256xf32, #tpu.memory_space<vmem>>, vector<1x256xf32>
    %167 = vector.broadcast %166 : vector<1x256xf32> to vector<8x256xf32>
    %168 = arith.mulf %165, %167 : vector<8x256xf32>
    %c8_118 = arith.constant 8 : index
    %c0_119 = arith.constant 0 : index
    %169 = vector.load %arg6[%c8_118, %c0_119] : memref<108x256xf32, #tpu.memory_space<vmem>>, vector<8x256xf32>
    tpu.vector_store %arg6[%c8_118, %c0_119], %168 {strides = array<i32>} : memref<108x256xf32, #tpu.memory_space<vmem>>, vector<8x256xf32>,
    %c15_i32_120 = arith.constant 15 : i32
    %170 = tpu.dynamic_rotate %156 by %c15_i32_120 dim 1 : vector<8x256xf32>, i32 -> vector<8x256xf32>
    %c2_121 = arith.constant 2 : index
    %c0_122 = arith.constant 0 : index
    %171 = vector.load %arg4[%c2_121, %c0_122] : memref<9x256xf32, #tpu.memory_space<vmem>>, vector<1x256xf32>
    %172 = vector.broadcast %171 : vector<1x256xf32> to vector<8x256xf32>
    %173 = arith.mulf %170, %172 : vector<8x256xf32>
    %c16_123 = arith.constant 16 : index
    %c0_124 = arith.constant 0 : index
    %174 = vector.load %arg6[%c16_123, %c0_124] : memref<108x256xf32, #tpu.memory_space<vmem>>, vector<8x256xf32>
    tpu.vector_store %arg6[%c16_123, %c0_124], %173 {strides = array<i32>} : memref<108x256xf32, #tpu.memory_space<vmem>>, vector<8x256xf32>,
    %c1_i32_125 = arith.constant 1 : i32
    %175 = tpu.dynamic_rotate %156 by %c1_i32_125 dim 1 : vector<8x256xf32>, i32 -> vector<8x256xf32>
    %c3_126 = arith.constant 3 : index
    %c0_127 = arith.constant 0 : index
    %176 = vector.load %arg4[%c3_126, %c0_127] : memref<9x256xf32, #tpu.memory_space<vmem>>, vector<1x256xf32>
    %177 = vector.broadcast %176 : vector<1x256xf32> to vector<8x256xf32>
    %178 = arith.mulf %175, %177 : vector<8x256xf32>
    %c24_128 = arith.constant 24 : index
    %c0_129 = arith.constant 0 : index
    %179 = vector.load %arg6[%c24_128, %c0_129] : memref<108x256xf32, #tpu.memory_space<vmem>>, vector<8x256xf32>
    tpu.vector_store %arg6[%c24_128, %c0_129], %178 {strides = array<i32>} : memref<108x256xf32, #tpu.memory_space<vmem>>, vector<8x256xf32>,
    %c32_130 = arith.constant 32 : index
    %c0_131 = arith.constant 0 : index
    %180 = vector.load %arg6[%c32_130, %c0_131] : memref<108x256xf32, #tpu.memory_space<vmem>>, vector<8x256xf32>
    tpu.vector_store %arg6[%c32_130, %c0_131], %156 {strides = array<i32>} : memref<108x256xf32, #tpu.memory_space<vmem>>, vector<8x256xf32>,
    %c255_i32_132 = arith.constant 255 : i32
    %181 = tpu.dynamic_rotate %156 by %c255_i32_132 dim 1 : vector<8x256xf32>, i32 -> vector<8x256xf32>
    %c5_133 = arith.constant 5 : index
    %c0_134 = arith.constant 0 : index
    %182 = vector.load %arg4[%c5_133, %c0_134] : memref<9x256xf32, #tpu.memory_space<vmem>>, vector<1x256xf32>
    %183 = vector.broadcast %182 : vector<1x256xf32> to vector<8x256xf32>
    %184 = arith.mulf %181, %183 : vector<8x256xf32>
    %c40_135 = arith.constant 40 : index
    %c0_136 = arith.constant 0 : index
    %185 = vector.load %arg6[%c40_135, %c0_136] : memref<108x256xf32, #tpu.memory_space<vmem>>, vector<8x256xf32>
    tpu.vector_store %arg6[%c40_135, %c0_136], %184 {strides = array<i32>} : memref<108x256xf32, #tpu.memory_space<vmem>>, vector<8x256xf32>,
    %c241_i32_137 = arith.constant 241 : i32
    %186 = tpu.dynamic_rotate %156 by %c241_i32_137 dim 1 : vector<8x256xf32>, i32 -> vector<8x256xf32>
    %c6_138 = arith.constant 6 : index
    %c0_139 = arith.constant 0 : index
    %187 = vector.load %arg4[%c6_138, %c0_139] : memref<9x256xf32, #tpu.memory_space<vmem>>, vector<1x256xf32>
    %188 = vector.broadcast %187 : vector<1x256xf32> to vector<8x256xf32>
    %189 = arith.mulf %186, %188 : vector<8x256xf32>
    %c48_140 = arith.constant 48 : index
    %c0_141 = arith.constant 0 : index
    %190 = vector.load %arg6[%c48_140, %c0_141] : memref<108x256xf32, #tpu.memory_space<vmem>>, vector<8x256xf32>
    tpu.vector_store %arg6[%c48_140, %c0_141], %189 {strides = array<i32>} : memref<108x256xf32, #tpu.memory_space<vmem>>, vector<8x256xf32>,
    %c240_i32_142 = arith.constant 240 : i32
    %191 = tpu.dynamic_rotate %156 by %c240_i32_142 dim 1 : vector<8x256xf32>, i32 -> vector<8x256xf32>
    %c7_143 = arith.constant 7 : index
    %c0_144 = arith.constant 0 : index
    %192 = vector.load %arg4[%c7_143, %c0_144] : memref<9x256xf32, #tpu.memory_space<vmem>>, vector<1x256xf32>
    %193 = vector.broadcast %192 : vector<1x256xf32> to vector<8x256xf32>
    %194 = arith.mulf %191, %193 : vector<8x256xf32>
    %c56_145 = arith.constant 56 : index
    %c0_146 = arith.constant 0 : index
    %195 = vector.load %arg6[%c56_145, %c0_146] : memref<108x256xf32, #tpu.memory_space<vmem>>, vector<8x256xf32>
    tpu.vector_store %arg6[%c56_145, %c0_146], %194 {strides = array<i32>} : memref<108x256xf32, #tpu.memory_space<vmem>>, vector<8x256xf32>,
    %c239_i32_147 = arith.constant 239 : i32
    %196 = tpu.dynamic_rotate %156 by %c239_i32_147 dim 1 : vector<8x256xf32>, i32 -> vector<8x256xf32>
    %c8_148 = arith.constant 8 : index
    %c0_149 = arith.constant 0 : index
    %197 = vector.load %arg4[%c8_148, %c0_149] : memref<9x256xf32, #tpu.memory_space<vmem>>, vector<1x256xf32>
    %198 = vector.broadcast %197 : vector<1x256xf32> to vector<8x256xf32>
    %199 = arith.mulf %196, %198 : vector<8x256xf32>
    %c64_150 = arith.constant 64 : index
    %c0_151 = arith.constant 0 : index
    %200 = vector.load %arg6[%c64_150, %c0_151] : memref<108x256xf32, #tpu.memory_space<vmem>>, vector<8x256xf32>
    tpu.vector_store %arg6[%c64_150, %c0_151], %199 {strides = array<i32>} : memref<108x256xf32, #tpu.memory_space<vmem>>, vector<8x256xf32>,
    %c17_i32_152 = arith.constant 17 : i32
    %201 = tpu.dynamic_rotate %159 by %c17_i32_152 dim 1 : vector<4x256xf32>, i32 -> vector<4x256xf32>
    %c0_153 = arith.constant 0 : index
    %c0_154 = arith.constant 0 : index
    %202 = vector.load %arg4[%c0_153, %c0_154] : memref<9x256xf32, #tpu.memory_space<vmem>>, vector<1x256xf32>
    %203 = vector.broadcast %202 : vector<1x256xf32> to vector<4x256xf32>
    %204 = arith.mulf %201, %203 : vector<4x256xf32>
    %c72_155 = arith.constant 72 : index
    %c0_156 = arith.constant 0 : index
    %205 = vector.load %arg6[%c72_155, %c0_156] : memref<108x256xf32, #tpu.memory_space<vmem>>, vector<4x256xf32>
    tpu.vector_store %arg6[%c72_155, %c0_156], %204 {strides = array<i32>} : memref<108x256xf32, #tpu.memory_space<vmem>>, vector<4x256xf32>,
    %c16_i32_157 = arith.constant 16 : i32
    %206 = tpu.dynamic_rotate %159 by %c16_i32_157 dim 1 : vector<4x256xf32>, i32 -> vector<4x256xf32>
    %c1_158 = arith.constant 1 : index
    %c0_159 = arith.constant 0 : index
    %207 = vector.load %arg4[%c1_158, %c0_159] : memref<9x256xf32, #tpu.memory_space<vmem>>, vector<1x256xf32>
    %208 = vector.broadcast %207 : vector<1x256xf32> to vector<4x256xf32>
    %209 = arith.mulf %206, %208 : vector<4x256xf32>
    %c76_160 = arith.constant 76 : index
    %c0_161 = arith.constant 0 : index
    %210 = vector.load %arg6[%c76_160, %c0_161] : memref<108x256xf32, #tpu.memory_space<vmem>>, vector<4x256xf32>
    tpu.vector_store %arg6[%c76_160, %c0_161], %209 {strides = array<i32>} : memref<108x256xf32, #tpu.memory_space<vmem>>, vector<4x256xf32>,
    %c15_i32_162 = arith.constant 15 : i32
    %211 = tpu.dynamic_rotate %159 by %c15_i32_162 dim 1 : vector<4x256xf32>, i32 -> vector<4x256xf32>
    %c2_163 = arith.constant 2 : index
    %c0_164 = arith.constant 0 : index
    %212 = vector.load %arg4[%c2_163, %c0_164] : memref<9x256xf32, #tpu.memory_space<vmem>>, vector<1x256xf32>
    %213 = vector.broadcast %212 : vector<1x256xf32> to vector<4x256xf32>
    %214 = arith.mulf %211, %213 : vector<4x256xf32>
    %c80_165 = arith.constant 80 : index
    %c0_166 = arith.constant 0 : index
    %215 = vector.load %arg6[%c80_165, %c0_166] : memref<108x256xf32, #tpu.memory_space<vmem>>, vector<4x256xf32>
    tpu.vector_store %arg6[%c80_165, %c0_166], %214 {strides = array<i32>} : memref<108x256xf32, #tpu.memory_space<vmem>>, vector<4x256xf32>,
    %c1_i32_167 = arith.constant 1 : i32
    %216 = tpu.dynamic_rotate %159 by %c1_i32_167 dim 1 : vector<4x256xf32>, i32 -> vector<4x256xf32>
    %c3_168 = arith.constant 3 : index
    %c0_169 = arith.constant 0 : index
    %217 = vector.load %arg4[%c3_168, %c0_169] : memref<9x256xf32, #tpu.memory_space<vmem>>, vector<1x256xf32>
    %218 = vector.broadcast %217 : vector<1x256xf32> to vector<4x256xf32>
    %219 = arith.mulf %216, %218 : vector<4x256xf32>
    %c84_170 = arith.constant 84 : index
    %c0_171 = arith.constant 0 : index
    %220 = vector.load %arg6[%c84_170, %c0_171] : memref<108x256xf32, #tpu.memory_space<vmem>>, vector<4x256xf32>
    tpu.vector_store %arg6[%c84_170, %c0_171], %219 {strides = array<i32>} : memref<108x256xf32, #tpu.memory_space<vmem>>, vector<4x256xf32>,
    %c88_172 = arith.constant 88 : index
    %c0_173 = arith.constant 0 : index
    %221 = vector.load %arg6[%c88_172, %c0_173] : memref<108x256xf32, #tpu.memory_space<vmem>>, vector<4x256xf32>
    tpu.vector_store %arg6[%c88_172, %c0_173], %159 {strides = array<i32>} : memref<108x256xf32, #tpu.memory_space<vmem>>, vector<4x256xf32>,
    %c255_i32_174 = arith.constant 255 : i32
    %222 = tpu.dynamic_rotate %159 by %c255_i32_174 dim 1 : vector<4x256xf32>, i32 -> vector<4x256xf32>
    %c5_175 = arith.constant 5 : index
    %c0_176 = arith.constant 0 : index
    %223 = vector.load %arg4[%c5_175, %c0_176] : memref<9x256xf32, #tpu.memory_space<vmem>>, vector<1x256xf32>
    %224 = vector.broadcast %223 : vector<1x256xf32> to vector<4x256xf32>
    %225 = arith.mulf %222, %224 : vector<4x256xf32>
    %c92_177 = arith.constant 92 : index
    %c0_178 = arith.constant 0 : index
    %226 = vector.load %arg6[%c92_177, %c0_178] : memref<108x256xf32, #tpu.memory_space<vmem>>, vector<4x256xf32>
    tpu.vector_store %arg6[%c92_177, %c0_178], %225 {strides = array<i32>} : memref<108x256xf32, #tpu.memory_space<vmem>>, vector<4x256xf32>,
    %c241_i32_179 = arith.constant 241 : i32
    %227 = tpu.dynamic_rotate %159 by %c241_i32_179 dim 1 : vector<4x256xf32>, i32 -> vector<4x256xf32>
    %c6_180 = arith.constant 6 : index
    %c0_181 = arith.constant 0 : index
    %228 = vector.load %arg4[%c6_180, %c0_181] : memref<9x256xf32, #tpu.memory_space<vmem>>, vector<1x256xf32>
    %229 = vector.broadcast %228 : vector<1x256xf32> to vector<4x256xf32>
    %230 = arith.mulf %227, %229 : vector<4x256xf32>
    %c96_182 = arith.constant 96 : index
    %c0_183 = arith.constant 0 : index
    %231 = vector.load %arg6[%c96_182, %c0_183] : memref<108x256xf32, #tpu.memory_space<vmem>>, vector<4x256xf32>
    tpu.vector_store %arg6[%c96_182, %c0_183], %230 {strides = array<i32>} : memref<108x256xf32, #tpu.memory_space<vmem>>, vector<4x256xf32>,
    %c240_i32_184 = arith.constant 240 : i32
    %232 = tpu.dynamic_rotate %159 by %c240_i32_184 dim 1 : vector<4x256xf32>, i32 -> vector<4x256xf32>
    %c7_185 = arith.constant 7 : index
    %c0_186 = arith.constant 0 : index
    %233 = vector.load %arg4[%c7_185, %c0_186] : memref<9x256xf32, #tpu.memory_space<vmem>>, vector<1x256xf32>
    %234 = vector.broadcast %233 : vector<1x256xf32> to vector<4x256xf32>
    %235 = arith.mulf %232, %234 : vector<4x256xf32>
    %c100_187 = arith.constant 100 : index
    %c0_188 = arith.constant 0 : index
    %236 = vector.load %arg6[%c100_187, %c0_188] : memref<108x256xf32, #tpu.memory_space<vmem>>, vector<4x256xf32>
    tpu.vector_store %arg6[%c100_187, %c0_188], %235 {strides = array<i32>} : memref<108x256xf32, #tpu.memory_space<vmem>>, vector<4x256xf32>,
    %c239_i32_189 = arith.constant 239 : i32
    %237 = tpu.dynamic_rotate %159 by %c239_i32_189 dim 1 : vector<4x256xf32>, i32 -> vector<4x256xf32>
    %c8_190 = arith.constant 8 : index
    %c0_191 = arith.constant 0 : index
    %238 = vector.load %arg4[%c8_190, %c0_191] : memref<9x256xf32, #tpu.memory_space<vmem>>, vector<1x256xf32>
    %239 = vector.broadcast %238 : vector<1x256xf32> to vector<4x256xf32>
    %240 = arith.mulf %237, %239 : vector<4x256xf32>
    %c104_192 = arith.constant 104 : index
    %c0_193 = arith.constant 0 : index
    %241 = vector.load %arg6[%c104_192, %c0_193] : memref<108x256xf32, #tpu.memory_space<vmem>>, vector<4x256xf32>
    tpu.vector_store %arg6[%c104_192, %c0_193], %240 {strides = array<i32>} : memref<108x256xf32, #tpu.memory_space<vmem>>, vector<4x256xf32>,
    %c80_194 = arith.constant 80 : index
    %c0_195 = arith.constant 0 : index
    %242 = vector.load %arg2[%c80_194, %c0_195] : memref<96x108xf32, #tpu.memory_space<vmem>>, vector<12x108xf32>
    %c0_196 = arith.constant 0 : index
    %c0_197 = arith.constant 0 : index
    %243 = vector.load %arg6[%c0_196, %c0_197] : memref<108x256xf32, #tpu.memory_space<vmem>>, vector<108x256xf32>
    %cst_198 = arith.constant dense<0.000000e+00> : vector<12x256xf32>
    %244 = tpu.matmul %242, %243, %cst_198 {dimension_numbers = #tpu.dot_dimension_numbers<[1], [0], [0], [1], [0, 0, 1, 1], [], []>, precision = #tpu.contract_precision<fp32>} : vector<12x108xf32>, vector<108x256xf32>, vector<12x256xf32> -> vector<12x256xf32>
    %c88_199 = arith.constant 88 : index
    %c0_200 = arith.constant 0 : index
    %245 = vector.load %arg3[%c88_199, %c0_200] : memref<120x4xf32, #tpu.memory_space<vmem>>, vector<12x1xf32>
    %246 = vector.broadcast %245 : vector<12x1xf32> to vector<12x256xf32>
    %247 = arith.addf %244, %246 : vector<12x256xf32>
    %248 = vector.extract_strided_slice %247 {offsets = [0, 0], sizes = [8, 256], strides = [1, 1]} : vector<12x256xf32> to vector<8x256xf32>
    %249 = vector.extract_strided_slice %247 {offsets = [8, 0], sizes = [4, 256], strides = [1, 1]} : vector<12x256xf32> to vector<4x256xf32>
    %cst_201 = arith.constant dense<0.000000e+00> : vector<4xf32>
    %250 = vector.multi_reduction <add>, %249, %cst_201 [1] : vector<4x256xf32> to vector<4xf32>
    %251 = vector.shape_cast %250 : vector<4xf32> to vector<4x1xf32>
    %cst_202 = arith.constant 3.906250e-03 : f32
    %252 = vector.broadcast %cst_202 : f32 to vector<4x1xf32>
    %253 = arith.mulf %251, %252 : vector<4x1xf32>
    %c104_203 = arith.constant 104 : index
    %c0_204 = arith.constant 0 : index
    %254 = vector.load %arg3[%c104_203, %c0_204] : memref<120x4xf32, #tpu.memory_space<vmem>>, vector<1x4xf32>
    %cst_205 = arith.constant dense<0.000000e+00> : vector<1x1xf32>
    %255 = tpu.matmul %254, %253, %cst_205 {dimension_numbers = #tpu.dot_dimension_numbers<[1], [0], [0], [1], [0, 0, 1, 1], [], []>, precision = #tpu.contract_precision<fp32>} : vector<1x4xf32>, vector<4x1xf32>, vector<1x1xf32> -> vector<1x1xf32>
    %c56_206 = arith.constant 56 : index
    %c0_207 = arith.constant 0 : index
    %256 = vector.load %arg3[%c56_206, %c0_207] : memref<120x4xf32, #tpu.memory_space<vmem>>, vector<1x1xf32>
    %257 = arith.addf %255, %256 : vector<1x1xf32>
    %cst_208 = arith.constant 0.000000e+00 : f32
    %258 = vector.broadcast %cst_208 : f32 to vector<1x1xf32>
    %259 = arith.maximumf %257, %258 : vector<1x1xf32>
    %c112 = arith.constant 112 : index
    %c0_209 = arith.constant 0 : index
    %260 = vector.load %arg3[%c112, %c0_209] : memref<120x4xf32, #tpu.memory_space<vmem>>, vector<4x1xf32>
    %cst_210 = arith.constant dense<0.000000e+00> : vector<4x1xf32>
    %261 = tpu.matmul %260, %259, %cst_210 {dimension_numbers = #tpu.dot_dimension_numbers<[1], [0], [0], [1], [0, 0, 1, 1], [], []>, precision = #tpu.contract_precision<fp32>} : vector<4x1xf32>, vector<1x1xf32>, vector<4x1xf32> -> vector<4x1xf32>
    %c64_211 = arith.constant 64 : index
    %c0_212 = arith.constant 0 : index
    %262 = vector.load %arg3[%c64_211, %c0_212] : memref<120x4xf32, #tpu.memory_space<vmem>>, vector<4x1xf32>
    %263 = arith.addf %261, %262 : vector<4x1xf32>
    %264 = arith.negf %263 : vector<4x1xf32>
    %265 = math.exp %264 : vector<4x1xf32>
    %cst_213 = arith.constant 1.000000e+00 : f32
    %266 = vector.broadcast %cst_213 : f32 to vector<4x1xf32>
    %267 = arith.addf %266, %265 : vector<4x1xf32>
    %268 = arith.divf %266, %267 : vector<4x1xf32>
    %269 = vector.broadcast %268 : vector<4x1xf32> to vector<4x256xf32>
    %270 = arith.mulf %249, %269 : vector<4x256xf32>
    %c0_214 = arith.constant 0 : index
    %c0_215 = arith.constant 0 : index
    %271 = vector.load %arg6[%c0_214, %c0_215] : memref<108x256xf32, #tpu.memory_space<vmem>>, vector<8x256xf32>
    tpu.vector_store %arg6[%c0_214, %c0_215], %248 {strides = array<i32>} : memref<108x256xf32, #tpu.memory_space<vmem>>, vector<8x256xf32>,
    %c8_216 = arith.constant 8 : index
    %c0_217 = arith.constant 0 : index
    %272 = vector.load %arg6[%c8_216, %c0_217] : memref<108x256xf32, #tpu.memory_space<vmem>>, vector<4x256xf32>
    tpu.vector_store %arg6[%c8_216, %c0_217], %270 {strides = array<i32>} : memref<108x256xf32, #tpu.memory_space<vmem>>, vector<4x256xf32>,
    %c12_218 = arith.constant 12 : index
    %c0_219 = arith.constant 0 : index
    %273 = vector.load %arg6[%c12_218, %c0_219] : memref<108x256xf32, #tpu.memory_space<vmem>>, vector<4x256xf32>
    tpu.vector_store %arg6[%c12_218, %c0_219], %9 {strides = array<i32>} : memref<108x256xf32, #tpu.memory_space<vmem>>, vector<4x256xf32>,
    %c0_220 = arith.constant 0 : index
    %c0_221 = arith.constant 0 : index
    %c0_222 = arith.constant 0 : index
    %274 = vector.load %arg1[%c0_220, %c0_221, %c0_222] : memref<1x16x256xf32, #tpu.memory_space<vmem>>, vector<1x16x256xf32>
    %275 = vector.shape_cast %274 : vector<1x16x256xf32> to vector<16x256xf32>
    %c16_223 = arith.constant 16 : index
    %c0_224 = arith.constant 0 : index
    %276 = vector.load %arg2[%c16_223, %c0_224] : memref<96x108xf32, #tpu.memory_space<vmem>>, vector<16x16xf32>
    %c0_225 = arith.constant 0 : index
    %c0_226 = arith.constant 0 : index
    %277 = vector.load %arg6[%c0_225, %c0_226] : memref<108x256xf32, #tpu.memory_space<vmem>>, vector<16x256xf32>
    %cst_227 = arith.constant dense<0.000000e+00> : vector<16x256xf32>
    %278 = tpu.matmul %276, %277, %cst_227 {dimension_numbers = #tpu.dot_dimension_numbers<[1], [0], [0], [1], [0, 0, 1, 1], [], []>, precision = #tpu.contract_precision<fp32>} : vector<16x16xf32>, vector<16x256xf32>, vector<16x256xf32> -> vector<16x256xf32>
    %279 = arith.addf %275, %278 : vector<16x256xf32>
    %c16_228 = arith.constant 16 : index
    %c0_229 = arith.constant 0 : index
    %280 = vector.load %arg3[%c16_228, %c0_229] : memref<120x4xf32, #tpu.memory_space<vmem>>, vector<16x1xf32>
    %281 = vector.broadcast %280 : vector<16x1xf32> to vector<16x256xf32>
    %282 = arith.addf %279, %281 : vector<16x256xf32>
    %c0_230 = arith.constant 0 : index
    %c0_231 = arith.constant 0 : index
    %c0_232 = arith.constant 0 : index
    %283 = vector.load %arg5[%c0_230, %c0_231, %c0_232] : memref<1x16x256xf32, #tpu.memory_space<vmem>>, vector<1x16x256xf32>
    %284 = vector.shape_cast %283 : vector<1x16x256xf32> to vector<16x256xf32>
    %285 = vector.shape_cast %282 : vector<16x256xf32> to vector<1x16x256xf32>
    tpu.vector_store %arg5[%c0_230, %c0_231, %c0_232], %285 {strides = array<i32>} : memref<1x16x256xf32, #tpu.memory_space<vmem>>, vector<1x16x256xf32>,
    return
  }
  func.func @transform_0(%arg0: i32) -> (i32, i32, i32) {
    %c0_i32 = arith.constant 0 : i32
    %c0_i32_0 = arith.constant 0 : i32
    %c0_i32_1 = arith.constant 0 : i32
    return %arg0, %c0_i32, %c0_i32_0 : i32, i32, i32
  }
  func.func @transform_1(%arg0: i32) -> (i32, i32) {
    %c0_i32 = arith.constant 0 : i32
    %c0_i32_0 = arith.constant 0 : i32
    %c0_i32_1 = arith.constant 0 : i32
    return %c0_i32, %c0_i32_0 : i32, i32
  }
  func.func @transform_2(%arg0: i32) -> (i32, i32) {
    %c0_i32 = arith.constant 0 : i32
    %c0_i32_0 = arith.constant 0 : i32
    %c0_i32_1 = arith.constant 0 : i32
    return %c0_i32, %c0_i32_0 : i32, i32
  }
  func.func @transform_3(%arg0: i32) -> (i32, i32) {
    %c0_i32 = arith.constant 0 : i32
    %c0_i32_0 = arith.constant 0 : i32
    %c0_i32_1 = arith.constant 0 : i32
    return %c0_i32, %c0_i32_0 : i32, i32
  }
  func.func @transform_4(%arg0: i32) -> (i32, i32, i32) {
    %c0_i32 = arith.constant 0 : i32
    %c0_i32_0 = arith.constant 0 : i32
    %c0_i32_1 = arith.constant 0 : i32
    return %arg0, %c0_i32, %c0_i32_0 : i32, i32, i32
  }
}

</mosaic_0001>

<llo_original>
// kernel: tpu_custom_call.1
$region0: #{tpu_custom_call.1}
  #allocation0 [shape = 'u32[]', space=smem, size = 0x4, offset = 0x4, fixed_abs, tag = 'smem constant byte address 0x4 - core index']
  #allocation1 [shape = 'u32[144,128]{1,0:T(1,128)}', space=vmem, size = 0x12000, scoped, tag = 'internal scratch']
  #allocation2 [shape = 'f32[108,256]{1,0:T(8,128)}', space=vmem, size = 0x1c000, scoped, tag = 'scratch operand']
  %s0 = inlined_call_operand.hbm [shape: f32[2,16,256], index: 0, kind: input, shape index: {}]
  %s1 = inlined_call_operand.vmem [shape: f32[96,108], index: 1, kind: input, shape index: {}]
  %s2 = inlined_call_operand.vmem [shape: f32[120,4], index: 2, kind: input, shape index: {}]
  %s3 = inlined_call_operand.vmem [shape: f32[9,256], index: 3, kind: input, shape index: {}]
  %s4 = inlined_call_operand.hbm [shape: f32[2,16,256], index: 4, kind: output, shape index: {}]
  %s5 = sld [smem:[#allocation0]]
  $region53: #{tpu_custom_call.1} parent=0
    _
  %s7 = ssub.s32 1, %s5
  %s8 = scalar_select 0, %s7, %s5
  $region1: #{tpu_custom_call.1} parent=0
    #allocation3 [shape = 'u8[32768]{0}', space=vmem, size = 0x8000, scoped, tag = 'input window, operand 0']
    #allocation4 [shape = 's32[2]{0}', space=sflag, size = 0x8, scoped, tag = 'scoped memory for tpu_custom_call.1']
    #allocation5 [shape = 's32[2]{0}', space=sflag, size = 0x8, scoped, tag = 'scoped memory for tpu_custom_call.1']
    #allocation6 [shape = 'u8[32768]{0}', space=vmem, size = 0x8000, scoped, tag = 'output window, operand 0']
    %9 = vsyncpa [#allocation4], 0
    %s10 = scalar_lea.sflag [#allocation4], 1
    %11 = vsyncpa %s10, 0
    %12 = vsyncpa [#allocation5], 0
    %s13 = scalar_lea.sflag [#allocation5], 1
    %14 = vsyncpa %s13, 0
    loop: start=0, step=1, limit=4
    $region2: #{tpu_custom_call.1} parent=1 // loop_pre_header
      _
    $region3: #{tpu_custom_call.1} parent=1 // loop_header
      %s16 = sphi 0, %s20
      %p17 = scmp.ge.s32.totalorder %s16, 4
      %s26 = sphi 0, %s28
      %s29 = sphi 0, %s26
      %s30 = sphi 0, %s29
      %s46 = sphi 0, %s30
      %s50 = sphi 0, %s50
      %s52 = sphi 0, %s50
      %s53 = sphi 0, %s52
      %s67 = sphi 0, %s53
      %s71 = sphi 0, %s71
      %s73 = sphi 0, %s71
      %s74 = sphi 0, %s73
      %s88 = sphi 0, %s74
      %s92 = sphi 0, %s92
      %s94 = sphi 0, %s92
      %s95 = sphi 0, %s94
      %s109 = sphi 0, %s95
      %s115 = sphi 0, %s117
      %s118 = sphi 0, %s115
      %s119 = sphi 0, %s118
      %s135 = sphi 0, %s119
    $region4: #{tpu_custom_call.1} parent=1 // loop_header_branch
      %19 = sbr.rel (%p17) target = $region8
    $region5: #{tpu_custom_call.1} parent=1 // loop_body
      %s21 = ssub.s32 %s16, 1
      %s22 = ssub.s32 %s16, 2
      %s23 = sadd.s32 %s16, 1
      %s24 = ssub.s32 %s16, %s23
      %p25 = scmp.eq.s32.totalorder %s24, 0
      %s27 = sadd.s32 %s26, 1
      %s28 = scalar_select %p25, %s26, %s27
      %p31 = pneg %p25
      %p32 = scmp.eq.s32.totalorder %s16, 1
      %p33 = por %p31, %p32
      %p34 = scmp.ne.s32.totalorder %s26, %s29
      %p35 = scmp.eq.s32.totalorder %s16, 0
      %p36 = por %p34, %p35
      %p37 = scmp.ne.s32.totalorder %s26, %s29
      %p38 = scmp.eq.s32.totalorder %s21, 1
      %p39 = por %p37, %p38
      %p40 = scmp.ne.s32.totalorder %s29, %s30
      %p41 = scmp.eq.s32.totalorder %s21, 0
      %p42 = por %p40, %p41
      %p43 = scmp.ne.s32.totalorder %s29, %s30
      %p44 = scmp.eq.s32.totalorder %s22, 1
      %p45 = por %p43, %p44
      %p47 = scmp.ne.s32.totalorder %s30, %s46
      %p48 = scmp.eq.s32.totalorder %s22, 0
      %p49 = por %p47, %p48
      %s51 = sadd.s32 %s50, 1
      %p54 = scmp.eq.s32.totalorder %s16, 1
      %p55 = scmp.ne.s32.totalorder %s50, %s52
      %p56 = scmp.eq.s32.totalorder %s16, 0
      %p57 = por %p55, %p56
      %p58 = scmp.ne.s32.totalorder %s50, %s52
      %p59 = scmp.eq.s32.totalorder %s21, 1
      %p60 = por %p58, %p59
      %p61 = scmp.ne.s32.totalorder %s52, %s53
      %p62 = scmp.eq.s32.totalorder %s21, 0
      %p63 = por %p61, %p62
      %p64 = scmp.ne.s32.totalorder %s52, %s53
      %p65 = scmp.eq.s32.totalorder %s22, 1
      %p66 = por %p64, %p65
      %p68 = scmp.ne.s32.totalorder %s53, %s67
      %p69 = scmp.eq.s32.totalorder %s22, 0
      %p70 = por %p68, %p69
      %s72 = sadd.s32 %s71, 1
      %p75 = scmp.eq.s32.totalorder %s16, 1
      %p76 = scmp.ne.s32.totalorder %s71, %s73
      %p77 = scmp.eq.s32.totalorder %s16, 0
      %p78 = por %p76, %p77
      %p79 = scmp.ne.s32.totalorder %s71, %s73
      %p80 = scmp.eq.s32.totalorder %s21, 1
      %p81 = por %p79, %p80
      %p82 = scmp.ne.s32.totalorder %s73, %s74
      %p83 = scmp.eq.s32.totalorder %s21, 0
      %p84 = por %p82, %p83
      %p85 = scmp.ne.s32.totalorder %s73, %s74
      %p86 = scmp.eq.s32.totalorder %s22, 1
      %p87 = por %p85, %p86
      %p89 = scmp.ne.s32.totalorder %s74, %s88
      %p90 = scmp.eq.s32.totalorder %s22, 0
      %p91 = por %p89, %p90
      %s93 = sadd.s32 %s92, 1
      %p96 = scmp.eq.s32.totalorder %s16, 1
      %p97 = scmp.ne.s32.totalorder %s92, %s94
      %p98 = scmp.eq.s32.totalorder %s16, 0
      %p99 = por %p97, %p98
      %p100 = scmp.ne.s32.totalorder %s92, %s94
      %p101 = scmp.eq.s32.totalorder %s21, 1
      %p102 = por %p100, %p101
      %p103 = scmp.ne.s32.totalorder %s94, %s95
      %p104 = scmp.eq.s32.totalorder %s21, 0
      %p105 = por %p103, %p104
      %p106 = scmp.ne.s32.totalorder %s94, %s95
      %p107 = scmp.eq.s32.totalorder %s22, 1
      %p108 = por %p106, %p107
      %p110 = scmp.ne.s32.totalorder %s95, %s109
      %p111 = scmp.eq.s32.totalorder %s22, 0
      %p112 = por %p110, %p111
      %s113 = ssub.s32 %s16, %s23
      %p114 = scmp.eq.s32.totalorder %s113, 0
      %s116 = sadd.s32 %s115, 1
      %s117 = scalar_select %p114, %s115, %s116
      %p120 = pneg %p114
      %p121 = scmp.eq.s32.totalorder %s16, 1
      %p122 = por %p120, %p121
      %p123 = scmp.ne.s32.totalorder %s115, %s118
      %p124 = scmp.eq.s32.totalorder %s16, 0
      %p125 = por %p123, %p124
      %p126 = scmp.ne.s32.totalorder %s115, %s118
      %p127 = scmp.eq.s32.totalorder %s21, 1
      %p128 = por %p126, %p127
      %p129 = scmp.ne.s32.totalorder %s118, %s119
      %p130 = scmp.eq.s32.totalorder %s21, 0
      %p131 = por %p129, %p130
      %p132 = scmp.ne.s32.totalorder %s118, %s119
      %p133 = scmp.eq.s32.totalorder %s22, 1
      %p134 = por %p132, %p133
      %p136 = scmp.ne.s32.totalorder %s119, %s135
      %p137 = scmp.eq.s32.totalorder %s22, 0
      %p138 = por %p136, %p137
      %p139 = scmp.le.s32.totalorder 1, %s16
      %p140 = scmp.lt.s32.totalorder %s16, 3
      %p141 = pnand %p139, %p140
      %p142 = pneg %p141
      // Predicated region
      $region9: #{tpu_custom_call.1} parent=5 // pred_check
        _
      $region10: #{tpu_custom_call.1} parent=5 // pred_check_branch
        %144 = sbr.rel (%p141) target = $region12
      $region11: #{tpu_custom_call.1} parent=5 // pred_region
        %s145 = ssub.s32 %s16, 1
        // Predicated region
        $region13: #{tpu_custom_call.1} parent=11 // pred_check
          %p146 = pneg %p63
        $region14: #{tpu_custom_call.1} parent=11 // pred_check_branch
          %148 = sbr.rel (%p146) target = $region16
        $region15: #{tpu_custom_call.1} parent=11 // pred_region
          _
        $region16: #{tpu_custom_call.1} parent=11 // pred_fallthru
          _
        // Predicated region
        $region17: #{tpu_custom_call.1} parent=11 // pred_check
          %p149 = pneg %p84
        $region18: #{tpu_custom_call.1} parent=11 // pred_check_branch
          %151 = sbr.rel (%p149) target = $region20
        $region19: #{tpu_custom_call.1} parent=11 // pred_region
          _
        $region20: #{tpu_custom_call.1} parent=11 // pred_fallthru
          _
        // Predicated region
        $region21: #{tpu_custom_call.1} parent=11 // pred_check
          %p152 = pneg %p105
        $region22: #{tpu_custom_call.1} parent=11 // pred_check_branch
          %154 = sbr.rel (%p152) target = $region24
        $region23: #{tpu_custom_call.1} parent=11 // pred_region
          _
        $region24: #{tpu_custom_call.1} parent=11 // pred_fallthru
          _
      $region12: #{tpu_custom_call.1} parent=5 // pred_fallthru
        _
      %p155 = scmp.lt.s32.totalorder %s16, 2
      // Predicated region
      $region25: #{tpu_custom_call.1} parent=5 // pred_check
        %p156 = pneg %p155
      $region26: #{tpu_custom_call.1} parent=5 // pred_check_branch
        %158 = sbr.rel (%p156) target = $region28
      $region27: #{tpu_custom_call.1} parent=5 // pred_region
        // Predicated region
        $region29: #{tpu_custom_call.1} parent=27 // pred_check
          %p159 = pneg %p36
        $region30: #{tpu_custom_call.1} parent=27 // pred_check_branch
          %161 = sbr.rel (%p159) target = $region32
        $region31: #{tpu_custom_call.1} parent=27 // pred_region
          %s162 = sand.u32 %s26, 1
          %s163 = scalar_lea.sflag [#allocation4], %s162
          %s164 = sand.u32 %s26, 1
          %s165 = smul.addr %s164, 32
          %s166 = scalar_lea.vmem [#allocation3], %s165
          %s168 = ssub.s32 512, 512
          %169 = vsyncadd %s163, %s168
          %s170 = smul.addr %s16, 4
          %s171 = smul.addr %s170, 128
          %s172 = scalar_lea.hbm %s0, %s171
          %s173 = sshll.u32 %s166, 4
          %s174 = int_to_ptr.vmem [resolvable:$true] %s173
          %179 = dma.hbm_to_vmem [thread:$0]  %s172, 512, %s174, %s163, 256, 256, 16
        $region32: #{tpu_custom_call.1} parent=27 // pred_fallthru
          _
      $region28: #{tpu_custom_call.1} parent=5 // pred_fallthru
        _
      %p180 = scmp.le.s32.totalorder 1, %s16
      %p181 = scmp.lt.s32.totalorder %s16, 3
      %p182 = pnand %p180, %p181
      %p183 = pneg %p182
      // Predicated region
      $region33: #{tpu_custom_call.1} parent=5 // pred_check
        _
      $region34: #{tpu_custom_call.1} parent=5 // pred_check_branch
        %185 = sbr.rel (%p182) target = $region36
      $region35: #{tpu_custom_call.1} parent=5 // pred_region
        %s186 = ssub.s32 %s16, 1
        %s187 = sand.u32 %s29, 1
        %s188 = scalar_lea.sflag [#allocation4], %s187
        %s189 = sand.u32 %s29, 1
        %s190 = smul.addr %s189, 32
        %s191 = scalar_lea.vmem [#allocation3], %s190
        // Predicated region
        $region37: #{tpu_custom_call.1} parent=35 // pred_check
          %p192 = pneg %p42
        $region38: #{tpu_custom_call.1} parent=35 // pred_check_branch
          %194 = sbr.rel (%p192) target = $region40
        $region39: #{tpu_custom_call.1} parent=35 // pred_region
          %195 = dma.done %s188, 512
        $region40: #{tpu_custom_call.1} parent=35 // pred_fallthru
          _
        %s196 = sand.u32 %s29, 1
        %s197 = scalar_lea.sflag [#allocation4], %s196
        %s198 = sand.u32 %s29, 1
        %s199 = smul.addr %s198, 32
        %s200 = scalar_lea.vmem [#allocation3], %s199
        %p201 = pneg %p42
        %p202 = pneg %p39
        %p203 = pneg %p63
        %p204 = pneg %p60
        %p205 = pneg %p84
        %p206 = pneg %p81
        %p207 = pneg %p105
        %p208 = pneg %p102
        %p209 = pneg %p131
        %p210 = pneg %p128
        %s211 = sand.u32 %s118, 1
        %s212 = scalar_lea.sflag [#allocation5], %s211
        %s213 = sand.u32 %s118, 1
        %s214 = smul.addr %s213, 32
        %s215 = scalar_lea.vmem [#allocation6], %s214
        %v216 = vld [vmem:[%s191] sm:$0xff]
        %v217 = vld [vmem:[%s191 + $0x8] sm:$0xff]
        %v218 = vld [vmem:[%s191 + $0x10] sm:$0xff]
        %v219 = vld [vmem:[%s191 + $0x18] sm:$0xff]
        %v220 = vld [vmem:[%s1] sm:$0xff]
        %v221 = vld [vmem:[%s1 + $0x8] sm:$0xff]
        %v222 = vld [vmem:[%s2] sm:$0xff]
        %v223 = vld [vmem:[%s2 + $0x8] sm:$0xff]
        %225 = vset.pattern.permute.xlu0 0
        %226 = vperm.xlu0 %225, %v222
        %v227 = vpop.permute.xlu0 %226
        %230 = vset.pattern.permute.xlu0 0
        %231 = vperm.xlu0 %230, %v223
        %v232 = vpop.permute.xlu0 %231
        %vm234 = vcmask 130048
        %v236 = vsel %vm234, %v220, 0
        %v239 = vsel %vm234, %v221, 0
        %241 = vmatprep.subr.mxu0 0.0
        %242 = vmatpush1.msra.mxu0 0.0
        %243 = vmatprep.subr.mxu0 0.0
        %244 = vmatpush1.msra.mxu0 0.0
        %245 = vmatprep.subr.mxu0 0.0
        %246 = vmatpush1.msra.mxu0 0.0
        %247 = vmatprep.subr.mxu0 0.0
        %248 = vmatpush1.msra.mxu0 0.0
        %249 = vmatprep.subr.mxu0 0.0
        %250 = vmatpush1.msra.mxu0 0.0
        %251 = vmatprep.subr.mxu0 0.0
        %252 = vmatpush1.msra.mxu0 0.0
        %253 = vmatprep.subr.mxu0 0.0
        %254 = vmatpush1.msra.mxu0 0.0
        %255 = vmatprep.subr.mxu0 0.0
        %256 = vmatpush1.msra.mxu0 0.0
        %257 = vmatprep.subr.mxu0 0.0
        %258 = vmatpush1.msra.mxu0 0.0
        %259 = vmatprep.subr.mxu0 0.0
        %260 = vmatpush1.msra.mxu0 0.0
        %261 = vmatprep.subr.mxu0 0.0
        %262 = vmatpush1.msra.mxu0 0.0
        %263 = vmatprep.subr.mxu0 0.0
        %264 = vmatpush1.msra.mxu0 0.0
        %265 = vmatprep.subr.mxu0 0.0
        %266 = vmatpush1.msra.mxu0 0.0
        %267 = vmatprep.subr.mxu0 0.0
        %268 = vmatpush1.msra.mxu0 0.0
        %v269 = vand.u32 %v219, 4294901760
        %270 = vmatprep.subr.mxu0 %v269
        %v271 = vand.u32 %v218, 4294901760
        %272 = vmatpush1.msra.mxu0 %v271
        %v273 = vand.u32 %v217, 4294901760
        %274 = vmatprep.subr.mxu0 %v273
        %v275 = vand.u32 %v216, 4294901760
        %276 = vmatpush1.msra.mxu0 %v275
        %277 = vmatprep.subr.mxu0 0.0
        %278 = vmatpush2.msra.mxu0 0.0
        %279 = vmatprep.subr.mxu0 0.0
        %280 = vmatpush2.msra.mxu0 0.0
        %281 = vmatprep.subr.mxu0 0.0
        %282 = vmatpush2.msra.mxu0 0.0
        %283 = vmatprep.subr.mxu0 0.0
        %284 = vmatpush2.msra.mxu0 0.0
        %285 = vmatprep.subr.mxu0 0.0
        %286 = vmatpush2.msra.mxu0 0.0
        %287 = vmatprep.subr.mxu0 0.0
        %288 = vmatpush2.msra.mxu0 0.0
        %289 = vmatprep.subr.mxu0 0.0
        %290 = vmatpush2.msra.mxu0 0.0
        %291 = vmatprep.subr.mxu0 0.0
        %292 = vmatpush2.msra.mxu0 0.0
        %293 = vmatprep.subr.mxu0 0.0
        %294 = vmatpush2.msra.mxu0 0.0
        %295 = vmatprep.subr.mxu0 0.0
        %296 = vmatpush2.msra.mxu0 0.0
        %297 = vmatprep.subr.mxu0 0.0
        %298 = vmatpush2.msra.mxu0 0.0
        %299 = vmatprep.subr.mxu0 0.0
        %300 = vmatpush2.msra.mxu0 0.0
        %301 = vmatprep.subr.mxu0 0.0
        %302 = vmatpush2.msra.mxu0 0.0
        %303 = vmatprep.subr.mxu0 0.0
        %304 = vmatpush2.msra.mxu0 0.0
        %305 = vmatprep.subr.mxu0 0.0
        %306 = vmatpush2.msra.mxu0 0.0
        %307 = vmatprep.subr.mxu0 0.0
        %308 = vmatpush2.msra.mxu0 0.0
        %309 = vmatprep.mubr.f32.mxu0 0.0
        %v310 = vand.u32 %v236, 4294901760
        %v311 = vsub.f32 %v236, %v310
        %v312 = vand.u32 %v311, 4294901760
        %v313 = vsub.f32 %v311, %v312
        %v314 = vand.u32 %v313, 4294901760
        %315 = vmatmul.mubr.f32.gmra.mxu0 %v314
        %v316 = vpop.f32.mrf.mxu0
        %v317 = vadd.f32 %v227, %v316
        %v318 = vpop.f32.mrf.mxu0
        %v319 = vadd.f32 %v227, %v318
        %320 = vmatprep.mubr.f32.mxu0 0.0
        %v321 = vand.u32 %v239, 4294901760
        %v322 = vsub.f32 %v239, %v321
        %v323 = vand.u32 %v322, 4294901760
        %v324 = vsub.f32 %v322, %v323
        %v325 = vand.u32 %v324, 4294901760
        %326 = vmatmul.mubr.f32.gmra.mxu0 %v325
        %v327 = vpop.f32.mrf.mxu0
        %v328 = vadd.f32 %v232, %v327
        %v329 = vpop.f32.mrf.mxu0
        %v330 = vadd.f32 %v232, %v329
        %331 = vdwg.mxu0
        %332 = vmatprep.subr.mxu0 0.0
        %333 = vmatpush1.msra.mxu0 0.0
        %334 = vmatprep.subr.mxu0 0.0
        %335 = vmatpush1.msra.mxu0 0.0
        %336 = vmatprep.subr.mxu0 0.0
        %337 = vmatpush1.msra.mxu0 0.0
        %338 = vmatprep.subr.mxu0 0.0
        %339 = vmatpush1.msra.mxu0 0.0
        %340 = vmatprep.subr.mxu0 0.0
        %341 = vmatpush1.msra.mxu0 0.0
        %342 = vmatprep.subr.mxu0 0.0
        %343 = vmatpush1.msra.mxu0 0.0
        %344 = vmatprep.subr.mxu0 0.0
        %345 = vmatpush1.msra.mxu0 0.0
        %346 = vmatprep.subr.mxu0 0.0
        %347 = vmatpush1.msra.mxu0 0.0
        %348 = vmatprep.subr.mxu0 0.0
        %349 = vmatpush1.msra.mxu0 0.0
        %350 = vmatprep.subr.mxu0 0.0
        %351 = vmatpush1.msra.mxu0 0.0
        %352 = vmatprep.subr.mxu0 0.0
        %353 = vmatpush1.msra.mxu0 0.0
        %354 = vmatprep.subr.mxu0 0.0
        %355 = vmatpush1.msra.mxu0 0.0
        %356 = vmatprep.subr.mxu0 0.0
        %357 = vmatpush1.msra.mxu0 0.0
        %358 = vmatprep.subr.mxu0 0.0
        %359 = vmatpush1.msra.mxu0 0.0
        %v360 = vand.u32 %v219, 4294901760
        %v361 = vsub.f32 %v219, %v360
        %v362 = vand.u32 %v361, 4294901760
        %v363 = vsub.f32 %v361, %v362
        %v364 = vand.u32 %v363, 4294901760
        %365 = vmatprep.subr.mxu0 %v364
        %v366 = vand.u32 %v218, 4294901760
        %v367 = vsub.f32 %v218, %v366
        %v368 = vand.u32 %v367, 4294901760
        %v369 = vsub.f32 %v367, %v368
        %v370 = vand.u32 %v369, 4294901760
        %371 = vmatpush1.msra.mxu0 %v370
        %v372 = vand.u32 %v217, 4294901760
        %v373 = vsub.f32 %v217, %v372
        %v374 = vand.u32 %v373, 4294901760
        %v375 = vsub.f32 %v373, %v374
        %v376 = vand.u32 %v375, 4294901760
        %377 = vmatprep.subr.mxu0 %v376
        %v378 = vand.u32 %v216, 4294901760
        %v379 = vsub.f32 %v216, %v378
        %v380 = vand.u32 %v379, 4294901760
        %v381 = vsub.f32 %v379, %v380
        %v382 = vand.u32 %v381, 4294901760
        %383 = vmatpush1.msra.mxu0 %v382
        %384 = vmatprep.subr.mxu0 0.0
        %385 = vmatpush2.msra.mxu0 0.0
        %386 = vmatprep.subr.mxu0 0.0
        %387 = vmatpush2.msra.mxu0 0.0
        %388 = vmatprep.subr.mxu0 0.0
        %389 = vmatpush2.msra.mxu0 0.0
        %390 = vmatprep.subr.mxu0 0.0
        %391 = vmatpush2.msra.mxu0 0.0
        %392 = vmatprep.subr.mxu0 0.0
        %393 = vmatpush2.msra.mxu0 0.0
        %394 = vmatprep.subr.mxu0 0.0
        %395 = vmatpush2.msra.mxu0 0.0
        %396 = vmatprep.subr.mxu0 0.0
        %397 = vmatpush2.msra.mxu0 0.0
        %398 = vmatprep.subr.mxu0 0.0
        %399 = vmatpush2.msra.mxu0 0.0
        %400 = vmatprep.subr.mxu0 0.0
        %401 = vmatpush2.msra.mxu0 0.0
        %402 = vmatprep.subr.mxu0 0.0
        %403 = vmatpush2.msra.mxu0 0.0
        %404 = vmatprep.subr.mxu0 0.0
        %405 = vmatpush2.msra.mxu0 0.0
        %406 = vmatprep.subr.mxu0 0.0
        %407 = vmatpush2.msra.mxu0 0.0
        %408 = vmatprep.subr.mxu0 0.0
        %409 = vmatpush2.msra.mxu0 0.0
        %410 = vmatprep.subr.mxu0 0.0
        %411 = vmatpush2.msra.mxu0 0.0
        %412 = vmatprep.subr.mxu0 0.0
        %413 = vmatpush2.msra.mxu0 0.0
        %414 = vmatprep.subr.mxu0 0.0
        %415 = vmatpush2.msra.mxu0 0.0
        %416 = vmatprep.mubr.f32.mxu0 0.0
        %v417 = vand.u32 %v236, 4294901760
        %418 = vmatmul.mubr.f32.gmra.mxu0 %v417
        %v419 = vpop.f32.mrf.mxu0
        %v420 = vadd.f32 %v317, %v419
        %v421 = vpop.f32.mrf.mxu0
        %v422 = vadd.f32 %v319, %v421
        %423 = vmatprep.mubr.f32.mxu0 0.0
        %v424 = vand.u32 %v239, 4294901760
        %425 = vmatmul.mubr.f32.gmra.mxu0 %v424
        %v426 = vpop.f32.mrf.mxu0
        %v427 = vadd.f32 %v328, %v426
        %v428 = vpop.f32.mrf.mxu0
        %v429 = vadd.f32 %v330, %v428
        %430 = vdwg.mxu0
        %431 = vmatprep.subr.mxu0 0.0
        %432 = vmatpush1.msra.mxu0 0.0
        %433 = vmatprep.subr.mxu0 0.0
        %434 = vmatpush1.msra.mxu0 0.0
        %435 = vmatprep.subr.mxu0 0.0
        %436 = vmatpush1.msra.mxu0 0.0
        %437 = vmatprep.subr.mxu0 0.0
        %438 = vmatpush1.msra.mxu0 0.0
        %439 = vmatprep.subr.mxu0 0.0
        %440 = vmatpush1.msra.mxu0 0.0
        %441 = vmatprep.subr.mxu0 0.0
        %442 = vmatpush1.msra.mxu0 0.0
        %443 = vmatprep.subr.mxu0 0.0
        %444 = vmatpush1.msra.mxu0 0.0
        %445 = vmatprep.subr.mxu0 0.0
        %446 = vmatpush1.msra.mxu0 0.0
        %447 = vmatprep.subr.mxu0 0.0
        %448 = vmatpush1.msra.mxu0 0.0
        %449 = vmatprep.subr.mxu0 0.0
        %450 = vmatpush1.msra.mxu0 0.0
        %451 = vmatprep.subr.mxu0 0.0
        %452 = vmatpush1.msra.mxu0 0.0
        %453 = vmatprep.subr.mxu0 0.0
        %454 = vmatpush1.msra.mxu0 0.0
        %455 = vmatprep.subr.mxu0 0.0
        %456 = vmatpush1.msra.mxu0 0.0
        %457 = vmatprep.subr.mxu0 0.0
        %458 = vmatpush1.msra.mxu0 0.0
        %v459 = vand.u32 %v219, 4294901760
        %v460 = vsub.f32 %v219, %v459
        %461 = vmatprep.subr.mxu0 %v460
        %v462 = vand.u32 %v218, 4294901760
        %v463 = vsub.f32 %v218, %v462
        %464 = vmatpush1.msra.mxu0 %v463
        %v465 = vand.u32 %v217, 4294901760
        %v466 = vsub.f32 %v217, %v465
        %467 = vmatprep.subr.mxu0 %v466
        %v468 = vand.u32 %v216, 4294901760
        %v469 = vsub.f32 %v216, %v468
        %470 = vmatpush1.msra.mxu0 %v469
        %471 = vmatprep.subr.mxu0 0.0
        %472 = vmatpush2.msra.mxu0 0.0
        %473 = vmatprep.subr.mxu0 0.0
        %474 = vmatpush2.msra.mxu0 0.0
        %475 = vmatprep.subr.mxu0 0.0
        %476 = vmatpush2.msra.mxu0 0.0
        %477 = vmatprep.subr.mxu0 0.0
        %478 = vmatpush2.msra.mxu0 0.0
        %479 = vmatprep.subr.mxu0 0.0
        %480 = vmatpush2.msra.mxu0 0.0
        %481 = vmatprep.subr.mxu0 0.0
        %482 = vmatpush2.msra.mxu0 0.0
        %483 = vmatprep.subr.mxu0 0.0
        %484 = vmatpush2.msra.mxu0 0.0
        %485 = vmatprep.subr.mxu0 0.0
        %486 = vmatpush2.msra.mxu0 0.0
        %487 = vmatprep.subr.mxu0 0.0
        %488 = vmatpush2.msra.mxu0 0.0
        %489 = vmatprep.subr.mxu0 0.0
        %490 = vmatpush2.msra.mxu0 0.0
        %491 = vmatprep.subr.mxu0 0.0
        %492 = vmatpush2.msra.mxu0 0.0
        %493 = vmatprep.subr.mxu0 0.0
        %494 = vmatpush2.msra.mxu0 0.0
        %495 = vmatprep.subr.mxu0 0.0
        %496 = vmatpush2.msra.mxu0 0.0
        %497 = vmatprep.subr.mxu0 0.0
        %498 = vmatpush2.msra.mxu0 0.0
        %499 = vmatprep.subr.mxu0 0.0
        %500 = vmatpush2.msra.mxu0 0.0
        %501 = vmatprep.subr.mxu0 0.0
        %502 = vmatpush2.msra.mxu0 0.0
        %503 = vmatprep.mubr.f32.mxu0 0.0
        %v504 = vand.u32 %v236, 4294901760
        %v505 = vsub.f32 %v236, %v504
        %506 = vmatmul.mubr.f32.gmra.mxu0 %v505
        %v507 = vpop.f32.mrf.mxu0
        %v508 = vadd.f32 %v420, %v507
        %v509 = vpop.f32.mrf.mxu0
        %v510 = vadd.f32 %v422, %v509
        %511 = vmatprep.mubr.f32.mxu0 0.0
        %v512 = vand.u32 %v239, 4294901760
        %v513 = vsub.f32 %v239, %v512
        %514 = vmatmul.mubr.f32.gmra.mxu0 %v513
        %v515 = vpop.f32.mrf.mxu0
        %v516 = vadd.f32 %v427, %v515
        %v517 = vpop.f32.mrf.mxu0
        %v518 = vadd.f32 %v429, %v517
        %519 = vdwg.mxu0
        %520 = vmatprep.subr.mxu0 0.0
        %521 = vmatpush1.msra.mxu0 0.0
        %522 = vmatprep.subr.mxu0 0.0
        %523 = vmatpush1.msra.mxu0 0.0
        %524 = vmatprep.subr.mxu0 0.0
        %525 = vmatpush1.msra.mxu0 0.0
        %526 = vmatprep.subr.mxu0 0.0
        %527 = vmatpush1.msra.mxu0 0.0
        %528 = vmatprep.subr.mxu0 0.0
        %529 = vmatpush1.msra.mxu0 0.0
        %530 = vmatprep.subr.mxu0 0.0
        %531 = vmatpush1.msra.mxu0 0.0
        %532 = vmatprep.subr.mxu0 0.0
        %533 = vmatpush1.msra.mxu0 0.0
        %534 = vmatprep.subr.mxu0 0.0
        %535 = vmatpush1.msra.mxu0 0.0
        %536 = vmatprep.subr.mxu0 0.0
        %537 = vmatpush1.msra.mxu0 0.0
        %538 = vmatprep.subr.mxu0 0.0
        %539 = vmatpush1.msra.mxu0 0.0
        %540 = vmatprep.subr.mxu0 0.0
        %541 = vmatpush1.msra.mxu0 0.0
        %542 = vmatprep.subr.mxu0 0.0
        %543 = vmatpush1.msra.mxu0 0.0
        %544 = vmatprep.subr.mxu0 0.0
        %545 = vmatpush1.msra.mxu0 0.0
        %546 = vmatprep.subr.mxu0 0.0
        %547 = vmatpush1.msra.mxu0 0.0
        %v548 = vand.u32 %v219, 4294901760
        %549 = vmatprep.subr.mxu0 %v548
        %v550 = vand.u32 %v218, 4294901760
        %551 = vmatpush1.msra.mxu0 %v550
        %v552 = vand.u32 %v217, 4294901760
        %553 = vmatprep.subr.mxu0 %v552
        %v554 = vand.u32 %v216, 4294901760
        %555 = vmatpush1.msra.mxu0 %v554
        %556 = vmatprep.subr.mxu0 0.0
        %557 = vmatpush2.msra.mxu0 0.0
        %558 = vmatprep.subr.mxu0 0.0
        %559 = vmatpush2.msra.mxu0 0.0
        %560 = vmatprep.subr.mxu0 0.0
        %561 = vmatpush2.msra.mxu0 0.0
        %562 = vmatprep.subr.mxu0 0.0
        %563 = vmatpush2.msra.mxu0 0.0
        %564 = vmatprep.subr.mxu0 0.0
        %565 = vmatpush2.msra.mxu0 0.0
        %566 = vmatprep.subr.mxu0 0.0
        %567 = vmatpush2.msra.mxu0 0.0
        %568 = vmatprep.subr.mxu0 0.0
        %569 = vmatpush2.msra.mxu0 0.0
        %570 = vmatprep.subr.mxu0 0.0
        %571 = vmatpush2.msra.mxu0 0.0
        %572 = vmatprep.subr.mxu0 0.0
        %573 = vmatpush2.msra.mxu0 0.0
        %574 = vmatprep.subr.mxu0 0.0
        %575 = vmatpush2.msra.mxu0 0.0
        %576 = vmatprep.subr.mxu0 0.0
        %577 = vmatpush2.msra.mxu0 0.0
        %578 = vmatprep.subr.mxu0 0.0
        %579 = vmatpush2.msra.mxu0 0.0
        %580 = vmatprep.subr.mxu0 0.0
        %581 = vmatpush2.msra.mxu0 0.0
        %582 = vmatprep.subr.mxu0 0.0
        %583 = vmatpush2.msra.mxu0 0.0
        %584 = vmatprep.subr.mxu0 0.0
        %585 = vmatpush2.msra.mxu0 0.0
        %586 = vmatprep.subr.mxu0 0.0
        %587 = vmatpush2.msra.mxu0 0.0
        %588 = vmatprep.mubr.f32.mxu0 0.0
        %v589 = vand.u32 %v236, 4294901760
        %v590 = vsub.f32 %v236, %v589
        %v591 = vand.u32 %v590, 4294901760
        %592 = vmatmul.mubr.f32.gmra.mxu0 %v591
        %v593 = vpop.f32.mrf.mxu0
        %v594 = vadd.f32 %v508, %v593
        %v595 = vpop.f32.mrf.mxu0
        %v596 = vadd.f32 %v510, %v595
        %597 = vmatprep.mubr.f32.mxu0 0.0
        %v598 = vand.u32 %v239, 4294901760
        %v599 = vsub.f32 %v239, %v598
        %v600 = vand.u32 %v599, 4294901760
        %601 = vmatmul.mubr.f32.gmra.mxu0 %v600
        %v602 = vpop.f32.mrf.mxu0
        %v603 = vadd.f32 %v516, %v602
        %v604 = vpop.f32.mrf.mxu0
        %v605 = vadd.f32 %v518, %v604
        %606 = vdwg.mxu0
        %607 = vmatprep.subr.mxu0 0.0
        %608 = vmatpush1.msra.mxu0 0.0
        %609 = vmatprep.subr.mxu0 0.0
        %610 = vmatpush1.msra.mxu0 0.0
        %611 = vmatprep.subr.mxu0 0.0
        %612 = vmatpush1.msra.mxu0 0.0
        %613 = vmatprep.subr.mxu0 0.0
        %614 = vmatpush1.msra.mxu0 0.0
        %615 = vmatprep.subr.mxu0 0.0
        %616 = vmatpush1.msra.mxu0 0.0
        %617 = vmatprep.subr.mxu0 0.0
        %618 = vmatpush1.msra.mxu0 0.0
        %619 = vmatprep.subr.mxu0 0.0
        %620 = vmatpush1.msra.mxu0 0.0
        %621 = vmatprep.subr.mxu0 0.0
        %622 = vmatpush1.msra.mxu0 0.0
        %623 = vmatprep.subr.mxu0 0.0
        %624 = vmatpush1.msra.mxu0 0.0
        %625 = vmatprep.subr.mxu0 0.0
        %626 = vmatpush1.msra.mxu0 0.0
        %627 = vmatprep.subr.mxu0 0.0
        %628 = vmatpush1.msra.mxu0 0.0
        %629 = vmatprep.subr.mxu0 0.0
        %630 = vmatpush1.msra.mxu0 0.0
        %631 = vmatprep.subr.mxu0 0.0
        %632 = vmatpush1.msra.mxu0 0.0
        %633 = vmatprep.subr.mxu0 0.0
        %634 = vmatpush1.msra.mxu0 0.0
        %v635 = vand.u32 %v219, 4294901760
        %v636 = vsub.f32 %v219, %v635
        %v637 = vand.u32 %v636, 4294901760
        %638 = vmatprep.subr.mxu0 %v637
        %v639 = vand.u32 %v218, 4294901760
        %v640 = vsub.f32 %v218, %v639
        %v641 = vand.u32 %v640, 4294901760
        %642 = vmatpush1.msra.mxu0 %v641
        %v643 = vand.u32 %v217, 4294901760
        %v644 = vsub.f32 %v217, %v643
        %v645 = vand.u32 %v644, 4294901760
        %646 = vmatprep.subr.mxu0 %v645
        %v647 = vand.u32 %v216, 4294901760
        %v648 = vsub.f32 %v216, %v647
        %v649 = vand.u32 %v648, 4294901760
        %650 = vmatpush1.msra.mxu0 %v649
        %651 = vmatprep.subr.mxu0 0.0
        %652 = vmatpush2.msra.mxu0 0.0
        %653 = vmatprep.subr.mxu0 0.0
        %654 = vmatpush2.msra.mxu0 0.0
        %655 = vmatprep.subr.mxu0 0.0
        %656 = vmatpush2.msra.mxu0 0.0
        %657 = vmatprep.subr.mxu0 0.0
        %658 = vmatpush2.msra.mxu0 0.0
        %659 = vmatprep.subr.mxu0 0.0
        %660 = vmatpush2.msra.mxu0 0.0
        %661 = vmatprep.subr.mxu0 0.0
        %662 = vmatpush2.msra.mxu0 0.0
        %663 = vmatprep.subr.mxu0 0.0
        %664 = vmatpush2.msra.mxu0 0.0
        %665 = vmatprep.subr.mxu0 0.0
        %666 = vmatpush2.msra.mxu0 0.0
        %667 = vmatprep.subr.mxu0 0.0
        %668 = vmatpush2.msra.mxu0 0.0
        %669 = vmatprep.subr.mxu0 0.0
        %670 = vmatpush2.msra.mxu0 0.0
        %671 = vmatprep.subr.mxu0 0.0
        %672 = vmatpush2.msra.mxu0 0.0
        %673 = vmatprep.subr.mxu0 0.0
        %674 = vmatpush2.msra.mxu0 0.0
        %675 = vmatprep.subr.mxu0 0.0
        %676 = vmatpush2.msra.mxu0 0.0
        %677 = vmatprep.subr.mxu0 0.0
        %678 = vmatpush2.msra.mxu0 0.0
        %679 = vmatprep.subr.mxu0 0.0
        %680 = vmatpush2.msra.mxu0 0.0
        %681 = vmatprep.subr.mxu0 0.0
        %682 = vmatpush2.msra.mxu0 0.0
        %683 = vmatprep.mubr.f32.mxu0 0.0
        %v684 = vand.u32 %v236, 4294901760
        %685 = vmatmul.mubr.f32.gmra.mxu0 %v684
        %v686 = vpop.f32.mrf.mxu0
        %v687 = vadd.f32 %v594, %v686
        %v688 = vpop.f32.mrf.mxu0
        %v689 = vadd.f32 %v596, %v688
        %690 = vmatprep.mubr.f32.mxu0 0.0
        %v691 = vand.u32 %v239, 4294901760
        %692 = vmatmul.mubr.f32.gmra.mxu0 %v691
        %v693 = vpop.f32.mrf.mxu0
        %v694 = vadd.f32 %v603, %v693
        %v695 = vpop.f32.mrf.mxu0
        %v696 = vadd.f32 %v605, %v695
        %697 = vdwg.mxu0
        %698 = vmatprep.subr.mxu0 0.0
        %699 = vmatpush1.msra.mxu0 0.0
        %700 = vmatprep.subr.mxu0 0.0
        %701 = vmatpush1.msra.mxu0 0.0
        %702 = vmatprep.subr.mxu0 0.0
        %703 = vmatpush1.msra.mxu0 0.0
        %704 = vmatprep.subr.mxu0 0.0
        %705 = vmatpush1.msra.mxu0 0.0
        %706 = vmatprep.subr.mxu0 0.0
        %707 = vmatpush1.msra.mxu0 0.0
        %708 = vmatprep.subr.mxu0 0.0
        %709 = vmatpush1.msra.mxu0 0.0
        %710 = vmatprep.subr.mxu0 0.0
        %711 = vmatpush1.msra.mxu0 0.0
        %712 = vmatprep.subr.mxu0 0.0
        %713 = vmatpush1.msra.mxu0 0.0
        %714 = vmatprep.subr.mxu0 0.0
        %715 = vmatpush1.msra.mxu0 0.0
        %716 = vmatprep.subr.mxu0 0.0
        %717 = vmatpush1.msra.mxu0 0.0
        %718 = vmatprep.subr.mxu0 0.0
        %719 = vmatpush1.msra.mxu0 0.0
        %720 = vmatprep.subr.mxu0 0.0
        %721 = vmatpush1.msra.mxu0 0.0
        %722 = vmatprep.subr.mxu0 0.0
        %723 = vmatpush1.msra.mxu0 0.0
        %724 = vmatprep.subr.mxu0 0.0
        %725 = vmatpush1.msra.mxu0 0.0
        %v726 = vand.u32 %v219, 4294901760
        %727 = vmatprep.subr.mxu0 %v726
        %v728 = vand.u32 %v218, 4294901760
        %729 = vmatpush1.msra.mxu0 %v728
        %v730 = vand.u32 %v217, 4294901760
        %731 = vmatprep.subr.mxu0 %v730
        %v732 = vand.u32 %v216, 4294901760
        %733 = vmatpush1.msra.mxu0 %v732
        %734 = vmatprep.subr.mxu0 0.0
        %735 = vmatpush2.msra.mxu0 0.0
        %736 = vmatprep.subr.mxu0 0.0
        %737 = vmatpush2.msra.mxu0 0.0
        %738 = vmatprep.subr.mxu0 0.0
        %739 = vmatpush2.msra.mxu0 0.0
        %740 = vmatprep.subr.mxu0 0.0
        %741 = vmatpush2.msra.mxu0 0.0
        %742 = vmatprep.subr.mxu0 0.0
        %743 = vmatpush2.msra.mxu0 0.0
        %744 = vmatprep.subr.mxu0 0.0
        %745 = vmatpush2.msra.mxu0 0.0
        %746 = vmatprep.subr.mxu0 0.0
        %747 = vmatpush2.msra.mxu0 0.0
        %748 = vmatprep.subr.mxu0 0.0
        %749 = vmatpush2.msra.mxu0 0.0
        %750 = vmatprep.subr.mxu0 0.0
        %751 = vmatpush2.msra.mxu0 0.0
        %752 = vmatprep.subr.mxu0 0.0
        %753 = vmatpush2.msra.mxu0 0.0
        %754 = vmatprep.subr.mxu0 0.0
        %755 = vmatpush2.msra.mxu0 0.0
        %756 = vmatprep.subr.mxu0 0.0
        %757 = vmatpush2.msra.mxu0 0.0
        %758 = vmatprep.subr.mxu0 0.0
        %759 = vmatpush2.msra.mxu0 0.0
        %760 = vmatprep.subr.mxu0 0.0
        %761 = vmatpush2.msra.mxu0 0.0
        %762 = vmatprep.subr.mxu0 0.0
        %763 = vmatpush2.msra.mxu0 0.0
        %764 = vmatprep.subr.mxu0 0.0
        %765 = vmatpush2.msra.mxu0 0.0
        %766 = vmatprep.mubr.f32.mxu0 0.0
        %v767 = vand.u32 %v236, 4294901760
        %768 = vmatmul.mubr.f32.gmra.mxu0 %v767
        %v769 = vpop.f32.mrf.mxu0
        %v770 = vadd.f32 %v687, %v769
        %v771 = vpop.f32.mrf.mxu0
        %v772 = vadd.f32 %v689, %v771
        %773 = vmatprep.mubr.f32.mxu0 0.0
        %v774 = vand.u32 %v239, 4294901760
        %775 = vmatmul.mubr.f32.gmra.mxu0 %v774
        %v776 = vpop.f32.mrf.mxu0
        %v777 = vadd.f32 %v694, %v776
        %v778 = vpop.f32.mrf.mxu0
        %v779 = vadd.f32 %v696, %v778
        %780 = vdwg.mxu0
        %v781 = vld [vmem:[%s1 + $0x20] sm:$0xff]
        %v782 = vld [vmem:[%s1 + $0x28] sm:$0xff]
        %v783 = vld [vmem:[%s2 + $0x28] sm:$0xff]
        %v784 = vld [vmem:[%s2 + $0x30] sm:$0xff]
        %786 = vset.pattern.permute.xlu0 0
        %787 = vperm.xlu0 %786, %v783
        %v788 = vpop.permute.xlu0 %787
        %791 = vset.pattern.permute.xlu0 0
        %792 = vperm.xlu0 %791, %v784
        %v793 = vpop.permute.xlu0 %792
        %vm795 = vcmask 64512
        %v797 = vsel %vm795, %v781, 0
        %v800 = vsel %vm795, %v782, 0
        %802 = vmatprep.subr.mxu0 0.0
        %803 = vmatpush1.msra.mxu0 0.0
        %804 = vmatprep.subr.mxu0 0.0
        %805 = vmatpush1.msra.mxu0 0.0
        %806 = vmatprep.subr.mxu0 0.0
        %807 = vmatpush1.msra.mxu0 0.0
        %808 = vmatprep.subr.mxu0 0.0
        %809 = vmatpush1.msra.mxu0 0.0
        %810 = vmatprep.subr.mxu0 0.0
        %811 = vmatpush1.msra.mxu0 0.0
        %812 = vmatprep.subr.mxu0 0.0
        %813 = vmatpush1.msra.mxu0 0.0
        %814 = vmatprep.subr.mxu0 0.0
        %815 = vmatpush1.msra.mxu0 0.0
        %816 = vmatprep.subr.mxu0 0.0
        %817 = vmatpush1.msra.mxu0 0.0
        %818 = vmatprep.subr.mxu0 0.0
        %819 = vmatpush1.msra.mxu0 0.0
        %820 = vmatprep.subr.mxu0 0.0
        %821 = vmatpush1.msra.mxu0 0.0
        %822 = vmatprep.subr.mxu0 0.0
        %823 = vmatpush1.msra.mxu0 0.0
        %824 = vmatprep.subr.mxu0 0.0
        %825 = vmatpush1.msra.mxu0 0.0
        %826 = vmatprep.subr.mxu0 0.0
        %827 = vmatpush1.msra.mxu0 0.0
        %828 = vmatprep.subr.mxu0 0.0
        %829 = vmatpush1.msra.mxu0 0.0
        %830 = vmatprep.subr.mxu0 0.0
        %831 = vmatpush1.msra.mxu0 0.0
        %v832 = vand.u32 %v772, 4294901760
        %833 = vmatprep.subr.mxu0 %v832
        %v834 = vand.u32 %v770, 4294901760
        %835 = vmatpush1.msra.mxu0 %v834
        %836 = vmatprep.subr.mxu0 0.0
        %837 = vmatpush2.msra.mxu0 0.0
        %838 = vmatprep.subr.mxu0 0.0
        %839 = vmatpush2.msra.mxu0 0.0
        %840 = vmatprep.subr.mxu0 0.0
        %841 = vmatpush2.msra.mxu0 0.0
        %842 = vmatprep.subr.mxu0 0.0
        %843 = vmatpush2.msra.mxu0 0.0
        %844 = vmatprep.subr.mxu0 0.0
        %845 = vmatpush2.msra.mxu0 0.0
        %846 = vmatprep.subr.mxu0 0.0
        %847 = vmatpush2.msra.mxu0 0.0
        %848 = vmatprep.subr.mxu0 0.0
        %849 = vmatpush2.msra.mxu0 0.0
        %850 = vmatprep.subr.mxu0 0.0
        %851 = vmatpush2.msra.mxu0 0.0
        %852 = vmatprep.subr.mxu0 0.0
        %853 = vmatpush2.msra.mxu0 0.0
        %854 = vmatprep.subr.mxu0 0.0
        %855 = vmatpush2.msra.mxu0 0.0
        %856 = vmatprep.subr.mxu0 0.0
        %857 = vmatpush2.msra.mxu0 0.0
        %858 = vmatprep.subr.mxu0 0.0
        %859 = vmatpush2.msra.mxu0 0.0
        %860 = vmatprep.subr.mxu0 0.0
        %861 = vmatpush2.msra.mxu0 0.0
        %862 = vmatprep.subr.mxu0 0.0
        %863 = vmatpush2.msra.mxu0 0.0
        %864 = vmatprep.subr.mxu0 0.0
        %865 = vmatpush2.msra.mxu0 0.0
        %866 = vmatprep.subr.mxu0 0.0
        %867 = vmatpush2.msra.mxu0 0.0
        %868 = vmatprep.mubr.f32.mxu0 0.0
        %v869 = vand.u32 %v797, 4294901760
        %v870 = vsub.f32 %v797, %v869
        %v871 = vand.u32 %v870, 4294901760
        %v872 = vsub.f32 %v870, %v871
        %v873 = vand.u32 %v872, 4294901760
        %874 = vmatmul.mubr.f32.gmra.mxu0 %v873
        %v875 = vpop.f32.mrf.mxu0
        %v876 = vadd.f32 %v788, %v875
        %v877 = vpop.f32.mrf.mxu0
        %v878 = vadd.f32 %v788, %v877
        %879 = vmatprep.mubr.f32.mxu0 0.0
        %v880 = vand.u32 %v800, 4294901760
        %v881 = vsub.f32 %v800, %v880
        %v882 = vand.u32 %v881, 4294901760
        %v883 = vsub.f32 %v881, %v882
        %v884 = vand.u32 %v883, 4294901760
        %885 = vmatmul.mubr.f32.gmra.mxu0 %v884
        %v886 = vpop.f32.mrf.mxu0
        %v887 = vadd.f32 %v793, %v886
        %v888 = vpop.f32.mrf.mxu0
        %v889 = vadd.f32 %v793, %v888
        %890 = vdwg.mxu0
        %891 = vmatprep.subr.mxu0 0.0
        %892 = vmatpush1.msra.mxu0 0.0
        %893 = vmatprep.subr.mxu0 0.0
        %894 = vmatpush1.msra.mxu0 0.0
        %895 = vmatprep.subr.mxu0 0.0
        %896 = vmatpush1.msra.mxu0 0.0
        %897 = vmatprep.subr.mxu0 0.0
        %898 = vmatpush1.msra.mxu0 0.0
        %899 = vmatprep.subr.mxu0 0.0
        %900 = vmatpush1.msra.mxu0 0.0
        %901 = vmatprep.subr.mxu0 0.0
        %902 = vmatpush1.msra.mxu0 0.0
        %903 = vmatprep.subr.mxu0 0.0
        %904 = vmatpush1.msra.mxu0 0.0
        %905 = vmatprep.subr.mxu0 0.0
        %906 = vmatpush1.msra.mxu0 0.0
        %907 = vmatprep.subr.mxu0 0.0
        %908 = vmatpush1.msra.mxu0 0.0
        %909 = vmatprep.subr.mxu0 0.0
        %910 = vmatpush1.msra.mxu0 0.0
        %911 = vmatprep.subr.mxu0 0.0
        %912 = vmatpush1.msra.mxu0 0.0
        %913 = vmatprep.subr.mxu0 0.0
        %914 = vmatpush1.msra.mxu0 0.0
        %915 = vmatprep.subr.mxu0 0.0
        %916 = vmatpush1.msra.mxu0 0.0
        %917 = vmatprep.subr.mxu0 0.0
        %918 = vmatpush1.msra.mxu0 0.0
        %919 = vmatprep.subr.mxu0 0.0
        %920 = vmatpush1.msra.mxu0 0.0
        %v921 = vand.u32 %v772, 4294901760
        %v922 = vsub.f32 %v772, %v921
        %v923 = vand.u32 %v922, 4294901760
        %v924 = vsub.f32 %v922, %v923
        %v925 = vand.u32 %v924, 4294901760
        %926 = vmatprep.subr.mxu0 %v925
        %v927 = vand.u32 %v770, 4294901760
        %v928 = vsub.f32 %v770, %v927
        %v929 = vand.u32 %v928, 4294901760
        %v930 = vsub.f32 %v928, %v929
        %v931 = vand.u32 %v930, 4294901760
        %932 = vmatpush1.msra.mxu0 %v931
        %933 = vmatprep.subr.mxu0 0.0
        %934 = vmatpush2.msra.mxu0 0.0
        %935 = vmatprep.subr.mxu0 0.0
        %936 = vmatpush2.msra.mxu0 0.0
        %937 = vmatprep.subr.mxu0 0.0
        %938 = vmatpush2.msra.mxu0 0.0
        %939 = vmatprep.subr.mxu0 0.0
        %940 = vmatpush2.msra.mxu0 0.0
        %941 = vmatprep.subr.mxu0 0.0
        %942 = vmatpush2.msra.mxu0 0.0
        %943 = vmatprep.subr.mxu0 0.0
        %944 = vmatpush2.msra.mxu0 0.0
        %945 = vmatprep.subr.mxu0 0.0
        %946 = vmatpush2.msra.mxu0 0.0
        %947 = vmatprep.subr.mxu0 0.0
        %948 = vmatpush2.msra.mxu0 0.0
        %949 = vmatprep.subr.mxu0 0.0
        %950 = vmatpush2.msra.mxu0 0.0
        %951 = vmatprep.subr.mxu0 0.0
        %952 = vmatpush2.msra.mxu0 0.0
        %953 = vmatprep.subr.mxu0 0.0
        %954 = vmatpush2.msra.mxu0 0.0
        %955 = vmatprep.subr.mxu0 0.0
        %956 = vmatpush2.msra.mxu0 0.0
        %957 = vmatprep.subr.mxu0 0.0
        %958 = vmatpush2.msra.mxu0 0.0
        %959 = vmatprep.subr.mxu0 0.0
        %960 = vmatpush2.msra.mxu0 0.0
        %961 = vmatprep.subr.mxu0 0.0
        %962 = vmatpush2.msra.mxu0 0.0
        %963 = vmatprep.subr.mxu0 0.0
        %964 = vmatpush2.msra.mxu0 0.0
        %965 = vmatprep.mubr.f32.mxu0 0.0
        %v966 = vand.u32 %v797, 4294901760
        %967 = vmatmul.mubr.f32.gmra.mxu0 %v966
        %v968 = vpop.f32.mrf.mxu0
        %v969 = vadd.f32 %v876, %v968
        %v970 = vpop.f32.mrf.mxu0
        %v971 = vadd.f32 %v878, %v970
        %972 = vmatprep.mubr.f32.mxu0 0.0
        %v973 = vand.u32 %v800, 4294901760
        %974 = vmatmul.mubr.f32.gmra.mxu0 %v973
        %v975 = vpop.f32.mrf.mxu0
        %v976 = vadd.f32 %v887, %v975
        %v977 = vpop.f32.mrf.mxu0
        %v978 = vadd.f32 %v889, %v977
        %979 = vdwg.mxu0
        %980 = vmatprep.subr.mxu0 0.0
        %981 = vmatpush1.msra.mxu0 0.0
        %982 = vmatprep.subr.mxu0 0.0
        %983 = vmatpush1.msra.mxu0 0.0
        %984 = vmatprep.subr.mxu0 0.0
        %985 = vmatpush1.msra.mxu0 0.0
        %986 = vmatprep.subr.mxu0 0.0
        %987 = vmatpush1.msra.mxu0 0.0
        %988 = vmatprep.subr.mxu0 0.0
        %989 = vmatpush1.msra.mxu0 0.0
        %990 = vmatprep.subr.mxu0 0.0
        %991 = vmatpush1.msra.mxu0 0.0
        %992 = vmatprep.subr.mxu0 0.0
        %993 = vmatpush1.msra.mxu0 0.0
        %994 = vmatprep.subr.mxu0 0.0
        %995 = vmatpush1.msra.mxu0 0.0
        %996 = vmatprep.subr.mxu0 0.0
        %997 = vmatpush1.msra.mxu0 0.0
        %998 = vmatprep.subr.mxu0 0.0
        %999 = vmatpush1.msra.mxu0 0.0
        %1000 = vmatprep.subr.mxu0 0.0
        %1001 = vmatpush1.msra.mxu0 0.0
        %1002 = vmatprep.subr.mxu0 0.0
        %1003 = vmatpush1.msra.mxu0 0.0
        %1004 = vmatprep.subr.mxu0 0.0
        %1005 = vmatpush1.msra.mxu0 0.0
        %1006 = vmatprep.subr.mxu0 0.0
        %1007 = vmatpush1.msra.mxu0 0.0
        %1008 = vmatprep.subr.mxu0 0.0
        %1009 = vmatpush1.msra.mxu0 0.0
        %v1010 = vand.u32 %v772, 4294901760
        %v1011 = vsub.f32 %v772, %v1010
        %1012 = vmatprep.subr.mxu0 %v1011
        %v1013 = vand.u32 %v770, 4294901760
        %v1014 = vsub.f32 %v770, %v1013
        %1015 = vmatpush1.msra.mxu0 %v1014
        %1016 = vmatprep.subr.mxu0 0.0
        %1017 = vmatpush2.msra.mxu0 0.0
        %1018 = vmatprep.subr.mxu0 0.0
        %1019 = vmatpush2.msra.mxu0 0.0
        %1020 = vmatprep.subr.mxu0 0.0
        %1021 = vmatpush2.msra.mxu0 0.0
        %1022 = vmatprep.subr.mxu0 0.0
        %1023 = vmatpush2.msra.mxu0 0.0
        %1024 = vmatprep.subr.mxu0 0.0
        %1025 = vmatpush2.msra.mxu0 0.0
        %1026 = vmatprep.subr.mxu0 0.0
        %1027 = vmatpush2.msra.mxu0 0.0
        %1028 = vmatprep.subr.mxu0 0.0
        %1029 = vmatpush2.msra.mxu0 0.0
        %1030 = vmatprep.subr.mxu0 0.0
        %1031 = vmatpush2.msra.mxu0 0.0
        %1032 = vmatprep.subr.mxu0 0.0
        %1033 = vmatpush2.msra.mxu0 0.0
        %1034 = vmatprep.subr.mxu0 0.0
        %1035 = vmatpush2.msra.mxu0 0.0
        %1036 = vmatprep.subr.mxu0 0.0
        %1037 = vmatpush2.msra.mxu0 0.0
        %1038 = vmatprep.subr.mxu0 0.0
        %1039 = vmatpush2.msra.mxu0 0.0
        %1040 = vmatprep.subr.mxu0 0.0
        %1041 = vmatpush2.msra.mxu0 0.0
        %1042 = vmatprep.subr.mxu0 0.0
        %1043 = vmatpush2.msra.mxu0 0.0
        %1044 = vmatprep.subr.mxu0 0.0
        %1045 = vmatpush2.msra.mxu0 0.0
        %1046 = vmatprep.subr.mxu0 0.0
        %1047 = vmatpush2.msra.mxu0 0.0
        %1048 = vmatprep.mubr.f32.mxu0 0.0
        %v1049 = vand.u32 %v797, 4294901760
        %v1050 = vsub.f32 %v797, %v1049
        %1051 = vmatmul.mubr.f32.gmra.mxu0 %v1050
        %v1052 = vpop.f32.mrf.mxu0
        %v1053 = vadd.f32 %v969, %v1052
        %v1054 = vpop.f32.mrf.mxu0
        %v1055 = vadd.f32 %v971, %v1054
        %1056 = vmatprep.mubr.f32.mxu0 0.0
        %v1057 = vand.u32 %v800, 4294901760
        %v1058 = vsub.f32 %v800, %v1057
        %1059 = vmatmul.mubr.f32.gmra.mxu0 %v1058
        %v1060 = vpop.f32.mrf.mxu0
        %v1061 = vadd.f32 %v976, %v1060
        %v1062 = vpop.f32.mrf.mxu0
        %v1063 = vadd.f32 %v978, %v1062
        %1064 = vdwg.mxu0
        %1065 = vmatprep.subr.mxu0 0.0
        %1066 = vmatpush1.msra.mxu0 0.0
        %1067 = vmatprep.subr.mxu0 0.0
        %1068 = vmatpush1.msra.mxu0 0.0
        %1069 = vmatprep.subr.mxu0 0.0
        %1070 = vmatpush1.msra.mxu0 0.0
        %1071 = vmatprep.subr.mxu0 0.0
        %1072 = vmatpush1.msra.mxu0 0.0
        %1073 = vmatprep.subr.mxu0 0.0
        %1074 = vmatpush1.msra.mxu0 0.0
        %1075 = vmatprep.subr.mxu0 0.0
        %1076 = vmatpush1.msra.mxu0 0.0
        %1077 = vmatprep.subr.mxu0 0.0
        %1078 = vmatpush1.msra.mxu0 0.0
        %1079 = vmatprep.subr.mxu0 0.0
        %1080 = vmatpush1.msra.mxu0 0.0
        %1081 = vmatprep.subr.mxu0 0.0
        %1082 = vmatpush1.msra.mxu0 0.0
        %1083 = vmatprep.subr.mxu0 0.0
        %1084 = vmatpush1.msra.mxu0 0.0
        %1085 = vmatprep.subr.mxu0 0.0
        %1086 = vmatpush1.msra.mxu0 0.0
        %1087 = vmatprep.subr.mxu0 0.0
        %1088 = vmatpush1.msra.mxu0 0.0
        %1089 = vmatprep.subr.mxu0 0.0
        %1090 = vmatpush1.msra.mxu0 0.0
        %1091 = vmatprep.subr.mxu0 0.0
        %1092 = vmatpush1.msra.mxu0 0.0
        %1093 = vmatprep.subr.mxu0 0.0
        %1094 = vmatpush1.msra.mxu0 0.0
        %v1095 = vand.u32 %v772, 4294901760
        %1096 = vmatprep.subr.mxu0 %v1095
        %v1097 = vand.u32 %v770, 4294901760
        %1098 = vmatpush1.msra.mxu0 %v1097
        %1099 = vmatprep.subr.mxu0 0.0
        %1100 = vmatpush2.msra.mxu0 0.0
        %1101 = vmatprep.subr.mxu0 0.0
        %1102 = vmatpush2.msra.mxu0 0.0
        %1103 = vmatprep.subr.mxu0 0.0
        %1104 = vmatpush2.msra.mxu0 0.0
        %1105 = vmatprep.subr.mxu0 0.0
        %1106 = vmatpush2.msra.mxu0 0.0
        %1107 = vmatprep.subr.mxu0 0.0
        %1108 = vmatpush2.msra.mxu0 0.0
        %1109 = vmatprep.subr.mxu0 0.0
        %1110 = vmatpush2.msra.mxu0 0.0
        %1111 = vmatprep.subr.mxu0 0.0
        %1112 = vmatpush2.msra.mxu0 0.0
        %1113 = vmatprep.subr.mxu0 0.0
        %1114 = vmatpush2.msra.mxu0 0.0
        %1115 = vmatprep.subr.mxu0 0.0
        %1116 = vmatpush2.msra.mxu0 0.0
        %1117 = vmatprep.subr.mxu0 0.0
        %1118 = vmatpush2.msra.mxu0 0.0
        %1119 = vmatprep.subr.mxu0 0.0
        %1120 = vmatpush2.msra.mxu0 0.0
        %1121 = vmatprep.subr.mxu0 0.0
        %1122 = vmatpush2.msra.mxu0 0.0
        %1123 = vmatprep.subr.mxu0 0.0
        %1124 = vmatpush2.msra.mxu0 0.0
        %1125 = vmatprep.subr.mxu0 0.0
        %1126 = vmatpush2.msra.mxu0 0.0
        %1127 = vmatprep.subr.mxu0 0.0
        %1128 = vmatpush2.msra.mxu0 0.0
        %1129 = vmatprep.subr.mxu0 0.0
        %1130 = vmatpush2.msra.mxu0 0.0
        %1131 = vmatprep.mubr.f32.mxu0 0.0
        %v1132 = vand.u32 %v797, 4294901760
        %v1133 = vsub.f32 %v797, %v1132
        %v1134 = vand.u32 %v1133, 4294901760
        %1135 = vmatmul.mubr.f32.gmra.mxu0 %v1134
        %v1136 = vpop.f32.mrf.mxu0
        %v1137 = vadd.f32 %v1053, %v1136
        %v1138 = vpop.f32.mrf.mxu0
        %v1139 = vadd.f32 %v1055, %v1138
        %1140 = vmatprep.mubr.f32.mxu0 0.0
        %v1141 = vand.u32 %v800, 4294901760
        %v1142 = vsub.f32 %v800, %v1141
        %v1143 = vand.u32 %v1142, 4294901760
        %1144 = vmatmul.mubr.f32.gmra.mxu0 %v1143
        %v1145 = vpop.f32.mrf.mxu0
        %v1146 = vadd.f32 %v1061, %v1145
        %v1147 = vpop.f32.mrf.mxu0
        %v1148 = vadd.f32 %v1063, %v1147
        %1149 = vdwg.mxu0
        %1150 = vmatprep.subr.mxu0 0.0
        %1151 = vmatpush1.msra.mxu0 0.0
        %1152 = vmatprep.subr.mxu0 0.0
        %1153 = vmatpush1.msra.mxu0 0.0
        %1154 = vmatprep.subr.mxu0 0.0
        %1155 = vmatpush1.msra.mxu0 0.0
        %1156 = vmatprep.subr.mxu0 0.0
        %1157 = vmatpush1.msra.mxu0 0.0
        %1158 = vmatprep.subr.mxu0 0.0
        %1159 = vmatpush1.msra.mxu0 0.0
        %1160 = vmatprep.subr.mxu0 0.0
        %1161 = vmatpush1.msra.mxu0 0.0
        %1162 = vmatprep.subr.mxu0 0.0
        %1163 = vmatpush1.msra.mxu0 0.0
        %1164 = vmatprep.subr.mxu0 0.0
        %1165 = vmatpush1.msra.mxu0 0.0
        %1166 = vmatprep.subr.mxu0 0.0
        %1167 = vmatpush1.msra.mxu0 0.0
        %1168 = vmatprep.subr.mxu0 0.0
        %1169 = vmatpush1.msra.mxu0 0.0
        %1170 = vmatprep.subr.mxu0 0.0
        %1171 = vmatpush1.msra.mxu0 0.0
        %1172 = vmatprep.subr.mxu0 0.0
        %1173 = vmatpush1.msra.mxu0 0.0
        %1174 = vmatprep.subr.mxu0 0.0
        %1175 = vmatpush1.msra.mxu0 0.0
        %1176 = vmatprep.subr.mxu0 0.0
        %1177 = vmatpush1.msra.mxu0 0.0
        %1178 = vmatprep.subr.mxu0 0.0
        %1179 = vmatpush1.msra.mxu0 0.0
        %v1180 = vand.u32 %v772, 4294901760
        %v1181 = vsub.f32 %v772, %v1180
        %v1182 = vand.u32 %v1181, 4294901760
        %1183 = vmatprep.subr.mxu0 %v1182
        %v1184 = vand.u32 %v770, 4294901760
        %v1185 = vsub.f32 %v770, %v1184
        %v1186 = vand.u32 %v1185, 4294901760
        %1187 = vmatpush1.msra.mxu0 %v1186
        %1188 = vmatprep.subr.mxu0 0.0
        %1189 = vmatpush2.msra.mxu0 0.0
        %1190 = vmatprep.subr.mxu0 0.0
        %1191 = vmatpush2.msra.mxu0 0.0
        %1192 = vmatprep.subr.mxu0 0.0
        %1193 = vmatpush2.msra.mxu0 0.0
        %1194 = vmatprep.subr.mxu0 0.0
        %1195 = vmatpush2.msra.mxu0 0.0
        %1196 = vmatprep.subr.mxu0 0.0
        %1197 = vmatpush2.msra.mxu0 0.0
        %1198 = vmatprep.subr.mxu0 0.0
        %1199 = vmatpush2.msra.mxu0 0.0
        %1200 = vmatprep.subr.mxu0 0.0
        %1201 = vmatpush2.msra.mxu0 0.0
        %1202 = vmatprep.subr.mxu0 0.0
        %1203 = vmatpush2.msra.mxu0 0.0
        %1204 = vmatprep.subr.mxu0 0.0
        %1205 = vmatpush2.msra.mxu0 0.0
        %1206 = vmatprep.subr.mxu0 0.0
        %1207 = vmatpush2.msra.mxu0 0.0
        %1208 = vmatprep.subr.mxu0 0.0
        %1209 = vmatpush2.msra.mxu0 0.0
        %1210 = vmatprep.subr.mxu0 0.0
        %1211 = vmatpush2.msra.mxu0 0.0
        %1212 = vmatprep.subr.mxu0 0.0
        %1213 = vmatpush2.msra.mxu0 0.0
        %1214 = vmatprep.subr.mxu0 0.0
        %1215 = vmatpush2.msra.mxu0 0.0
        %1216 = vmatprep.subr.mxu0 0.0
        %1217 = vmatpush2.msra.mxu0 0.0
        %1218 = vmatprep.subr.mxu0 0.0
        %1219 = vmatpush2.msra.mxu0 0.0
        %1220 = vmatprep.mubr.f32.mxu0 0.0
        %v1221 = vand.u32 %v797, 4294901760
        %1222 = vmatmul.mubr.f32.gmra.mxu0 %v1221
        %v1223 = vpop.f32.mrf.mxu0
        %v1224 = vadd.f32 %v1137, %v1223
        %v1225 = vpop.f32.mrf.mxu0
        %v1226 = vadd.f32 %v1139, %v1225
        %1227 = vmatprep.mubr.f32.mxu0 0.0
        %v1228 = vand.u32 %v800, 4294901760
        %1229 = vmatmul.mubr.f32.gmra.mxu0 %v1228
        %v1230 = vpop.f32.mrf.mxu0
        %v1231 = vadd.f32 %v1146, %v1230
        %v1232 = vpop.f32.mrf.mxu0
        %v1233 = vadd.f32 %v1148, %v1232
        %1234 = vdwg.mxu0
        %1235 = vmatprep.subr.mxu0 0.0
        %1236 = vmatpush1.msra.mxu0 0.0
        %1237 = vmatprep.subr.mxu0 0.0
        %1238 = vmatpush1.msra.mxu0 0.0
        %1239 = vmatprep.subr.mxu0 0.0
        %1240 = vmatpush1.msra.mxu0 0.0
        %1241 = vmatprep.subr.mxu0 0.0
        %1242 = vmatpush1.msra.mxu0 0.0
        %1243 = vmatprep.subr.mxu0 0.0
        %1244 = vmatpush1.msra.mxu0 0.0
        %1245 = vmatprep.subr.mxu0 0.0
        %1246 = vmatpush1.msra.mxu0 0.0
        %1247 = vmatprep.subr.mxu0 0.0
        %1248 = vmatpush1.msra.mxu0 0.0
        %1249 = vmatprep.subr.mxu0 0.0
        %1250 = vmatpush1.msra.mxu0 0.0
        %1251 = vmatprep.subr.mxu0 0.0
        %1252 = vmatpush1.msra.mxu0 0.0
        %1253 = vmatprep.subr.mxu0 0.0
        %1254 = vmatpush1.msra.mxu0 0.0
        %1255 = vmatprep.subr.mxu0 0.0
        %1256 = vmatpush1.msra.mxu0 0.0
        %1257 = vmatprep.subr.mxu0 0.0
        %1258 = vmatpush1.msra.mxu0 0.0
        %1259 = vmatprep.subr.mxu0 0.0
        %1260 = vmatpush1.msra.mxu0 0.0
        %1261 = vmatprep.subr.mxu0 0.0
        %1262 = vmatpush1.msra.mxu0 0.0
        %1263 = vmatprep.subr.mxu0 0.0
        %1264 = vmatpush1.msra.mxu0 0.0
        %v1265 = vand.u32 %v772, 4294901760
        %1266 = vmatprep.subr.mxu0 %v1265
        %v1267 = vand.u32 %v770, 4294901760
        %1268 = vmatpush1.msra.mxu0 %v1267
        %1269 = vmatprep.subr.mxu0 0.0
        %1270 = vmatpush2.msra.mxu0 0.0
        %1271 = vmatprep.subr.mxu0 0.0
        %1272 = vmatpush2.msra.mxu0 0.0
        %1273 = vmatprep.subr.mxu0 0.0
        %1274 = vmatpush2.msra.mxu0 0.0
        %1275 = vmatprep.subr.mxu0 0.0
        %1276 = vmatpush2.msra.mxu0 0.0
        %1277 = vmatprep.subr.mxu0 0.0
        %1278 = vmatpush2.msra.mxu0 0.0
        %1279 = vmatprep.subr.mxu0 0.0
        %1280 = vmatpush2.msra.mxu0 0.0
        %1281 = vmatprep.subr.mxu0 0.0
        %1282 = vmatpush2.msra.mxu0 0.0
        %1283 = vmatprep.subr.mxu0 0.0
        %1284 = vmatpush2.msra.mxu0 0.0
        %1285 = vmatprep.subr.mxu0 0.0
        %1286 = vmatpush2.msra.mxu0 0.0
        %1287 = vmatprep.subr.mxu0 0.0
        %1288 = vmatpush2.msra.mxu0 0.0
        %1289 = vmatprep.subr.mxu0 0.0
        %1290 = vmatpush2.msra.mxu0 0.0
        %1291 = vmatprep.subr.mxu0 0.0
        %1292 = vmatpush2.msra.mxu0 0.0
        %1293 = vmatprep.subr.mxu0 0.0
        %1294 = vmatpush2.msra.mxu0 0.0
        %1295 = vmatprep.subr.mxu0 0.0
        %1296 = vmatpush2.msra.mxu0 0.0
        %1297 = vmatprep.subr.mxu0 0.0
        %1298 = vmatpush2.msra.mxu0 0.0
        %1299 = vmatprep.subr.mxu0 0.0
        %1300 = vmatpush2.msra.mxu0 0.0
        %1301 = vmatprep.mubr.f32.mxu0 0.0
        %v1302 = vand.u32 %v797, 4294901760
        %1303 = vmatmul.mubr.f32.gmra.mxu0 %v1302
        %v1304 = vpop.f32.mrf.mxu0
        %v1305 = vadd.f32 %v1224, %v1304
        %v1306 = vpop.f32.mrf.mxu0
        %v1307 = vadd.f32 %v1226, %v1306
        %1308 = vmatprep.mubr.f32.mxu0 0.0
        %v1309 = vand.u32 %v800, 4294901760
        %1310 = vmatmul.mubr.f32.gmra.mxu0 %v1309
        %v1311 = vpop.f32.mrf.mxu0
        %v1312 = vadd.f32 %v1231, %v1311
        %v1313 = vpop.f32.mrf.mxu0
        %v1314 = vadd.f32 %v1233, %v1313
        %1315 = vdwg.mxu0
        %v1316 = vmax.f32 %v1305, 0.0
        %v1317 = vmax.f32 %v1307, 0.0
        %v1318 = vmax.f32 %v1312, 0.0
        %v1319 = vmax.f32 %v1314, 0.0
        %v1322 = vrot.slane %v1318, 4
        %v1323 = vrot.slane %v1319, 4
        %1326 = vrot.lane.b32.xlu0 %v1322, 17
        %v1327 = vpop.permute.xlu0 %1326
        %1328 = vrot.lane.b32.xlu0 %v1323, 17
        %v1329 = vpop.permute.xlu0 %1328
        %v1330 = vlaneseq
        %v1331 = vand.u32 %v1330, 127
        %vm1332 = vcmp.lt.s32.totalorder %v1331, 17
        %v1333 = vsel %vm1332, %v1327, %v1329
        %v1334 = vsel %vm1332, %v1329, %v1327
        %v1335 = vld [vmem:[%s3] ss:$8 sm:$0x3]
        %v1337 = vlaneseq
        %v1338 = vshrl.u32 %v1337, 7
        %v1339 = vsub.s32 0, %v1338
        %v1340 = vrot.slane %v1335, %v1339
        %v1341 = vlaneseq
        %v1342 = vshrl.u32 %v1341, 7
        %v1343 = vsub.s32 1, %v1342
        %v1344 = vrot.slane %v1335, %v1343
        %v1347 = vmul.f32 %v1334, %v1340
        %v1348 = vmul.f32 %v1333, %v1344
        %1349 = vst [vmem:[#allocation2] sm:$0xf] %v1347
        %1350 = vst [vmem:[#allocation2 + $0x8] sm:$0xf] %v1348
        %1351 = vrot.lane.b32.xlu0 %v1318, 16
        %v1352 = vpop.permute.xlu0 %1351
        %1353 = vrot.lane.b32.xlu0 %v1319, 16
        %v1354 = vpop.permute.xlu0 %1353
        %vm1355 = vcmp.lt.s32.totalorder %v1331, 16
        %v1356 = vsel %vm1355, %v1352, %v1354
        %v1357 = vsel %vm1355, %v1354, %v1352
        %s1358 = scalar_lea.vmem %s3, 1
        %v1359 = vld [vmem:[%s1358] ss:$8 sm:$0x3]
        %v1361 = vlaneseq
        %v1362 = vshrl.u32 %v1361, 7
        %v1363 = vsub.s32 0, %v1362
        %v1364 = vrot.slane %v1359, %v1363
        %v1365 = vlaneseq
        %v1366 = vshrl.u32 %v1365, 7
        %v1367 = vsub.s32 1, %v1366
        %v1368 = vrot.slane %v1359, %v1367
        %v1371 = vmul.f32 %v1357, %v1364
        %v1372 = vmul.f32 %v1356, %v1368
        %v1375 = vrot.slane %v1371, 4
        %v1376 = vrot.slane %v1372, 4
        %1379 = vst [vmem:[#allocation2] sm:$0xf0] %v1375
        %1380 = vst [vmem:[#allocation2 + $0x8] sm:$0xf0] %v1376
        %1381 = vrot.lane.b32.xlu0 %v1322, 16
        %v1382 = vpop.permute.xlu0 %1381
        %1383 = vrot.lane.b32.xlu0 %v1323, 16
        %v1384 = vpop.permute.xlu0 %1383
        %v1385 = vsel %vm1355, %v1382, %v1384
        %v1386 = vsel %vm1355, %v1384, %v1382
        %v1387 = vld [vmem:[%s1358] ss:$8 sm:$0x3]
        %v1389 = vlaneseq
        %v1390 = vshrl.u32 %v1389, 7
        %v1391 = vsub.s32 0, %v1390
        %v1392 = vrot.slane %v1387, %v1391
        %v1393 = vlaneseq
        %v1394 = vshrl.u32 %v1393, 7
        %v1395 = vsub.s32 1, %v1394
        %v1396 = vrot.slane %v1387, %v1395
        %v1399 = vmul.f32 %v1386, %v1392
        %v1400 = vmul.f32 %v1385, %v1396
        %1401 = vst [vmem:[#allocation2 + $0x10] sm:$0xf] %v1399
        %1402 = vst [vmem:[#allocation2 + $0x18] sm:$0xf] %v1400
        %v1405 = vrot.slane %v1316, 4
        %v1406 = vrot.slane %v1317, 4
        %1409 = vrot.lane.b32.xlu0 %v1405, 1
        %v1410 = vpop.permute.xlu0 %1409
        %1411 = vrot.lane.b32.xlu0 %v1406, 1
        %v1412 = vpop.permute.xlu0 %1411
        %vm1413 = vcmp.lt.s32.totalorder %v1331, 1
        %v1414 = vsel %vm1413, %v1410, %v1412
        %v1415 = vsel %vm1413, %v1412, %v1410
        %s1416 = scalar_lea.vmem %s3, 3
        %v1417 = vld [vmem:[%s1416] ss:$8 sm:$0x3]
        %v1419 = vlaneseq
        %v1420 = vshrl.u32 %v1419, 7
        %v1421 = vsub.s32 0, %v1420
        %v1422 = vrot.slane %v1417, %v1421
        %v1423 = vlaneseq
        %v1424 = vshrl.u32 %v1423, 7
        %v1425 = vsub.s32 1, %v1424
        %v1426 = vrot.slane %v1417, %v1425
        %v1429 = vmul.f32 %v1415, %v1422
        %v1430 = vmul.f32 %v1414, %v1426
        %v1433 = vrot.slane %v1429, 4
        %v1434 = vrot.slane %v1430, 4
        %1437 = vst [vmem:[#allocation2 + $0x10] sm:$0xf0] %v1433
        %1438 = vst [vmem:[#allocation2 + $0x18] sm:$0xf0] %v1434
        %1439 = vst [vmem:[#allocation2 + $0x20] sm:$0xf] %v1316
        %1440 = vst [vmem:[#allocation2 + $0x28] sm:$0xf] %v1317
        %1441 = vst [vmem:[#allocation2 + $0x20] sm:$0xf0] %v1316
        %1442 = vst [vmem:[#allocation2 + $0x28] sm:$0xf0] %v1317
        %1443 = vrot.lane.b32.xlu0 %v1322, 1
        %v1444 = vpop.permute.xlu0 %1443
        %1445 = vrot.lane.b32.xlu0 %v1323, 1
        %v1446 = vpop.permute.xlu0 %1445
        %v1447 = vsel %vm1413, %v1444, %v1446
        %v1448 = vsel %vm1413, %v1446, %v1444
        %v1449 = vld [vmem:[%s1416] ss:$8 sm:$0x3]
        %v1451 = vlaneseq
        %v1452 = vshrl.u32 %v1451, 7
        %v1453 = vsub.s32 0, %v1452
        %v1454 = vrot.slane %v1449, %v1453
        %v1455 = vlaneseq
        %v1456 = vshrl.u32 %v1455, 7
        %v1457 = vsub.s32 1, %v1456
        %v1458 = vrot.slane %v1449, %v1457
        %v1461 = vmul.f32 %v1448, %v1454
        %v1462 = vmul.f32 %v1447, %v1458
        %1463 = vst [vmem:[#allocation2 + $0x30] sm:$0xf] %v1461
        %1464 = vst [vmem:[#allocation2 + $0x38] sm:$0xf] %v1462
        %1465 = vst [vmem:[#allocation2 + $0x30] sm:$0xf0] %v1322
        %1466 = vst [vmem:[#allocation2 + $0x38] sm:$0xf0] %v1323
        %1467 = vst [vmem:[#allocation2 + $0x40] sm:$0xf] %v1322
        %1468 = vst [vmem:[#allocation2 + $0x48] sm:$0xf] %v1323
        %v1469 = vld [vmem:[%s1 + $0x30] sm:$0xff]
        %v1470 = vld [vmem:[#allocation2] sm:$0xff]
        %v1471 = vld [vmem:[#allocation2 + $0x8] sm:$0xff]
        %v1472 = vld [vmem:[#allocation2 + $0x10] sm:$0xff]
        %v1473 = vld [vmem:[#allocation2 + $0x18] sm:$0xff]
        %v1474 = vld [vmem:[#allocation2 + $0x20] sm:$0xff]
        %v1475 = vld [vmem:[#allocation2 + $0x28] sm:$0xff]
        %v1476 = vld [vmem:[#allocation2 + $0x30] sm:$0xff]
        %v1477 = vld [vmem:[#allocation2 + $0x38] sm:$0xff]
        %v1478 = vld [vmem:[#allocation2 + $0x40] sm:$0xf]
        %v1479 = vld [vmem:[#allocation2 + $0x48] sm:$0xf]
        %v1480 = vld [vmem:[%s2 + $0x20] sm:$0xff]
        %1482 = vset.pattern.permute.xlu0 0
        %1483 = vperm.xlu0 %1482, %v1480
        %v1484 = vpop.permute.xlu0 %1483
        %vm1486 = vcmask 293888
        %v1488 = vsel %vm1486, %v1469, 0
        %vm1490 = vcmask 1043456
        %v1492 = vsel %vm1490, %v1478, 0
        %v1495 = vsel %vm1490, %v1479, 0
        %1497 = vmatprep.subr.mxu0 0.0
        %1498 = vmatpush1.msra.mxu0 0.0
        %1499 = vmatprep.subr.mxu0 0.0
        %1500 = vmatpush1.msra.mxu0 0.0
        %1501 = vmatprep.subr.mxu0 0.0
        %1502 = vmatpush1.msra.mxu0 0.0
        %1503 = vmatprep.subr.mxu0 0.0
        %1504 = vmatpush1.msra.mxu0 0.0
        %1505 = vmatprep.subr.mxu0 0.0
        %1506 = vmatpush1.msra.mxu0 0.0
        %1507 = vmatprep.subr.mxu0 0.0
        %1508 = vmatpush1.msra.mxu0 0.0
        %1509 = vmatprep.subr.mxu0 0.0
        %1510 = vmatpush1.msra.mxu0 0.0
        %1511 = vmatprep.subr.mxu0 0.0
        %1512 = vmatpush1.msra.mxu0 0.0
        %1513 = vmatprep.subr.mxu0 0.0
        %1514 = vmatpush1.msra.mxu0 0.0
        %1515 = vmatprep.subr.mxu0 0.0
        %1516 = vmatpush1.msra.mxu0 0.0
        %1517 = vmatprep.subr.mxu0 0.0
        %1518 = vmatpush1.msra.mxu0 0.0
        %v1519 = vand.u32 %v1495, 4294901760
        %1520 = vmatprep.subr.mxu0 %v1519
        %v1521 = vand.u32 %v1492, 4294901760
        %1522 = vmatpush1.msra.mxu0 %v1521
        %v1523 = vand.u32 %v1477, 4294901760
        %1524 = vmatprep.subr.mxu0 %v1523
        %v1525 = vand.u32 %v1476, 4294901760
        %1526 = vmatpush1.msra.mxu0 %v1525
        %v1527 = vand.u32 %v1475, 4294901760
        %1528 = vmatprep.subr.mxu0 %v1527
        %v1529 = vand.u32 %v1474, 4294901760
        %1530 = vmatpush1.msra.mxu0 %v1529
        %v1531 = vand.u32 %v1473, 4294901760
        %1532 = vmatprep.subr.mxu0 %v1531
        %v1533 = vand.u32 %v1472, 4294901760
        %1534 = vmatpush1.msra.mxu0 %v1533
        %v1535 = vand.u32 %v1471, 4294901760
        %1536 = vmatprep.subr.mxu0 %v1535
        %v1537 = vand.u32 %v1470, 4294901760
        %1538 = vmatpush1.msra.mxu0 %v1537
        %1539 = vmatprep.subr.mxu0 0.0
        %1540 = vmatpush2.msra.mxu0 0.0
        %1541 = vmatprep.subr.mxu0 0.0
        %1542 = vmatpush2.msra.mxu0 0.0
        %1543 = vmatprep.subr.mxu0 0.0
        %1544 = vmatpush2.msra.mxu0 0.0
        %1545 = vmatprep.subr.mxu0 0.0
        %1546 = vmatpush2.msra.mxu0 0.0
        %1547 = vmatprep.subr.mxu0 0.0
        %1548 = vmatpush2.msra.mxu0 0.0
        %1549 = vmatprep.subr.mxu0 0.0
        %1550 = vmatpush2.msra.mxu0 0.0
        %1551 = vmatprep.subr.mxu0 0.0
        %1552 = vmatpush2.msra.mxu0 0.0
        %1553 = vmatprep.subr.mxu0 0.0
        %1554 = vmatpush2.msra.mxu0 0.0
        %1555 = vmatprep.subr.mxu0 0.0
        %1556 = vmatpush2.msra.mxu0 0.0
        %1557 = vmatprep.subr.mxu0 0.0
        %1558 = vmatpush2.msra.mxu0 0.0
        %1559 = vmatprep.subr.mxu0 0.0
        %1560 = vmatpush2.msra.mxu0 0.0
        %1561 = vmatprep.subr.mxu0 0.0
        %1562 = vmatpush2.msra.mxu0 0.0
        %1563 = vmatprep.subr.mxu0 0.0
        %1564 = vmatpush2.msra.mxu0 0.0
        %1565 = vmatprep.subr.mxu0 0.0
        %1566 = vmatpush2.msra.mxu0 0.0
        %1567 = vmatprep.subr.mxu0 0.0
        %1568 = vmatpush2.msra.mxu0 0.0
        %1569 = vmatprep.subr.mxu0 0.0
        %1570 = vmatpush2.msra.mxu0 0.0
        %1571 = vmatprep.mubr.f32.mxu0 0.0
        %v1572 = vand.u32 %v1488, 4294901760
        %v1573 = vsub.f32 %v1488, %v1572
        %v1574 = vand.u32 %v1573, 4294901760
        %v1575 = vsub.f32 %v1573, %v1574
        %v1576 = vand.u32 %v1575, 4294901760
        %1577 = vmatmul.mubr.f32.gmra.mxu0 %v1576
        %v1578 = vpop.f32.mrf.mxu0
        %v1579 = vadd.f32 %v1484, %v1578
        %v1580 = vpop.f32.mrf.mxu0
        %v1581 = vadd.f32 %v1484, %v1580
        %1582 = vdwg.mxu0
        %1583 = vmatprep.subr.mxu0 0.0
        %1584 = vmatpush1.msra.mxu0 0.0
        %1585 = vmatprep.subr.mxu0 0.0
        %1586 = vmatpush1.msra.mxu0 0.0
        %1587 = vmatprep.subr.mxu0 0.0
        %1588 = vmatpush1.msra.mxu0 0.0
        %1589 = vmatprep.subr.mxu0 0.0
        %1590 = vmatpush1.msra.mxu0 0.0
        %1591 = vmatprep.subr.mxu0 0.0
        %1592 = vmatpush1.msra.mxu0 0.0
        %1593 = vmatprep.subr.mxu0 0.0
        %1594 = vmatpush1.msra.mxu0 0.0
        %1595 = vmatprep.subr.mxu0 0.0
        %1596 = vmatpush1.msra.mxu0 0.0
        %1597 = vmatprep.subr.mxu0 0.0
        %1598 = vmatpush1.msra.mxu0 0.0
        %1599 = vmatprep.subr.mxu0 0.0
        %1600 = vmatpush1.msra.mxu0 0.0
        %1601 = vmatprep.subr.mxu0 0.0
        %1602 = vmatpush1.msra.mxu0 0.0
        %1603 = vmatprep.subr.mxu0 0.0
        %1604 = vmatpush1.msra.mxu0 0.0
        %v1605 = vand.u32 %v1495, 4294901760
        %v1606 = vsub.f32 %v1495, %v1605
        %v1607 = vand.u32 %v1606, 4294901760
        %v1608 = vsub.f32 %v1606, %v1607
        %v1609 = vand.u32 %v1608, 4294901760
        %1610 = vmatprep.subr.mxu0 %v1609
        %v1611 = vand.u32 %v1492, 4294901760
        %v1612 = vsub.f32 %v1492, %v1611
        %v1613 = vand.u32 %v1612, 4294901760
        %v1614 = vsub.f32 %v1612, %v1613
        %v1615 = vand.u32 %v1614, 4294901760
        %1616 = vmatpush1.msra.mxu0 %v1615
        %v1617 = vand.u32 %v1477, 4294901760
        %v1618 = vsub.f32 %v1477, %v1617
        %v1619 = vand.u32 %v1618, 4294901760
        %v1620 = vsub.f32 %v1618, %v1619
        %v1621 = vand.u32 %v1620, 4294901760
        %1622 = vmatprep.subr.mxu0 %v1621
        %v1623 = vand.u32 %v1476, 4294901760
        %v1624 = vsub.f32 %v1476, %v1623
        %v1625 = vand.u32 %v1624, 4294901760
        %v1626 = vsub.f32 %v1624, %v1625
        %v1627 = vand.u32 %v1626, 4294901760
        %1628 = vmatpush1.msra.mxu0 %v1627
        %v1629 = vand.u32 %v1475, 4294901760
        %v1630 = vsub.f32 %v1475, %v1629
        %v1631 = vand.u32 %v1630, 4294901760
        %v1632 = vsub.f32 %v1630, %v1631
        %v1633 = vand.u32 %v1632, 4294901760
        %1634 = vmatprep.subr.mxu0 %v1633
        %v1635 = vand.u32 %v1474, 4294901760
        %v1636 = vsub.f32 %v1474, %v1635
        %v1637 = vand.u32 %v1636, 4294901760
        %v1638 = vsub.f32 %v1636, %v1637
        %v1639 = vand.u32 %v1638, 4294901760
        %1640 = vmatpush1.msra.mxu0 %v1639
        %v1641 = vand.u32 %v1473, 4294901760
        %v1642 = vsub.f32 %v1473, %v1641
        %v1643 = vand.u32 %v1642, 4294901760
        %v1644 = vsub.f32 %v1642, %v1643
        %v1645 = vand.u32 %v1644, 4294901760
        %1646 = vmatprep.subr.mxu0 %v1645
        %v1647 = vand.u32 %v1472, 4294901760
        %v1648 = vsub.f32 %v1472, %v1647
        %v1649 = vand.u32 %v1648, 4294901760
        %v1650 = vsub.f32 %v1648, %v1649
        %v1651 = vand.u32 %v1650, 4294901760
        %1652 = vmatpush1.msra.mxu0 %v1651
        %v1653 = vand.u32 %v1471, 4294901760
        %v1654 = vsub.f32 %v1471, %v1653
        %v1655 = vand.u32 %v1654, 4294901760
        %v1656 = vsub.f32 %v1654, %v1655
        %v1657 = vand.u32 %v1656, 4294901760
        %1658 = vmatprep.subr.mxu0 %v1657
        %v1659 = vand.u32 %v1470, 4294901760
        %v1660 = vsub.f32 %v1470, %v1659
        %v1661 = vand.u32 %v1660, 4294901760
        %v1662 = vsub.f32 %v1660, %v1661
        %v1663 = vand.u32 %v1662, 4294901760
        %1664 = vmatpush1.msra.mxu0 %v1663
        %1665 = vmatprep.subr.mxu0 0.0
        %1666 = vmatpush2.msra.mxu0 0.0
        %1667 = vmatprep.subr.mxu0 0.0
        %1668 = vmatpush2.msra.mxu0 0.0
        %1669 = vmatprep.subr.mxu0 0.0
        %1670 = vmatpush2.msra.mxu0 0.0
        %1671 = vmatprep.subr.mxu0 0.0
        %1672 = vmatpush2.msra.mxu0 0.0
        %1673 = vmatprep.subr.mxu0 0.0
        %1674 = vmatpush2.msra.mxu0 0.0
        %1675 = vmatprep.subr.mxu0 0.0
        %1676 = vmatpush2.msra.mxu0 0.0
        %1677 = vmatprep.subr.mxu0 0.0
        %1678 = vmatpush2.msra.mxu0 0.0
        %1679 = vmatprep.subr.mxu0 0.0
        %1680 = vmatpush2.msra.mxu0 0.0
        %1681 = vmatprep.subr.mxu0 0.0
        %1682 = vmatpush2.msra.mxu0 0.0
        %1683 = vmatprep.subr.mxu0 0.0
        %1684 = vmatpush2.msra.mxu0 0.0
        %1685 = vmatprep.subr.mxu0 0.0
        %1686 = vmatpush2.msra.mxu0 0.0
        %1687 = vmatprep.subr.mxu0 0.0
        %1688 = vmatpush2.msra.mxu0 0.0
        %1689 = vmatprep.subr.mxu0 0.0
        %1690 = vmatpush2.msra.mxu0 0.0
        %1691 = vmatprep.subr.mxu0 0.0
        %1692 = vmatpush2.msra.mxu0 0.0
        %1693 = vmatprep.subr.mxu0 0.0
        %1694 = vmatpush2.msra.mxu0 0.0
        %1695 = vmatprep.subr.mxu0 0.0
        %1696 = vmatpush2.msra.mxu0 0.0
        %1697 = vmatprep.mubr.f32.mxu0 0.0
        %v1698 = vand.u32 %v1488, 4294901760
        %1699 = vmatmul.mubr.f32.gmra.mxu0 %v1698
        %v1700 = vpop.f32.mrf.mxu0
        %v1701 = vadd.f32 %v1579, %v1700
        %v1702 = vpop.f32.mrf.mxu0
        %v1703 = vadd.f32 %v1581, %v1702
        %1704 = vdwg.mxu0
        %1705 = vmatprep.subr.mxu0 0.0
        %1706 = vmatpush1.msra.mxu0 0.0
        %1707 = vmatprep.subr.mxu0 0.0
        %1708 = vmatpush1.msra.mxu0 0.0
        %1709 = vmatprep.subr.mxu0 0.0
        %1710 = vmatpush1.msra.mxu0 0.0
        %1711 = vmatprep.subr.mxu0 0.0
        %1712 = vmatpush1.msra.mxu0 0.0
        %1713 = vmatprep.subr.mxu0 0.0
        %1714 = vmatpush1.msra.mxu0 0.0
        %1715 = vmatprep.subr.mxu0 0.0
        %1716 = vmatpush1.msra.mxu0 0.0
        %1717 = vmatprep.subr.mxu0 0.0
        %1718 = vmatpush1.msra.mxu0 0.0
        %1719 = vmatprep.subr.mxu0 0.0
        %1720 = vmatpush1.msra.mxu0 0.0
        %1721 = vmatprep.subr.mxu0 0.0
        %1722 = vmatpush1.msra.mxu0 0.0
        %1723 = vmatprep.subr.mxu0 0.0
        %1724 = vmatpush1.msra.mxu0 0.0
        %1725 = vmatprep.subr.mxu0 0.0
        %1726 = vmatpush1.msra.mxu0 0.0
        %v1727 = vand.u32 %v1495, 4294901760
        %v1728 = vsub.f32 %v1495, %v1727
        %1729 = vmatprep.subr.mxu0 %v1728
        %v1730 = vand.u32 %v1492, 4294901760
        %v1731 = vsub.f32 %v1492, %v1730
        %1732 = vmatpush1.msra.mxu0 %v1731
        %v1733 = vand.u32 %v1477, 4294901760
        %v1734 = vsub.f32 %v1477, %v1733
        %1735 = vmatprep.subr.mxu0 %v1734
        %v1736 = vand.u32 %v1476, 4294901760
        %v1737 = vsub.f32 %v1476, %v1736
        %1738 = vmatpush1.msra.mxu0 %v1737
        %v1739 = vand.u32 %v1475, 4294901760
        %v1740 = vsub.f32 %v1475, %v1739
        %1741 = vmatprep.subr.mxu0 %v1740
        %v1742 = vand.u32 %v1474, 4294901760
        %v1743 = vsub.f32 %v1474, %v1742
        %1744 = vmatpush1.msra.mxu0 %v1743
        %v1745 = vand.u32 %v1473, 4294901760
        %v1746 = vsub.f32 %v1473, %v1745
        %1747 = vmatprep.subr.mxu0 %v1746
        %v1748 = vand.u32 %v1472, 4294901760
        %v1749 = vsub.f32 %v1472, %v1748
        %1750 = vmatpush1.msra.mxu0 %v1749
        %v1751 = vand.u32 %v1471, 4294901760
        %v1752 = vsub.f32 %v1471, %v1751
        %1753 = vmatprep.subr.mxu0 %v1752
        %v1754 = vand.u32 %v1470, 4294901760
        %v1755 = vsub.f32 %v1470, %v1754
        %1756 = vmatpush1.msra.mxu0 %v1755
        %1757 = vmatprep.subr.mxu0 0.0
        %1758 = vmatpush2.msra.mxu0 0.0
        %1759 = vmatprep.subr.mxu0 0.0
        %1760 = vmatpush2.msra.mxu0 0.0
        %1761 = vmatprep.subr.mxu0 0.0
        %1762 = vmatpush2.msra.mxu0 0.0
        %1763 = vmatprep.subr.mxu0 0.0
        %1764 = vmatpush2.msra.mxu0 0.0
        %1765 = vmatprep.subr.mxu0 0.0
        %1766 = vmatpush2.msra.mxu0 0.0
        %1767 = vmatprep.subr.mxu0 0.0
        %1768 = vmatpush2.msra.mxu0 0.0
        %1769 = vmatprep.subr.mxu0 0.0
        %1770 = vmatpush2.msra.mxu0 0.0
        %1771 = vmatprep.subr.mxu0 0.0
        %1772 = vmatpush2.msra.mxu0 0.0
        %1773 = vmatprep.subr.mxu0 0.0
        %1774 = vmatpush2.msra.mxu0 0.0
        %1775 = vmatprep.subr.mxu0 0.0
        %1776 = vmatpush2.msra.mxu0 0.0
        %1777 = vmatprep.subr.mxu0 0.0
        %1778 = vmatpush2.msra.mxu0 0.0
        %1779 = vmatprep.subr.mxu0 0.0
        %1780 = vmatpush2.msra.mxu0 0.0
        %1781 = vmatprep.subr.mxu0 0.0
        %1782 = vmatpush2.msra.mxu0 0.0
        %1783 = vmatprep.subr.mxu0 0.0
        %1784 = vmatpush2.msra.mxu0 0.0
        %1785 = vmatprep.subr.mxu0 0.0
        %1786 = vmatpush2.msra.mxu0 0.0
        %1787 = vmatprep.subr.mxu0 0.0
        %1788 = vmatpush2.msra.mxu0 0.0
        %1789 = vmatprep.mubr.f32.mxu0 0.0
        %v1790 = vand.u32 %v1488, 4294901760
        %v1791 = vsub.f32 %v1488, %v1790
        %1792 = vmatmul.mubr.f32.gmra.mxu0 %v1791
        %v1793 = vpop.f32.mrf.mxu0
        %v1794 = vadd.f32 %v1701, %v1793
        %v1795 = vpop.f32.mrf.mxu0
        %v1796 = vadd.f32 %v1703, %v1795
        %1797 = vdwg.mxu0
        %1798 = vmatprep.subr.mxu0 0.0
        %1799 = vmatpush1.msra.mxu0 0.0
        %1800 = vmatprep.subr.mxu0 0.0
        %1801 = vmatpush1.msra.mxu0 0.0
        %1802 = vmatprep.subr.mxu0 0.0
        %1803 = vmatpush1.msra.mxu0 0.0
        %1804 = vmatprep.subr.mxu0 0.0
        %1805 = vmatpush1.msra.mxu0 0.0
        %1806 = vmatprep.subr.mxu0 0.0
        %1807 = vmatpush1.msra.mxu0 0.0
        %1808 = vmatprep.subr.mxu0 0.0
        %1809 = vmatpush1.msra.mxu0 0.0
        %1810 = vmatprep.subr.mxu0 0.0
        %1811 = vmatpush1.msra.mxu0 0.0
        %1812 = vmatprep.subr.mxu0 0.0
        %1813 = vmatpush1.msra.mxu0 0.0
        %1814 = vmatprep.subr.mxu0 0.0
        %1815 = vmatpush1.msra.mxu0 0.0
        %1816 = vmatprep.subr.mxu0 0.0
        %1817 = vmatpush1.msra.mxu0 0.0
        %1818 = vmatprep.subr.mxu0 0.0
        %1819 = vmatpush1.msra.mxu0 0.0
        %v1820 = vand.u32 %v1495, 4294901760
        %1821 = vmatprep.subr.mxu0 %v1820
        %v1822 = vand.u32 %v1492, 4294901760
        %1823 = vmatpush1.msra.mxu0 %v1822
        %v1824 = vand.u32 %v1477, 4294901760
        %1825 = vmatprep.subr.mxu0 %v1824
        %v1826 = vand.u32 %v1476, 4294901760
        %1827 = vmatpush1.msra.mxu0 %v1826
        %v1828 = vand.u32 %v1475, 4294901760
        %1829 = vmatprep.subr.mxu0 %v1828
        %v1830 = vand.u32 %v1474, 4294901760
        %1831 = vmatpush1.msra.mxu0 %v1830
        %v1832 = vand.u32 %v1473, 4294901760
        %1833 = vmatprep.subr.mxu0 %v1832
        %v1834 = vand.u32 %v1472, 4294901760
        %1835 = vmatpush1.msra.mxu0 %v1834
        %v1836 = vand.u32 %v1471, 4294901760
        %1837 = vmatprep.subr.mxu0 %v1836
        %v1838 = vand.u32 %v1470, 4294901760
        %1839 = vmatpush1.msra.mxu0 %v1838
        %1840 = vmatprep.subr.mxu0 0.0
        %1841 = vmatpush2.msra.mxu0 0.0
        %1842 = vmatprep.subr.mxu0 0.0
        %1843 = vmatpush2.msra.mxu0 0.0
        %1844 = vmatprep.subr.mxu0 0.0
        %1845 = vmatpush2.msra.mxu0 0.0
        %1846 = vmatprep.subr.mxu0 0.0
        %1847 = vmatpush2.msra.mxu0 0.0
        %1848 = vmatprep.subr.mxu0 0.0
        %1849 = vmatpush2.msra.mxu0 0.0
        %1850 = vmatprep.subr.mxu0 0.0
        %1851 = vmatpush2.msra.mxu0 0.0
        %1852 = vmatprep.subr.mxu0 0.0
        %1853 = vmatpush2.msra.mxu0 0.0
        %1854 = vmatprep.subr.mxu0 0.0
        %1855 = vmatpush2.msra.mxu0 0.0
        %1856 = vmatprep.subr.mxu0 0.0
        %1857 = vmatpush2.msra.mxu0 0.0
        %1858 = vmatprep.subr.mxu0 0.0
        %1859 = vmatpush2.msra.mxu0 0.0
        %1860 = vmatprep.subr.mxu0 0.0
        %1861 = vmatpush2.msra.mxu0 0.0
        %1862 = vmatprep.subr.mxu0 0.0
        %1863 = vmatpush2.msra.mxu0 0.0
        %1864 = vmatprep.subr.mxu0 0.0
        %1865 = vmatpush2.msra.mxu0 0.0
        %1866 = vmatprep.subr.mxu0 0.0
        %1867 = vmatpush2.msra.mxu0 0.0
        %1868 = vmatprep.subr.mxu0 0.0
        %1869 = vmatpush2.msra.mxu0 0.0
        %1870 = vmatprep.subr.mxu0 0.0
        %1871 = vmatpush2.msra.mxu0 0.0
        %1872 = vmatprep.mubr.f32.mxu0 0.0
        %v1873 = vand.u32 %v1488, 4294901760
        %v1874 = vsub.f32 %v1488, %v1873
        %v1875 = vand.u32 %v1874, 4294901760
        %1876 = vmatmul.mubr.f32.gmra.mxu0 %v1875
        %v1877 = vpop.f32.mrf.mxu0
        %v1878 = vadd.f32 %v1794, %v1877
        %v1879 = vpop.f32.mrf.mxu0
        %v1880 = vadd.f32 %v1796, %v1879
        %1881 = vdwg.mxu0
        %1882 = vmatprep.subr.mxu0 0.0
        %1883 = vmatpush1.msra.mxu0 0.0
        %1884 = vmatprep.subr.mxu0 0.0
        %1885 = vmatpush1.msra.mxu0 0.0
        %1886 = vmatprep.subr.mxu0 0.0
        %1887 = vmatpush1.msra.mxu0 0.0
        %1888 = vmatprep.subr.mxu0 0.0
        %1889 = vmatpush1.msra.mxu0 0.0
        %1890 = vmatprep.subr.mxu0 0.0
        %1891 = vmatpush1.msra.mxu0 0.0
        %1892 = vmatprep.subr.mxu0 0.0
        %1893 = vmatpush1.msra.mxu0 0.0
        %1894 = vmatprep.subr.mxu0 0.0
        %1895 = vmatpush1.msra.mxu0 0.0
        %1896 = vmatprep.subr.mxu0 0.0
        %1897 = vmatpush1.msra.mxu0 0.0
        %1898 = vmatprep.subr.mxu0 0.0
        %1899 = vmatpush1.msra.mxu0 0.0
        %1900 = vmatprep.subr.mxu0 0.0
        %1901 = vmatpush1.msra.mxu0 0.0
        %1902 = vmatprep.subr.mxu0 0.0
        %1903 = vmatpush1.msra.mxu0 0.0
        %v1904 = vand.u32 %v1495, 4294901760
        %v1905 = vsub.f32 %v1495, %v1904
        %v1906 = vand.u32 %v1905, 4294901760
        %1907 = vmatprep.subr.mxu0 %v1906
        %v1908 = vand.u32 %v1492, 4294901760
        %v1909 = vsub.f32 %v1492, %v1908
        %v1910 = vand.u32 %v1909, 4294901760
        %1911 = vmatpush1.msra.mxu0 %v1910
        %v1912 = vand.u32 %v1477, 4294901760
        %v1913 = vsub.f32 %v1477, %v1912
        %v1914 = vand.u32 %v1913, 4294901760
        %1915 = vmatprep.subr.mxu0 %v1914
        %v1916 = vand.u32 %v1476, 4294901760
        %v1917 = vsub.f32 %v1476, %v1916
        %v1918 = vand.u32 %v1917, 4294901760
        %1919 = vmatpush1.msra.mxu0 %v1918
        %v1920 = vand.u32 %v1475, 4294901760
        %v1921 = vsub.f32 %v1475, %v1920
        %v1922 = vand.u32 %v1921, 4294901760
        %1923 = vmatprep.subr.mxu0 %v1922
        %v1924 = vand.u32 %v1474, 4294901760
        %v1925 = vsub.f32 %v1474, %v1924
        %v1926 = vand.u32 %v1925, 4294901760
        %1927 = vmatpush1.msra.mxu0 %v1926
        %v1928 = vand.u32 %v1473, 4294901760
        %v1929 = vsub.f32 %v1473, %v1928
        %v1930 = vand.u32 %v1929, 4294901760
        %1931 = vmatprep.subr.mxu0 %v1930
        %v1932 = vand.u32 %v1472, 4294901760
        %v1933 = vsub.f32 %v1472, %v1932
        %v1934 = vand.u32 %v1933, 4294901760
        %1935 = vmatpush1.msra.mxu0 %v1934
        %v1936 = vand.u32 %v1471, 4294901760
        %v1937 = vsub.f32 %v1471, %v1936
        %v1938 = vand.u32 %v1937, 4294901760
        %1939 = vmatprep.subr.mxu0 %v1938
        %v1940 = vand.u32 %v1470, 4294901760
        %v1941 = vsub.f32 %v1470, %v1940
        %v1942 = vand.u32 %v1941, 4294901760
        %1943 = vmatpush1.msra.mxu0 %v1942
        %1944 = vmatprep.subr.mxu0 0.0
        %1945 = vmatpush2.msra.mxu0 0.0
        %1946 = vmatprep.subr.mxu0 0.0
        %1947 = vmatpush2.msra.mxu0 0.0
        %1948 = vmatprep.subr.mxu0 0.0
        %1949 = vmatpush2.msra.mxu0 0.0
        %1950 = vmatprep.subr.mxu0 0.0
        %1951 = vmatpush2.msra.mxu0 0.0
        %1952 = vmatprep.subr.mxu0 0.0
        %1953 = vmatpush2.msra.mxu0 0.0
        %1954 = vmatprep.subr.mxu0 0.0
        %1955 = vmatpush2.msra.mxu0 0.0
        %1956 = vmatprep.subr.mxu0 0.0
        %1957 = vmatpush2.msra.mxu0 0.0
        %1958 = vmatprep.subr.mxu0 0.0
        %1959 = vmatpush2.msra.mxu0 0.0
        %1960 = vmatprep.subr.mxu0 0.0
        %1961 = vmatpush2.msra.mxu0 0.0
        %1962 = vmatprep.subr.mxu0 0.0
        %1963 = vmatpush2.msra.mxu0 0.0
        %1964 = vmatprep.subr.mxu0 0.0
        %1965 = vmatpush2.msra.mxu0 0.0
        %1966 = vmatprep.subr.mxu0 0.0
        %1967 = vmatpush2.msra.mxu0 0.0
        %1968 = vmatprep.subr.mxu0 0.0
        %1969 = vmatpush2.msra.mxu0 0.0
        %1970 = vmatprep.subr.mxu0 0.0
        %1971 = vmatpush2.msra.mxu0 0.0
        %1972 = vmatprep.subr.mxu0 0.0
        %1973 = vmatpush2.msra.mxu0 0.0
        %1974 = vmatprep.subr.mxu0 0.0
        %1975 = vmatpush2.msra.mxu0 0.0
        %1976 = vmatprep.mubr.f32.mxu0 0.0
        %v1977 = vand.u32 %v1488, 4294901760
        %1978 = vmatmul.mubr.f32.gmra.mxu0 %v1977
        %v1979 = vpop.f32.mrf.mxu0
        %v1980 = vadd.f32 %v1878, %v1979
        %v1981 = vpop.f32.mrf.mxu0
        %v1982 = vadd.f32 %v1880, %v1981
        %1983 = vdwg.mxu0
        %1984 = vmatprep.subr.mxu0 0.0
        %1985 = vmatpush1.msra.mxu0 0.0
        %1986 = vmatprep.subr.mxu0 0.0
        %1987 = vmatpush1.msra.mxu0 0.0
        %1988 = vmatprep.subr.mxu0 0.0
        %1989 = vmatpush1.msra.mxu0 0.0
        %1990 = vmatprep.subr.mxu0 0.0
        %1991 = vmatpush1.msra.mxu0 0.0
        %1992 = vmatprep.subr.mxu0 0.0
        %1993 = vmatpush1.msra.mxu0 0.0
        %1994 = vmatprep.subr.mxu0 0.0
        %1995 = vmatpush1.msra.mxu0 0.0
        %1996 = vmatprep.subr.mxu0 0.0
        %1997 = vmatpush1.msra.mxu0 0.0
        %1998 = vmatprep.subr.mxu0 0.0
        %1999 = vmatpush1.msra.mxu0 0.0
        %2000 = vmatprep.subr.mxu0 0.0
        %2001 = vmatpush1.msra.mxu0 0.0
        %2002 = vmatprep.subr.mxu0 0.0
        %2003 = vmatpush1.msra.mxu0 0.0
        %2004 = vmatprep.subr.mxu0 0.0
        %2005 = vmatpush1.msra.mxu0 0.0
        %v2006 = vand.u32 %v1495, 4294901760
        %2007 = vmatprep.subr.mxu0 %v2006
        %v2008 = vand.u32 %v1492, 4294901760
        %2009 = vmatpush1.msra.mxu0 %v2008
        %v2010 = vand.u32 %v1477, 4294901760
        %2011 = vmatprep.subr.mxu0 %v2010
        %v2012 = vand.u32 %v1476, 4294901760
        %2013 = vmatpush1.msra.mxu0 %v2012
        %v2014 = vand.u32 %v1475, 4294901760
        %2015 = vmatprep.subr.mxu0 %v2014
        %v2016 = vand.u32 %v1474, 4294901760
        %2017 = vmatpush1.msra.mxu0 %v2016
        %v2018 = vand.u32 %v1473, 4294901760
        %2019 = vmatprep.subr.mxu0 %v2018
        %v2020 = vand.u32 %v1472, 4294901760
        %2021 = vmatpush1.msra.mxu0 %v2020
        %v2022 = vand.u32 %v1471, 4294901760
        %2023 = vmatprep.subr.mxu0 %v2022
        %v2024 = vand.u32 %v1470, 4294901760
        %2025 = vmatpush1.msra.mxu0 %v2024
        %2026 = vmatprep.subr.mxu0 0.0
        %2027 = vmatpush2.msra.mxu0 0.0
        %2028 = vmatprep.subr.mxu0 0.0
        %2029 = vmatpush2.msra.mxu0 0.0
        %2030 = vmatprep.subr.mxu0 0.0
        %2031 = vmatpush2.msra.mxu0 0.0
        %2032 = vmatprep.subr.mxu0 0.0
        %2033 = vmatpush2.msra.mxu0 0.0
        %2034 = vmatprep.subr.mxu0 0.0
        %2035 = vmatpush2.msra.mxu0 0.0
        %2036 = vmatprep.subr.mxu0 0.0
        %2037 = vmatpush2.msra.mxu0 0.0
        %2038 = vmatprep.subr.mxu0 0.0
        %2039 = vmatpush2.msra.mxu0 0.0
        %2040 = vmatprep.subr.mxu0 0.0
        %2041 = vmatpush2.msra.mxu0 0.0
        %2042 = vmatprep.subr.mxu0 0.0
        %2043 = vmatpush2.msra.mxu0 0.0
        %2044 = vmatprep.subr.mxu0 0.0
        %2045 = vmatpush2.msra.mxu0 0.0
        %2046 = vmatprep.subr.mxu0 0.0
        %2047 = vmatpush2.msra.mxu0 0.0
        %2048 = vmatprep.subr.mxu0 0.0
        %2049 = vmatpush2.msra.mxu0 0.0
        %2050 = vmatprep.subr.mxu0 0.0
        %2051 = vmatpush2.msra.mxu0 0.0
        %2052 = vmatprep.subr.mxu0 0.0
        %2053 = vmatpush2.msra.mxu0 0.0
        %2054 = vmatprep.subr.mxu0 0.0
        %2055 = vmatpush2.msra.mxu0 0.0
        %2056 = vmatprep.subr.mxu0 0.0
        %2057 = vmatpush2.msra.mxu0 0.0
        %2058 = vmatprep.mubr.f32.mxu0 0.0
        %v2059 = vand.u32 %v1488, 4294901760
        %2060 = vmatmul.mubr.f32.gmra.mxu0 %v2059
        %v2061 = vpop.f32.mrf.mxu0
        %v2062 = vadd.f32 %v1980, %v2061
        %v2063 = vpop.f32.mrf.mxu0
        %v2064 = vadd.f32 %v1982, %v2063
        %2065 = vdwg.mxu0
        %v2066 = vadd.f32 %v2062, %v770
        %v2067 = vadd.f32 %v2064, %v772
        %2068 = vrot.lane.b32.xlu0 %v770, 17
        %v2069 = vpop.permute.xlu0 %2068
        %2070 = vrot.lane.b32.xlu0 %v772, 17
        %v2071 = vpop.permute.xlu0 %2070
        %v2072 = vsel %vm1332, %v2069, %v2071
        %v2073 = vsel %vm1332, %v2071, %v2069
        %v2074 = vld [vmem:[%s3] ss:$8 sm:$0x3]
        %v2076 = vlaneseq
        %v2077 = vshrl.u32 %v2076, 7
        %v2078 = vsub.s32 0, %v2077
        %v2079 = vrot.slane %v2074, %v2078
        %v2080 = vlaneseq
        %v2081 = vshrl.u32 %v2080, 7
        %v2082 = vsub.s32 1, %v2081
        %v2083 = vrot.slane %v2074, %v2082
        %v2086 = vmul.f32 %v2073, %v2079
        %v2087 = vmul.f32 %v2072, %v2083
        %2088 = vst [vmem:[#allocation2] sm:$0xff] %v2086
        %2089 = vst [vmem:[#allocation2 + $0x8] sm:$0xff] %v2087
        %2090 = vrot.lane.b32.xlu0 %v770, 16
        %v2091 = vpop.permute.xlu0 %2090
        %2092 = vrot.lane.b32.xlu0 %v772, 16
        %v2093 = vpop.permute.xlu0 %2092
        %v2094 = vsel %vm1355, %v2091, %v2093
        %v2095 = vsel %vm1355, %v2093, %v2091
        %v2096 = vld [vmem:[%s1358] ss:$8 sm:$0x3]
        %v2098 = vlaneseq
        %v2099 = vshrl.u32 %v2098, 7
        %v2100 = vsub.s32 0, %v2099
        %v2101 = vrot.slane %v2096, %v2100
        %v2102 = vlaneseq
        %v2103 = vshrl.u32 %v2102, 7
        %v2104 = vsub.s32 1, %v2103
        %v2105 = vrot.slane %v2096, %v2104
        %v2108 = vmul.f32 %v2095, %v2101
        %v2109 = vmul.f32 %v2094, %v2105
        %2110 = vst [vmem:[#allocation2 + $0x10] sm:$0xff] %v2108
        %2111 = vst [vmem:[#allocation2 + $0x18] sm:$0xff] %v2109
        %2112 = vrot.lane.b32.xlu0 %v770, 15
        %v2113 = vpop.permute.xlu0 %2112
        %2114 = vrot.lane.b32.xlu0 %v772, 15
        %v2115 = vpop.permute.xlu0 %2114
        %vm2116 = vcmp.lt.s32.totalorder %v1331, 15
        %v2117 = vsel %vm2116, %v2113, %v2115
        %v2118 = vsel %vm2116, %v2115, %v2113
        %s2119 = scalar_lea.vmem %s3, 2
        %v2120 = vld [vmem:[%s2119] ss:$8 sm:$0x3]
        %v2122 = vlaneseq
        %v2123 = vshrl.u32 %v2122, 7
        %v2124 = vsub.s32 0, %v2123
        %v2125 = vrot.slane %v2120, %v2124
        %v2126 = vlaneseq
        %v2127 = vshrl.u32 %v2126, 7
        %v2128 = vsub.s32 1, %v2127
        %v2129 = vrot.slane %v2120, %v2128
        %v2132 = vmul.f32 %v2118, %v2125
        %v2133 = vmul.f32 %v2117, %v2129
        %2134 = vst [vmem:[#allocation2 + $0x20] sm:$0xff] %v2132
        %2135 = vst [vmem:[#allocation2 + $0x28] sm:$0xff] %v2133
        %2136 = vrot.lane.b32.xlu0 %v770, 1
        %v2137 = vpop.permute.xlu0 %2136
        %2138 = vrot.lane.b32.xlu0 %v772, 1
        %v2139 = vpop.permute.xlu0 %2138
        %v2140 = vsel %vm1413, %v2137, %v2139
        %v2141 = vsel %vm1413, %v2139, %v2137
        %v2142 = vld [vmem:[%s1416] ss:$8 sm:$0x3]
        %v2144 = vlaneseq
        %v2145 = vshrl.u32 %v2144, 7
        %v2146 = vsub.s32 0, %v2145
        %v2147 = vrot.slane %v2142, %v2146
        %v2148 = vlaneseq
        %v2149 = vshrl.u32 %v2148, 7
        %v2150 = vsub.s32 1, %v2149
        %v2151 = vrot.slane %v2142, %v2150
        %v2154 = vmul.f32 %v2141, %v2147
        %v2155 = vmul.f32 %v2140, %v2151
        %2156 = vst [vmem:[#allocation2 + $0x30] sm:$0xff] %v2154
        %2157 = vst [vmem:[#allocation2 + $0x38] sm:$0xff] %v2155
        %2158 = vst [vmem:[#allocation2 + $0x40] sm:$0xff] %v770
        %2159 = vst [vmem:[#allocation2 + $0x48] sm:$0xff] %v772
        %2160 = vrot.lane.b32.xlu0 %v770, 127
        %v2161 = vpop.permute.xlu0 %2160
        %2162 = vrot.lane.b32.xlu0 %v772, 127
        %v2163 = vpop.permute.xlu0 %2162
        %vm2164 = vcmp.lt.s32.totalorder %v1331, 127
        %v2165 = vsel %vm2164, %v2161, %v2163
        %v2166 = vsel %vm2164, %v2163, %v2161
        %s2167 = scalar_lea.vmem %s3, 5
        %v2168 = vld [vmem:[%s2167] ss:$8 sm:$0x3]
        %v2170 = vlaneseq
        %v2171 = vshrl.u32 %v2170, 7
        %v2172 = vsub.s32 0, %v2171
        %v2173 = vrot.slane %v2168, %v2172
        %v2174 = vlaneseq
        %v2175 = vshrl.u32 %v2174, 7
        %v2176 = vsub.s32 1, %v2175
        %v2177 = vrot.slane %v2168, %v2176
        %v2180 = vmul.f32 %v2165, %v2173
        %v2181 = vmul.f32 %v2166, %v2177
        %2182 = vst [vmem:[#allocation2 + $0x50] sm:$0xff] %v2180
        %2183 = vst [vmem:[#allocation2 + $0x58] sm:$0xff] %v2181
        %2184 = vrot.lane.b32.xlu0 %v770, 113
        %v2185 = vpop.permute.xlu0 %2184
        %2186 = vrot.lane.b32.xlu0 %v772, 113
        %v2187 = vpop.permute.xlu0 %2186
        %vm2188 = vcmp.lt.s32.totalorder %v1331, 113
        %v2189 = vsel %vm2188, %v2185, %v2187
        %v2190 = vsel %vm2188, %v2187, %v2185
        %s2191 = scalar_lea.vmem %s3, 6
        %v2192 = vld [vmem:[%s2191] ss:$8 sm:$0x3]
        %v2194 = vlaneseq
        %v2195 = vshrl.u32 %v2194, 7
        %v2196 = vsub.s32 0, %v2195
        %v2197 = vrot.slane %v2192, %v2196
        %v2198 = vlaneseq
        %v2199 = vshrl.u32 %v2198, 7
        %v2200 = vsub.s32 1, %v2199
        %v2201 = vrot.slane %v2192, %v2200
        %v2204 = vmul.f32 %v2189, %v2197
        %v2205 = vmul.f32 %v2190, %v2201
        %2206 = vst [vmem:[#allocation2 + $0x60] sm:$0xff] %v2204
        %2207 = vst [vmem:[#allocation2 + $0x68] sm:$0xff] %v2205
        %2208 = vrot.lane.b32.xlu0 %v770, 112
        %v2209 = vpop.permute.xlu0 %2208
        %2210 = vrot.lane.b32.xlu0 %v772, 112
        %v2211 = vpop.permute.xlu0 %2210
        %vm2212 = vcmp.lt.s32.totalorder %v1331, 112
        %v2213 = vsel %vm2212, %v2209, %v2211
        %v2214 = vsel %vm2212, %v2211, %v2209
        %s2215 = scalar_lea.vmem %s3, 7
        %v2216 = vld [vmem:[%s2215] ss:$8 sm:$0x3]
        %v2218 = vlaneseq
        %v2219 = vshrl.u32 %v2218, 7
        %v2220 = vsub.s32 0, %v2219
        %v2221 = vrot.slane %v2216, %v2220
        %v2222 = vlaneseq
        %v2223 = vshrl.u32 %v2222, 7
        %v2224 = vsub.s32 1, %v2223
        %v2225 = vrot.slane %v2216, %v2224
        %v2228 = vmul.f32 %v2213, %v2221
        %v2229 = vmul.f32 %v2214, %v2225
        %2230 = vst [vmem:[#allocation2 + $0x70] sm:$0xff] %v2228
        %2231 = vst [vmem:[#allocation2 + $0x78] sm:$0xff] %v2229
        %2232 = vrot.lane.b32.xlu0 %v770, 111
        %v2233 = vpop.permute.xlu0 %2232
        %2234 = vrot.lane.b32.xlu0 %v772, 111
        %v2235 = vpop.permute.xlu0 %2234
        %vm2236 = vcmp.lt.s32.totalorder %v1331, 111
        %v2237 = vsel %vm2236, %v2233, %v2235
        %v2238 = vsel %vm2236, %v2235, %v2233
        %s2239 = scalar_lea.vmem %s3, 16
        %v2240 = vld [vmem:[%s2239] ss:$8 sm:$0x3]
        %v2242 = vlaneseq
        %v2243 = vshrl.u32 %v2242, 7
        %v2244 = vsub.s32 0, %v2243
        %v2245 = vrot.slane %v2240, %v2244
        %v2246 = vlaneseq
        %v2247 = vshrl.u32 %v2246, 7
        %v2248 = vsub.s32 1, %v2247
        %v2249 = vrot.slane %v2240, %v2248
        %v2252 = vmul.f32 %v2237, %v2245
        %v2253 = vmul.f32 %v2238, %v2249
        %2254 = vst [vmem:[#allocation2 + $0x80] sm:$0xff] %v2252
        %2255 = vst [vmem:[#allocation2 + $0x88] sm:$0xff] %v2253
        %2256 = vrot.lane.b32.xlu0 %v777, 17
        %v2257 = vpop.permute.xlu0 %2256
        %2258 = vrot.lane.b32.xlu0 %v779, 17
        %v2259 = vpop.permute.xlu0 %2258
        %v2260 = vsel %vm1332, %v2257, %v2259
        %v2261 = vsel %vm1332, %v2259, %v2257
        %v2262 = vld [vmem:[%s3] ss:$8 sm:$0x3]
        %v2264 = vlaneseq
        %v2265 = vshrl.u32 %v2264, 7
        %v2266 = vsub.s32 0, %v2265
        %v2267 = vrot.slane %v2262, %v2266
        %v2268 = vlaneseq
        %v2269 = vshrl.u32 %v2268, 7
        %v2270 = vsub.s32 1, %v2269
        %v2271 = vrot.slane %v2262, %v2270
        %v2274 = vmul.f32 %v2261, %v2267
        %v2275 = vmul.f32 %v2260, %v2271
        %2276 = vst [vmem:[#allocation2 + $0x90] sm:$0xf] %v2274
        %2277 = vst [vmem:[#allocation2 + $0x98] sm:$0xf] %v2275
        %2278 = vrot.lane.b32.xlu0 %v777, 16
        %v2279 = vpop.permute.xlu0 %2278
        %2280 = vrot.lane.b32.xlu0 %v779, 16
        %v2281 = vpop.permute.xlu0 %2280
        %v2282 = vsel %vm1355, %v2279, %v2281
        %v2283 = vsel %vm1355, %v2281, %v2279
        %v2284 = vld [vmem:[%s1358] ss:$8 sm:$0x3]
        %v2286 = vlaneseq
        %v2287 = vshrl.u32 %v2286, 7
        %v2288 = vsub.s32 0, %v2287
        %v2289 = vrot.slane %v2284, %v2288
        %v2290 = vlaneseq
        %v2291 = vshrl.u32 %v2290, 7
        %v2292 = vsub.s32 1, %v2291
        %v2293 = vrot.slane %v2284, %v2292
        %v2296 = vmul.f32 %v2283, %v2289
        %v2297 = vmul.f32 %v2282, %v2293
        %v2300 = vrot.slane %v2296, 4
        %v2301 = vrot.slane %v2297, 4
        %2304 = vst [vmem:[#allocation2 + $0x90] sm:$0xf0] %v2300
        %2305 = vst [vmem:[#allocation2 + $0x98] sm:$0xf0] %v2301
        %2306 = vrot.lane.b32.xlu0 %v777, 15
        %v2307 = vpop.permute.xlu0 %2306
        %2308 = vrot.lane.b32.xlu0 %v779, 15
        %v2309 = vpop.permute.xlu0 %2308
        %v2310 = vsel %vm2116, %v2307, %v2309
        %v2311 = vsel %vm2116, %v2309, %v2307
        %v2312 = vld [vmem:[%s2119] ss:$8 sm:$0x3]
        %v2314 = vlaneseq
        %v2315 = vshrl.u32 %v2314, 7
        %v2316 = vsub.s32 0, %v2315
        %v2317 = vrot.slane %v2312, %v2316
        %v2318 = vlaneseq
        %v2319 = vshrl.u32 %v2318, 7
        %v2320 = vsub.s32 1, %v2319
        %v2321 = vrot.slane %v2312, %v2320
        %v2324 = vmul.f32 %v2311, %v2317
        %v2325 = vmul.f32 %v2310, %v2321
        %2326 = vst [vmem:[#allocation2 + $0xa0] sm:$0xf] %v2324
        %2327 = vst [vmem:[#allocation2 + $0xa8] sm:$0xf] %v2325
        %2328 = vrot.lane.b32.xlu0 %v777, 1
        %v2329 = vpop.permute.xlu0 %2328
        %2330 = vrot.lane.b32.xlu0 %v779, 1
        %v2331 = vpop.permute.xlu0 %2330
        %v2332 = vsel %vm1413, %v2329, %v2331
        %v2333 = vsel %vm1413, %v2331, %v2329
        %v2334 = vld [vmem:[%s1416] ss:$8 sm:$0x3]
        %v2336 = vlaneseq
        %v2337 = vshrl.u32 %v2336, 7
        %v2338 = vsub.s32 0, %v2337
        %v2339 = vrot.slane %v2334, %v2338
        %v2340 = vlaneseq
        %v2341 = vshrl.u32 %v2340, 7
        %v2342 = vsub.s32 1, %v2341
        %v2343 = vrot.slane %v2334, %v2342
        %v2346 = vmul.f32 %v2333, %v2339
        %v2347 = vmul.f32 %v2332, %v2343
        %v2350 = vrot.slane %v2346, 4
        %v2351 = vrot.slane %v2347, 4
        %2354 = vst [vmem:[#allocation2 + $0xa0] sm:$0xf0] %v2350
        %2355 = vst [vmem:[#allocation2 + $0xa8] sm:$0xf0] %v2351
        %2356 = vst [vmem:[#allocation2 + $0xb0] sm:$0xf] %v777
        %2357 = vst [vmem:[#allocation2 + $0xb8] sm:$0xf] %v779
        %2358 = vrot.lane.b32.xlu0 %v777, 127
        %v2359 = vpop.permute.xlu0 %2358
        %2360 = vrot.lane.b32.xlu0 %v779, 127
        %v2361 = vpop.permute.xlu0 %2360
        %v2362 = vsel %vm2164, %v2359, %v2361
        %v2363 = vsel %vm2164, %v2361, %v2359
        %v2364 = vld [vmem:[%s2167] ss:$8 sm:$0x3]
        %v2366 = vlaneseq
        %v2367 = vshrl.u32 %v2366, 7
        %v2368 = vsub.s32 0, %v2367
        %v2369 = vrot.slane %v2364, %v2368
        %v2370 = vlaneseq
        %v2371 = vshrl.u32 %v2370, 7
        %v2372 = vsub.s32 1, %v2371
        %v2373 = vrot.slane %v2364, %v2372
        %v2376 = vmul.f32 %v2362, %v2369
        %v2377 = vmul.f32 %v2363, %v2373
        %v2380 = vrot.slane %v2376, 4
        %v2381 = vrot.slane %v2377, 4
        %2384 = vst [vmem:[#allocation2 + $0xb0] sm:$0xf0] %v2380
        %2385 = vst [vmem:[#allocation2 + $0xb8] sm:$0xf0] %v2381
        %2386 = vrot.lane.b32.xlu0 %v777, 113
        %v2387 = vpop.permute.xlu0 %2386
        %2388 = vrot.lane.b32.xlu0 %v779, 113
        %v2389 = vpop.permute.xlu0 %2388
        %v2390 = vsel %vm2188, %v2387, %v2389
        %v2391 = vsel %vm2188, %v2389, %v2387
        %v2392 = vld [vmem:[%s2191] ss:$8 sm:$0x3]
        %v2394 = vlaneseq
        %v2395 = vshrl.u32 %v2394, 7
        %v2396 = vsub.s32 0, %v2395
        %v2397 = vrot.slane %v2392, %v2396
        %v2398 = vlaneseq
        %v2399 = vshrl.u32 %v2398, 7
        %v2400 = vsub.s32 1, %v2399
        %v2401 = vrot.slane %v2392, %v2400
        %v2404 = vmul.f32 %v2390, %v2397
        %v2405 = vmul.f32 %v2391, %v2401
        %2406 = vst [vmem:[#allocation2 + $0xc0] sm:$0xf] %v2404
        %2407 = vst [vmem:[#allocation2 + $0xc8] sm:$0xf] %v2405
        %2408 = vrot.lane.b32.xlu0 %v777, 112
        %v2409 = vpop.permute.xlu0 %2408
        %2410 = vrot.lane.b32.xlu0 %v779, 112
        %v2411 = vpop.permute.xlu0 %2410
        %v2412 = vsel %vm2212, %v2409, %v2411
        %v2413 = vsel %vm2212, %v2411, %v2409
        %v2414 = vld [vmem:[%s2215] ss:$8 sm:$0x3]
        %v2416 = vlaneseq
        %v2417 = vshrl.u32 %v2416, 7
        %v2418 = vsub.s32 0, %v2417
        %v2419 = vrot.slane %v2414, %v2418
        %v2420 = vlaneseq
        %v2421 = vshrl.u32 %v2420, 7
        %v2422 = vsub.s32 1, %v2421
        %v2423 = vrot.slane %v2414, %v2422
        %v2426 = vmul.f32 %v2412, %v2419
        %v2427 = vmul.f32 %v2413, %v2423
        %v2430 = vrot.slane %v2426, 4
        %v2431 = vrot.slane %v2427, 4
        %2434 = vst [vmem:[#allocation2 + $0xc0] sm:$0xf0] %v2430
        %2435 = vst [vmem:[#allocation2 + $0xc8] sm:$0xf0] %v2431
        %2436 = vrot.lane.b32.xlu0 %v777, 111
        %v2437 = vpop.permute.xlu0 %2436
        %2438 = vrot.lane.b32.xlu0 %v779, 111
        %v2439 = vpop.permute.xlu0 %2438
        %v2440 = vsel %vm2236, %v2437, %v2439
        %v2441 = vsel %vm2236, %v2439, %v2437
        %v2442 = vld [vmem:[%s2239] ss:$8 sm:$0x3]
        %v2444 = vlaneseq
        %v2445 = vshrl.u32 %v2444, 7
        %v2446 = vsub.s32 0, %v2445
        %v2447 = vrot.slane %v2442, %v2446
        %v2448 = vlaneseq
        %v2449 = vshrl.u32 %v2448, 7
        %v2450 = vsub.s32 1, %v2449
        %v2451 = vrot.slane %v2442, %v2450
        %v2454 = vmul.f32 %v2440, %v2447
        %v2455 = vmul.f32 %v2441, %v2451
        %2456 = vst [vmem:[#allocation2 + $0xd0] sm:$0xf] %v2454
        %2457 = vst [vmem:[#allocation2 + $0xd8] sm:$0xf] %v2455
        %v2458 = vld [vmem:[%s1 + $0x40] sm:$0xff]
        %v2459 = vld [vmem:[%s1 + $0x48] sm:$0xf]
        %v2460 = vld [vmem:[#allocation2] sm:$0xff]
        %v2461 = vld [vmem:[#allocation2 + $0x8] sm:$0xff]
        %v2462 = vld [vmem:[#allocation2 + $0x10] sm:$0xff]
        %v2463 = vld [vmem:[#allocation2 + $0x18] sm:$0xff]
        %v2464 = vld [vmem:[#allocation2 + $0x20] sm:$0xff]
        %v2465 = vld [vmem:[#allocation2 + $0x28] sm:$0xff]
        %v2466 = vld [vmem:[#allocation2 + $0x30] sm:$0xff]
        %v2467 = vld [vmem:[#allocation2 + $0x38] sm:$0xff]
        %v2468 = vld [vmem:[#allocation2 + $0x40] sm:$0xff]
        %v2469 = vld [vmem:[#allocation2 + $0x48] sm:$0xff]
        %v2470 = vld [vmem:[#allocation2 + $0x50] sm:$0xff]
        %v2471 = vld [vmem:[#allocation2 + $0x58] sm:$0xff]
        %v2472 = vld [vmem:[#allocation2 + $0x60] sm:$0xff]
        %v2473 = vld [vmem:[#allocation2 + $0x68] sm:$0xff]
        %v2474 = vld [vmem:[#allocation2 + $0x70] sm:$0xff]
        %v2475 = vld [vmem:[#allocation2 + $0x78] sm:$0xff]
        %v2476 = vld [vmem:[#allocation2 + $0x80] sm:$0xff]
        %v2477 = vld [vmem:[#allocation2 + $0x88] sm:$0xff]
        %v2478 = vld [vmem:[#allocation2 + $0x90] sm:$0xff]
        %v2479 = vld [vmem:[#allocation2 + $0x98] sm:$0xff]
        %v2480 = vld [vmem:[#allocation2 + $0xa0] sm:$0xff]
        %v2481 = vld [vmem:[#allocation2 + $0xa8] sm:$0xff]
        %v2482 = vld [vmem:[#allocation2 + $0xb0] sm:$0xff]
        %v2483 = vld [vmem:[#allocation2 + $0xb8] sm:$0xff]
        %v2484 = vld [vmem:[#allocation2 + $0xc0] sm:$0xff]
        %v2485 = vld [vmem:[#allocation2 + $0xc8] sm:$0xff]
        %v2486 = vld [vmem:[#allocation2 + $0xd0] sm:$0xf]
        %v2487 = vld [vmem:[#allocation2 + $0xd8] sm:$0xf]
        %v2488 = vld [vmem:[%s2 + $0x48] sm:$0xff]
        %v2489 = vld [vmem:[%s2 + $0x50] sm:$0xf]
        %2491 = vset.pattern.permute.xlu0 0
        %2492 = vperm.xlu0 %2491, %v2488
        %v2493 = vpop.permute.xlu0 %2492
        %2496 = vset.pattern.permute.xlu0 0
        %2497 = vperm.xlu0 %2496, %v2489
        %v2498 = vpop.permute.xlu0 %2497
        %vm2500 = vcmask 883712
        %v2502 = vsel %vm2500, %v2458, 0
        %v2505 = vsel %vm2500, %v2459, 0
        %v2508 = vsel %vm1490, %v2486, 0
        %v2511 = vsel %vm1490, %v2487, 0
        %2513 = vmatprep.subr.mxu0 0.0
        %2514 = vmatpush1.msra.mxu0 0.0
        %2515 = vmatprep.subr.mxu0 0.0
        %2516 = vmatpush1.msra.mxu0 0.0
        %v2517 = vand.u32 %v2511, 4294901760
        %2518 = vmatprep.subr.mxu0 %v2517
        %v2519 = vand.u32 %v2508, 4294901760
        %2520 = vmatpush1.msra.mxu0 %v2519
        %v2521 = vand.u32 %v2485, 4294901760
        %2522 = vmatprep.subr.mxu0 %v2521
        %v2523 = vand.u32 %v2484, 4294901760
        %2524 = vmatpush1.msra.mxu0 %v2523
        %v2525 = vand.u32 %v2483, 4294901760
        %2526 = vmatprep.subr.mxu0 %v2525
        %v2527 = vand.u32 %v2482, 4294901760
        %2528 = vmatpush1.msra.mxu0 %v2527
        %v2529 = vand.u32 %v2481, 4294901760
        %2530 = vmatprep.subr.mxu0 %v2529
        %v2531 = vand.u32 %v2480, 4294901760
        %2532 = vmatpush1.msra.mxu0 %v2531
        %v2533 = vand.u32 %v2479, 4294901760
        %2534 = vmatprep.subr.mxu0 %v2533
        %v2535 = vand.u32 %v2478, 4294901760
        %2536 = vmatpush1.msra.mxu0 %v2535
        %v2537 = vand.u32 %v2477, 4294901760
        %2538 = vmatprep.subr.mxu0 %v2537
        %v2539 = vand.u32 %v2476, 4294901760
        %2540 = vmatpush1.msra.mxu0 %v2539
        %v2541 = vand.u32 %v2475, 4294901760
        %2542 = vmatprep.subr.mxu0 %v2541
        %v2543 = vand.u32 %v2474, 4294901760
        %2544 = vmatpush1.msra.mxu0 %v2543
        %v2545 = vand.u32 %v2473, 4294901760
        %2546 = vmatprep.subr.mxu0 %v2545
        %v2547 = vand.u32 %v2472, 4294901760
        %2548 = vmatpush1.msra.mxu0 %v2547
        %v2549 = vand.u32 %v2471, 4294901760
        %2550 = vmatprep.subr.mxu0 %v2549
        %v2551 = vand.u32 %v2470, 4294901760
        %2552 = vmatpush1.msra.mxu0 %v2551
        %v2553 = vand.u32 %v2469, 4294901760
        %2554 = vmatprep.subr.mxu0 %v2553
        %v2555 = vand.u32 %v2468, 4294901760
        %2556 = vmatpush1.msra.mxu0 %v2555
        %v2557 = vand.u32 %v2467, 4294901760
        %2558 = vmatprep.subr.mxu0 %v2557
        %v2559 = vand.u32 %v2466, 4294901760
        %2560 = vmatpush1.msra.mxu0 %v2559
        %v2561 = vand.u32 %v2465, 4294901760
        %2562 = vmatprep.subr.mxu0 %v2561
        %v2563 = vand.u32 %v2464, 4294901760
        %2564 = vmatpush1.msra.mxu0 %v2563
        %v2565 = vand.u32 %v2463, 4294901760
        %2566 = vmatprep.subr.mxu0 %v2565
        %v2567 = vand.u32 %v2462, 4294901760
        %2568 = vmatpush1.msra.mxu0 %v2567
        %v2569 = vand.u32 %v2461, 4294901760
        %2570 = vmatprep.subr.mxu0 %v2569
        %v2571 = vand.u32 %v2460, 4294901760
        %2572 = vmatpush1.msra.mxu0 %v2571
        %2573 = vmatprep.subr.mxu0 0.0
        %2574 = vmatpush2.msra.mxu0 0.0
        %2575 = vmatprep.subr.mxu0 0.0
        %2576 = vmatpush2.msra.mxu0 0.0
        %2577 = vmatprep.subr.mxu0 0.0
        %2578 = vmatpush2.msra.mxu0 0.0
        %2579 = vmatprep.subr.mxu0 0.0
        %2580 = vmatpush2.msra.mxu0 0.0
        %2581 = vmatprep.subr.mxu0 0.0
        %2582 = vmatpush2.msra.mxu0 0.0
        %2583 = vmatprep.subr.mxu0 0.0
        %2584 = vmatpush2.msra.mxu0 0.0
        %2585 = vmatprep.subr.mxu0 0.0
        %2586 = vmatpush2.msra.mxu0 0.0
        %2587 = vmatprep.subr.mxu0 0.0
        %2588 = vmatpush2.msra.mxu0 0.0
        %2589 = vmatprep.subr.mxu0 0.0
        %2590 = vmatpush2.msra.mxu0 0.0
        %2591 = vmatprep.subr.mxu0 0.0
        %2592 = vmatpush2.msra.mxu0 0.0
        %2593 = vmatprep.subr.mxu0 0.0
        %2594 = vmatpush2.msra.mxu0 0.0
        %2595 = vmatprep.subr.mxu0 0.0
        %2596 = vmatpush2.msra.mxu0 0.0
        %2597 = vmatprep.subr.mxu0 0.0
        %2598 = vmatpush2.msra.mxu0 0.0
        %2599 = vmatprep.subr.mxu0 0.0
        %2600 = vmatpush2.msra.mxu0 0.0
        %2601 = vmatprep.subr.mxu0 0.0
        %2602 = vmatpush2.msra.mxu0 0.0
        %2603 = vmatprep.subr.mxu0 0.0
        %2604 = vmatpush2.msra.mxu0 0.0
        %2605 = vmatprep.mubr.f32.mxu0 0.0
        %v2606 = vand.u32 %v2502, 4294901760
        %v2607 = vsub.f32 %v2502, %v2606
        %v2608 = vand.u32 %v2607, 4294901760
        %v2609 = vsub.f32 %v2607, %v2608
        %v2610 = vand.u32 %v2609, 4294901760
        %2611 = vmatmul.mubr.f32.gmra.mxu0 %v2610
        %v2612 = vpop.f32.mrf.mxu0
        %v2613 = vadd.f32 %v2493, %v2612
        %v2614 = vpop.f32.mrf.mxu0
        %v2615 = vadd.f32 %v2493, %v2614
        %2616 = vmatprep.mubr.f32.mxu0 0.0
        %v2617 = vand.u32 %v2505, 4294901760
        %v2618 = vsub.f32 %v2505, %v2617
        %v2619 = vand.u32 %v2618, 4294901760
        %v2620 = vsub.f32 %v2618, %v2619
        %v2621 = vand.u32 %v2620, 4294901760
        %2622 = vmatmul.mubr.f32.gmra.mxu0 %v2621
        %v2623 = vpop.f32.mrf.mxu0
        %v2624 = vadd.f32 %v2498, %v2623
        %v2625 = vpop.f32.mrf.mxu0
        %v2626 = vadd.f32 %v2498, %v2625
        %2627 = vdwg.mxu0
        %2628 = vmatprep.subr.mxu0 0.0
        %2629 = vmatpush1.msra.mxu0 0.0
        %2630 = vmatprep.subr.mxu0 0.0
        %2631 = vmatpush1.msra.mxu0 0.0
        %v2632 = vand.u32 %v2511, 4294901760
        %v2633 = vsub.f32 %v2511, %v2632
        %v2634 = vand.u32 %v2633, 4294901760
        %v2635 = vsub.f32 %v2633, %v2634
        %v2636 = vand.u32 %v2635, 4294901760
        %2637 = vmatprep.subr.mxu0 %v2636
        %v2638 = vand.u32 %v2508, 4294901760
        %v2639 = vsub.f32 %v2508, %v2638
        %v2640 = vand.u32 %v2639, 4294901760
        %v2641 = vsub.f32 %v2639, %v2640
        %v2642 = vand.u32 %v2641, 4294901760
        %2643 = vmatpush1.msra.mxu0 %v2642
        %v2644 = vand.u32 %v2485, 4294901760
        %v2645 = vsub.f32 %v2485, %v2644
        %v2646 = vand.u32 %v2645, 4294901760
        %v2647 = vsub.f32 %v2645, %v2646
        %v2648 = vand.u32 %v2647, 4294901760
        %2649 = vmatprep.subr.mxu0 %v2648
        %v2650 = vand.u32 %v2484, 4294901760
        %v2651 = vsub.f32 %v2484, %v2650
        %v2652 = vand.u32 %v2651, 4294901760
        %v2653 = vsub.f32 %v2651, %v2652
        %v2654 = vand.u32 %v2653, 4294901760
        %2655 = vmatpush1.msra.mxu0 %v2654
        %v2656 = vand.u32 %v2483, 4294901760
        %v2657 = vsub.f32 %v2483, %v2656
        %v2658 = vand.u32 %v2657, 4294901760
        %v2659 = vsub.f32 %v2657, %v2658
        %v2660 = vand.u32 %v2659, 4294901760
        %2661 = vmatprep.subr.mxu0 %v2660
        %v2662 = vand.u32 %v2482, 4294901760
        %v2663 = vsub.f32 %v2482, %v2662
        %v2664 = vand.u32 %v2663, 4294901760
        %v2665 = vsub.f32 %v2663, %v2664
        %v2666 = vand.u32 %v2665, 4294901760
        %2667 = vmatpush1.msra.mxu0 %v2666
        %v2668 = vand.u32 %v2481, 4294901760
        %v2669 = vsub.f32 %v2481, %v2668
        %v2670 = vand.u32 %v2669, 4294901760
        %v2671 = vsub.f32 %v2669, %v2670
        %v2672 = vand.u32 %v2671, 4294901760
        %2673 = vmatprep.subr.mxu0 %v2672
        %v2674 = vand.u32 %v2480, 4294901760
        %v2675 = vsub.f32 %v2480, %v2674
        %v2676 = vand.u32 %v2675, 4294901760
        %v2677 = vsub.f32 %v2675, %v2676
        %v2678 = vand.u32 %v2677, 4294901760
        %2679 = vmatpush1.msra.mxu0 %v2678
        %v2680 = vand.u32 %v2479, 4294901760
        %v2681 = vsub.f32 %v2479, %v2680
        %v2682 = vand.u32 %v2681, 4294901760
        %v2683 = vsub.f32 %v2681, %v2682
        %v2684 = vand.u32 %v2683, 4294901760
        %2685 = vmatprep.subr.mxu0 %v2684
        %v2686 = vand.u32 %v2478, 4294901760
        %v2687 = vsub.f32 %v2478, %v2686
        %v2688 = vand.u32 %v2687, 4294901760
        %v2689 = vsub.f32 %v2687, %v2688
        %v2690 = vand.u32 %v2689, 4294901760
        %2691 = vmatpush1.msra.mxu0 %v2690
        %v2692 = vand.u32 %v2477, 4294901760
        %v2693 = vsub.f32 %v2477, %v2692
        %v2694 = vand.u32 %v2693, 4294901760
        %v2695 = vsub.f32 %v2693, %v2694
        %v2696 = vand.u32 %v2695, 4294901760
        %2697 = vmatprep.subr.mxu0 %v2696
        %v2698 = vand.u32 %v2476, 4294901760
        %v2699 = vsub.f32 %v2476, %v2698
        %v2700 = vand.u32 %v2699, 4294901760
        %v2701 = vsub.f32 %v2699, %v2700
        %v2702 = vand.u32 %v2701, 4294901760
        %2703 = vmatpush1.msra.mxu0 %v2702
        %v2704 = vand.u32 %v2475, 4294901760
        %v2705 = vsub.f32 %v2475, %v2704
        %v2706 = vand.u32 %v2705, 4294901760
        %v2707 = vsub.f32 %v2705, %v2706
        %v2708 = vand.u32 %v2707, 4294901760
        %2709 = vmatprep.subr.mxu0 %v2708
        %v2710 = vand.u32 %v2474, 4294901760
        %v2711 = vsub.f32 %v2474, %v2710
        %v2712 = vand.u32 %v2711, 4294901760
        %v2713 = vsub.f32 %v2711, %v2712
        %v2714 = vand.u32 %v2713, 4294901760
        %2715 = vmatpush1.msra.mxu0 %v2714
        %v2716 = vand.u32 %v2473, 4294901760
        %v2717 = vsub.f32 %v2473, %v2716
        %v2718 = vand.u32 %v2717, 4294901760
        %v2719 = vsub.f32 %v2717, %v2718
        %v2720 = vand.u32 %v2719, 4294901760
        %2721 = vmatprep.subr.mxu0 %v2720
        %v2722 = vand.u32 %v2472, 4294901760
        %v2723 = vsub.f32 %v2472, %v2722
        %v2724 = vand.u32 %v2723, 4294901760
        %v2725 = vsub.f32 %v2723, %v2724
        %v2726 = vand.u32 %v2725, 4294901760
        %2727 = vmatpush1.msra.mxu0 %v2726
        %v2728 = vand.u32 %v2471, 4294901760
        %v2729 = vsub.f32 %v2471, %v2728
        %v2730 = vand.u32 %v2729, 4294901760
        %v2731 = vsub.f32 %v2729, %v2730
        %v2732 = vand.u32 %v2731, 4294901760
        %2733 = vmatprep.subr.mxu0 %v2732
        %v2734 = vand.u32 %v2470, 4294901760
        %v2735 = vsub.f32 %v2470, %v2734
        %v2736 = vand.u32 %v2735, 4294901760
        %v2737 = vsub.f32 %v2735, %v2736
        %v2738 = vand.u32 %v2737, 4294901760
        %2739 = vmatpush1.msra.mxu0 %v2738
        %v2740 = vand.u32 %v2469, 4294901760
        %v2741 = vsub.f32 %v2469, %v2740
        %v2742 = vand.u32 %v2741, 4294901760
        %v2743 = vsub.f32 %v2741, %v2742
        %v2744 = vand.u32 %v2743, 4294901760
        %2745 = vmatprep.subr.mxu0 %v2744
        %v2746 = vand.u32 %v2468, 4294901760
        %v2747 = vsub.f32 %v2468, %v2746
        %v2748 = vand.u32 %v2747, 4294901760
        %v2749 = vsub.f32 %v2747, %v2748
        %v2750 = vand.u32 %v2749, 4294901760
        %2751 = vmatpush1.msra.mxu0 %v2750
        %v2752 = vand.u32 %v2467, 4294901760
        %v2753 = vsub.f32 %v2467, %v2752
        %v2754 = vand.u32 %v2753, 4294901760
        %v2755 = vsub.f32 %v2753, %v2754
        %v2756 = vand.u32 %v2755, 4294901760
        %2757 = vmatprep.subr.mxu0 %v2756
        %v2758 = vand.u32 %v2466, 4294901760
        %v2759 = vsub.f32 %v2466, %v2758
        %v2760 = vand.u32 %v2759, 4294901760
        %v2761 = vsub.f32 %v2759, %v2760
        %v2762 = vand.u32 %v2761, 4294901760
        %2763 = vmatpush1.msra.mxu0 %v2762
        %v2764 = vand.u32 %v2465, 4294901760
        %v2765 = vsub.f32 %v2465, %v2764
        %v2766 = vand.u32 %v2765, 4294901760
        %v2767 = vsub.f32 %v2765, %v2766
        %v2768 = vand.u32 %v2767, 4294901760
        %2769 = vmatprep.subr.mxu0 %v2768
        %v2770 = vand.u32 %v2464, 4294901760
        %v2771 = vsub.f32 %v2464, %v2770
        %v2772 = vand.u32 %v2771, 4294901760
        %v2773 = vsub.f32 %v2771, %v2772
        %v2774 = vand.u32 %v2773, 4294901760
        %2775 = vmatpush1.msra.mxu0 %v2774
        %v2776 = vand.u32 %v2463, 4294901760
        %v2777 = vsub.f32 %v2463, %v2776
        %v2778 = vand.u32 %v2777, 4294901760
        %v2779 = vsub.f32 %v2777, %v2778
        %v2780 = vand.u32 %v2779, 4294901760
        %2781 = vmatprep.subr.mxu0 %v2780
        %v2782 = vand.u32 %v2462, 4294901760
        %v2783 = vsub.f32 %v2462, %v2782
        %v2784 = vand.u32 %v2783, 4294901760
        %v2785 = vsub.f32 %v2783, %v2784
        %v2786 = vand.u32 %v2785, 4294901760
        %2787 = vmatpush1.msra.mxu0 %v2786
        %v2788 = vand.u32 %v2461, 4294901760
        %v2789 = vsub.f32 %v2461, %v2788
        %v2790 = vand.u32 %v2789, 4294901760
        %v2791 = vsub.f32 %v2789, %v2790
        %v2792 = vand.u32 %v2791, 4294901760
        %2793 = vmatprep.subr.mxu0 %v2792
        %v2794 = vand.u32 %v2460, 4294901760
        %v2795 = vsub.f32 %v2460, %v2794
        %v2796 = vand.u32 %v2795, 4294901760
        %v2797 = vsub.f32 %v2795, %v2796
        %v2798 = vand.u32 %v2797, 4294901760
        %2799 = vmatpush1.msra.mxu0 %v2798
        %2800 = vmatprep.subr.mxu0 0.0
        %2801 = vmatpush2.msra.mxu0 0.0
        %2802 = vmatprep.subr.mxu0 0.0
        %2803 = vmatpush2.msra.mxu0 0.0
        %2804 = vmatprep.subr.mxu0 0.0
        %2805 = vmatpush2.msra.mxu0 0.0
        %2806 = vmatprep.subr.mxu0 0.0
        %2807 = vmatpush2.msra.mxu0 0.0
        %2808 = vmatprep.subr.mxu0 0.0
        %2809 = vmatpush2.msra.mxu0 0.0
        %2810 = vmatprep.subr.mxu0 0.0
        %2811 = vmatpush2.msra.mxu0 0.0
        %2812 = vmatprep.subr.mxu0 0.0
        %2813 = vmatpush2.msra.mxu0 0.0
        %2814 = vmatprep.subr.mxu0 0.0
        %2815 = vmatpush2.msra.mxu0 0.0
        %2816 = vmatprep.subr.mxu0 0.0
        %2817 = vmatpush2.msra.mxu0 0.0
        %2818 = vmatprep.subr.mxu0 0.0
        %2819 = vmatpush2.msra.mxu0 0.0
        %2820 = vmatprep.subr.mxu0 0.0
        %2821 = vmatpush2.msra.mxu0 0.0
        %2822 = vmatprep.subr.mxu0 0.0
        %2823 = vmatpush2.msra.mxu0 0.0
        %2824 = vmatprep.subr.mxu0 0.0
        %2825 = vmatpush2.msra.mxu0 0.0
        %2826 = vmatprep.subr.mxu0 0.0
        %2827 = vmatpush2.msra.mxu0 0.0
        %2828 = vmatprep.subr.mxu0 0.0
        %2829 = vmatpush2.msra.mxu0 0.0
        %2830 = vmatprep.subr.mxu0 0.0
        %2831 = vmatpush2.msra.mxu0 0.0
        %2832 = vmatprep.mubr.f32.mxu0 0.0
        %v2833 = vand.u32 %v2502, 4294901760
        %2834 = vmatmul.mubr.f32.gmra.mxu0 %v2833
        %v2835 = vpop.f32.mrf.mxu0
        %v2836 = vadd.f32 %v2613, %v2835
        %v2837 = vpop.f32.mrf.mxu0
        %v2838 = vadd.f32 %v2615, %v2837
        %2839 = vmatprep.mubr.f32.mxu0 0.0
        %v2840 = vand.u32 %v2505, 4294901760
        %2841 = vmatmul.mubr.f32.gmra.mxu0 %v2840
        %v2842 = vpop.f32.mrf.mxu0
        %v2843 = vadd.f32 %v2624, %v2842
        %v2844 = vpop.f32.mrf.mxu0
        %v2845 = vadd.f32 %v2626, %v2844
        %2846 = vdwg.mxu0
        %2847 = vmatprep.subr.mxu0 0.0
        %2848 = vmatpush1.msra.mxu0 0.0
        %2849 = vmatprep.subr.mxu0 0.0
        %2850 = vmatpush1.msra.mxu0 0.0
        %v2851 = vand.u32 %v2511, 4294901760
        %v2852 = vsub.f32 %v2511, %v2851
        %2853 = vmatprep.subr.mxu0 %v2852
        %v2854 = vand.u32 %v2508, 4294901760
        %v2855 = vsub.f32 %v2508, %v2854
        %2856 = vmatpush1.msra.mxu0 %v2855
        %v2857 = vand.u32 %v2485, 4294901760
        %v2858 = vsub.f32 %v2485, %v2857
        %2859 = vmatprep.subr.mxu0 %v2858
        %v2860 = vand.u32 %v2484, 4294901760
        %v2861 = vsub.f32 %v2484, %v2860
        %2862 = vmatpush1.msra.mxu0 %v2861
        %v2863 = vand.u32 %v2483, 4294901760
        %v2864 = vsub.f32 %v2483, %v2863
        %2865 = vmatprep.subr.mxu0 %v2864
        %v2866 = vand.u32 %v2482, 4294901760
        %v2867 = vsub.f32 %v2482, %v2866
        %2868 = vmatpush1.msra.mxu0 %v2867
        %v2869 = vand.u32 %v2481, 4294901760
        %v2870 = vsub.f32 %v2481, %v2869
        %2871 = vmatprep.subr.mxu0 %v2870
        %v2872 = vand.u32 %v2480, 4294901760
        %v2873 = vsub.f32 %v2480, %v2872
        %2874 = vmatpush1.msra.mxu0 %v2873
        %v2875 = vand.u32 %v2479, 4294901760
        %v2876 = vsub.f32 %v2479, %v2875
        %2877 = vmatprep.subr.mxu0 %v2876
        %v2878 = vand.u32 %v2478, 4294901760
        %v2879 = vsub.f32 %v2478, %v2878
        %2880 = vmatpush1.msra.mxu0 %v2879
        %v2881 = vand.u32 %v2477, 4294901760
        %v2882 = vsub.f32 %v2477, %v2881
        %2883 = vmatprep.subr.mxu0 %v2882
        %v2884 = vand.u32 %v2476, 4294901760
        %v2885 = vsub.f32 %v2476, %v2884
        %2886 = vmatpush1.msra.mxu0 %v2885
        %v2887 = vand.u32 %v2475, 4294901760
        %v2888 = vsub.f32 %v2475, %v2887
        %2889 = vmatprep.subr.mxu0 %v2888
        %v2890 = vand.u32 %v2474, 4294901760
        %v2891 = vsub.f32 %v2474, %v2890
        %2892 = vmatpush1.msra.mxu0 %v2891
        %v2893 = vand.u32 %v2473, 4294901760
        %v2894 = vsub.f32 %v2473, %v2893
        %2895 = vmatprep.subr.mxu0 %v2894
        %v2896 = vand.u32 %v2472, 4294901760
        %v2897 = vsub.f32 %v2472, %v2896
        %2898 = vmatpush1.msra.mxu0 %v2897
        %v2899 = vand.u32 %v2471, 4294901760
        %v2900 = vsub.f32 %v2471, %v2899
        %2901 = vmatprep.subr.mxu0 %v2900
        %v2902 = vand.u32 %v2470, 4294901760
        %v2903 = vsub.f32 %v2470, %v2902
        %2904 = vmatpush1.msra.mxu0 %v2903
        %v2905 = vand.u32 %v2469, 4294901760
        %v2906 = vsub.f32 %v2469, %v2905
        %2907 = vmatprep.subr.mxu0 %v2906
        %v2908 = vand.u32 %v2468, 4294901760
        %v2909 = vsub.f32 %v2468, %v2908
        %2910 = vmatpush1.msra.mxu0 %v2909
        %v2911 = vand.u32 %v2467, 4294901760
        %v2912 = vsub.f32 %v2467, %v2911
        %2913 = vmatprep.subr.mxu0 %v2912
        %v2914 = vand.u32 %v2466, 4294901760
        %v2915 = vsub.f32 %v2466, %v2914
        %2916 = vmatpush1.msra.mxu0 %v2915
        %v2917 = vand.u32 %v2465, 4294901760
        %v2918 = vsub.f32 %v2465, %v2917
        %2919 = vmatprep.subr.mxu0 %v2918
        %v2920 = vand.u32 %v2464, 4294901760
        %v2921 = vsub.f32 %v2464, %v2920
        %2922 = vmatpush1.msra.mxu0 %v2921
        %v2923 = vand.u32 %v2463, 4294901760
        %v2924 = vsub.f32 %v2463, %v2923
        %2925 = vmatprep.subr.mxu0 %v2924
        %v2926 = vand.u32 %v2462, 4294901760
        %v2927 = vsub.f32 %v2462, %v2926
        %2928 = vmatpush1.msra.mxu0 %v2927
        %v2929 = vand.u32 %v2461, 4294901760
        %v2930 = vsub.f32 %v2461, %v2929
        %2931 = vmatprep.subr.mxu0 %v2930
        %v2932 = vand.u32 %v2460, 4294901760
        %v2933 = vsub.f32 %v2460, %v2932
        %2934 = vmatpush1.msra.mxu0 %v2933
        %2935 = vmatprep.subr.mxu0 0.0
        %2936 = vmatpush2.msra.mxu0 0.0
        %2937 = vmatprep.subr.mxu0 0.0
        %2938 = vmatpush2.msra.mxu0 0.0
        %2939 = vmatprep.subr.mxu0 0.0
        %2940 = vmatpush2.msra.mxu0 0.0
        %2941 = vmatprep.subr.mxu0 0.0
        %2942 = vmatpush2.msra.mxu0 0.0
        %2943 = vmatprep.subr.mxu0 0.0
        %2944 = vmatpush2.msra.mxu0 0.0
        %2945 = vmatprep.subr.mxu0 0.0
        %2946 = vmatpush2.msra.mxu0 0.0
        %2947 = vmatprep.subr.mxu0 0.0
        %2948 = vmatpush2.msra.mxu0 0.0
        %2949 = vmatprep.subr.mxu0 0.0
        %2950 = vmatpush2.msra.mxu0 0.0
        %2951 = vmatprep.subr.mxu0 0.0
        %2952 = vmatpush2.msra.mxu0 0.0
        %2953 = vmatprep.subr.mxu0 0.0
        %2954 = vmatpush2.msra.mxu0 0.0
        %2955 = vmatprep.subr.mxu0 0.0
        %2956 = vmatpush2.msra.mxu0 0.0
        %2957 = vmatprep.subr.mxu0 0.0
        %2958 = vmatpush2.msra.mxu0 0.0
        %2959 = vmatprep.subr.mxu0 0.0
        %2960 = vmatpush2.msra.mxu0 0.0
        %2961 = vmatprep.subr.mxu0 0.0
        %2962 = vmatpush2.msra.mxu0 0.0
        %2963 = vmatprep.subr.mxu0 0.0
        %2964 = vmatpush2.msra.mxu0 0.0
        %2965 = vmatprep.subr.mxu0 0.0
        %2966 = vmatpush2.msra.mxu0 0.0
        %2967 = vmatprep.mubr.f32.mxu0 0.0
        %v2968 = vand.u32 %v2502, 4294901760
        %v2969 = vsub.f32 %v2502, %v2968
        %2970 = vmatmul.mubr.f32.gmra.mxu0 %v2969
        %v2971 = vpop.f32.mrf.mxu0
        %v2972 = vadd.f32 %v2836, %v2971
        %v2973 = vpop.f32.mrf.mxu0
        %v2974 = vadd.f32 %v2838, %v2973
        %2975 = vmatprep.mubr.f32.mxu0 0.0
        %v2976 = vand.u32 %v2505, 4294901760
        %v2977 = vsub.f32 %v2505, %v2976
        %2978 = vmatmul.mubr.f32.gmra.mxu0 %v2977
        %v2979 = vpop.f32.mrf.mxu0
        %v2980 = vadd.f32 %v2843, %v2979
        %v2981 = vpop.f32.mrf.mxu0
        %v2982 = vadd.f32 %v2845, %v2981
        %2983 = vdwg.mxu0
        %2984 = vmatprep.subr.mxu0 0.0
        %2985 = vmatpush1.msra.mxu0 0.0
        %2986 = vmatprep.subr.mxu0 0.0
        %2987 = vmatpush1.msra.mxu0 0.0
        %v2988 = vand.u32 %v2511, 4294901760
        %2989 = vmatprep.subr.mxu0 %v2988
        %v2990 = vand.u32 %v2508, 4294901760
        %2991 = vmatpush1.msra.mxu0 %v2990
        %v2992 = vand.u32 %v2485, 4294901760
        %2993 = vmatprep.subr.mxu0 %v2992
        %v2994 = vand.u32 %v2484, 4294901760
        %2995 = vmatpush1.msra.mxu0 %v2994
        %v2996 = vand.u32 %v2483, 4294901760
        %2997 = vmatprep.subr.mxu0 %v2996
        %v2998 = vand.u32 %v2482, 4294901760
        %2999 = vmatpush1.msra.mxu0 %v2998
        %v3000 = vand.u32 %v2481, 4294901760
        %3001 = vmatprep.subr.mxu0 %v3000
        %v3002 = vand.u32 %v2480, 4294901760
        %3003 = vmatpush1.msra.mxu0 %v3002
        %v3004 = vand.u32 %v2479, 4294901760
        %3005 = vmatprep.subr.mxu0 %v3004
        %v3006 = vand.u32 %v2478, 4294901760
        %3007 = vmatpush1.msra.mxu0 %v3006
        %v3008 = vand.u32 %v2477, 4294901760
        %3009 = vmatprep.subr.mxu0 %v3008
        %v3010 = vand.u32 %v2476, 4294901760
        %3011 = vmatpush1.msra.mxu0 %v3010
        %v3012 = vand.u32 %v2475, 4294901760
        %3013 = vmatprep.subr.mxu0 %v3012
        %v3014 = vand.u32 %v2474, 4294901760
        %3015 = vmatpush1.msra.mxu0 %v3014
        %v3016 = vand.u32 %v2473, 4294901760
        %3017 = vmatprep.subr.mxu0 %v3016
        %v3018 = vand.u32 %v2472, 4294901760
        %3019 = vmatpush1.msra.mxu0 %v3018
        %v3020 = vand.u32 %v2471, 4294901760
        %3021 = vmatprep.subr.mxu0 %v3020
        %v3022 = vand.u32 %v2470, 4294901760
        %3023 = vmatpush1.msra.mxu0 %v3022
        %v3024 = vand.u32 %v2469, 4294901760
        %3025 = vmatprep.subr.mxu0 %v3024
        %v3026 = vand.u32 %v2468, 4294901760
        %3027 = vmatpush1.msra.mxu0 %v3026
        %v3028 = vand.u32 %v2467, 4294901760
        %3029 = vmatprep.subr.mxu0 %v3028
        %v3030 = vand.u32 %v2466, 4294901760
        %3031 = vmatpush1.msra.mxu0 %v3030
        %v3032 = vand.u32 %v2465, 4294901760
        %3033 = vmatprep.subr.mxu0 %v3032
        %v3034 = vand.u32 %v2464, 4294901760
        %3035 = vmatpush1.msra.mxu0 %v3034
        %v3036 = vand.u32 %v2463, 4294901760
        %3037 = vmatprep.subr.mxu0 %v3036
        %v3038 = vand.u32 %v2462, 4294901760
        %3039 = vmatpush1.msra.mxu0 %v3038
        %v3040 = vand.u32 %v2461, 4294901760
        %3041 = vmatprep.subr.mxu0 %v3040
        %v3042 = vand.u32 %v2460, 4294901760
        %3043 = vmatpush1.msra.mxu0 %v3042
        %3044 = vmatprep.subr.mxu0 0.0
        %3045 = vmatpush2.msra.mxu0 0.0
        %3046 = vmatprep.subr.mxu0 0.0
        %3047 = vmatpush2.msra.mxu0 0.0
        %3048 = vmatprep.subr.mxu0 0.0
        %3049 = vmatpush2.msra.mxu0 0.0
        %3050 = vmatprep.subr.mxu0 0.0
        %3051 = vmatpush2.msra.mxu0 0.0
        %3052 = vmatprep.subr.mxu0 0.0
        %3053 = vmatpush2.msra.mxu0 0.0
        %3054 = vmatprep.subr.mxu0 0.0
        %3055 = vmatpush2.msra.mxu0 0.0
        %3056 = vmatprep.subr.mxu0 0.0
        %3057 = vmatpush2.msra.mxu0 0.0
        %3058 = vmatprep.subr.mxu0 0.0
        %3059 = vmatpush2.msra.mxu0 0.0
        %3060 = vmatprep.subr.mxu0 0.0
        %3061 = vmatpush2.msra.mxu0 0.0
        %3062 = vmatprep.subr.mxu0 0.0
        %3063 = vmatpush2.msra.mxu0 0.0
        %3064 = vmatprep.subr.mxu0 0.0
        %3065 = vmatpush2.msra.mxu0 0.0
        %3066 = vmatprep.subr.mxu0 0.0
        %3067 = vmatpush2.msra.mxu0 0.0
        %3068 = vmatprep.subr.mxu0 0.0
        %3069 = vmatpush2.msra.mxu0 0.0
        %3070 = vmatprep.subr.mxu0 0.0
        %3071 = vmatpush2.msra.mxu0 0.0
        %3072 = vmatprep.subr.mxu0 0.0
        %3073 = vmatpush2.msra.mxu0 0.0
        %3074 = vmatprep.subr.mxu0 0.0
        %3075 = vmatpush2.msra.mxu0 0.0
        %3076 = vmatprep.mubr.f32.mxu0 0.0
        %v3077 = vand.u32 %v2502, 4294901760
        %v3078 = vsub.f32 %v2502, %v3077
        %v3079 = vand.u32 %v3078, 4294901760
        %3080 = vmatmul.mubr.f32.gmra.mxu0 %v3079
        %v3081 = vpop.f32.mrf.mxu0
        %v3082 = vadd.f32 %v2972, %v3081
        %v3083 = vpop.f32.mrf.mxu0
        %v3084 = vadd.f32 %v2974, %v3083
        %3085 = vmatprep.mubr.f32.mxu0 0.0
        %v3086 = vand.u32 %v2505, 4294901760
        %v3087 = vsub.f32 %v2505, %v3086
        %v3088 = vand.u32 %v3087, 4294901760
        %3089 = vmatmul.mubr.f32.gmra.mxu0 %v3088
        %v3090 = vpop.f32.mrf.mxu0
        %v3091 = vadd.f32 %v2980, %v3090
        %v3092 = vpop.f32.mrf.mxu0
        %v3093 = vadd.f32 %v2982, %v3092
        %3094 = vdwg.mxu0
        %3095 = vmatprep.subr.mxu0 0.0
        %3096 = vmatpush1.msra.mxu0 0.0
        %3097 = vmatprep.subr.mxu0 0.0
        %3098 = vmatpush1.msra.mxu0 0.0
        %v3099 = vand.u32 %v2511, 4294901760
        %v3100 = vsub.f32 %v2511, %v3099
        %v3101 = vand.u32 %v3100, 4294901760
        %3102 = vmatprep.subr.mxu0 %v3101
        %v3103 = vand.u32 %v2508, 4294901760
        %v3104 = vsub.f32 %v2508, %v3103
        %v3105 = vand.u32 %v3104, 4294901760
        %3106 = vmatpush1.msra.mxu0 %v3105
        %v3107 = vand.u32 %v2485, 4294901760
        %v3108 = vsub.f32 %v2485, %v3107
        %v3109 = vand.u32 %v3108, 4294901760
        %3110 = vmatprep.subr.mxu0 %v3109
        %v3111 = vand.u32 %v2484, 4294901760
        %v3112 = vsub.f32 %v2484, %v3111
        %v3113 = vand.u32 %v3112, 4294901760
        %3114 = vmatpush1.msra.mxu0 %v3113
        %v3115 = vand.u32 %v2483, 4294901760
        %v3116 = vsub.f32 %v2483, %v3115
        %v3117 = vand.u32 %v3116, 4294901760
        %3118 = vmatprep.subr.mxu0 %v3117
        %v3119 = vand.u32 %v2482, 4294901760
        %v3120 = vsub.f32 %v2482, %v3119
        %v3121 = vand.u32 %v3120, 4294901760
        %3122 = vmatpush1.msra.mxu0 %v3121
        %v3123 = vand.u32 %v2481, 4294901760
        %v3124 = vsub.f32 %v2481, %v3123
        %v3125 = vand.u32 %v3124, 4294901760
        %3126 = vmatprep.subr.mxu0 %v3125
        %v3127 = vand.u32 %v2480, 4294901760
        %v3128 = vsub.f32 %v2480, %v3127
        %v3129 = vand.u32 %v3128, 4294901760
        %3130 = vmatpush1.msra.mxu0 %v3129
        %v3131 = vand.u32 %v2479, 4294901760
        %v3132 = vsub.f32 %v2479, %v3131
        %v3133 = vand.u32 %v3132, 4294901760
        %3134 = vmatprep.subr.mxu0 %v3133
        %v3135 = vand.u32 %v2478, 4294901760
        %v3136 = vsub.f32 %v2478, %v3135
        %v3137 = vand.u32 %v3136, 4294901760
        %3138 = vmatpush1.msra.mxu0 %v3137
        %v3139 = vand.u32 %v2477, 4294901760
        %v3140 = vsub.f32 %v2477, %v3139
        %v3141 = vand.u32 %v3140, 4294901760
        %3142 = vmatprep.subr.mxu0 %v3141
        %v3143 = vand.u32 %v2476, 4294901760
        %v3144 = vsub.f32 %v2476, %v3143
        %v3145 = vand.u32 %v3144, 4294901760
        %3146 = vmatpush1.msra.mxu0 %v3145
        %v3147 = vand.u32 %v2475, 4294901760
        %v3148 = vsub.f32 %v2475, %v3147
        %v3149 = vand.u32 %v3148, 4294901760
        %3150 = vmatprep.subr.mxu0 %v3149
        %v3151 = vand.u32 %v2474, 4294901760
        %v3152 = vsub.f32 %v2474, %v3151
        %v3153 = vand.u32 %v3152, 4294901760
        %3154 = vmatpush1.msra.mxu0 %v3153
        %v3155 = vand.u32 %v2473, 4294901760
        %v3156 = vsub.f32 %v2473, %v3155
        %v3157 = vand.u32 %v3156, 4294901760
        %3158 = vmatprep.subr.mxu0 %v3157
        %v3159 = vand.u32 %v2472, 4294901760
        %v3160 = vsub.f32 %v2472, %v3159
        %v3161 = vand.u32 %v3160, 4294901760
        %3162 = vmatpush1.msra.mxu0 %v3161
        %v3163 = vand.u32 %v2471, 4294901760
        %v3164 = vsub.f32 %v2471, %v3163
        %v3165 = vand.u32 %v3164, 4294901760
        %3166 = vmatprep.subr.mxu0 %v3165
        %v3167 = vand.u32 %v2470, 4294901760
        %v3168 = vsub.f32 %v2470, %v3167
        %v3169 = vand.u32 %v3168, 4294901760
        %3170 = vmatpush1.msra.mxu0 %v3169
        %v3171 = vand.u32 %v2469, 4294901760
        %v3172 = vsub.f32 %v2469, %v3171
        %v3173 = vand.u32 %v3172, 4294901760
        %3174 = vmatprep.subr.mxu0 %v3173
        %v3175 = vand.u32 %v2468, 4294901760
        %v3176 = vsub.f32 %v2468, %v3175
        %v3177 = vand.u32 %v3176, 4294901760
        %3178 = vmatpush1.msra.mxu0 %v3177
        %v3179 = vand.u32 %v2467, 4294901760
        %v3180 = vsub.f32 %v2467, %v3179
        %v3181 = vand.u32 %v3180, 4294901760
        %3182 = vmatprep.subr.mxu0 %v3181
        %v3183 = vand.u32 %v2466, 4294901760
        %v3184 = vsub.f32 %v2466, %v3183
        %v3185 = vand.u32 %v3184, 4294901760
        %3186 = vmatpush1.msra.mxu0 %v3185
        %v3187 = vand.u32 %v2465, 4294901760
        %v3188 = vsub.f32 %v2465, %v3187
        %v3189 = vand.u32 %v3188, 4294901760
        %3190 = vmatprep.subr.mxu0 %v3189
        %v3191 = vand.u32 %v2464, 4294901760
        %v3192 = vsub.f32 %v2464, %v3191
        %v3193 = vand.u32 %v3192, 4294901760
        %3194 = vmatpush1.msra.mxu0 %v3193
        %v3195 = vand.u32 %v2463, 4294901760
        %v3196 = vsub.f32 %v2463, %v3195
        %v3197 = vand.u32 %v3196, 4294901760
        %3198 = vmatprep.subr.mxu0 %v3197
        %v3199 = vand.u32 %v2462, 4294901760
        %v3200 = vsub.f32 %v2462, %v3199
        %v3201 = vand.u32 %v3200, 4294901760
        %3202 = vmatpush1.msra.mxu0 %v3201
        %v3203 = vand.u32 %v2461, 4294901760
        %v3204 = vsub.f32 %v2461, %v3203
        %v3205 = vand.u32 %v3204, 4294901760
        %3206 = vmatprep.subr.mxu0 %v3205
        %v3207 = vand.u32 %v2460, 4294901760
        %v3208 = vsub.f32 %v2460, %v3207
        %v3209 = vand.u32 %v3208, 4294901760
        %3210 = vmatpush1.msra.mxu0 %v3209
        %3211 = vmatprep.subr.mxu0 0.0
        %3212 = vmatpush2.msra.mxu0 0.0
        %3213 = vmatprep.subr.mxu0 0.0
        %3214 = vmatpush2.msra.mxu0 0.0
        %3215 = vmatprep.subr.mxu0 0.0
        %3216 = vmatpush2.msra.mxu0 0.0
        %3217 = vmatprep.subr.mxu0 0.0
        %3218 = vmatpush2.msra.mxu0 0.0
        %3219 = vmatprep.subr.mxu0 0.0
        %3220 = vmatpush2.msra.mxu0 0.0
        %3221 = vmatprep.subr.mxu0 0.0
        %3222 = vmatpush2.msra.mxu0 0.0
        %3223 = vmatprep.subr.mxu0 0.0
        %3224 = vmatpush2.msra.mxu0 0.0
        %3225 = vmatprep.subr.mxu0 0.0
        %3226 = vmatpush2.msra.mxu0 0.0
        %3227 = vmatprep.subr.mxu0 0.0
        %3228 = vmatpush2.msra.mxu0 0.0
        %3229 = vmatprep.subr.mxu0 0.0
        %3230 = vmatpush2.msra.mxu0 0.0
        %3231 = vmatprep.subr.mxu0 0.0
        %3232 = vmatpush2.msra.mxu0 0.0
        %3233 = vmatprep.subr.mxu0 0.0
        %3234 = vmatpush2.msra.mxu0 0.0
        %3235 = vmatprep.subr.mxu0 0.0
        %3236 = vmatpush2.msra.mxu0 0.0
        %3237 = vmatprep.subr.mxu0 0.0
        %3238 = vmatpush2.msra.mxu0 0.0
        %3239 = vmatprep.subr.mxu0 0.0
        %3240 = vmatpush2.msra.mxu0 0.0
        %3241 = vmatprep.subr.mxu0 0.0
        %3242 = vmatpush2.msra.mxu0 0.0
        %3243 = vmatprep.mubr.f32.mxu0 0.0
        %v3244 = vand.u32 %v2502, 4294901760
        %3245 = vmatmul.mubr.f32.gmra.mxu0 %v3244
        %v3246 = vpop.f32.mrf.mxu0
        %v3247 = vadd.f32 %v3082, %v3246
        %v3248 = vpop.f32.mrf.mxu0
        %v3249 = vadd.f32 %v3084, %v3248
        %3250 = vmatprep.mubr.f32.mxu0 0.0
        %v3251 = vand.u32 %v2505, 4294901760
        %3252 = vmatmul.mubr.f32.gmra.mxu0 %v3251
        %v3253 = vpop.f32.mrf.mxu0
        %v3254 = vadd.f32 %v3091, %v3253
        %v3255 = vpop.f32.mrf.mxu0
        %v3256 = vadd.f32 %v3093, %v3255
        %3257 = vdwg.mxu0
        %3258 = vmatprep.subr.mxu0 0.0
        %3259 = vmatpush1.msra.mxu0 0.0
        %3260 = vmatprep.subr.mxu0 0.0
        %3261 = vmatpush1.msra.mxu0 0.0
        %v3262 = vand.u32 %v2511, 4294901760
        %3263 = vmatprep.subr.mxu0 %v3262
        %v3264 = vand.u32 %v2508, 4294901760
        %3265 = vmatpush1.msra.mxu0 %v3264
        %v3266 = vand.u32 %v2485, 4294901760
        %3267 = vmatprep.subr.mxu0 %v3266
        %v3268 = vand.u32 %v2484, 4294901760
        %3269 = vmatpush1.msra.mxu0 %v3268
        %v3270 = vand.u32 %v2483, 4294901760
        %3271 = vmatprep.subr.mxu0 %v3270
        %v3272 = vand.u32 %v2482, 4294901760
        %3273 = vmatpush1.msra.mxu0 %v3272
        %v3274 = vand.u32 %v2481, 4294901760
        %3275 = vmatprep.subr.mxu0 %v3274
        %v3276 = vand.u32 %v2480, 4294901760
        %3277 = vmatpush1.msra.mxu0 %v3276
        %v3278 = vand.u32 %v2479, 4294901760
        %3279 = vmatprep.subr.mxu0 %v3278
        %v3280 = vand.u32 %v2478, 4294901760
        %3281 = vmatpush1.msra.mxu0 %v3280
        %v3282 = vand.u32 %v2477, 4294901760
        %3283 = vmatprep.subr.mxu0 %v3282
        %v3284 = vand.u32 %v2476, 4294901760
        %3285 = vmatpush1.msra.mxu0 %v3284
        %v3286 = vand.u32 %v2475, 4294901760
        %3287 = vmatprep.subr.mxu0 %v3286
        %v3288 = vand.u32 %v2474, 4294901760
        %3289 = vmatpush1.msra.mxu0 %v3288
        %v3290 = vand.u32 %v2473, 4294901760
        %3291 = vmatprep.subr.mxu0 %v3290
        %v3292 = vand.u32 %v2472, 4294901760
        %3293 = vmatpush1.msra.mxu0 %v3292
        %v3294 = vand.u32 %v2471, 4294901760
        %3295 = vmatprep.subr.mxu0 %v3294
        %v3296 = vand.u32 %v2470, 4294901760
        %3297 = vmatpush1.msra.mxu0 %v3296
        %v3298 = vand.u32 %v2469, 4294901760
        %3299 = vmatprep.subr.mxu0 %v3298
        %v3300 = vand.u32 %v2468, 4294901760
        %3301 = vmatpush1.msra.mxu0 %v3300
        %v3302 = vand.u32 %v2467, 4294901760
        %3303 = vmatprep.subr.mxu0 %v3302
        %v3304 = vand.u32 %v2466, 4294901760
        %3305 = vmatpush1.msra.mxu0 %v3304
        %v3306 = vand.u32 %v2465, 4294901760
        %3307 = vmatprep.subr.mxu0 %v3306
        %v3308 = vand.u32 %v2464, 4294901760
        %3309 = vmatpush1.msra.mxu0 %v3308
        %v3310 = vand.u32 %v2463, 4294901760
        %3311 = vmatprep.subr.mxu0 %v3310
        %v3312 = vand.u32 %v2462, 4294901760
        %3313 = vmatpush1.msra.mxu0 %v3312
        %v3314 = vand.u32 %v2461, 4294901760
        %3315 = vmatprep.subr.mxu0 %v3314
        %v3316 = vand.u32 %v2460, 4294901760
        %3317 = vmatpush1.msra.mxu0 %v3316
        %3318 = vmatprep.subr.mxu0 0.0
        %3319 = vmatpush2.msra.mxu0 0.0
        %3320 = vmatprep.subr.mxu0 0.0
        %3321 = vmatpush2.msra.mxu0 0.0
        %3322 = vmatprep.subr.mxu0 0.0
        %3323 = vmatpush2.msra.mxu0 0.0
        %3324 = vmatprep.subr.mxu0 0.0
        %3325 = vmatpush2.msra.mxu0 0.0
        %3326 = vmatprep.subr.mxu0 0.0
        %3327 = vmatpush2.msra.mxu0 0.0
        %3328 = vmatprep.subr.mxu0 0.0
        %3329 = vmatpush2.msra.mxu0 0.0
        %3330 = vmatprep.subr.mxu0 0.0
        %3331 = vmatpush2.msra.mxu0 0.0
        %3332 = vmatprep.subr.mxu0 0.0
        %3333 = vmatpush2.msra.mxu0 0.0
        %3334 = vmatprep.subr.mxu0 0.0
        %3335 = vmatpush2.msra.mxu0 0.0
        %3336 = vmatprep.subr.mxu0 0.0
        %3337 = vmatpush2.msra.mxu0 0.0
        %3338 = vmatprep.subr.mxu0 0.0
        %3339 = vmatpush2.msra.mxu0 0.0
        %3340 = vmatprep.subr.mxu0 0.0
        %3341 = vmatpush2.msra.mxu0 0.0
        %3342 = vmatprep.subr.mxu0 0.0
        %3343 = vmatpush2.msra.mxu0 0.0
        %3344 = vmatprep.subr.mxu0 0.0
        %3345 = vmatpush2.msra.mxu0 0.0
        %3346 = vmatprep.subr.mxu0 0.0
        %3347 = vmatpush2.msra.mxu0 0.0
        %3348 = vmatprep.subr.mxu0 0.0
        %3349 = vmatpush2.msra.mxu0 0.0
        %3350 = vmatprep.mubr.f32.mxu0 0.0
        %v3351 = vand.u32 %v2502, 4294901760
        %3352 = vmatmul.mubr.f32.gmra.mxu0 %v3351
        %v3353 = vpop.f32.mrf.mxu0
        %v3354 = vadd.f32 %v3247, %v3353
        %v3355 = vpop.f32.mrf.mxu0
        %v3356 = vadd.f32 %v3249, %v3355
        %3357 = vmatprep.mubr.f32.mxu0 0.0
        %v3358 = vand.u32 %v2505, 4294901760
        %3359 = vmatmul.mubr.f32.gmra.mxu0 %v3358
        %v3360 = vpop.f32.mrf.mxu0
        %v3361 = vadd.f32 %v3254, %v3360
        %v3362 = vpop.f32.mrf.mxu0
        %v3363 = vadd.f32 %v3256, %v3362
        %3364 = vdwg.mxu0
        %v3365 = vxor.u32 %v2066, 2147483648
        %v3366 = vxor.u32 %v2067, 2147483648
        %v3367 = vmul.f32 %v3365, 1.442695
        %v3368 = vpow.pop %v3367
        %v3369 = vmul.f32 %v3366, 1.442695
        %v3370 = vpow.pop %v3369
        %v3371 = vadd.f32 %v3368, 1.0
        %v3372 = vadd.f32 %v3370, 1.0
        %v3373 = vrcp.pop %v3371
        %v3374 = vmul.f32 1.0, %v3373
        %v3375 = vrcp.pop %v3372
        %v3376 = vmul.f32 1.0, %v3375
        %v3377 = vmul.f32 %v3354, %v3374
        %v3378 = vmul.f32 %v3356, %v3376
        %v3379 = vmax.f32 %v3361, 0.0
        %v3380 = vmax.f32 %v3363, 0.0
        %3381 = vrot.lane.b32.xlu0 %v3377, 17
        %v3382 = vpop.permute.xlu0 %3381
        %3383 = vrot.lane.b32.xlu0 %v3378, 17
        %v3384 = vpop.permute.xlu0 %3383
        %v3385 = vsel %vm1332, %v3382, %v3384
        %v3386 = vsel %vm1332, %v3384, %v3382
        %v3387 = vld [vmem:[%s3] ss:$8 sm:$0x3]
        %v3389 = vlaneseq
        %v3390 = vshrl.u32 %v3389, 7
        %v3391 = vsub.s32 0, %v3390
        %v3392 = vrot.slane %v3387, %v3391
        %v3393 = vlaneseq
        %v3394 = vshrl.u32 %v3393, 7
        %v3395 = vsub.s32 1, %v3394
        %v3396 = vrot.slane %v3387, %v3395
        %v3399 = vmul.f32 %v3386, %v3392
        %v3400 = vmul.f32 %v3385, %v3396
        %3401 = vst [vmem:[#allocation2] sm:$0xff] %v3399
        %3402 = vst [vmem:[#allocation2 + $0x8] sm:$0xff] %v3400
        %3403 = vrot.lane.b32.xlu0 %v3377, 16
        %v3404 = vpop.permute.xlu0 %3403
        %3405 = vrot.lane.b32.xlu0 %v3378, 16
        %v3406 = vpop.permute.xlu0 %3405
        %v3407 = vsel %vm1355, %v3404, %v3406
        %v3408 = vsel %vm1355, %v3406, %v3404
        %v3409 = vld [vmem:[%s1358] ss:$8 sm:$0x3]
        %v3411 = vlaneseq
        %v3412 = vshrl.u32 %v3411, 7
        %v3413 = vsub.s32 0, %v3412
        %v3414 = vrot.slane %v3409, %v3413
        %v3415 = vlaneseq
        %v3416 = vshrl.u32 %v3415, 7
        %v3417 = vsub.s32 1, %v3416
        %v3418 = vrot.slane %v3409, %v3417
        %v3421 = vmul.f32 %v3408, %v3414
        %v3422 = vmul.f32 %v3407, %v3418
        %3423 = vst [vmem:[#allocation2 + $0x10] sm:$0xff] %v3421
        %3424 = vst [vmem:[#allocation2 + $0x18] sm:$0xff] %v3422
        %3425 = vrot.lane.b32.xlu0 %v3377, 15
        %v3426 = vpop.permute.xlu0 %3425
        %3427 = vrot.lane.b32.xlu0 %v3378, 15
        %v3428 = vpop.permute.xlu0 %3427
        %v3429 = vsel %vm2116, %v3426, %v3428
        %v3430 = vsel %vm2116, %v3428, %v3426
        %v3431 = vld [vmem:[%s2119] ss:$8 sm:$0x3]
        %v3433 = vlaneseq
        %v3434 = vshrl.u32 %v3433, 7
        %v3435 = vsub.s32 0, %v3434
        %v3436 = vrot.slane %v3431, %v3435
        %v3437 = vlaneseq
        %v3438 = vshrl.u32 %v3437, 7
        %v3439 = vsub.s32 1, %v3438
        %v3440 = vrot.slane %v3431, %v3439
        %v3443 = vmul.f32 %v3430, %v3436
        %v3444 = vmul.f32 %v3429, %v3440
        %3445 = vst [vmem:[#allocation2 + $0x20] sm:$0xff] %v3443
        %3446 = vst [vmem:[#allocation2 + $0x28] sm:$0xff] %v3444
        %3447 = vrot.lane.b32.xlu0 %v3377, 1
        %v3448 = vpop.permute.xlu0 %3447
        %3449 = vrot.lane.b32.xlu0 %v3378, 1
        %v3450 = vpop.permute.xlu0 %3449
        %v3451 = vsel %vm1413, %v3448, %v3450
        %v3452 = vsel %vm1413, %v3450, %v3448
        %v3453 = vld [vmem:[%s1416] ss:$8 sm:$0x3]
        %v3455 = vlaneseq
        %v3456 = vshrl.u32 %v3455, 7
        %v3457 = vsub.s32 0, %v3456
        %v3458 = vrot.slane %v3453, %v3457
        %v3459 = vlaneseq
        %v3460 = vshrl.u32 %v3459, 7
        %v3461 = vsub.s32 1, %v3460
        %v3462 = vrot.slane %v3453, %v3461
        %v3465 = vmul.f32 %v3452, %v3458
        %v3466 = vmul.f32 %v3451, %v3462
        %3467 = vst [vmem:[#allocation2 + $0x30] sm:$0xff] %v3465
        %3468 = vst [vmem:[#allocation2 + $0x38] sm:$0xff] %v3466
        %3469 = vst [vmem:[#allocation2 + $0x40] sm:$0xff] %v3377
        %3470 = vst [vmem:[#allocation2 + $0x48] sm:$0xff] %v3378
        %3471 = vrot.lane.b32.xlu0 %v3377, 127
        %v3472 = vpop.permute.xlu0 %3471
        %3473 = vrot.lane.b32.xlu0 %v3378, 127
        %v3474 = vpop.permute.xlu0 %3473
        %v3475 = vsel %vm2164, %v3472, %v3474
        %v3476 = vsel %vm2164, %v3474, %v3472
        %v3477 = vld [vmem:[%s2167] ss:$8 sm:$0x3]
        %v3479 = vlaneseq
        %v3480 = vshrl.u32 %v3479, 7
        %v3481 = vsub.s32 0, %v3480
        %v3482 = vrot.slane %v3477, %v3481
        %v3483 = vlaneseq
        %v3484 = vshrl.u32 %v3483, 7
        %v3485 = vsub.s32 1, %v3484
        %v3486 = vrot.slane %v3477, %v3485
        %v3489 = vmul.f32 %v3475, %v3482
        %v3490 = vmul.f32 %v3476, %v3486
        %3491 = vst [vmem:[#allocation2 + $0x50] sm:$0xff] %v3489
        %3492 = vst [vmem:[#allocation2 + $0x58] sm:$0xff] %v3490
        %3493 = vrot.lane.b32.xlu0 %v3377, 113
        %v3494 = vpop.permute.xlu0 %3493
        %3495 = vrot.lane.b32.xlu0 %v3378, 113
        %v3496 = vpop.permute.xlu0 %3495
        %v3497 = vsel %vm2188, %v3494, %v3496
        %v3498 = vsel %vm2188, %v3496, %v3494
        %v3499 = vld [vmem:[%s2191] ss:$8 sm:$0x3]
        %v3501 = vlaneseq
        %v3502 = vshrl.u32 %v3501, 7
        %v3503 = vsub.s32 0, %v3502
        %v3504 = vrot.slane %v3499, %v3503
        %v3505 = vlaneseq
        %v3506 = vshrl.u32 %v3505, 7
        %v3507 = vsub.s32 1, %v3506
        %v3508 = vrot.slane %v3499, %v3507
        %v3511 = vmul.f32 %v3497, %v3504
        %v3512 = vmul.f32 %v3498, %v3508
        %3513 = vst [vmem:[#allocation2 + $0x60] sm:$0xff] %v3511
        %3514 = vst [vmem:[#allocation2 + $0x68] sm:$0xff] %v3512
        %3515 = vrot.lane.b32.xlu0 %v3377, 112
        %v3516 = vpop.permute.xlu0 %3515
        %3517 = vrot.lane.b32.xlu0 %v3378, 112
        %v3518 = vpop.permute.xlu0 %3517
        %v3519 = vsel %vm2212, %v3516, %v3518
        %v3520 = vsel %vm2212, %v3518, %v3516
        %v3521 = vld [vmem:[%s2215] ss:$8 sm:$0x3]
        %v3523 = vlaneseq
        %v3524 = vshrl.u32 %v3523, 7
        %v3525 = vsub.s32 0, %v3524
        %v3526 = vrot.slane %v3521, %v3525
        %v3527 = vlaneseq
        %v3528 = vshrl.u32 %v3527, 7
        %v3529 = vsub.s32 1, %v3528
        %v3530 = vrot.slane %v3521, %v3529
        %v3533 = vmul.f32 %v3519, %v3526
        %v3534 = vmul.f32 %v3520, %v3530
        %3535 = vst [vmem:[#allocation2 + $0x70] sm:$0xff] %v3533
        %3536 = vst [vmem:[#allocation2 + $0x78] sm:$0xff] %v3534
        %3537 = vrot.lane.b32.xlu0 %v3377, 111
        %v3538 = vpop.permute.xlu0 %3537
        %3539 = vrot.lane.b32.xlu0 %v3378, 111
        %v3540 = vpop.permute.xlu0 %3539
        %v3541 = vsel %vm2236, %v3538, %v3540
        %v3542 = vsel %vm2236, %v3540, %v3538
        %v3543 = vld [vmem:[%s2239] ss:$8 sm:$0x3]
        %v3545 = vlaneseq
        %v3546 = vshrl.u32 %v3545, 7
        %v3547 = vsub.s32 0, %v3546
        %v3548 = vrot.slane %v3543, %v3547
        %v3549 = vlaneseq
        %v3550 = vshrl.u32 %v3549, 7
        %v3551 = vsub.s32 1, %v3550
        %v3552 = vrot.slane %v3543, %v3551
        %v3555 = vmul.f32 %v3541, %v3548
        %v3556 = vmul.f32 %v3542, %v3552
        %3557 = vst [vmem:[#allocation2 + $0x80] sm:$0xff] %v3555
        %3558 = vst [vmem:[#allocation2 + $0x88] sm:$0xff] %v3556
        %3559 = vrot.lane.b32.xlu0 %v3379, 17
        %v3560 = vpop.permute.xlu0 %3559
        %3561 = vrot.lane.b32.xlu0 %v3380, 17
        %v3562 = vpop.permute.xlu0 %3561
        %v3563 = vsel %vm1332, %v3560, %v3562
        %v3564 = vsel %vm1332, %v3562, %v3560
        %v3565 = vld [vmem:[%s3] ss:$8 sm:$0x3]
        %v3567 = vlaneseq
        %v3568 = vshrl.u32 %v3567, 7
        %v3569 = vsub.s32 0, %v3568
        %v3570 = vrot.slane %v3565, %v3569
        %v3571 = vlaneseq
        %v3572 = vshrl.u32 %v3571, 7
        %v3573 = vsub.s32 1, %v3572
        %v3574 = vrot.slane %v3565, %v3573
        %v3577 = vmul.f32 %v3564, %v3570
        %v3578 = vmul.f32 %v3563, %v3574
        %3579 = vst [vmem:[#allocation2 + $0x90] sm:$0xf] %v3577
        %3580 = vst [vmem:[#allocation2 + $0x98] sm:$0xf] %v3578
        %3581 = vrot.lane.b32.xlu0 %v3379, 16
        %v3582 = vpop.permute.xlu0 %3581
        %3583 = vrot.lane.b32.xlu0 %v3380, 16
        %v3584 = vpop.permute.xlu0 %3583
        %v3585 = vsel %vm1355, %v3582, %v3584
        %v3586 = vsel %vm1355, %v3584, %v3582
        %v3587 = vld [vmem:[%s1358] ss:$8 sm:$0x3]
        %v3589 = vlaneseq
        %v3590 = vshrl.u32 %v3589, 7
        %v3591 = vsub.s32 0, %v3590
        %v3592 = vrot.slane %v3587, %v3591
        %v3593 = vlaneseq
        %v3594 = vshrl.u32 %v3593, 7
        %v3595 = vsub.s32 1, %v3594
        %v3596 = vrot.slane %v3587, %v3595
        %v3599 = vmul.f32 %v3586, %v3592
        %v3600 = vmul.f32 %v3585, %v3596
        %v3603 = vrot.slane %v3599, 4
        %v3604 = vrot.slane %v3600, 4
        %3607 = vst [vmem:[#allocation2 + $0x90] sm:$0xf0] %v3603
        %3608 = vst [vmem:[#allocation2 + $0x98] sm:$0xf0] %v3604
        %3609 = vrot.lane.b32.xlu0 %v3379, 15
        %v3610 = vpop.permute.xlu0 %3609
        %3611 = vrot.lane.b32.xlu0 %v3380, 15
        %v3612 = vpop.permute.xlu0 %3611
        %v3613 = vsel %vm2116, %v3610, %v3612
        %v3614 = vsel %vm2116, %v3612, %v3610
        %v3615 = vld [vmem:[%s2119] ss:$8 sm:$0x3]
        %v3617 = vlaneseq
        %v3618 = vshrl.u32 %v3617, 7
        %v3619 = vsub.s32 0, %v3618
        %v3620 = vrot.slane %v3615, %v3619
        %v3621 = vlaneseq
        %v3622 = vshrl.u32 %v3621, 7
        %v3623 = vsub.s32 1, %v3622
        %v3624 = vrot.slane %v3615, %v3623
        %v3627 = vmul.f32 %v3614, %v3620
        %v3628 = vmul.f32 %v3613, %v3624
        %3629 = vst [vmem:[#allocation2 + $0xa0] sm:$0xf] %v3627
        %3630 = vst [vmem:[#allocation2 + $0xa8] sm:$0xf] %v3628
        %3631 = vrot.lane.b32.xlu0 %v3379, 1
        %v3632 = vpop.permute.xlu0 %3631
        %3633 = vrot.lane.b32.xlu0 %v3380, 1
        %v3634 = vpop.permute.xlu0 %3633
        %v3635 = vsel %vm1413, %v3632, %v3634
        %v3636 = vsel %vm1413, %v3634, %v3632
        %v3637 = vld [vmem:[%s1416] ss:$8 sm:$0x3]
        %v3639 = vlaneseq
        %v3640 = vshrl.u32 %v3639, 7
        %v3641 = vsub.s32 0, %v3640
        %v3642 = vrot.slane %v3637, %v3641
        %v3643 = vlaneseq
        %v3644 = vshrl.u32 %v3643, 7
        %v3645 = vsub.s32 1, %v3644
        %v3646 = vrot.slane %v3637, %v3645
        %v3649 = vmul.f32 %v3636, %v3642
        %v3650 = vmul.f32 %v3635, %v3646
        %v3653 = vrot.slane %v3649, 4
        %v3654 = vrot.slane %v3650, 4
        %3657 = vst [vmem:[#allocation2 + $0xa0] sm:$0xf0] %v3653
        %3658 = vst [vmem:[#allocation2 + $0xa8] sm:$0xf0] %v3654
        %3659 = vst [vmem:[#allocation2 + $0xb0] sm:$0xf] %v3379
        %3660 = vst [vmem:[#allocation2 + $0xb8] sm:$0xf] %v3380
        %3661 = vrot.lane.b32.xlu0 %v3379, 127
        %v3662 = vpop.permute.xlu0 %3661
        %3663 = vrot.lane.b32.xlu0 %v3380, 127
        %v3664 = vpop.permute.xlu0 %3663
        %v3665 = vsel %vm2164, %v3662, %v3664
        %v3666 = vsel %vm2164, %v3664, %v3662
        %v3667 = vld [vmem:[%s2167] ss:$8 sm:$0x3]
        %v3669 = vlaneseq
        %v3670 = vshrl.u32 %v3669, 7
        %v3671 = vsub.s32 0, %v3670
        %v3672 = vrot.slane %v3667, %v3671
        %v3673 = vlaneseq
        %v3674 = vshrl.u32 %v3673, 7
        %v3675 = vsub.s32 1, %v3674
        %v3676 = vrot.slane %v3667, %v3675
        %v3679 = vmul.f32 %v3665, %v3672
        %v3680 = vmul.f32 %v3666, %v3676
        %v3683 = vrot.slane %v3679, 4
        %v3684 = vrot.slane %v3680, 4
        %3687 = vst [vmem:[#allocation2 + $0xb0] sm:$0xf0] %v3683
        %3688 = vst [vmem:[#allocation2 + $0xb8] sm:$0xf0] %v3684
        %3689 = vrot.lane.b32.xlu0 %v3379, 113
        %v3690 = vpop.permute.xlu0 %3689
        %3691 = vrot.lane.b32.xlu0 %v3380, 113
        %v3692 = vpop.permute.xlu0 %3691
        %v3693 = vsel %vm2188, %v3690, %v3692
        %v3694 = vsel %vm2188, %v3692, %v3690
        %v3695 = vld [vmem:[%s2191] ss:$8 sm:$0x3]
        %v3697 = vlaneseq
        %v3698 = vshrl.u32 %v3697, 7
        %v3699 = vsub.s32 0, %v3698
        %v3700 = vrot.slane %v3695, %v3699
        %v3701 = vlaneseq
        %v3702 = vshrl.u32 %v3701, 7
        %v3703 = vsub.s32 1, %v3702
        %v3704 = vrot.slane %v3695, %v3703
        %v3707 = vmul.f32 %v3693, %v3700
        %v3708 = vmul.f32 %v3694, %v3704
        %3709 = vst [vmem:[#allocation2 + $0xc0] sm:$0xf] %v3707
        %3710 = vst [vmem:[#allocation2 + $0xc8] sm:$0xf] %v3708
        %3711 = vrot.lane.b32.xlu0 %v3379, 112
        %v3712 = vpop.permute.xlu0 %3711
        %3713 = vrot.lane.b32.xlu0 %v3380, 112
        %v3714 = vpop.permute.xlu0 %3713
        %v3715 = vsel %vm2212, %v3712, %v3714
        %v3716 = vsel %vm2212, %v3714, %v3712
        %v3717 = vld [vmem:[%s2215] ss:$8 sm:$0x3]
        %v3719 = vlaneseq
        %v3720 = vshrl.u32 %v3719, 7
        %v3721 = vsub.s32 0, %v3720
        %v3722 = vrot.slane %v3717, %v3721
        %v3723 = vlaneseq
        %v3724 = vshrl.u32 %v3723, 7
        %v3725 = vsub.s32 1, %v3724
        %v3726 = vrot.slane %v3717, %v3725
        %v3729 = vmul.f32 %v3715, %v3722
        %v3730 = vmul.f32 %v3716, %v3726
        %v3733 = vrot.slane %v3729, 4
        %v3734 = vrot.slane %v3730, 4
        %3737 = vst [vmem:[#allocation2 + $0xc0] sm:$0xf0] %v3733
        %3738 = vst [vmem:[#allocation2 + $0xc8] sm:$0xf0] %v3734
        %3739 = vrot.lane.b32.xlu0 %v3379, 111
        %v3740 = vpop.permute.xlu0 %3739
        %3741 = vrot.lane.b32.xlu0 %v3380, 111
        %v3742 = vpop.permute.xlu0 %3741
        %v3743 = vsel %vm2236, %v3740, %v3742
        %v3744 = vsel %vm2236, %v3742, %v3740
        %v3745 = vld [vmem:[%s2239] ss:$8 sm:$0x3]
        %v3747 = vlaneseq
        %v3748 = vshrl.u32 %v3747, 7
        %v3749 = vsub.s32 0, %v3748
        %v3750 = vrot.slane %v3745, %v3749
        %v3751 = vlaneseq
        %v3752 = vshrl.u32 %v3751, 7
        %v3753 = vsub.s32 1, %v3752
        %v3754 = vrot.slane %v3745, %v3753
        %v3757 = vmul.f32 %v3743, %v3750
        %v3758 = vmul.f32 %v3744, %v3754
        %3759 = vst [vmem:[#allocation2 + $0xd0] sm:$0xf] %v3757
        %3760 = vst [vmem:[#allocation2 + $0xd8] sm:$0xf] %v3758
        %v3761 = vld [vmem:[%s1 + $0x50] sm:$0xff]
        %v3762 = vld [vmem:[%s1 + $0x58] sm:$0xf]
        %v3763 = vld [vmem:[#allocation2] sm:$0xff]
        %v3764 = vld [vmem:[#allocation2 + $0x8] sm:$0xff]
        %v3765 = vld [vmem:[#allocation2 + $0x10] sm:$0xff]
        %v3766 = vld [vmem:[#allocation2 + $0x18] sm:$0xff]
        %v3767 = vld [vmem:[#allocation2 + $0x20] sm:$0xff]
        %v3768 = vld [vmem:[#allocation2 + $0x28] sm:$0xff]
        %v3769 = vld [vmem:[#allocation2 + $0x30] sm:$0xff]
        %v3770 = vld [vmem:[#allocation2 + $0x38] sm:$0xff]
        %v3771 = vld [vmem:[#allocation2 + $0x40] sm:$0xff]
        %v3772 = vld [vmem:[#allocation2 + $0x48] sm:$0xff]
        %v3773 = vld [vmem:[#allocation2 + $0x50] sm:$0xff]
        %v3774 = vld [vmem:[#allocation2 + $0x58] sm:$0xff]
        %v3775 = vld [vmem:[#allocation2 + $0x60] sm:$0xff]
        %v3776 = vld [vmem:[#allocation2 + $0x68] sm:$0xff]
        %v3777 = vld [vmem:[#allocation2 + $0x70] sm:$0xff]
        %v3778 = vld [vmem:[#allocation2 + $0x78] sm:$0xff]
        %v3779 = vld [vmem:[#allocation2 + $0x80] sm:$0xff]
        %v3780 = vld [vmem:[#allocation2 + $0x88] sm:$0xff]
        %v3781 = vld [vmem:[#allocation2 + $0x90] sm:$0xff]
        %v3782 = vld [vmem:[#allocation2 + $0x98] sm:$0xff]
        %v3783 = vld [vmem:[#allocation2 + $0xa0] sm:$0xff]
        %v3784 = vld [vmem:[#allocation2 + $0xa8] sm:$0xff]
        %v3785 = vld [vmem:[#allocation2 + $0xb0] sm:$0xff]
        %v3786 = vld [vmem:[#allocation2 + $0xb8] sm:$0xff]
        %v3787 = vld [vmem:[#allocation2 + $0xc0] sm:$0xff]
        %v3788 = vld [vmem:[#allocation2 + $0xc8] sm:$0xff]
        %v3789 = vld [vmem:[#allocation2 + $0xd0] sm:$0xf]
        %v3790 = vld [vmem:[#allocation2 + $0xd8] sm:$0xf]
        %v3791 = vld [vmem:[%s2 + $0x58] sm:$0xff]
        %v3792 = vld [vmem:[%s2 + $0x60] sm:$0xf]
        %3794 = vset.pattern.permute.xlu0 0
        %3795 = vperm.xlu0 %3794, %v3791
        %v3796 = vpop.permute.xlu0 %3795
        %3799 = vset.pattern.permute.xlu0 0
        %3800 = vperm.xlu0 %3799, %v3792
        %v3801 = vpop.permute.xlu0 %3800
        %v3804 = vsel %vm2500, %v3761, 0
        %v3807 = vsel %vm2500, %v3762, 0
        %v3810 = vsel %vm1490, %v3789, 0
        %v3813 = vsel %vm1490, %v3790, 0
        %3815 = vmatprep.subr.mxu0 0.0
        %3816 = vmatpush1.msra.mxu0 0.0
        %3817 = vmatprep.subr.mxu0 0.0
        %3818 = vmatpush1.msra.mxu0 0.0
        %v3819 = vand.u32 %v3813, 4294901760
        %3820 = vmatprep.subr.mxu0 %v3819
        %v3821 = vand.u32 %v3810, 4294901760
        %3822 = vmatpush1.msra.mxu0 %v3821
        %v3823 = vand.u32 %v3788, 4294901760
        %3824 = vmatprep.subr.mxu0 %v3823
        %v3825 = vand.u32 %v3787, 4294901760
        %3826 = vmatpush1.msra.mxu0 %v3825
        %v3827 = vand.u32 %v3786, 4294901760
        %3828 = vmatprep.subr.mxu0 %v3827
        %v3829 = vand.u32 %v3785, 4294901760
        %3830 = vmatpush1.msra.mxu0 %v3829
        %v3831 = vand.u32 %v3784, 4294901760
        %3832 = vmatprep.subr.mxu0 %v3831
        %v3833 = vand.u32 %v3783, 4294901760
        %3834 = vmatpush1.msra.mxu0 %v3833
        %v3835 = vand.u32 %v3782, 4294901760
        %3836 = vmatprep.subr.mxu0 %v3835
        %v3837 = vand.u32 %v3781, 4294901760
        %3838 = vmatpush1.msra.mxu0 %v3837
        %v3839 = vand.u32 %v3780, 4294901760
        %3840 = vmatprep.subr.mxu0 %v3839
        %v3841 = vand.u32 %v3779, 4294901760
        %3842 = vmatpush1.msra.mxu0 %v3841
        %v3843 = vand.u32 %v3778, 4294901760
        %3844 = vmatprep.subr.mxu0 %v3843
        %v3845 = vand.u32 %v3777, 4294901760
        %3846 = vmatpush1.msra.mxu0 %v3845
        %v3847 = vand.u32 %v3776, 4294901760
        %3848 = vmatprep.subr.mxu0 %v3847
        %v3849 = vand.u32 %v3775, 4294901760
        %3850 = vmatpush1.msra.mxu0 %v3849
        %v3851 = vand.u32 %v3774, 4294901760
        %3852 = vmatprep.subr.mxu0 %v3851
        %v3853 = vand.u32 %v3773, 4294901760
        %3854 = vmatpush1.msra.mxu0 %v3853
        %v3855 = vand.u32 %v3772, 4294901760
        %3856 = vmatprep.subr.mxu0 %v3855
        %v3857 = vand.u32 %v3771, 4294901760
        %3858 = vmatpush1.msra.mxu0 %v3857
        %v3859 = vand.u32 %v3770, 4294901760
        %3860 = vmatprep.subr.mxu0 %v3859
        %v3861 = vand.u32 %v3769, 4294901760
        %3862 = vmatpush1.msra.mxu0 %v3861
        %v3863 = vand.u32 %v3768, 4294901760
        %3864 = vmatprep.subr.mxu0 %v3863
        %v3865 = vand.u32 %v3767, 4294901760
        %3866 = vmatpush1.msra.mxu0 %v3865
        %v3867 = vand.u32 %v3766, 4294901760
        %3868 = vmatprep.subr.mxu0 %v3867
        %v3869 = vand.u32 %v3765, 4294901760
        %3870 = vmatpush1.msra.mxu0 %v3869
        %v3871 = vand.u32 %v3764, 4294901760
        %3872 = vmatprep.subr.mxu0 %v3871
        %v3873 = vand.u32 %v3763, 4294901760
        %3874 = vmatpush1.msra.mxu0 %v3873
        %3875 = vmatprep.subr.mxu0 0.0
        %3876 = vmatpush2.msra.mxu0 0.0
        %3877 = vmatprep.subr.mxu0 0.0
        %3878 = vmatpush2.msra.mxu0 0.0
        %3879 = vmatprep.subr.mxu0 0.0
        %3880 = vmatpush2.msra.mxu0 0.0
        %3881 = vmatprep.subr.mxu0 0.0
        %3882 = vmatpush2.msra.mxu0 0.0
        %3883 = vmatprep.subr.mxu0 0.0
        %3884 = vmatpush2.msra.mxu0 0.0
        %3885 = vmatprep.subr.mxu0 0.0
        %3886 = vmatpush2.msra.mxu0 0.0
        %3887 = vmatprep.subr.mxu0 0.0
        %3888 = vmatpush2.msra.mxu0 0.0
        %3889 = vmatprep.subr.mxu0 0.0
        %3890 = vmatpush2.msra.mxu0 0.0
        %3891 = vmatprep.subr.mxu0 0.0
        %3892 = vmatpush2.msra.mxu0 0.0
        %3893 = vmatprep.subr.mxu0 0.0
        %3894 = vmatpush2.msra.mxu0 0.0
        %3895 = vmatprep.subr.mxu0 0.0
        %3896 = vmatpush2.msra.mxu0 0.0
        %3897 = vmatprep.subr.mxu0 0.0
        %3898 = vmatpush2.msra.mxu0 0.0
        %3899 = vmatprep.subr.mxu0 0.0
        %3900 = vmatpush2.msra.mxu0 0.0
        %3901 = vmatprep.subr.mxu0 0.0
        %3902 = vmatpush2.msra.mxu0 0.0
        %3903 = vmatprep.subr.mxu0 0.0
        %3904 = vmatpush2.msra.mxu0 0.0
        %3905 = vmatprep.subr.mxu0 0.0
        %3906 = vmatpush2.msra.mxu0 0.0
        %3907 = vmatprep.mubr.f32.mxu0 0.0
        %v3908 = vand.u32 %v3804, 4294901760
        %v3909 = vsub.f32 %v3804, %v3908
        %v3910 = vand.u32 %v3909, 4294901760
        %v3911 = vsub.f32 %v3909, %v3910
        %v3912 = vand.u32 %v3911, 4294901760
        %3913 = vmatmul.mubr.f32.gmra.mxu0 %v3912
        %v3914 = vpop.f32.mrf.mxu0
        %v3915 = vadd.f32 %v3796, %v3914
        %v3916 = vpop.f32.mrf.mxu0
        %v3917 = vadd.f32 %v3796, %v3916
        %3918 = vmatprep.mubr.f32.mxu0 0.0
        %v3919 = vand.u32 %v3807, 4294901760
        %v3920 = vsub.f32 %v3807, %v3919
        %v3921 = vand.u32 %v3920, 4294901760
        %v3922 = vsub.f32 %v3920, %v3921
        %v3923 = vand.u32 %v3922, 4294901760
        %3924 = vmatmul.mubr.f32.gmra.mxu0 %v3923
        %v3925 = vpop.f32.mrf.mxu0
        %v3926 = vadd.f32 %v3801, %v3925
        %v3927 = vpop.f32.mrf.mxu0
        %v3928 = vadd.f32 %v3801, %v3927
        %3929 = vdwg.mxu0
        %3930 = vmatprep.subr.mxu0 0.0
        %3931 = vmatpush1.msra.mxu0 0.0
        %3932 = vmatprep.subr.mxu0 0.0
        %3933 = vmatpush1.msra.mxu0 0.0
        %v3934 = vand.u32 %v3813, 4294901760
        %v3935 = vsub.f32 %v3813, %v3934
        %v3936 = vand.u32 %v3935, 4294901760
        %v3937 = vsub.f32 %v3935, %v3936
        %v3938 = vand.u32 %v3937, 4294901760
        %3939 = vmatprep.subr.mxu0 %v3938
        %v3940 = vand.u32 %v3810, 4294901760
        %v3941 = vsub.f32 %v3810, %v3940
        %v3942 = vand.u32 %v3941, 4294901760
        %v3943 = vsub.f32 %v3941, %v3942
        %v3944 = vand.u32 %v3943, 4294901760
        %3945 = vmatpush1.msra.mxu0 %v3944
        %v3946 = vand.u32 %v3788, 4294901760
        %v3947 = vsub.f32 %v3788, %v3946
        %v3948 = vand.u32 %v3947, 4294901760
        %v3949 = vsub.f32 %v3947, %v3948
        %v3950 = vand.u32 %v3949, 4294901760
        %3951 = vmatprep.subr.mxu0 %v3950
        %v3952 = vand.u32 %v3787, 4294901760
        %v3953 = vsub.f32 %v3787, %v3952
        %v3954 = vand.u32 %v3953, 4294901760
        %v3955 = vsub.f32 %v3953, %v3954
        %v3956 = vand.u32 %v3955, 4294901760
        %3957 = vmatpush1.msra.mxu0 %v3956
        %v3958 = vand.u32 %v3786, 4294901760
        %v3959 = vsub.f32 %v3786, %v3958
        %v3960 = vand.u32 %v3959, 4294901760
        %v3961 = vsub.f32 %v3959, %v3960
        %v3962 = vand.u32 %v3961, 4294901760
        %3963 = vmatprep.subr.mxu0 %v3962
        %v3964 = vand.u32 %v3785, 4294901760
        %v3965 = vsub.f32 %v3785, %v3964
        %v3966 = vand.u32 %v3965, 4294901760
        %v3967 = vsub.f32 %v3965, %v3966
        %v3968 = vand.u32 %v3967, 4294901760
        %3969 = vmatpush1.msra.mxu0 %v3968
        %v3970 = vand.u32 %v3784, 4294901760
        %v3971 = vsub.f32 %v3784, %v3970
        %v3972 = vand.u32 %v3971, 4294901760
        %v3973 = vsub.f32 %v3971, %v3972
        %v3974 = vand.u32 %v3973, 4294901760
        %3975 = vmatprep.subr.mxu0 %v3974
        %v3976 = vand.u32 %v3783, 4294901760
        %v3977 = vsub.f32 %v3783, %v3976
        %v3978 = vand.u32 %v3977, 4294901760
        %v3979 = vsub.f32 %v3977, %v3978
        %v3980 = vand.u32 %v3979, 4294901760
        %3981 = vmatpush1.msra.mxu0 %v3980
        %v3982 = vand.u32 %v3782, 4294901760
        %v3983 = vsub.f32 %v3782, %v3982
        %v3984 = vand.u32 %v3983, 4294901760
        %v3985 = vsub.f32 %v3983, %v3984
        %v3986 = vand.u32 %v3985, 4294901760
        %3987 = vmatprep.subr.mxu0 %v3986
        %v3988 = vand.u32 %v3781, 4294901760
        %v3989 = vsub.f32 %v3781, %v3988
        %v3990 = vand.u32 %v3989, 4294901760
        %v3991 = vsub.f32 %v3989, %v3990
        %v3992 = vand.u32 %v3991, 4294901760
        %3993 = vmatpush1.msra.mxu0 %v3992
        %v3994 = vand.u32 %v3780, 4294901760
        %v3995 = vsub.f32 %v3780, %v3994
        %v3996 = vand.u32 %v3995, 4294901760
        %v3997 = vsub.f32 %v3995, %v3996
        %v3998 = vand.u32 %v3997, 4294901760
        %3999 = vmatprep.subr.mxu0 %v3998
        %v4000 = vand.u32 %v3779, 4294901760
        %v4001 = vsub.f32 %v3779, %v4000
        %v4002 = vand.u32 %v4001, 4294901760
        %v4003 = vsub.f32 %v4001, %v4002
        %v4004 = vand.u32 %v4003, 4294901760
        %4005 = vmatpush1.msra.mxu0 %v4004
        %v4006 = vand.u32 %v3778, 4294901760
        %v4007 = vsub.f32 %v3778, %v4006
        %v4008 = vand.u32 %v4007, 4294901760
        %v4009 = vsub.f32 %v4007, %v4008
        %v4010 = vand.u32 %v4009, 4294901760
        %4011 = vmatprep.subr.mxu0 %v4010
        %v4012 = vand.u32 %v3777, 4294901760
        %v4013 = vsub.f32 %v3777, %v4012
        %v4014 = vand.u32 %v4013, 4294901760
        %v4015 = vsub.f32 %v4013, %v4014
        %v4016 = vand.u32 %v4015, 4294901760
        %4017 = vmatpush1.msra.mxu0 %v4016
        %v4018 = vand.u32 %v3776, 4294901760
        %v4019 = vsub.f32 %v3776, %v4018
        %v4020 = vand.u32 %v4019, 4294901760
        %v4021 = vsub.f32 %v4019, %v4020
        %v4022 = vand.u32 %v4021, 4294901760
        %4023 = vmatprep.subr.mxu0 %v4022
        %v4024 = vand.u32 %v3775, 4294901760
        %v4025 = vsub.f32 %v3775, %v4024
        %v4026 = vand.u32 %v4025, 4294901760
        %v4027 = vsub.f32 %v4025, %v4026
        %v4028 = vand.u32 %v4027, 4294901760
        %4029 = vmatpush1.msra.mxu0 %v4028
        %v4030 = vand.u32 %v3774, 4294901760
        %v4031 = vsub.f32 %v3774, %v4030
        %v4032 = vand.u32 %v4031, 4294901760
        %v4033 = vsub.f32 %v4031, %v4032
        %v4034 = vand.u32 %v4033, 4294901760
        %4035 = vmatprep.subr.mxu0 %v4034
        %v4036 = vand.u32 %v3773, 4294901760
        %v4037 = vsub.f32 %v3773, %v4036
        %v4038 = vand.u32 %v4037, 4294901760
        %v4039 = vsub.f32 %v4037, %v4038
        %v4040 = vand.u32 %v4039, 4294901760
        %4041 = vmatpush1.msra.mxu0 %v4040
        %v4042 = vand.u32 %v3772, 4294901760
        %v4043 = vsub.f32 %v3772, %v4042
        %v4044 = vand.u32 %v4043, 4294901760
        %v4045 = vsub.f32 %v4043, %v4044
        %v4046 = vand.u32 %v4045, 4294901760
        %4047 = vmatprep.subr.mxu0 %v4046
        %v4048 = vand.u32 %v3771, 4294901760
        %v4049 = vsub.f32 %v3771, %v4048
        %v4050 = vand.u32 %v4049, 4294901760
        %v4051 = vsub.f32 %v4049, %v4050
        %v4052 = vand.u32 %v4051, 4294901760
        %4053 = vmatpush1.msra.mxu0 %v4052
        %v4054 = vand.u32 %v3770, 4294901760
        %v4055 = vsub.f32 %v3770, %v4054
        %v4056 = vand.u32 %v4055, 4294901760
        %v4057 = vsub.f32 %v4055, %v4056
        %v4058 = vand.u32 %v4057, 4294901760
        %4059 = vmatprep.subr.mxu0 %v4058
        %v4060 = vand.u32 %v3769, 4294901760
        %v4061 = vsub.f32 %v3769, %v4060
        %v4062 = vand.u32 %v4061, 4294901760
        %v4063 = vsub.f32 %v4061, %v4062
        %v4064 = vand.u32 %v4063, 4294901760
        %4065 = vmatpush1.msra.mxu0 %v4064
        %v4066 = vand.u32 %v3768, 4294901760
        %v4067 = vsub.f32 %v3768, %v4066
        %v4068 = vand.u32 %v4067, 4294901760
        %v4069 = vsub.f32 %v4067, %v4068
        %v4070 = vand.u32 %v4069, 4294901760
        %4071 = vmatprep.subr.mxu0 %v4070
        %v4072 = vand.u32 %v3767, 4294901760
        %v4073 = vsub.f32 %v3767, %v4072
        %v4074 = vand.u32 %v4073, 4294901760
        %v4075 = vsub.f32 %v4073, %v4074
        %v4076 = vand.u32 %v4075, 4294901760
        %4077 = vmatpush1.msra.mxu0 %v4076
        %v4078 = vand.u32 %v3766, 4294901760
        %v4079 = vsub.f32 %v3766, %v4078
        %v4080 = vand.u32 %v4079, 4294901760
        %v4081 = vsub.f32 %v4079, %v4080
        %v4082 = vand.u32 %v4081, 4294901760
        %4083 = vmatprep.subr.mxu0 %v4082
        %v4084 = vand.u32 %v3765, 4294901760
        %v4085 = vsub.f32 %v3765, %v4084
        %v4086 = vand.u32 %v4085, 4294901760
        %v4087 = vsub.f32 %v4085, %v4086
        %v4088 = vand.u32 %v4087, 4294901760
        %4089 = vmatpush1.msra.mxu0 %v4088
        %v4090 = vand.u32 %v3764, 4294901760
        %v4091 = vsub.f32 %v3764, %v4090
        %v4092 = vand.u32 %v4091, 4294901760
        %v4093 = vsub.f32 %v4091, %v4092
        %v4094 = vand.u32 %v4093, 4294901760
        %4095 = vmatprep.subr.mxu0 %v4094
        %v4096 = vand.u32 %v3763, 4294901760
        %v4097 = vsub.f32 %v3763, %v4096
        %v4098 = vand.u32 %v4097, 4294901760
        %v4099 = vsub.f32 %v4097, %v4098
        %v4100 = vand.u32 %v4099, 4294901760
        %4101 = vmatpush1.msra.mxu0 %v4100
        %4102 = vmatprep.subr.mxu0 0.0
        %4103 = vmatpush2.msra.mxu0 0.0
        %4104 = vmatprep.subr.mxu0 0.0
        %4105 = vmatpush2.msra.mxu0 0.0
        %4106 = vmatprep.subr.mxu0 0.0
        %4107 = vmatpush2.msra.mxu0 0.0
        %4108 = vmatprep.subr.mxu0 0.0
        %4109 = vmatpush2.msra.mxu0 0.0
        %4110 = vmatprep.subr.mxu0 0.0
        %4111 = vmatpush2.msra.mxu0 0.0
        %4112 = vmatprep.subr.mxu0 0.0
        %4113 = vmatpush2.msra.mxu0 0.0
        %4114 = vmatprep.subr.mxu0 0.0
        %4115 = vmatpush2.msra.mxu0 0.0
        %4116 = vmatprep.subr.mxu0 0.0
        %4117 = vmatpush2.msra.mxu0 0.0
        %4118 = vmatprep.subr.mxu0 0.0
        %4119 = vmatpush2.msra.mxu0 0.0
        %4120 = vmatprep.subr.mxu0 0.0
        %4121 = vmatpush2.msra.mxu0 0.0
        %4122 = vmatprep.subr.mxu0 0.0
        %4123 = vmatpush2.msra.mxu0 0.0
        %4124 = vmatprep.subr.mxu0 0.0
        %4125 = vmatpush2.msra.mxu0 0.0
        %4126 = vmatprep.subr.mxu0 0.0
        %4127 = vmatpush2.msra.mxu0 0.0
        %4128 = vmatprep.subr.mxu0 0.0
        %4129 = vmatpush2.msra.mxu0 0.0
        %4130 = vmatprep.subr.mxu0 0.0
        %4131 = vmatpush2.msra.mxu0 0.0
        %4132 = vmatprep.subr.mxu0 0.0
        %4133 = vmatpush2.msra.mxu0 0.0
        %4134 = vmatprep.mubr.f32.mxu0 0.0
        %v4135 = vand.u32 %v3804, 4294901760
        %4136 = vmatmul.mubr.f32.gmra.mxu0 %v4135
        %v4137 = vpop.f32.mrf.mxu0
        %v4138 = vadd.f32 %v3915, %v4137
        %v4139 = vpop.f32.mrf.mxu0
        %v4140 = vadd.f32 %v3917, %v4139
        %4141 = vmatprep.mubr.f32.mxu0 0.0
        %v4142 = vand.u32 %v3807, 4294901760
        %4143 = vmatmul.mubr.f32.gmra.mxu0 %v4142
        %v4144 = vpop.f32.mrf.mxu0
        %v4145 = vadd.f32 %v3926, %v4144
        %v4146 = vpop.f32.mrf.mxu0
        %v4147 = vadd.f32 %v3928, %v4146
        %4148 = vdwg.mxu0
        %4149 = vmatprep.subr.mxu0 0.0
        %4150 = vmatpush1.msra.mxu0 0.0
        %4151 = vmatprep.subr.mxu0 0.0
        %4152 = vmatpush1.msra.mxu0 0.0
        %v4153 = vand.u32 %v3813, 4294901760
        %v4154 = vsub.f32 %v3813, %v4153
        %4155 = vmatprep.subr.mxu0 %v4154
        %v4156 = vand.u32 %v3810, 4294901760
        %v4157 = vsub.f32 %v3810, %v4156
        %4158 = vmatpush1.msra.mxu0 %v4157
        %v4159 = vand.u32 %v3788, 4294901760
        %v4160 = vsub.f32 %v3788, %v4159
        %4161 = vmatprep.subr.mxu0 %v4160
        %v4162 = vand.u32 %v3787, 4294901760
        %v4163 = vsub.f32 %v3787, %v4162
        %4164 = vmatpush1.msra.mxu0 %v4163
        %v4165 = vand.u32 %v3786, 4294901760
        %v4166 = vsub.f32 %v3786, %v4165
        %4167 = vmatprep.subr.mxu0 %v4166
        %v4168 = vand.u32 %v3785, 4294901760
        %v4169 = vsub.f32 %v3785, %v4168
        %4170 = vmatpush1.msra.mxu0 %v4169
        %v4171 = vand.u32 %v3784, 4294901760
        %v4172 = vsub.f32 %v3784, %v4171
        %4173 = vmatprep.subr.mxu0 %v4172
        %v4174 = vand.u32 %v3783, 4294901760
        %v4175 = vsub.f32 %v3783, %v4174
        %4176 = vmatpush1.msra.mxu0 %v4175
        %v4177 = vand.u32 %v3782, 4294901760
        %v4178 = vsub.f32 %v3782, %v4177
        %4179 = vmatprep.subr.mxu0 %v4178
        %v4180 = vand.u32 %v3781, 4294901760
        %v4181 = vsub.f32 %v3781, %v4180
        %4182 = vmatpush1.msra.mxu0 %v4181
        %v4183 = vand.u32 %v3780, 4294901760
        %v4184 = vsub.f32 %v3780, %v4183
        %4185 = vmatprep.subr.mxu0 %v4184
        %v4186 = vand.u32 %v3779, 4294901760
        %v4187 = vsub.f32 %v3779, %v4186
        %4188 = vmatpush1.msra.mxu0 %v4187
        %v4189 = vand.u32 %v3778, 4294901760
        %v4190 = vsub.f32 %v3778, %v4189
        %4191 = vmatprep.subr.mxu0 %v4190
        %v4192 = vand.u32 %v3777, 4294901760
        %v4193 = vsub.f32 %v3777, %v4192
        %4194 = vmatpush1.msra.mxu0 %v4193
        %v4195 = vand.u32 %v3776, 4294901760
        %v4196 = vsub.f32 %v3776, %v4195
        %4197 = vmatprep.subr.mxu0 %v4196
        %v4198 = vand.u32 %v3775, 4294901760
        %v4199 = vsub.f32 %v3775, %v4198
        %4200 = vmatpush1.msra.mxu0 %v4199
        %v4201 = vand.u32 %v3774, 4294901760
        %v4202 = vsub.f32 %v3774, %v4201
        %4203 = vmatprep.subr.mxu0 %v4202
        %v4204 = vand.u32 %v3773, 4294901760
        %v4205 = vsub.f32 %v3773, %v4204
        %4206 = vmatpush1.msra.mxu0 %v4205
        %v4207 = vand.u32 %v3772, 4294901760
        %v4208 = vsub.f32 %v3772, %v4207
        %4209 = vmatprep.subr.mxu0 %v4208
        %v4210 = vand.u32 %v3771, 4294901760
        %v4211 = vsub.f32 %v3771, %v4210
        %4212 = vmatpush1.msra.mxu0 %v4211
        %v4213 = vand.u32 %v3770, 4294901760
        %v4214 = vsub.f32 %v3770, %v4213
        %4215 = vmatprep.subr.mxu0 %v4214
        %v4216 = vand.u32 %v3769, 4294901760
        %v4217 = vsub.f32 %v3769, %v4216
        %4218 = vmatpush1.msra.mxu0 %v4217
        %v4219 = vand.u32 %v3768, 4294901760
        %v4220 = vsub.f32 %v3768, %v4219
        %4221 = vmatprep.subr.mxu0 %v4220
        %v4222 = vand.u32 %v3767, 4294901760
        %v4223 = vsub.f32 %v3767, %v4222
        %4224 = vmatpush1.msra.mxu0 %v4223
        %v4225 = vand.u32 %v3766, 4294901760
        %v4226 = vsub.f32 %v3766, %v4225
        %4227 = vmatprep.subr.mxu0 %v4226
        %v4228 = vand.u32 %v3765, 4294901760
        %v4229 = vsub.f32 %v3765, %v4228
        %4230 = vmatpush1.msra.mxu0 %v4229
        %v4231 = vand.u32 %v3764, 4294901760
        %v4232 = vsub.f32 %v3764, %v4231
        %4233 = vmatprep.subr.mxu0 %v4232
        %v4234 = vand.u32 %v3763, 4294901760
        %v4235 = vsub.f32 %v3763, %v4234
        %4236 = vmatpush1.msra.mxu0 %v4235
        %4237 = vmatprep.subr.mxu0 0.0
        %4238 = vmatpush2.msra.mxu0 0.0
        %4239 = vmatprep.subr.mxu0 0.0
        %4240 = vmatpush2.msra.mxu0 0.0
        %4241 = vmatprep.subr.mxu0 0.0
        %4242 = vmatpush2.msra.mxu0 0.0
        %4243 = vmatprep.subr.mxu0 0.0
        %4244 = vmatpush2.msra.mxu0 0.0
        %4245 = vmatprep.subr.mxu0 0.0
        %4246 = vmatpush2.msra.mxu0 0.0
        %4247 = vmatprep.subr.mxu0 0.0
        %4248 = vmatpush2.msra.mxu0 0.0
        %4249 = vmatprep.subr.mxu0 0.0
        %4250 = vmatpush2.msra.mxu0 0.0
        %4251 = vmatprep.subr.mxu0 0.0
        %4252 = vmatpush2.msra.mxu0 0.0
        %4253 = vmatprep.subr.mxu0 0.0
        %4254 = vmatpush2.msra.mxu0 0.0
        %4255 = vmatprep.subr.mxu0 0.0
        %4256 = vmatpush2.msra.mxu0 0.0
        %4257 = vmatprep.subr.mxu0 0.0
        %4258 = vmatpush2.msra.mxu0 0.0
        %4259 = vmatprep.subr.mxu0 0.0
        %4260 = vmatpush2.msra.mxu0 0.0
        %4261 = vmatprep.subr.mxu0 0.0
        %4262 = vmatpush2.msra.mxu0 0.0
        %4263 = vmatprep.subr.mxu0 0.0
        %4264 = vmatpush2.msra.mxu0 0.0
        %4265 = vmatprep.subr.mxu0 0.0
        %4266 = vmatpush2.msra.mxu0 0.0
        %4267 = vmatprep.subr.mxu0 0.0
        %4268 = vmatpush2.msra.mxu0 0.0
        %4269 = vmatprep.mubr.f32.mxu0 0.0
        %v4270 = vand.u32 %v3804, 4294901760
        %v4271 = vsub.f32 %v3804, %v4270
        %4272 = vmatmul.mubr.f32.gmra.mxu0 %v4271
        %v4273 = vpop.f32.mrf.mxu0
        %v4274 = vadd.f32 %v4138, %v4273
        %v4275 = vpop.f32.mrf.mxu0
        %v4276 = vadd.f32 %v4140, %v4275
        %4277 = vmatprep.mubr.f32.mxu0 0.0
        %v4278 = vand.u32 %v3807, 4294901760
        %v4279 = vsub.f32 %v3807, %v4278
        %4280 = vmatmul.mubr.f32.gmra.mxu0 %v4279
        %v4281 = vpop.f32.mrf.mxu0
        %v4282 = vadd.f32 %v4145, %v4281
        %v4283 = vpop.f32.mrf.mxu0
        %v4284 = vadd.f32 %v4147, %v4283
        %4285 = vdwg.mxu0
        %4286 = vmatprep.subr.mxu0 0.0
        %4287 = vmatpush1.msra.mxu0 0.0
        %4288 = vmatprep.subr.mxu0 0.0
        %4289 = vmatpush1.msra.mxu0 0.0
        %v4290 = vand.u32 %v3813, 4294901760
        %4291 = vmatprep.subr.mxu0 %v4290
        %v4292 = vand.u32 %v3810, 4294901760
        %4293 = vmatpush1.msra.mxu0 %v4292
        %v4294 = vand.u32 %v3788, 4294901760
        %4295 = vmatprep.subr.mxu0 %v4294
        %v4296 = vand.u32 %v3787, 4294901760
        %4297 = vmatpush1.msra.mxu0 %v4296
        %v4298 = vand.u32 %v3786, 4294901760
        %4299 = vmatprep.subr.mxu0 %v4298
        %v4300 = vand.u32 %v3785, 4294901760
        %4301 = vmatpush1.msra.mxu0 %v4300
        %v4302 = vand.u32 %v3784, 4294901760
        %4303 = vmatprep.subr.mxu0 %v4302
        %v4304 = vand.u32 %v3783, 4294901760
        %4305 = vmatpush1.msra.mxu0 %v4304
        %v4306 = vand.u32 %v3782, 4294901760
        %4307 = vmatprep.subr.mxu0 %v4306
        %v4308 = vand.u32 %v3781, 4294901760
        %4309 = vmatpush1.msra.mxu0 %v4308
        %v4310 = vand.u32 %v3780, 4294901760
        %4311 = vmatprep.subr.mxu0 %v4310
        %v4312 = vand.u32 %v3779, 4294901760
        %4313 = vmatpush1.msra.mxu0 %v4312
        %v4314 = vand.u32 %v3778, 4294901760
        %4315 = vmatprep.subr.mxu0 %v4314
        %v4316 = vand.u32 %v3777, 4294901760
        %4317 = vmatpush1.msra.mxu0 %v4316
        %v4318 = vand.u32 %v3776, 4294901760
        %4319 = vmatprep.subr.mxu0 %v4318
        %v4320 = vand.u32 %v3775, 4294901760
        %4321 = vmatpush1.msra.mxu0 %v4320
        %v4322 = vand.u32 %v3774, 4294901760
        %4323 = vmatprep.subr.mxu0 %v4322
        %v4324 = vand.u32 %v3773, 4294901760
        %4325 = vmatpush1.msra.mxu0 %v4324
        %v4326 = vand.u32 %v3772, 4294901760
        %4327 = vmatprep.subr.mxu0 %v4326
        %v4328 = vand.u32 %v3771, 4294901760
        %4329 = vmatpush1.msra.mxu0 %v4328
        %v4330 = vand.u32 %v3770, 4294901760
        %4331 = vmatprep.subr.mxu0 %v4330
        %v4332 = vand.u32 %v3769, 4294901760
        %4333 = vmatpush1.msra.mxu0 %v4332
        %v4334 = vand.u32 %v3768, 4294901760
        %4335 = vmatprep.subr.mxu0 %v4334
        %v4336 = vand.u32 %v3767, 4294901760
        %4337 = vmatpush1.msra.mxu0 %v4336
        %v4338 = vand.u32 %v3766, 4294901760
        %4339 = vmatprep.subr.mxu0 %v4338
        %v4340 = vand.u32 %v3765, 4294901760
        %4341 = vmatpush1.msra.mxu0 %v4340
        %v4342 = vand.u32 %v3764, 4294901760
        %4343 = vmatprep.subr.mxu0 %v4342
        %v4344 = vand.u32 %v3763, 4294901760
        %4345 = vmatpush1.msra.mxu0 %v4344
        %4346 = vmatprep.subr.mxu0 0.0
        %4347 = vmatpush2.msra.mxu0 0.0
        %4348 = vmatprep.subr.mxu0 0.0
        %4349 = vmatpush2.msra.mxu0 0.0
        %4350 = vmatprep.subr.mxu0 0.0
        %4351 = vmatpush2.msra.mxu0 0.0
        %4352 = vmatprep.subr.mxu0 0.0
        %4353 = vmatpush2.msra.mxu0 0.0
        %4354 = vmatprep.subr.mxu0 0.0
        %4355 = vmatpush2.msra.mxu0 0.0
        %4356 = vmatprep.subr.mxu0 0.0
        %4357 = vmatpush2.msra.mxu0 0.0
        %4358 = vmatprep.subr.mxu0 0.0
        %4359 = vmatpush2.msra.mxu0 0.0
        %4360 = vmatprep.subr.mxu0 0.0
        %4361 = vmatpush2.msra.mxu0 0.0
        %4362 = vmatprep.subr.mxu0 0.0
        %4363 = vmatpush2.msra.mxu0 0.0
        %4364 = vmatprep.subr.mxu0 0.0
        %4365 = vmatpush2.msra.mxu0 0.0
        %4366 = vmatprep.subr.mxu0 0.0
        %4367 = vmatpush2.msra.mxu0 0.0
        %4368 = vmatprep.subr.mxu0 0.0
        %4369 = vmatpush2.msra.mxu0 0.0
        %4370 = vmatprep.subr.mxu0 0.0
        %4371 = vmatpush2.msra.mxu0 0.0
        %4372 = vmatprep.subr.mxu0 0.0
        %4373 = vmatpush2.msra.mxu0 0.0
        %4374 = vmatprep.subr.mxu0 0.0
        %4375 = vmatpush2.msra.mxu0 0.0
        %4376 = vmatprep.subr.mxu0 0.0
        %4377 = vmatpush2.msra.mxu0 0.0
        %4378 = vmatprep.mubr.f32.mxu0 0.0
        %v4379 = vand.u32 %v3804, 4294901760
        %v4380 = vsub.f32 %v3804, %v4379
        %v4381 = vand.u32 %v4380, 4294901760
        %4382 = vmatmul.mubr.f32.gmra.mxu0 %v4381
        %v4383 = vpop.f32.mrf.mxu0
        %v4384 = vadd.f32 %v4274, %v4383
        %v4385 = vpop.f32.mrf.mxu0
        %v4386 = vadd.f32 %v4276, %v4385
        %4387 = vmatprep.mubr.f32.mxu0 0.0
        %v4388 = vand.u32 %v3807, 4294901760
        %v4389 = vsub.f32 %v3807, %v4388
        %v4390 = vand.u32 %v4389, 4294901760
        %4391 = vmatmul.mubr.f32.gmra.mxu0 %v4390
        %v4392 = vpop.f32.mrf.mxu0
        %v4393 = vadd.f32 %v4282, %v4392
        %v4394 = vpop.f32.mrf.mxu0
        %v4395 = vadd.f32 %v4284, %v4394
        %4396 = vdwg.mxu0
        %4397 = vmatprep.subr.mxu0 0.0
        %4398 = vmatpush1.msra.mxu0 0.0
        %4399 = vmatprep.subr.mxu0 0.0
        %4400 = vmatpush1.msra.mxu0 0.0
        %v4401 = vand.u32 %v3813, 4294901760
        %v4402 = vsub.f32 %v3813, %v4401
        %v4403 = vand.u32 %v4402, 4294901760
        %4404 = vmatprep.subr.mxu0 %v4403
        %v4405 = vand.u32 %v3810, 4294901760
        %v4406 = vsub.f32 %v3810, %v4405
        %v4407 = vand.u32 %v4406, 4294901760
        %4408 = vmatpush1.msra.mxu0 %v4407
        %v4409 = vand.u32 %v3788, 4294901760
        %v4410 = vsub.f32 %v3788, %v4409
        %v4411 = vand.u32 %v4410, 4294901760
        %4412 = vmatprep.subr.mxu0 %v4411
        %v4413 = vand.u32 %v3787, 4294901760
        %v4414 = vsub.f32 %v3787, %v4413
        %v4415 = vand.u32 %v4414, 4294901760
        %4416 = vmatpush1.msra.mxu0 %v4415
        %v4417 = vand.u32 %v3786, 4294901760
        %v4418 = vsub.f32 %v3786, %v4417
        %v4419 = vand.u32 %v4418, 4294901760
        %4420 = vmatprep.subr.mxu0 %v4419
        %v4421 = vand.u32 %v3785, 4294901760
        %v4422 = vsub.f32 %v3785, %v4421
        %v4423 = vand.u32 %v4422, 4294901760
        %4424 = vmatpush1.msra.mxu0 %v4423
        %v4425 = vand.u32 %v3784, 4294901760
        %v4426 = vsub.f32 %v3784, %v4425
        %v4427 = vand.u32 %v4426, 4294901760
        %4428 = vmatprep.subr.mxu0 %v4427
        %v4429 = vand.u32 %v3783, 4294901760
        %v4430 = vsub.f32 %v3783, %v4429
        %v4431 = vand.u32 %v4430, 4294901760
        %4432 = vmatpush1.msra.mxu0 %v4431
        %v4433 = vand.u32 %v3782, 4294901760
        %v4434 = vsub.f32 %v3782, %v4433
        %v4435 = vand.u32 %v4434, 4294901760
        %4436 = vmatprep.subr.mxu0 %v4435
        %v4437 = vand.u32 %v3781, 4294901760
        %v4438 = vsub.f32 %v3781, %v4437
        %v4439 = vand.u32 %v4438, 4294901760
        %4440 = vmatpush1.msra.mxu0 %v4439
        %v4441 = vand.u32 %v3780, 4294901760
        %v4442 = vsub.f32 %v3780, %v4441
        %v4443 = vand.u32 %v4442, 4294901760
        %4444 = vmatprep.subr.mxu0 %v4443
        %v4445 = vand.u32 %v3779, 4294901760
        %v4446 = vsub.f32 %v3779, %v4445
        %v4447 = vand.u32 %v4446, 4294901760
        %4448 = vmatpush1.msra.mxu0 %v4447
        %v4449 = vand.u32 %v3778, 4294901760
        %v4450 = vsub.f32 %v3778, %v4449
        %v4451 = vand.u32 %v4450, 4294901760
        %4452 = vmatprep.subr.mxu0 %v4451
        %v4453 = vand.u32 %v3777, 4294901760
        %v4454 = vsub.f32 %v3777, %v4453
        %v4455 = vand.u32 %v4454, 4294901760
        %4456 = vmatpush1.msra.mxu0 %v4455
        %v4457 = vand.u32 %v3776, 4294901760
        %v4458 = vsub.f32 %v3776, %v4457
        %v4459 = vand.u32 %v4458, 4294901760
        %4460 = vmatprep.subr.mxu0 %v4459
        %v4461 = vand.u32 %v3775, 4294901760
        %v4462 = vsub.f32 %v3775, %v4461
        %v4463 = vand.u32 %v4462, 4294901760
        %4464 = vmatpush1.msra.mxu0 %v4463
        %v4465 = vand.u32 %v3774, 4294901760
        %v4466 = vsub.f32 %v3774, %v4465
        %v4467 = vand.u32 %v4466, 4294901760
        %4468 = vmatprep.subr.mxu0 %v4467
        %v4469 = vand.u32 %v3773, 4294901760
        %v4470 = vsub.f32 %v3773, %v4469
        %v4471 = vand.u32 %v4470, 4294901760
        %4472 = vmatpush1.msra.mxu0 %v4471
        %v4473 = vand.u32 %v3772, 4294901760
        %v4474 = vsub.f32 %v3772, %v4473
        %v4475 = vand.u32 %v4474, 4294901760
        %4476 = vmatprep.subr.mxu0 %v4475
        %v4477 = vand.u32 %v3771, 4294901760
        %v4478 = vsub.f32 %v3771, %v4477
        %v4479 = vand.u32 %v4478, 4294901760
        %4480 = vmatpush1.msra.mxu0 %v4479
        %v4481 = vand.u32 %v3770, 4294901760
        %v4482 = vsub.f32 %v3770, %v4481
        %v4483 = vand.u32 %v4482, 4294901760
        %4484 = vmatprep.subr.mxu0 %v4483
        %v4485 = vand.u32 %v3769, 4294901760
        %v4486 = vsub.f32 %v3769, %v4485
        %v4487 = vand.u32 %v4486, 4294901760
        %4488 = vmatpush1.msra.mxu0 %v4487
        %v4489 = vand.u32 %v3768, 4294901760
        %v4490 = vsub.f32 %v3768, %v4489
        %v4491 = vand.u32 %v4490, 4294901760
        %4492 = vmatprep.subr.mxu0 %v4491
        %v4493 = vand.u32 %v3767, 4294901760
        %v4494 = vsub.f32 %v3767, %v4493
        %v4495 = vand.u32 %v4494, 4294901760
        %4496 = vmatpush1.msra.mxu0 %v4495
        %v4497 = vand.u32 %v3766, 4294901760
        %v4498 = vsub.f32 %v3766, %v4497
        %v4499 = vand.u32 %v4498, 4294901760
        %4500 = vmatprep.subr.mxu0 %v4499
        %v4501 = vand.u32 %v3765, 4294901760
        %v4502 = vsub.f32 %v3765, %v4501
        %v4503 = vand.u32 %v4502, 4294901760
        %4504 = vmatpush1.msra.mxu0 %v4503
        %v4505 = vand.u32 %v3764, 4294901760
        %v4506 = vsub.f32 %v3764, %v4505
        %v4507 = vand.u32 %v4506, 4294901760
        %4508 = vmatprep.subr.mxu0 %v4507
        %v4509 = vand.u32 %v3763, 4294901760
        %v4510 = vsub.f32 %v3763, %v4509
        %v4511 = vand.u32 %v4510, 4294901760
        %4512 = vmatpush1.msra.mxu0 %v4511
        %4513 = vmatprep.subr.mxu0 0.0
        %4514 = vmatpush2.msra.mxu0 0.0
        %4515 = vmatprep.subr.mxu0 0.0
        %4516 = vmatpush2.msra.mxu0 0.0
        %4517 = vmatprep.subr.mxu0 0.0
        %4518 = vmatpush2.msra.mxu0 0.0
        %4519 = vmatprep.subr.mxu0 0.0
        %4520 = vmatpush2.msra.mxu0 0.0
        %4521 = vmatprep.subr.mxu0 0.0
        %4522 = vmatpush2.msra.mxu0 0.0
        %4523 = vmatprep.subr.mxu0 0.0
        %4524 = vmatpush2.msra.mxu0 0.0
        %4525 = vmatprep.subr.mxu0 0.0
        %4526 = vmatpush2.msra.mxu0 0.0
        %4527 = vmatprep.subr.mxu0 0.0
        %4528 = vmatpush2.msra.mxu0 0.0
        %4529 = vmatprep.subr.mxu0 0.0
        %4530 = vmatpush2.msra.mxu0 0.0
        %4531 = vmatprep.subr.mxu0 0.0
        %4532 = vmatpush2.msra.mxu0 0.0
        %4533 = vmatprep.subr.mxu0 0.0
        %4534 = vmatpush2.msra.mxu0 0.0
        %4535 = vmatprep.subr.mxu0 0.0
        %4536 = vmatpush2.msra.mxu0 0.0
        %4537 = vmatprep.subr.mxu0 0.0
        %4538 = vmatpush2.msra.mxu0 0.0
        %4539 = vmatprep.subr.mxu0 0.0
        %4540 = vmatpush2.msra.mxu0 0.0
        %4541 = vmatprep.subr.mxu0 0.0
        %4542 = vmatpush2.msra.mxu0 0.0
        %4543 = vmatprep.subr.mxu0 0.0
        %4544 = vmatpush2.msra.mxu0 0.0
        %4545 = vmatprep.mubr.f32.mxu0 0.0
        %v4546 = vand.u32 %v3804, 4294901760
        %4547 = vmatmul.mubr.f32.gmra.mxu0 %v4546
        %v4548 = vpop.f32.mrf.mxu0
        %v4549 = vadd.f32 %v4384, %v4548
        %v4550 = vpop.f32.mrf.mxu0
        %v4551 = vadd.f32 %v4386, %v4550
        %4552 = vmatprep.mubr.f32.mxu0 0.0
        %v4553 = vand.u32 %v3807, 4294901760
        %4554 = vmatmul.mubr.f32.gmra.mxu0 %v4553
        %v4555 = vpop.f32.mrf.mxu0
        %v4556 = vadd.f32 %v4393, %v4555
        %v4557 = vpop.f32.mrf.mxu0
        %v4558 = vadd.f32 %v4395, %v4557
        %4559 = vdwg.mxu0
        %4560 = vmatprep.subr.mxu0 0.0
        %4561 = vmatpush1.msra.mxu0 0.0
        %4562 = vmatprep.subr.mxu0 0.0
        %4563 = vmatpush1.msra.mxu0 0.0
        %v4564 = vand.u32 %v3813, 4294901760
        %4565 = vmatprep.subr.mxu0 %v4564
        %v4566 = vand.u32 %v3810, 4294901760
        %4567 = vmatpush1.msra.mxu0 %v4566
        %v4568 = vand.u32 %v3788, 4294901760
        %4569 = vmatprep.subr.mxu0 %v4568
        %v4570 = vand.u32 %v3787, 4294901760
        %4571 = vmatpush1.msra.mxu0 %v4570
        %v4572 = vand.u32 %v3786, 4294901760
        %4573 = vmatprep.subr.mxu0 %v4572
        %v4574 = vand.u32 %v3785, 4294901760
        %4575 = vmatpush1.msra.mxu0 %v4574
        %v4576 = vand.u32 %v3784, 4294901760
        %4577 = vmatprep.subr.mxu0 %v4576
        %v4578 = vand.u32 %v3783, 4294901760
        %4579 = vmatpush1.msra.mxu0 %v4578
        %v4580 = vand.u32 %v3782, 4294901760
        %4581 = vmatprep.subr.mxu0 %v4580
        %v4582 = vand.u32 %v3781, 4294901760
        %4583 = vmatpush1.msra.mxu0 %v4582
        %v4584 = vand.u32 %v3780, 4294901760
        %4585 = vmatprep.subr.mxu0 %v4584
        %v4586 = vand.u32 %v3779, 4294901760
        %4587 = vmatpush1.msra.mxu0 %v4586
        %v4588 = vand.u32 %v3778, 4294901760
        %4589 = vmatprep.subr.mxu0 %v4588
        %v4590 = vand.u32 %v3777, 4294901760
        %4591 = vmatpush1.msra.mxu0 %v4590
        %v4592 = vand.u32 %v3776, 4294901760
        %4593 = vmatprep.subr.mxu0 %v4592
        %v4594 = vand.u32 %v3775, 4294901760
        %4595 = vmatpush1.msra.mxu0 %v4594
        %v4596 = vand.u32 %v3774, 4294901760
        %4597 = vmatprep.subr.mxu0 %v4596
        %v4598 = vand.u32 %v3773, 4294901760
        %4599 = vmatpush1.msra.mxu0 %v4598
        %v4600 = vand.u32 %v3772, 4294901760
        %4601 = vmatprep.subr.mxu0 %v4600
        %v4602 = vand.u32 %v3771, 4294901760
        %4603 = vmatpush1.msra.mxu0 %v4602
        %v4604 = vand.u32 %v3770, 4294901760
        %4605 = vmatprep.subr.mxu0 %v4604
        %v4606 = vand.u32 %v3769, 4294901760
        %4607 = vmatpush1.msra.mxu0 %v4606
        %v4608 = vand.u32 %v3768, 4294901760
        %4609 = vmatprep.subr.mxu0 %v4608
        %v4610 = vand.u32 %v3767, 4294901760
        %4611 = vmatpush1.msra.mxu0 %v4610
        %v4612 = vand.u32 %v3766, 4294901760
        %4613 = vmatprep.subr.mxu0 %v4612
        %v4614 = vand.u32 %v3765, 4294901760
        %4615 = vmatpush1.msra.mxu0 %v4614
        %v4616 = vand.u32 %v3764, 4294901760
        %4617 = vmatprep.subr.mxu0 %v4616
        %v4618 = vand.u32 %v3763, 4294901760
        %4619 = vmatpush1.msra.mxu0 %v4618
        %4620 = vmatprep.subr.mxu0 0.0
        %4621 = vmatpush2.msra.mxu0 0.0
        %4622 = vmatprep.subr.mxu0 0.0
        %4623 = vmatpush2.msra.mxu0 0.0
        %4624 = vmatprep.subr.mxu0 0.0
        %4625 = vmatpush2.msra.mxu0 0.0
        %4626 = vmatprep.subr.mxu0 0.0
        %4627 = vmatpush2.msra.mxu0 0.0
        %4628 = vmatprep.subr.mxu0 0.0
        %4629 = vmatpush2.msra.mxu0 0.0
        %4630 = vmatprep.subr.mxu0 0.0
        %4631 = vmatpush2.msra.mxu0 0.0
        %4632 = vmatprep.subr.mxu0 0.0
        %4633 = vmatpush2.msra.mxu0 0.0
        %4634 = vmatprep.subr.mxu0 0.0
        %4635 = vmatpush2.msra.mxu0 0.0
        %4636 = vmatprep.subr.mxu0 0.0
        %4637 = vmatpush2.msra.mxu0 0.0
        %4638 = vmatprep.subr.mxu0 0.0
        %4639 = vmatpush2.msra.mxu0 0.0
        %4640 = vmatprep.subr.mxu0 0.0
        %4641 = vmatpush2.msra.mxu0 0.0
        %4642 = vmatprep.subr.mxu0 0.0
        %4643 = vmatpush2.msra.mxu0 0.0
        %4644 = vmatprep.subr.mxu0 0.0
        %4645 = vmatpush2.msra.mxu0 0.0
        %4646 = vmatprep.subr.mxu0 0.0
        %4647 = vmatpush2.msra.mxu0 0.0
        %4648 = vmatprep.subr.mxu0 0.0
        %4649 = vmatpush2.msra.mxu0 0.0
        %4650 = vmatprep.subr.mxu0 0.0
        %4651 = vmatpush2.msra.mxu0 0.0
        %4652 = vmatprep.mubr.f32.mxu0 0.0
        %v4653 = vand.u32 %v3804, 4294901760
        %4654 = vmatmul.mubr.f32.gmra.mxu0 %v4653
        %v4655 = vpop.f32.mrf.mxu0
        %v4656 = vadd.f32 %v4549, %v4655
        %v4657 = vpop.f32.mrf.mxu0
        %v4658 = vadd.f32 %v4551, %v4657
        %4659 = vmatprep.mubr.f32.mxu0 0.0
        %v4660 = vand.u32 %v3807, 4294901760
        %4661 = vmatmul.mubr.f32.gmra.mxu0 %v4660
        %v4662 = vpop.f32.mrf.mxu0
        %v4663 = vadd.f32 %v4556, %v4662
        %v4664 = vpop.f32.mrf.mxu0
        %v4665 = vadd.f32 %v4558, %v4664
        %4666 = vdwg.mxu0
        %v4667 = vsel %vm1490, %v4663, 0.0
        %v4668 = vsel %vm1490, %v4665, 0.0
        %v4669 = vadd.f32 %v4667, %v4668
        %4670 = vadd.xlane.f32.xlu0 %v4669
        %v4671 = vpop.xlane.xlu0 %4670
        %v4672 = vmul.f32 %v4671, 0.00390625
        %v4673 = vld [vmem:[%s2 + $0x68] sm:$0x1]
        %v4674 = vld [vmem:[%s2 + $0x38] sm:$0x1]
        %vm4675 = vcmask 31744
        %v4677 = vsel %vm4675, %v4673, 0
        %v4680 = vsel %vm1490, %v4672, 0
        %4682 = vmatprep.subr.mxu0 0.0
        %4683 = vmatpush1.msra.mxu0 0.0
        %4684 = vmatprep.subr.mxu0 0.0
        %4685 = vmatpush1.msra.mxu0 0.0
        %4686 = vmatprep.subr.mxu0 0.0
        %4687 = vmatpush1.msra.mxu0 0.0
        %4688 = vmatprep.subr.mxu0 0.0
        %4689 = vmatpush1.msra.mxu0 0.0
        %4690 = vmatprep.subr.mxu0 0.0
        %4691 = vmatpush1.msra.mxu0 0.0
        %4692 = vmatprep.subr.mxu0 0.0
        %4693 = vmatpush1.msra.mxu0 0.0
        %4694 = vmatprep.subr.mxu0 0.0
        %4695 = vmatpush1.msra.mxu0 0.0
        %4696 = vmatprep.subr.mxu0 0.0
        %4697 = vmatpush1.msra.mxu0 0.0
        %4698 = vmatprep.subr.mxu0 0.0
        %4699 = vmatpush1.msra.mxu0 0.0
        %4700 = vmatprep.subr.mxu0 0.0
        %4701 = vmatpush1.msra.mxu0 0.0
        %4702 = vmatprep.subr.mxu0 0.0
        %4703 = vmatpush1.msra.mxu0 0.0
        %4704 = vmatprep.subr.mxu0 0.0
        %4705 = vmatpush1.msra.mxu0 0.0
        %4706 = vmatprep.subr.mxu0 0.0
        %4707 = vmatpush1.msra.mxu0 0.0
        %4708 = vmatprep.subr.mxu0 0.0
        %4709 = vmatpush1.msra.mxu0 0.0
        %4710 = vmatprep.subr.mxu0 0.0
        %4711 = vmatpush1.msra.mxu0 0.0
        %4712 = vmatprep.subr.mxu0 0.0
        %v4713 = vand.u32 %v4680, 4294901760
        %4714 = vmatpush1.msra.mxu0 %v4713
        %4715 = vmatprep.subr.mxu0 0.0
        %4716 = vmatpush2.msra.mxu0 0.0
        %4717 = vmatprep.subr.mxu0 0.0
        %4718 = vmatpush2.msra.mxu0 0.0
        %4719 = vmatprep.subr.mxu0 0.0
        %4720 = vmatpush2.msra.mxu0 0.0
        %4721 = vmatprep.subr.mxu0 0.0
        %4722 = vmatpush2.msra.mxu0 0.0
        %4723 = vmatprep.subr.mxu0 0.0
        %4724 = vmatpush2.msra.mxu0 0.0
        %4725 = vmatprep.subr.mxu0 0.0
        %4726 = vmatpush2.msra.mxu0 0.0
        %4727 = vmatprep.subr.mxu0 0.0
        %4728 = vmatpush2.msra.mxu0 0.0
        %4729 = vmatprep.subr.mxu0 0.0
        %4730 = vmatpush2.msra.mxu0 0.0
        %4731 = vmatprep.subr.mxu0 0.0
        %4732 = vmatpush2.msra.mxu0 0.0
        %4733 = vmatprep.subr.mxu0 0.0
        %4734 = vmatpush2.msra.mxu0 0.0
        %4735 = vmatprep.subr.mxu0 0.0
        %4736 = vmatpush2.msra.mxu0 0.0
        %4737 = vmatprep.subr.mxu0 0.0
        %4738 = vmatpush2.msra.mxu0 0.0
        %4739 = vmatprep.subr.mxu0 0.0
        %4740 = vmatpush2.msra.mxu0 0.0
        %4741 = vmatprep.subr.mxu0 0.0
        %4742 = vmatpush2.msra.mxu0 0.0
        %4743 = vmatprep.subr.mxu0 0.0
        %4744 = vmatpush2.msra.mxu0 0.0
        %4745 = vmatprep.subr.mxu0 0.0
        %4746 = vmatpush2.msra.mxu0 0.0
        %4747 = vmatprep.mubr.f32.mxu0 0.0
        %v4748 = vand.u32 %v4677, 4294901760
        %v4749 = vsub.f32 %v4677, %v4748
        %v4750 = vand.u32 %v4749, 4294901760
        %v4751 = vsub.f32 %v4749, %v4750
        %v4752 = vand.u32 %v4751, 4294901760
        %4753 = vmatmul.mubr.f32.gmra.mxu0 %v4752
        %v4754 = vpop.f32.mrf.mxu0
        %v4755 = vadd.f32 %v4674, %v4754
        %v4756 = vpop.f32.mrf.mxu0
        %4757 = vdwg.mxu0
        %4758 = vmatprep.subr.mxu0 0.0
        %4759 = vmatpush1.msra.mxu0 0.0
        %4760 = vmatprep.subr.mxu0 0.0
        %4761 = vmatpush1.msra.mxu0 0.0
        %4762 = vmatprep.subr.mxu0 0.0
        %4763 = vmatpush1.msra.mxu0 0.0
        %4764 = vmatprep.subr.mxu0 0.0
        %4765 = vmatpush1.msra.mxu0 0.0
        %4766 = vmatprep.subr.mxu0 0.0
        %4767 = vmatpush1.msra.mxu0 0.0
        %4768 = vmatprep.subr.mxu0 0.0
        %4769 = vmatpush1.msra.mxu0 0.0
        %4770 = vmatprep.subr.mxu0 0.0
        %4771 = vmatpush1.msra.mxu0 0.0
        %4772 = vmatprep.subr.mxu0 0.0
        %4773 = vmatpush1.msra.mxu0 0.0
        %4774 = vmatprep.subr.mxu0 0.0
        %4775 = vmatpush1.msra.mxu0 0.0
        %4776 = vmatprep.subr.mxu0 0.0
        %4777 = vmatpush1.msra.mxu0 0.0
        %4778 = vmatprep.subr.mxu0 0.0
        %4779 = vmatpush1.msra.mxu0 0.0
        %4780 = vmatprep.subr.mxu0 0.0
        %4781 = vmatpush1.msra.mxu0 0.0
        %4782 = vmatprep.subr.mxu0 0.0
        %4783 = vmatpush1.msra.mxu0 0.0
        %4784 = vmatprep.subr.mxu0 0.0
        %4785 = vmatpush1.msra.mxu0 0.0
        %4786 = vmatprep.subr.mxu0 0.0
        %4787 = vmatpush1.msra.mxu0 0.0
        %4788 = vmatprep.subr.mxu0 0.0
        %v4789 = vand.u32 %v4680, 4294901760
        %v4790 = vsub.f32 %v4680, %v4789
        %v4791 = vand.u32 %v4790, 4294901760
        %v4792 = vsub.f32 %v4790, %v4791
        %v4793 = vand.u32 %v4792, 4294901760
        %4794 = vmatpush1.msra.mxu0 %v4793
        %4795 = vmatprep.subr.mxu0 0.0
        %4796 = vmatpush2.msra.mxu0 0.0
        %4797 = vmatprep.subr.mxu0 0.0
        %4798 = vmatpush2.msra.mxu0 0.0
        %4799 = vmatprep.subr.mxu0 0.0
        %4800 = vmatpush2.msra.mxu0 0.0
        %4801 = vmatprep.subr.mxu0 0.0
        %4802 = vmatpush2.msra.mxu0 0.0
        %4803 = vmatprep.subr.mxu0 0.0
        %4804 = vmatpush2.msra.mxu0 0.0
        %4805 = vmatprep.subr.mxu0 0.0
        %4806 = vmatpush2.msra.mxu0 0.0
        %4807 = vmatprep.subr.mxu0 0.0
        %4808 = vmatpush2.msra.mxu0 0.0
        %4809 = vmatprep.subr.mxu0 0.0
        %4810 = vmatpush2.msra.mxu0 0.0
        %4811 = vmatprep.subr.mxu0 0.0
        %4812 = vmatpush2.msra.mxu0 0.0
        %4813 = vmatprep.subr.mxu0 0.0
        %4814 = vmatpush2.msra.mxu0 0.0
        %4815 = vmatprep.subr.mxu0 0.0
        %4816 = vmatpush2.msra.mxu0 0.0
        %4817 = vmatprep.subr.mxu0 0.0
        %4818 = vmatpush2.msra.mxu0 0.0
        %4819 = vmatprep.subr.mxu0 0.0
        %4820 = vmatpush2.msra.mxu0 0.0
        %4821 = vmatprep.subr.mxu0 0.0
        %4822 = vmatpush2.msra.mxu0 0.0
        %4823 = vmatprep.subr.mxu0 0.0
        %4824 = vmatpush2.msra.mxu0 0.0
        %4825 = vmatprep.subr.mxu0 0.0
        %4826 = vmatpush2.msra.mxu0 0.0
        %4827 = vmatprep.mubr.f32.mxu0 0.0
        %v4828 = vand.u32 %v4677, 4294901760
        %4829 = vmatmul.mubr.f32.gmra.mxu0 %v4828
        %v4830 = vpop.f32.mrf.mxu0
        %v4831 = vadd.f32 %v4755, %v4830
        %v4832 = vpop.f32.mrf.mxu0
        %4833 = vdwg.mxu0
        %4834 = vmatprep.subr.mxu0 0.0
        %4835 = vmatpush1.msra.mxu0 0.0
        %4836 = vmatprep.subr.mxu0 0.0
        %4837 = vmatpush1.msra.mxu0 0.0
        %4838 = vmatprep.subr.mxu0 0.0
        %4839 = vmatpush1.msra.mxu0 0.0
        %4840 = vmatprep.subr.mxu0 0.0
        %4841 = vmatpush1.msra.mxu0 0.0
        %4842 = vmatprep.subr.mxu0 0.0
        %4843 = vmatpush1.msra.mxu0 0.0
        %4844 = vmatprep.subr.mxu0 0.0
        %4845 = vmatpush1.msra.mxu0 0.0
        %4846 = vmatprep.subr.mxu0 0.0
        %4847 = vmatpush1.msra.mxu0 0.0
        %4848 = vmatprep.subr.mxu0 0.0
        %4849 = vmatpush1.msra.mxu0 0.0
        %4850 = vmatprep.subr.mxu0 0.0
        %4851 = vmatpush1.msra.mxu0 0.0
        %4852 = vmatprep.subr.mxu0 0.0
        %4853 = vmatpush1.msra.mxu0 0.0
        %4854 = vmatprep.subr.mxu0 0.0
        %4855 = vmatpush1.msra.mxu0 0.0
        %4856 = vmatprep.subr.mxu0 0.0
        %4857 = vmatpush1.msra.mxu0 0.0
        %4858 = vmatprep.subr.mxu0 0.0
        %4859 = vmatpush1.msra.mxu0 0.0
        %4860 = vmatprep.subr.mxu0 0.0
        %4861 = vmatpush1.msra.mxu0 0.0
        %4862 = vmatprep.subr.mxu0 0.0
        %4863 = vmatpush1.msra.mxu0 0.0
        %4864 = vmatprep.subr.mxu0 0.0
        %v4865 = vand.u32 %v4680, 4294901760
        %v4866 = vsub.f32 %v4680, %v4865
        %4867 = vmatpush1.msra.mxu0 %v4866
        %4868 = vmatprep.subr.mxu0 0.0
        %4869 = vmatpush2.msra.mxu0 0.0
        %4870 = vmatprep.subr.mxu0 0.0
        %4871 = vmatpush2.msra.mxu0 0.0
        %4872 = vmatprep.subr.mxu0 0.0
        %4873 = vmatpush2.msra.mxu0 0.0
        %4874 = vmatprep.subr.mxu0 0.0
        %4875 = vmatpush2.msra.mxu0 0.0
        %4876 = vmatprep.subr.mxu0 0.0
        %4877 = vmatpush2.msra.mxu0 0.0
        %4878 = vmatprep.subr.mxu0 0.0
        %4879 = vmatpush2.msra.mxu0 0.0
        %4880 = vmatprep.subr.mxu0 0.0
        %4881 = vmatpush2.msra.mxu0 0.0
        %4882 = vmatprep.subr.mxu0 0.0
        %4883 = vmatpush2.msra.mxu0 0.0
        %4884 = vmatprep.subr.mxu0 0.0
        %4885 = vmatpush2.msra.mxu0 0.0
        %4886 = vmatprep.subr.mxu0 0.0
        %4887 = vmatpush2.msra.mxu0 0.0
        %4888 = vmatprep.subr.mxu0 0.0
        %4889 = vmatpush2.msra.mxu0 0.0
        %4890 = vmatprep.subr.mxu0 0.0
        %4891 = vmatpush2.msra.mxu0 0.0
        %4892 = vmatprep.subr.mxu0 0.0
        %4893 = vmatpush2.msra.mxu0 0.0
        %4894 = vmatprep.subr.mxu0 0.0
        %4895 = vmatpush2.msra.mxu0 0.0
        %4896 = vmatprep.subr.mxu0 0.0
        %4897 = vmatpush2.msra.mxu0 0.0
        %4898 = vmatprep.subr.mxu0 0.0
        %4899 = vmatpush2.msra.mxu0 0.0
        %4900 = vmatprep.mubr.f32.mxu0 0.0
        %v4901 = vand.u32 %v4677, 4294901760
        %v4902 = vsub.f32 %v4677, %v4901
        %4903 = vmatmul.mubr.f32.gmra.mxu0 %v4902
        %v4904 = vpop.f32.mrf.mxu0
        %v4905 = vadd.f32 %v4831, %v4904
        %v4906 = vpop.f32.mrf.mxu0
        %4907 = vdwg.mxu0
        %4908 = vmatprep.subr.mxu0 0.0
        %4909 = vmatpush1.msra.mxu0 0.0
        %4910 = vmatprep.subr.mxu0 0.0
        %4911 = vmatpush1.msra.mxu0 0.0
        %4912 = vmatprep.subr.mxu0 0.0
        %4913 = vmatpush1.msra.mxu0 0.0
        %4914 = vmatprep.subr.mxu0 0.0
        %4915 = vmatpush1.msra.mxu0 0.0
        %4916 = vmatprep.subr.mxu0 0.0
        %4917 = vmatpush1.msra.mxu0 0.0
        %4918 = vmatprep.subr.mxu0 0.0
        %4919 = vmatpush1.msra.mxu0 0.0
        %4920 = vmatprep.subr.mxu0 0.0
        %4921 = vmatpush1.msra.mxu0 0.0
        %4922 = vmatprep.subr.mxu0 0.0
        %4923 = vmatpush1.msra.mxu0 0.0
        %4924 = vmatprep.subr.mxu0 0.0
        %4925 = vmatpush1.msra.mxu0 0.0
        %4926 = vmatprep.subr.mxu0 0.0
        %4927 = vmatpush1.msra.mxu0 0.0
        %4928 = vmatprep.subr.mxu0 0.0
        %4929 = vmatpush1.msra.mxu0 0.0
        %4930 = vmatprep.subr.mxu0 0.0
        %4931 = vmatpush1.msra.mxu0 0.0
        %4932 = vmatprep.subr.mxu0 0.0
        %4933 = vmatpush1.msra.mxu0 0.0
        %4934 = vmatprep.subr.mxu0 0.0
        %4935 = vmatpush1.msra.mxu0 0.0
        %4936 = vmatprep.subr.mxu0 0.0
        %4937 = vmatpush1.msra.mxu0 0.0
        %4938 = vmatprep.subr.mxu0 0.0
        %v4939 = vand.u32 %v4680, 4294901760
        %4940 = vmatpush1.msra.mxu0 %v4939
        %4941 = vmatprep.subr.mxu0 0.0
        %4942 = vmatpush2.msra.mxu0 0.0
        %4943 = vmatprep.subr.mxu0 0.0
        %4944 = vmatpush2.msra.mxu0 0.0
        %4945 = vmatprep.subr.mxu0 0.0
        %4946 = vmatpush2.msra.mxu0 0.0
        %4947 = vmatprep.subr.mxu0 0.0
        %4948 = vmatpush2.msra.mxu0 0.0
        %4949 = vmatprep.subr.mxu0 0.0
        %4950 = vmatpush2.msra.mxu0 0.0
        %4951 = vmatprep.subr.mxu0 0.0
        %4952 = vmatpush2.msra.mxu0 0.0
        %4953 = vmatprep.subr.mxu0 0.0
        %4954 = vmatpush2.msra.mxu0 0.0
        %4955 = vmatprep.subr.mxu0 0.0
        %4956 = vmatpush2.msra.mxu0 0.0
        %4957 = vmatprep.subr.mxu0 0.0
        %4958 = vmatpush2.msra.mxu0 0.0
        %4959 = vmatprep.subr.mxu0 0.0
        %4960 = vmatpush2.msra.mxu0 0.0
        %4961 = vmatprep.subr.mxu0 0.0
        %4962 = vmatpush2.msra.mxu0 0.0
        %4963 = vmatprep.subr.mxu0 0.0
        %4964 = vmatpush2.msra.mxu0 0.0
        %4965 = vmatprep.subr.mxu0 0.0
        %4966 = vmatpush2.msra.mxu0 0.0
        %4967 = vmatprep.subr.mxu0 0.0
        %4968 = vmatpush2.msra.mxu0 0.0
        %4969 = vmatprep.subr.mxu0 0.0
        %4970 = vmatpush2.msra.mxu0 0.0
        %4971 = vmatprep.subr.mxu0 0.0
        %4972 = vmatpush2.msra.mxu0 0.0
        %4973 = vmatprep.mubr.f32.mxu0 0.0
        %v4974 = vand.u32 %v4677, 4294901760
        %v4975 = vsub.f32 %v4677, %v4974
        %v4976 = vand.u32 %v4975, 4294901760
        %4977 = vmatmul.mubr.f32.gmra.mxu0 %v4976
        %v4978 = vpop.f32.mrf.mxu0
        %v4979 = vadd.f32 %v4905, %v4978
        %v4980 = vpop.f32.mrf.mxu0
        %4981 = vdwg.mxu0
        %4982 = vmatprep.subr.mxu0 0.0
        %4983 = vmatpush1.msra.mxu0 0.0
        %4984 = vmatprep.subr.mxu0 0.0
        %4985 = vmatpush1.msra.mxu0 0.0
        %4986 = vmatprep.subr.mxu0 0.0
        %4987 = vmatpush1.msra.mxu0 0.0
        %4988 = vmatprep.subr.mxu0 0.0
        %4989 = vmatpush1.msra.mxu0 0.0
        %4990 = vmatprep.subr.mxu0 0.0
        %4991 = vmatpush1.msra.mxu0 0.0
        %4992 = vmatprep.subr.mxu0 0.0
        %4993 = vmatpush1.msra.mxu0 0.0
        %4994 = vmatprep.subr.mxu0 0.0
        %4995 = vmatpush1.msra.mxu0 0.0
        %4996 = vmatprep.subr.mxu0 0.0
        %4997 = vmatpush1.msra.mxu0 0.0
        %4998 = vmatprep.subr.mxu0 0.0
        %4999 = vmatpush1.msra.mxu0 0.0
        %5000 = vmatprep.subr.mxu0 0.0
        %5001 = vmatpush1.msra.mxu0 0.0
        %5002 = vmatprep.subr.mxu0 0.0
        %5003 = vmatpush1.msra.mxu0 0.0
        %5004 = vmatprep.subr.mxu0 0.0
        %5005 = vmatpush1.msra.mxu0 0.0
        %5006 = vmatprep.subr.mxu0 0.0
        %5007 = vmatpush1.msra.mxu0 0.0
        %5008 = vmatprep.subr.mxu0 0.0
        %5009 = vmatpush1.msra.mxu0 0.0
        %5010 = vmatprep.subr.mxu0 0.0
        %5011 = vmatpush1.msra.mxu0 0.0
        %5012 = vmatprep.subr.mxu0 0.0
        %v5013 = vand.u32 %v4680, 4294901760
        %v5014 = vsub.f32 %v4680, %v5013
        %v5015 = vand.u32 %v5014, 4294901760
        %5016 = vmatpush1.msra.mxu0 %v5015
        %5017 = vmatprep.subr.mxu0 0.0
        %5018 = vmatpush2.msra.mxu0 0.0
        %5019 = vmatprep.subr.mxu0 0.0
        %5020 = vmatpush2.msra.mxu0 0.0
        %5021 = vmatprep.subr.mxu0 0.0
        %5022 = vmatpush2.msra.mxu0 0.0
        %5023 = vmatprep.subr.mxu0 0.0
        %5024 = vmatpush2.msra.mxu0 0.0
        %5025 = vmatprep.subr.mxu0 0.0
        %5026 = vmatpush2.msra.mxu0 0.0
        %5027 = vmatprep.subr.mxu0 0.0
        %5028 = vmatpush2.msra.mxu0 0.0
        %5029 = vmatprep.subr.mxu0 0.0
        %5030 = vmatpush2.msra.mxu0 0.0
        %5031 = vmatprep.subr.mxu0 0.0
        %5032 = vmatpush2.msra.mxu0 0.0
        %5033 = vmatprep.subr.mxu0 0.0
        %5034 = vmatpush2.msra.mxu0 0.0
        %5035 = vmatprep.subr.mxu0 0.0
        %5036 = vmatpush2.msra.mxu0 0.0
        %5037 = vmatprep.subr.mxu0 0.0
        %5038 = vmatpush2.msra.mxu0 0.0
        %5039 = vmatprep.subr.mxu0 0.0
        %5040 = vmatpush2.msra.mxu0 0.0
        %5041 = vmatprep.subr.mxu0 0.0
        %5042 = vmatpush2.msra.mxu0 0.0
        %5043 = vmatprep.subr.mxu0 0.0
        %5044 = vmatpush2.msra.mxu0 0.0
        %5045 = vmatprep.subr.mxu0 0.0
        %5046 = vmatpush2.msra.mxu0 0.0
        %5047 = vmatprep.subr.mxu0 0.0
        %5048 = vmatpush2.msra.mxu0 0.0
        %5049 = vmatprep.mubr.f32.mxu0 0.0
        %v5050 = vand.u32 %v4677, 4294901760
        %5051 = vmatmul.mubr.f32.gmra.mxu0 %v5050
        %v5052 = vpop.f32.mrf.mxu0
        %v5053 = vadd.f32 %v4979, %v5052
        %v5054 = vpop.f32.mrf.mxu0
        %5055 = vdwg.mxu0
        %5056 = vmatprep.subr.mxu0 0.0
        %5057 = vmatpush1.msra.mxu0 0.0
        %5058 = vmatprep.subr.mxu0 0.0
        %5059 = vmatpush1.msra.mxu0 0.0
        %5060 = vmatprep.subr.mxu0 0.0
        %5061 = vmatpush1.msra.mxu0 0.0
        %5062 = vmatprep.subr.mxu0 0.0
        %5063 = vmatpush1.msra.mxu0 0.0
        %5064 = vmatprep.subr.mxu0 0.0
        %5065 = vmatpush1.msra.mxu0 0.0
        %5066 = vmatprep.subr.mxu0 0.0
        %5067 = vmatpush1.msra.mxu0 0.0
        %5068 = vmatprep.subr.mxu0 0.0
        %5069 = vmatpush1.msra.mxu0 0.0
        %5070 = vmatprep.subr.mxu0 0.0
        %5071 = vmatpush1.msra.mxu0 0.0
        %5072 = vmatprep.subr.mxu0 0.0
        %5073 = vmatpush1.msra.mxu0 0.0
        %5074 = vmatprep.subr.mxu0 0.0
        %5075 = vmatpush1.msra.mxu0 0.0
        %5076 = vmatprep.subr.mxu0 0.0
        %5077 = vmatpush1.msra.mxu0 0.0
        %5078 = vmatprep.subr.mxu0 0.0
        %5079 = vmatpush1.msra.mxu0 0.0
        %5080 = vmatprep.subr.mxu0 0.0
        %5081 = vmatpush1.msra.mxu0 0.0
        %5082 = vmatprep.subr.mxu0 0.0
        %5083 = vmatpush1.msra.mxu0 0.0
        %5084 = vmatprep.subr.mxu0 0.0
        %5085 = vmatpush1.msra.mxu0 0.0
        %5086 = vmatprep.subr.mxu0 0.0
        %v5087 = vand.u32 %v4680, 4294901760
        %5088 = vmatpush1.msra.mxu0 %v5087
        %5089 = vmatprep.subr.mxu0 0.0
        %5090 = vmatpush2.msra.mxu0 0.0
        %5091 = vmatprep.subr.mxu0 0.0
        %5092 = vmatpush2.msra.mxu0 0.0
        %5093 = vmatprep.subr.mxu0 0.0
        %5094 = vmatpush2.msra.mxu0 0.0
        %5095 = vmatprep.subr.mxu0 0.0
        %5096 = vmatpush2.msra.mxu0 0.0
        %5097 = vmatprep.subr.mxu0 0.0
        %5098 = vmatpush2.msra.mxu0 0.0
        %5099 = vmatprep.subr.mxu0 0.0
        %5100 = vmatpush2.msra.mxu0 0.0
        %5101 = vmatprep.subr.mxu0 0.0
        %5102 = vmatpush2.msra.mxu0 0.0
        %5103 = vmatprep.subr.mxu0 0.0
        %5104 = vmatpush2.msra.mxu0 0.0
        %5105 = vmatprep.subr.mxu0 0.0
        %5106 = vmatpush2.msra.mxu0 0.0
        %5107 = vmatprep.subr.mxu0 0.0
        %5108 = vmatpush2.msra.mxu0 0.0
        %5109 = vmatprep.subr.mxu0 0.0
        %5110 = vmatpush2.msra.mxu0 0.0
        %5111 = vmatprep.subr.mxu0 0.0
        %5112 = vmatpush2.msra.mxu0 0.0
        %5113 = vmatprep.subr.mxu0 0.0
        %5114 = vmatpush2.msra.mxu0 0.0
        %5115 = vmatprep.subr.mxu0 0.0
        %5116 = vmatpush2.msra.mxu0 0.0
        %5117 = vmatprep.subr.mxu0 0.0
        %5118 = vmatpush2.msra.mxu0 0.0
        %5119 = vmatprep.subr.mxu0 0.0
        %5120 = vmatpush2.msra.mxu0 0.0
        %5121 = vmatprep.mubr.f32.mxu0 0.0
        %v5122 = vand.u32 %v4677, 4294901760
        %5123 = vmatmul.mubr.f32.gmra.mxu0 %v5122
        %v5124 = vpop.f32.mrf.mxu0
        %v5125 = vadd.f32 %v5053, %v5124
        %v5126 = vpop.f32.mrf.mxu0
        %5127 = vdwg.mxu0
        %v5128 = vmax.f32 %v5125, 0.0
        %v5129 = vld [vmem:[%s2 + $0x70] sm:$0xf]
        %v5130 = vld [vmem:[%s2 + $0x40] sm:$0xf]
        %vm5131 = vcmask 7168
        %v5133 = vsel %vm5131, %v5129, 0
        %vm5135 = vcmask 1040384
        %v5137 = vsel %vm5135, %v5128, 0
        %5139 = vmatprep.subr.mxu0 0.0
        %5140 = vmatpush1.msra.mxu0 0.0
        %5141 = vmatprep.subr.mxu0 0.0
        %5142 = vmatpush1.msra.mxu0 0.0
        %5143 = vmatprep.subr.mxu0 0.0
        %5144 = vmatpush1.msra.mxu0 0.0
        %5145 = vmatprep.subr.mxu0 0.0
        %5146 = vmatpush1.msra.mxu0 0.0
        %5147 = vmatprep.subr.mxu0 0.0
        %5148 = vmatpush1.msra.mxu0 0.0
        %5149 = vmatprep.subr.mxu0 0.0
        %5150 = vmatpush1.msra.mxu0 0.0
        %5151 = vmatprep.subr.mxu0 0.0
        %5152 = vmatpush1.msra.mxu0 0.0
        %5153 = vmatprep.subr.mxu0 0.0
        %5154 = vmatpush1.msra.mxu0 0.0
        %5155 = vmatprep.subr.mxu0 0.0
        %5156 = vmatpush1.msra.mxu0 0.0
        %5157 = vmatprep.subr.mxu0 0.0
        %5158 = vmatpush1.msra.mxu0 0.0
        %5159 = vmatprep.subr.mxu0 0.0
        %5160 = vmatpush1.msra.mxu0 0.0
        %5161 = vmatprep.subr.mxu0 0.0
        %5162 = vmatpush1.msra.mxu0 0.0
        %5163 = vmatprep.subr.mxu0 0.0
        %5164 = vmatpush1.msra.mxu0 0.0
        %5165 = vmatprep.subr.mxu0 0.0
        %5166 = vmatpush1.msra.mxu0 0.0
        %5167 = vmatprep.subr.mxu0 0.0
        %5168 = vmatpush1.msra.mxu0 0.0
        %5169 = vmatprep.subr.mxu0 0.0
        %v5170 = vand.u32 %v5137, 4294901760
        %5171 = vmatpush1.msra.mxu0 %v5170
        %5172 = vmatprep.subr.mxu0 0.0
        %5173 = vmatpush2.msra.mxu0 0.0
        %5174 = vmatprep.subr.mxu0 0.0
        %5175 = vmatpush2.msra.mxu0 0.0
        %5176 = vmatprep.subr.mxu0 0.0
        %5177 = vmatpush2.msra.mxu0 0.0
        %5178 = vmatprep.subr.mxu0 0.0
        %5179 = vmatpush2.msra.mxu0 0.0
        %5180 = vmatprep.subr.mxu0 0.0
        %5181 = vmatpush2.msra.mxu0 0.0
        %5182 = vmatprep.subr.mxu0 0.0
        %5183 = vmatpush2.msra.mxu0 0.0
        %5184 = vmatprep.subr.mxu0 0.0
        %5185 = vmatpush2.msra.mxu0 0.0
        %5186 = vmatprep.subr.mxu0 0.0
        %5187 = vmatpush2.msra.mxu0 0.0
        %5188 = vmatprep.subr.mxu0 0.0
        %5189 = vmatpush2.msra.mxu0 0.0
        %5190 = vmatprep.subr.mxu0 0.0
        %5191 = vmatpush2.msra.mxu0 0.0
        %5192 = vmatprep.subr.mxu0 0.0
        %5193 = vmatpush2.msra.mxu0 0.0
        %5194 = vmatprep.subr.mxu0 0.0
        %5195 = vmatpush2.msra.mxu0 0.0
        %5196 = vmatprep.subr.mxu0 0.0
        %5197 = vmatpush2.msra.mxu0 0.0
        %5198 = vmatprep.subr.mxu0 0.0
        %5199 = vmatpush2.msra.mxu0 0.0
        %5200 = vmatprep.subr.mxu0 0.0
        %5201 = vmatpush2.msra.mxu0 0.0
        %5202 = vmatprep.subr.mxu0 0.0
        %5203 = vmatpush2.msra.mxu0 0.0
        %5204 = vmatprep.mubr.f32.mxu0 0.0
        %v5205 = vand.u32 %v5133, 4294901760
        %v5206 = vsub.f32 %v5133, %v5205
        %v5207 = vand.u32 %v5206, 4294901760
        %v5208 = vsub.f32 %v5206, %v5207
        %v5209 = vand.u32 %v5208, 4294901760
        %5210 = vmatmul.mubr.f32.gmra.mxu0 %v5209
        %v5211 = vpop.f32.mrf.mxu0
        %v5212 = vadd.f32 %v5130, %v5211
        %v5213 = vpop.f32.mrf.mxu0
        %5214 = vdwg.mxu0
        %5215 = vmatprep.subr.mxu0 0.0
        %5216 = vmatpush1.msra.mxu0 0.0
        %5217 = vmatprep.subr.mxu0 0.0
        %5218 = vmatpush1.msra.mxu0 0.0
        %5219 = vmatprep.subr.mxu0 0.0
        %5220 = vmatpush1.msra.mxu0 0.0
        %5221 = vmatprep.subr.mxu0 0.0
        %5222 = vmatpush1.msra.mxu0 0.0
        %5223 = vmatprep.subr.mxu0 0.0
        %5224 = vmatpush1.msra.mxu0 0.0
        %5225 = vmatprep.subr.mxu0 0.0
        %5226 = vmatpush1.msra.mxu0 0.0
        %5227 = vmatprep.subr.mxu0 0.0
        %5228 = vmatpush1.msra.mxu0 0.0
        %5229 = vmatprep.subr.mxu0 0.0
        %5230 = vmatpush1.msra.mxu0 0.0
        %5231 = vmatprep.subr.mxu0 0.0
        %5232 = vmatpush1.msra.mxu0 0.0
        %5233 = vmatprep.subr.mxu0 0.0
        %5234 = vmatpush1.msra.mxu0 0.0
        %5235 = vmatprep.subr.mxu0 0.0
        %5236 = vmatpush1.msra.mxu0 0.0
        %5237 = vmatprep.subr.mxu0 0.0
        %5238 = vmatpush1.msra.mxu0 0.0
        %5239 = vmatprep.subr.mxu0 0.0
        %5240 = vmatpush1.msra.mxu0 0.0
        %5241 = vmatprep.subr.mxu0 0.0
        %5242 = vmatpush1.msra.mxu0 0.0
        %5243 = vmatprep.subr.mxu0 0.0
        %5244 = vmatpush1.msra.mxu0 0.0
        %5245 = vmatprep.subr.mxu0 0.0
        %v5246 = vand.u32 %v5137, 4294901760
        %v5247 = vsub.f32 %v5137, %v5246
        %v5248 = vand.u32 %v5247, 4294901760
        %v5249 = vsub.f32 %v5247, %v5248
        %v5250 = vand.u32 %v5249, 4294901760
        %5251 = vmatpush1.msra.mxu0 %v5250
        %5252 = vmatprep.subr.mxu0 0.0
        %5253 = vmatpush2.msra.mxu0 0.0
        %5254 = vmatprep.subr.mxu0 0.0
        %5255 = vmatpush2.msra.mxu0 0.0
        %5256 = vmatprep.subr.mxu0 0.0
        %5257 = vmatpush2.msra.mxu0 0.0
        %5258 = vmatprep.subr.mxu0 0.0
        %5259 = vmatpush2.msra.mxu0 0.0
        %5260 = vmatprep.subr.mxu0 0.0
        %5261 = vmatpush2.msra.mxu0 0.0
        %5262 = vmatprep.subr.mxu0 0.0
        %5263 = vmatpush2.msra.mxu0 0.0
        %5264 = vmatprep.subr.mxu0 0.0
        %5265 = vmatpush2.msra.mxu0 0.0
        %5266 = vmatprep.subr.mxu0 0.0
        %5267 = vmatpush2.msra.mxu0 0.0
        %5268 = vmatprep.subr.mxu0 0.0
        %5269 = vmatpush2.msra.mxu0 0.0
        %5270 = vmatprep.subr.mxu0 0.0
        %5271 = vmatpush2.msra.mxu0 0.0
        %5272 = vmatprep.subr.mxu0 0.0
        %5273 = vmatpush2.msra.mxu0 0.0
        %5274 = vmatprep.subr.mxu0 0.0
        %5275 = vmatpush2.msra.mxu0 0.0
        %5276 = vmatprep.subr.mxu0 0.0
        %5277 = vmatpush2.msra.mxu0 0.0
        %5278 = vmatprep.subr.mxu0 0.0
        %5279 = vmatpush2.msra.mxu0 0.0
        %5280 = vmatprep.subr.mxu0 0.0
        %5281 = vmatpush2.msra.mxu0 0.0
        %5282 = vmatprep.subr.mxu0 0.0
        %5283 = vmatpush2.msra.mxu0 0.0
        %5284 = vmatprep.mubr.f32.mxu0 0.0
        %v5285 = vand.u32 %v5133, 4294901760
        %5286 = vmatmul.mubr.f32.gmra.mxu0 %v5285
        %v5287 = vpop.f32.mrf.mxu0
        %v5288 = vadd.f32 %v5212, %v5287
        %v5289 = vpop.f32.mrf.mxu0
        %5290 = vdwg.mxu0
        %5291 = vmatprep.subr.mxu0 0.0
        %5292 = vmatpush1.msra.mxu0 0.0
        %5293 = vmatprep.subr.mxu0 0.0
        %5294 = vmatpush1.msra.mxu0 0.0
        %5295 = vmatprep.subr.mxu0 0.0
        %5296 = vmatpush1.msra.mxu0 0.0
        %5297 = vmatprep.subr.mxu0 0.0
        %5298 = vmatpush1.msra.mxu0 0.0
        %5299 = vmatprep.subr.mxu0 0.0
        %5300 = vmatpush1.msra.mxu0 0.0
        %5301 = vmatprep.subr.mxu0 0.0
        %5302 = vmatpush1.msra.mxu0 0.0
        %5303 = vmatprep.subr.mxu0 0.0
        %5304 = vmatpush1.msra.mxu0 0.0
        %5305 = vmatprep.subr.mxu0 0.0
        %5306 = vmatpush1.msra.mxu0 0.0
        %5307 = vmatprep.subr.mxu0 0.0
        %5308 = vmatpush1.msra.mxu0 0.0
        %5309 = vmatprep.subr.mxu0 0.0
        %5310 = vmatpush1.msra.mxu0 0.0
        %5311 = vmatprep.subr.mxu0 0.0
        %5312 = vmatpush1.msra.mxu0 0.0
        %5313 = vmatprep.subr.mxu0 0.0
        %5314 = vmatpush1.msra.mxu0 0.0
        %5315 = vmatprep.subr.mxu0 0.0
        %5316 = vmatpush1.msra.mxu0 0.0
        %5317 = vmatprep.subr.mxu0 0.0
        %5318 = vmatpush1.msra.mxu0 0.0
        %5319 = vmatprep.subr.mxu0 0.0
        %5320 = vmatpush1.msra.mxu0 0.0
        %5321 = vmatprep.subr.mxu0 0.0
        %v5322 = vand.u32 %v5137, 4294901760
        %v5323 = vsub.f32 %v5137, %v5322
        %5324 = vmatpush1.msra.mxu0 %v5323
        %5325 = vmatprep.subr.mxu0 0.0
        %5326 = vmatpush2.msra.mxu0 0.0
        %5327 = vmatprep.subr.mxu0 0.0
        %5328 = vmatpush2.msra.mxu0 0.0
        %5329 = vmatprep.subr.mxu0 0.0
        %5330 = vmatpush2.msra.mxu0 0.0
        %5331 = vmatprep.subr.mxu0 0.0
        %5332 = vmatpush2.msra.mxu0 0.0
        %5333 = vmatprep.subr.mxu0 0.0
        %5334 = vmatpush2.msra.mxu0 0.0
        %5335 = vmatprep.subr.mxu0 0.0
        %5336 = vmatpush2.msra.mxu0 0.0
        %5337 = vmatprep.subr.mxu0 0.0
        %5338 = vmatpush2.msra.mxu0 0.0
        %5339 = vmatprep.subr.mxu0 0.0
        %5340 = vmatpush2.msra.mxu0 0.0
        %5341 = vmatprep.subr.mxu0 0.0
        %5342 = vmatpush2.msra.mxu0 0.0
        %5343 = vmatprep.subr.mxu0 0.0
        %5344 = vmatpush2.msra.mxu0 0.0
        %5345 = vmatprep.subr.mxu0 0.0
        %5346 = vmatpush2.msra.mxu0 0.0
        %5347 = vmatprep.subr.mxu0 0.0
        %5348 = vmatpush2.msra.mxu0 0.0
        %5349 = vmatprep.subr.mxu0 0.0
        %5350 = vmatpush2.msra.mxu0 0.0
        %5351 = vmatprep.subr.mxu0 0.0
        %5352 = vmatpush2.msra.mxu0 0.0
        %5353 = vmatprep.subr.mxu0 0.0
        %5354 = vmatpush2.msra.mxu0 0.0
        %5355 = vmatprep.subr.mxu0 0.0
        %5356 = vmatpush2.msra.mxu0 0.0
        %5357 = vmatprep.mubr.f32.mxu0 0.0
        %v5358 = vand.u32 %v5133, 4294901760
        %v5359 = vsub.f32 %v5133, %v5358
        %5360 = vmatmul.mubr.f32.gmra.mxu0 %v5359
        %v5361 = vpop.f32.mrf.mxu0
        %v5362 = vadd.f32 %v5288, %v5361
        %v5363 = vpop.f32.mrf.mxu0
        %5364 = vdwg.mxu0
        %5365 = vmatprep.subr.mxu0 0.0
        %5366 = vmatpush1.msra.mxu0 0.0
        %5367 = vmatprep.subr.mxu0 0.0
        %5368 = vmatpush1.msra.mxu0 0.0
        %5369 = vmatprep.subr.mxu0 0.0
        %5370 = vmatpush1.msra.mxu0 0.0
        %5371 = vmatprep.subr.mxu0 0.0
        %5372 = vmatpush1.msra.mxu0 0.0
        %5373 = vmatprep.subr.mxu0 0.0
        %5374 = vmatpush1.msra.mxu0 0.0
        %5375 = vmatprep.subr.mxu0 0.0
        %5376 = vmatpush1.msra.mxu0 0.0
        %5377 = vmatprep.subr.mxu0 0.0
        %5378 = vmatpush1.msra.mxu0 0.0
        %5379 = vmatprep.subr.mxu0 0.0
        %5380 = vmatpush1.msra.mxu0 0.0
        %5381 = vmatprep.subr.mxu0 0.0
        %5382 = vmatpush1.msra.mxu0 0.0
        %5383 = vmatprep.subr.mxu0 0.0
        %5384 = vmatpush1.msra.mxu0 0.0
        %5385 = vmatprep.subr.mxu0 0.0
        %5386 = vmatpush1.msra.mxu0 0.0
        %5387 = vmatprep.subr.mxu0 0.0
        %5388 = vmatpush1.msra.mxu0 0.0
        %5389 = vmatprep.subr.mxu0 0.0
        %5390 = vmatpush1.msra.mxu0 0.0
        %5391 = vmatprep.subr.mxu0 0.0
        %5392 = vmatpush1.msra.mxu0 0.0
        %5393 = vmatprep.subr.mxu0 0.0
        %5394 = vmatpush1.msra.mxu0 0.0
        %5395 = vmatprep.subr.mxu0 0.0
        %v5396 = vand.u32 %v5137, 4294901760
        %5397 = vmatpush1.msra.mxu0 %v5396
        %5398 = vmatprep.subr.mxu0 0.0
        %5399 = vmatpush2.msra.mxu0 0.0
        %5400 = vmatprep.subr.mxu0 0.0
        %5401 = vmatpush2.msra.mxu0 0.0
        %5402 = vmatprep.subr.mxu0 0.0
        %5403 = vmatpush2.msra.mxu0 0.0
        %5404 = vmatprep.subr.mxu0 0.0
        %5405 = vmatpush2.msra.mxu0 0.0
        %5406 = vmatprep.subr.mxu0 0.0
        %5407 = vmatpush2.msra.mxu0 0.0
        %5408 = vmatprep.subr.mxu0 0.0
        %5409 = vmatpush2.msra.mxu0 0.0
        %5410 = vmatprep.subr.mxu0 0.0
        %5411 = vmatpush2.msra.mxu0 0.0
        %5412 = vmatprep.subr.mxu0 0.0
        %5413 = vmatpush2.msra.mxu0 0.0
        %5414 = vmatprep.subr.mxu0 0.0
        %5415 = vmatpush2.msra.mxu0 0.0
        %5416 = vmatprep.subr.mxu0 0.0
        %5417 = vmatpush2.msra.mxu0 0.0
        %5418 = vmatprep.subr.mxu0 0.0
        %5419 = vmatpush2.msra.mxu0 0.0
        %5420 = vmatprep.subr.mxu0 0.0
        %5421 = vmatpush2.msra.mxu0 0.0
        %5422 = vmatprep.subr.mxu0 0.0
        %5423 = vmatpush2.msra.mxu0 0.0
        %5424 = vmatprep.subr.mxu0 0.0
        %5425 = vmatpush2.msra.mxu0 0.0
        %5426 = vmatprep.subr.mxu0 0.0
        %5427 = vmatpush2.msra.mxu0 0.0
        %5428 = vmatprep.subr.mxu0 0.0
        %5429 = vmatpush2.msra.mxu0 0.0
        %5430 = vmatprep.mubr.f32.mxu0 0.0
        %v5431 = vand.u32 %v5133, 4294901760
        %v5432 = vsub.f32 %v5133, %v5431
        %v5433 = vand.u32 %v5432, 4294901760
        %5434 = vmatmul.mubr.f32.gmra.mxu0 %v5433
        %v5435 = vpop.f32.mrf.mxu0
        %v5436 = vadd.f32 %v5362, %v5435
        %v5437 = vpop.f32.mrf.mxu0
        %5438 = vdwg.mxu0
        %5439 = vmatprep.subr.mxu0 0.0
        %5440 = vmatpush1.msra.mxu0 0.0
        %5441 = vmatprep.subr.mxu0 0.0
        %5442 = vmatpush1.msra.mxu0 0.0
        %5443 = vmatprep.subr.mxu0 0.0
        %5444 = vmatpush1.msra.mxu0 0.0
        %5445 = vmatprep.subr.mxu0 0.0
        %5446 = vmatpush1.msra.mxu0 0.0
        %5447 = vmatprep.subr.mxu0 0.0
        %5448 = vmatpush1.msra.mxu0 0.0
        %5449 = vmatprep.subr.mxu0 0.0
        %5450 = vmatpush1.msra.mxu0 0.0
        %5451 = vmatprep.subr.mxu0 0.0
        %5452 = vmatpush1.msra.mxu0 0.0
        %5453 = vmatprep.subr.mxu0 0.0
        %5454 = vmatpush1.msra.mxu0 0.0
        %5455 = vmatprep.subr.mxu0 0.0
        %5456 = vmatpush1.msra.mxu0 0.0
        %5457 = vmatprep.subr.mxu0 0.0
        %5458 = vmatpush1.msra.mxu0 0.0
        %5459 = vmatprep.subr.mxu0 0.0
        %5460 = vmatpush1.msra.mxu0 0.0
        %5461 = vmatprep.subr.mxu0 0.0
        %5462 = vmatpush1.msra.mxu0 0.0
        %5463 = vmatprep.subr.mxu0 0.0
        %5464 = vmatpush1.msra.mxu0 0.0
        %5465 = vmatprep.subr.mxu0 0.0
        %5466 = vmatpush1.msra.mxu0 0.0
        %5467 = vmatprep.subr.mxu0 0.0
        %5468 = vmatpush1.msra.mxu0 0.0
        %5469 = vmatprep.subr.mxu0 0.0
        %v5470 = vand.u32 %v5137, 4294901760
        %v5471 = vsub.f32 %v5137, %v5470
        %v5472 = vand.u32 %v5471, 4294901760
        %5473 = vmatpush1.msra.mxu0 %v5472
        %5474 = vmatprep.subr.mxu0 0.0
        %5475 = vmatpush2.msra.mxu0 0.0
        %5476 = vmatprep.subr.mxu0 0.0
        %5477 = vmatpush2.msra.mxu0 0.0
        %5478 = vmatprep.subr.mxu0 0.0
        %5479 = vmatpush2.msra.mxu0 0.0
        %5480 = vmatprep.subr.mxu0 0.0
        %5481 = vmatpush2.msra.mxu0 0.0
        %5482 = vmatprep.subr.mxu0 0.0
        %5483 = vmatpush2.msra.mxu0 0.0
        %5484 = vmatprep.subr.mxu0 0.0
        %5485 = vmatpush2.msra.mxu0 0.0
        %5486 = vmatprep.subr.mxu0 0.0
        %5487 = vmatpush2.msra.mxu0 0.0
        %5488 = vmatprep.subr.mxu0 0.0
        %5489 = vmatpush2.msra.mxu0 0.0
        %5490 = vmatprep.subr.mxu0 0.0
        %5491 = vmatpush2.msra.mxu0 0.0
        %5492 = vmatprep.subr.mxu0 0.0
        %5493 = vmatpush2.msra.mxu0 0.0
        %5494 = vmatprep.subr.mxu0 0.0
        %5495 = vmatpush2.msra.mxu0 0.0
        %5496 = vmatprep.subr.mxu0 0.0
        %5497 = vmatpush2.msra.mxu0 0.0
        %5498 = vmatprep.subr.mxu0 0.0
        %5499 = vmatpush2.msra.mxu0 0.0
        %5500 = vmatprep.subr.mxu0 0.0
        %5501 = vmatpush2.msra.mxu0 0.0
        %5502 = vmatprep.subr.mxu0 0.0
        %5503 = vmatpush2.msra.mxu0 0.0
        %5504 = vmatprep.subr.mxu0 0.0
        %5505 = vmatpush2.msra.mxu0 0.0
        %5506 = vmatprep.mubr.f32.mxu0 0.0
        %v5507 = vand.u32 %v5133, 4294901760
        %5508 = vmatmul.mubr.f32.gmra.mxu0 %v5507
        %v5509 = vpop.f32.mrf.mxu0
        %v5510 = vadd.f32 %v5436, %v5509
        %v5511 = vpop.f32.mrf.mxu0
        %5512 = vdwg.mxu0
        %5513 = vmatprep.subr.mxu0 0.0
        %5514 = vmatpush1.msra.mxu0 0.0
        %5515 = vmatprep.subr.mxu0 0.0
        %5516 = vmatpush1.msra.mxu0 0.0
        %5517 = vmatprep.subr.mxu0 0.0
        %5518 = vmatpush1.msra.mxu0 0.0
        %5519 = vmatprep.subr.mxu0 0.0
        %5520 = vmatpush1.msra.mxu0 0.0
        %5521 = vmatprep.subr.mxu0 0.0
        %5522 = vmatpush1.msra.mxu0 0.0
        %5523 = vmatprep.subr.mxu0 0.0
        %5524 = vmatpush1.msra.mxu0 0.0
        %5525 = vmatprep.subr.mxu0 0.0
        %5526 = vmatpush1.msra.mxu0 0.0
        %5527 = vmatprep.subr.mxu0 0.0
        %5528 = vmatpush1.msra.mxu0 0.0
        %5529 = vmatprep.subr.mxu0 0.0
        %5530 = vmatpush1.msra.mxu0 0.0
        %5531 = vmatprep.subr.mxu0 0.0
        %5532 = vmatpush1.msra.mxu0 0.0
        %5533 = vmatprep.subr.mxu0 0.0
        %5534 = vmatpush1.msra.mxu0 0.0
        %5535 = vmatprep.subr.mxu0 0.0
        %5536 = vmatpush1.msra.mxu0 0.0
        %5537 = vmatprep.subr.mxu0 0.0
        %5538 = vmatpush1.msra.mxu0 0.0
        %5539 = vmatprep.subr.mxu0 0.0
        %5540 = vmatpush1.msra.mxu0 0.0
        %5541 = vmatprep.subr.mxu0 0.0
        %5542 = vmatpush1.msra.mxu0 0.0
        %5543 = vmatprep.subr.mxu0 0.0
        %v5544 = vand.u32 %v5137, 4294901760
        %5545 = vmatpush1.msra.mxu0 %v5544
        %5546 = vmatprep.subr.mxu0 0.0
        %5547 = vmatpush2.msra.mxu0 0.0
        %5548 = vmatprep.subr.mxu0 0.0
        %5549 = vmatpush2.msra.mxu0 0.0
        %5550 = vmatprep.subr.mxu0 0.0
        %5551 = vmatpush2.msra.mxu0 0.0
        %5552 = vmatprep.subr.mxu0 0.0
        %5553 = vmatpush2.msra.mxu0 0.0
        %5554 = vmatprep.subr.mxu0 0.0
        %5555 = vmatpush2.msra.mxu0 0.0
        %5556 = vmatprep.subr.mxu0 0.0
        %5557 = vmatpush2.msra.mxu0 0.0
        %5558 = vmatprep.subr.mxu0 0.0
        %5559 = vmatpush2.msra.mxu0 0.0
        %5560 = vmatprep.subr.mxu0 0.0
        %5561 = vmatpush2.msra.mxu0 0.0
        %5562 = vmatprep.subr.mxu0 0.0
        %5563 = vmatpush2.msra.mxu0 0.0
        %5564 = vmatprep.subr.mxu0 0.0
        %5565 = vmatpush2.msra.mxu0 0.0
        %5566 = vmatprep.subr.mxu0 0.0
        %5567 = vmatpush2.msra.mxu0 0.0
        %5568 = vmatprep.subr.mxu0 0.0
        %5569 = vmatpush2.msra.mxu0 0.0
        %5570 = vmatprep.subr.mxu0 0.0
        %5571 = vmatpush2.msra.mxu0 0.0
        %5572 = vmatprep.subr.mxu0 0.0
        %5573 = vmatpush2.msra.mxu0 0.0
        %5574 = vmatprep.subr.mxu0 0.0
        %5575 = vmatpush2.msra.mxu0 0.0
        %5576 = vmatprep.subr.mxu0 0.0
        %5577 = vmatpush2.msra.mxu0 0.0
        %5578 = vmatprep.mubr.f32.mxu0 0.0
        %v5579 = vand.u32 %v5133, 4294901760
        %5580 = vmatmul.mubr.f32.gmra.mxu0 %v5579
        %v5581 = vpop.f32.mrf.mxu0
        %v5582 = vadd.f32 %v5510, %v5581
        %v5583 = vpop.f32.mrf.mxu0
        %5584 = vdwg.mxu0
        %v5585 = vxor.u32 %v5582, 2147483648
        %v5586 = vmul.f32 %v5585, 1.442695
        %v5587 = vpow.pop %v5586
        %v5588 = vadd.f32 %v5587, 1.0
        %v5589 = vrcp.pop %v5588
        %v5590 = vmul.f32 1.0, %v5589
        %5592 = vset.pattern.permute.xlu0 0
        %5593 = vperm.xlu0 %5592, %v5590
        %v5594 = vpop.permute.xlu0 %5593
        %v5596 = vmul.f32 %v4663, %v5594
        %v5597 = vmul.f32 %v4665, %v5594
        %5598 = vst [vmem:[#allocation2] sm:$0xff] %v4656
        %5599 = vst [vmem:[#allocation2 + $0x8] sm:$0xff] %v4658
        %5600 = vst [vmem:[#allocation2 + $0x10] sm:$0xf] %v5596
        %5601 = vst [vmem:[#allocation2 + $0x18] sm:$0xf] %v5597
        %5602 = vst [vmem:[#allocation2 + $0x10] sm:$0xf0] %v777
        %5603 = vst [vmem:[#allocation2 + $0x18] sm:$0xf0] %v779
        %v5604 = vld [vmem:[%s191] sm:$0xff]
        %v5605 = vld [vmem:[%s191 + $0x8] sm:$0xff]
        %v5606 = vld [vmem:[%s191 + $0x10] sm:$0xff]
        %v5607 = vld [vmem:[%s191 + $0x18] sm:$0xff]
        %v5608 = vld [vmem:[%s1 + $0x10] sm:$0xff]
        %v5609 = vld [vmem:[%s1 + $0x18] sm:$0xff]
        %v5610 = vld [vmem:[#allocation2] sm:$0xff]
        %v5611 = vld [vmem:[#allocation2 + $0x8] sm:$0xff]
        %v5612 = vld [vmem:[#allocation2 + $0x10] sm:$0xff]
        %v5613 = vld [vmem:[#allocation2 + $0x18] sm:$0xff]
        %v5615 = vsel %vm234, %v5608, 0
        %v5618 = vsel %vm234, %v5609, 0
        %5620 = vmatprep.subr.mxu0 0.0
        %5621 = vmatpush1.msra.mxu0 0.0
        %5622 = vmatprep.subr.mxu0 0.0
        %5623 = vmatpush1.msra.mxu0 0.0
        %5624 = vmatprep.subr.mxu0 0.0
        %5625 = vmatpush1.msra.mxu0 0.0
        %5626 = vmatprep.subr.mxu0 0.0
        %5627 = vmatpush1.msra.mxu0 0.0
        %5628 = vmatprep.subr.mxu0 0.0
        %5629 = vmatpush1.msra.mxu0 0.0
        %5630 = vmatprep.subr.mxu0 0.0
        %5631 = vmatpush1.msra.mxu0 0.0
        %5632 = vmatprep.subr.mxu0 0.0
        %5633 = vmatpush1.msra.mxu0 0.0
        %5634 = vmatprep.subr.mxu0 0.0
        %5635 = vmatpush1.msra.mxu0 0.0
        %5636 = vmatprep.subr.mxu0 0.0
        %5637 = vmatpush1.msra.mxu0 0.0
        %5638 = vmatprep.subr.mxu0 0.0
        %5639 = vmatpush1.msra.mxu0 0.0
        %5640 = vmatprep.subr.mxu0 0.0
        %5641 = vmatpush1.msra.mxu0 0.0
        %5642 = vmatprep.subr.mxu0 0.0
        %5643 = vmatpush1.msra.mxu0 0.0
        %5644 = vmatprep.subr.mxu0 0.0
        %5645 = vmatpush1.msra.mxu0 0.0
        %5646 = vmatprep.subr.mxu0 0.0
        %5647 = vmatpush1.msra.mxu0 0.0
        %v5648 = vand.u32 %v5613, 4294901760
        %5649 = vmatprep.subr.mxu0 %v5648
        %v5650 = vand.u32 %v5612, 4294901760
        %5651 = vmatpush1.msra.mxu0 %v5650
        %v5652 = vand.u32 %v5611, 4294901760
        %5653 = vmatprep.subr.mxu0 %v5652
        %v5654 = vand.u32 %v5610, 4294901760
        %5655 = vmatpush1.msra.mxu0 %v5654
        %5656 = vmatprep.subr.mxu0 0.0
        %5657 = vmatpush2.msra.mxu0 0.0
        %5658 = vmatprep.subr.mxu0 0.0
        %5659 = vmatpush2.msra.mxu0 0.0
        %5660 = vmatprep.subr.mxu0 0.0
        %5661 = vmatpush2.msra.mxu0 0.0
        %5662 = vmatprep.subr.mxu0 0.0
        %5663 = vmatpush2.msra.mxu0 0.0
        %5664 = vmatprep.subr.mxu0 0.0
        %5665 = vmatpush2.msra.mxu0 0.0
        %5666 = vmatprep.subr.mxu0 0.0
        %5667 = vmatpush2.msra.mxu0 0.0
        %5668 = vmatprep.subr.mxu0 0.0
        %5669 = vmatpush2.msra.mxu0 0.0
        %5670 = vmatprep.subr.mxu0 0.0
        %5671 = vmatpush2.msra.mxu0 0.0
        %5672 = vmatprep.subr.mxu0 0.0
        %5673 = vmatpush2.msra.mxu0 0.0
        %5674 = vmatprep.subr.mxu0 0.0
        %5675 = vmatpush2.msra.mxu0 0.0
        %5676 = vmatprep.subr.mxu0 0.0
        %5677 = vmatpush2.msra.mxu0 0.0
        %5678 = vmatprep.subr.mxu0 0.0
        %5679 = vmatpush2.msra.mxu0 0.0
        %5680 = vmatprep.subr.mxu0 0.0
        %5681 = vmatpush2.msra.mxu0 0.0
        %5682 = vmatprep.subr.mxu0 0.0
        %5683 = vmatpush2.msra.mxu0 0.0
        %5684 = vmatprep.subr.mxu0 0.0
        %5685 = vmatpush2.msra.mxu0 0.0
        %5686 = vmatprep.subr.mxu0 0.0
        %5687 = vmatpush2.msra.mxu0 0.0
        %5688 = vmatprep.mubr.f32.mxu0 0.0
        %v5689 = vand.u32 %v5615, 4294901760
        %v5690 = vsub.f32 %v5615, %v5689
        %v5691 = vand.u32 %v5690, 4294901760
        %v5692 = vsub.f32 %v5690, %v5691
        %v5693 = vand.u32 %v5692, 4294901760
        %5694 = vmatmul.mubr.f32.gmra.mxu0 %v5693
        %v5695 = vpop.f32.mrf.mxu0
        %v5696 = vadd.f32 0.0, %v5695
        %v5697 = vpop.f32.mrf.mxu0
        %v5698 = vadd.f32 0.0, %v5697
        %5699 = vmatprep.mubr.f32.mxu0 0.0
        %v5700 = vand.u32 %v5618, 4294901760
        %v5701 = vsub.f32 %v5618, %v5700
        %v5702 = vand.u32 %v5701, 4294901760
        %v5703 = vsub.f32 %v5701, %v5702
        %v5704 = vand.u32 %v5703, 4294901760
        %5705 = vmatmul.mubr.f32.gmra.mxu0 %v5704
        %v5706 = vpop.f32.mrf.mxu0
        %v5707 = vadd.f32 0.0, %v5706
        %v5708 = vpop.f32.mrf.mxu0
        %v5709 = vadd.f32 0.0, %v5708
        %5710 = vdwg.mxu0
        %5711 = vmatprep.subr.mxu0 0.0
        %5712 = vmatpush1.msra.mxu0 0.0
        %5713 = vmatprep.subr.mxu0 0.0
        %5714 = vmatpush1.msra.mxu0 0.0
        %5715 = vmatprep.subr.mxu0 0.0
        %5716 = vmatpush1.msra.mxu0 0.0
        %5717 = vmatprep.subr.mxu0 0.0
        %5718 = vmatpush1.msra.mxu0 0.0
        %5719 = vmatprep.subr.mxu0 0.0
        %5720 = vmatpush1.msra.mxu0 0.0
        %5721 = vmatprep.subr.mxu0 0.0
        %5722 = vmatpush1.msra.mxu0 0.0
        %5723 = vmatprep.subr.mxu0 0.0
        %5724 = vmatpush1.msra.mxu0 0.0
        %5725 = vmatprep.subr.mxu0 0.0
        %5726 = vmatpush1.msra.mxu0 0.0
        %5727 = vmatprep.subr.mxu0 0.0
        %5728 = vmatpush1.msra.mxu0 0.0
        %5729 = vmatprep.subr.mxu0 0.0
        %5730 = vmatpush1.msra.mxu0 0.0
        %5731 = vmatprep.subr.mxu0 0.0
        %5732 = vmatpush1.msra.mxu0 0.0
        %5733 = vmatprep.subr.mxu0 0.0
        %5734 = vmatpush1.msra.mxu0 0.0
        %5735 = vmatprep.subr.mxu0 0.0
        %5736 = vmatpush1.msra.mxu0 0.0
        %5737 = vmatprep.subr.mxu0 0.0
        %5738 = vmatpush1.msra.mxu0 0.0
        %v5739 = vand.u32 %v5613, 4294901760
        %v5740 = vsub.f32 %v5613, %v5739
        %v5741 = vand.u32 %v5740, 4294901760
        %v5742 = vsub.f32 %v5740, %v5741
        %v5743 = vand.u32 %v5742, 4294901760
        %5744 = vmatprep.subr.mxu0 %v5743
        %v5745 = vand.u32 %v5612, 4294901760
        %v5746 = vsub.f32 %v5612, %v5745
        %v5747 = vand.u32 %v5746, 4294901760
        %v5748 = vsub.f32 %v5746, %v5747
        %v5749 = vand.u32 %v5748, 4294901760
        %5750 = vmatpush1.msra.mxu0 %v5749
        %v5751 = vand.u32 %v5611, 4294901760
        %v5752 = vsub.f32 %v5611, %v5751
        %v5753 = vand.u32 %v5752, 4294901760
        %v5754 = vsub.f32 %v5752, %v5753
        %v5755 = vand.u32 %v5754, 4294901760
        %5756 = vmatprep.subr.mxu0 %v5755
        %v5757 = vand.u32 %v5610, 4294901760
        %v5758 = vsub.f32 %v5610, %v5757
        %v5759 = vand.u32 %v5758, 4294901760
        %v5760 = vsub.f32 %v5758, %v5759
        %v5761 = vand.u32 %v5760, 4294901760
        %5762 = vmatpush1.msra.mxu0 %v5761
        %5763 = vmatprep.subr.mxu0 0.0
        %5764 = vmatpush2.msra.mxu0 0.0
        %5765 = vmatprep.subr.mxu0 0.0
        %5766 = vmatpush2.msra.mxu0 0.0
        %5767 = vmatprep.subr.mxu0 0.0
        %5768 = vmatpush2.msra.mxu0 0.0
        %5769 = vmatprep.subr.mxu0 0.0
        %5770 = vmatpush2.msra.mxu0 0.0
        %5771 = vmatprep.subr.mxu0 0.0
        %5772 = vmatpush2.msra.mxu0 0.0
        %5773 = vmatprep.subr.mxu0 0.0
        %5774 = vmatpush2.msra.mxu0 0.0
        %5775 = vmatprep.subr.mxu0 0.0
        %5776 = vmatpush2.msra.mxu0 0.0
        %5777 = vmatprep.subr.mxu0 0.0
        %5778 = vmatpush2.msra.mxu0 0.0
        %5779 = vmatprep.subr.mxu0 0.0
        %5780 = vmatpush2.msra.mxu0 0.0
        %5781 = vmatprep.subr.mxu0 0.0
        %5782 = vmatpush2.msra.mxu0 0.0
        %5783 = vmatprep.subr.mxu0 0.0
        %5784 = vmatpush2.msra.mxu0 0.0
        %5785 = vmatprep.subr.mxu0 0.0
        %5786 = vmatpush2.msra.mxu0 0.0
        %5787 = vmatprep.subr.mxu0 0.0
        %5788 = vmatpush2.msra.mxu0 0.0
        %5789 = vmatprep.subr.mxu0 0.0
        %5790 = vmatpush2.msra.mxu0 0.0
        %5791 = vmatprep.subr.mxu0 0.0
        %5792 = vmatpush2.msra.mxu0 0.0
        %5793 = vmatprep.subr.mxu0 0.0
        %5794 = vmatpush2.msra.mxu0 0.0
        %5795 = vmatprep.mubr.f32.mxu0 0.0
        %v5796 = vand.u32 %v5615, 4294901760
        %5797 = vmatmul.mubr.f32.gmra.mxu0 %v5796
        %v5798 = vpop.f32.mrf.mxu0
        %v5799 = vadd.f32 %v5696, %v5798
        %v5800 = vpop.f32.mrf.mxu0
        %v5801 = vadd.f32 %v5698, %v5800
        %5802 = vmatprep.mubr.f32.mxu0 0.0
        %v5803 = vand.u32 %v5618, 4294901760
        %5804 = vmatmul.mubr.f32.gmra.mxu0 %v5803
        %v5805 = vpop.f32.mrf.mxu0
        %v5806 = vadd.f32 %v5707, %v5805
        %v5807 = vpop.f32.mrf.mxu0
        %v5808 = vadd.f32 %v5709, %v5807
        %5809 = vdwg.mxu0
        %5810 = vmatprep.subr.mxu0 0.0
        %5811 = vmatpush1.msra.mxu0 0.0
        %5812 = vmatprep.subr.mxu0 0.0
        %5813 = vmatpush1.msra.mxu0 0.0
        %5814 = vmatprep.subr.mxu0 0.0
        %5815 = vmatpush1.msra.mxu0 0.0
        %5816 = vmatprep.subr.mxu0 0.0
        %5817 = vmatpush1.msra.mxu0 0.0
        %5818 = vmatprep.subr.mxu0 0.0
        %5819 = vmatpush1.msra.mxu0 0.0
        %5820 = vmatprep.subr.mxu0 0.0
        %5821 = vmatpush1.msra.mxu0 0.0
        %5822 = vmatprep.subr.mxu0 0.0
        %5823 = vmatpush1.msra.mxu0 0.0
        %5824 = vmatprep.subr.mxu0 0.0
        %5825 = vmatpush1.msra.mxu0 0.0
        %5826 = vmatprep.subr.mxu0 0.0
        %5827 = vmatpush1.msra.mxu0 0.0
        %5828 = vmatprep.subr.mxu0 0.0
        %5829 = vmatpush1.msra.mxu0 0.0
        %5830 = vmatprep.subr.mxu0 0.0
        %5831 = vmatpush1.msra.mxu0 0.0
        %5832 = vmatprep.subr.mxu0 0.0
        %5833 = vmatpush1.msra.mxu0 0.0
        %5834 = vmatprep.subr.mxu0 0.0
        %5835 = vmatpush1.msra.mxu0 0.0
        %5836 = vmatprep.subr.mxu0 0.0
        %5837 = vmatpush1.msra.mxu0 0.0
        %v5838 = vand.u32 %v5613, 4294901760
        %v5839 = vsub.f32 %v5613, %v5838
        %5840 = vmatprep.subr.mxu0 %v5839
        %v5841 = vand.u32 %v5612, 4294901760
        %v5842 = vsub.f32 %v5612, %v5841
        %5843 = vmatpush1.msra.mxu0 %v5842
        %v5844 = vand.u32 %v5611, 4294901760
        %v5845 = vsub.f32 %v5611, %v5844
        %5846 = vmatprep.subr.mxu0 %v5845
        %v5847 = vand.u32 %v5610, 4294901760
        %v5848 = vsub.f32 %v5610, %v5847
        %5849 = vmatpush1.msra.mxu0 %v5848
        %5850 = vmatprep.subr.mxu0 0.0
        %5851 = vmatpush2.msra.mxu0 0.0
        %5852 = vmatprep.subr.mxu0 0.0
        %5853 = vmatpush2.msra.mxu0 0.0
        %5854 = vmatprep.subr.mxu0 0.0
        %5855 = vmatpush2.msra.mxu0 0.0
        %5856 = vmatprep.subr.mxu0 0.0
        %5857 = vmatpush2.msra.mxu0 0.0
        %5858 = vmatprep.subr.mxu0 0.0
        %5859 = vmatpush2.msra.mxu0 0.0
        %5860 = vmatprep.subr.mxu0 0.0
        %5861 = vmatpush2.msra.mxu0 0.0
        %5862 = vmatprep.subr.mxu0 0.0
        %5863 = vmatpush2.msra.mxu0 0.0
        %5864 = vmatprep.subr.mxu0 0.0
        %5865 = vmatpush2.msra.mxu0 0.0
        %5866 = vmatprep.subr.mxu0 0.0
        %5867 = vmatpush2.msra.mxu0 0.0
        %5868 = vmatprep.subr.mxu0 0.0
        %5869 = vmatpush2.msra.mxu0 0.0
        %5870 = vmatprep.subr.mxu0 0.0
        %5871 = vmatpush2.msra.mxu0 0.0
        %5872 = vmatprep.subr.mxu0 0.0
        %5873 = vmatpush2.msra.mxu0 0.0
        %5874 = vmatprep.subr.mxu0 0.0
        %5875 = vmatpush2.msra.mxu0 0.0
        %5876 = vmatprep.subr.mxu0 0.0
        %5877 = vmatpush2.msra.mxu0 0.0
        %5878 = vmatprep.subr.mxu0 0.0
        %5879 = vmatpush2.msra.mxu0 0.0
        %5880 = vmatprep.subr.mxu0 0.0
        %5881 = vmatpush2.msra.mxu0 0.0
        %5882 = vmatprep.mubr.f32.mxu0 0.0
        %v5883 = vand.u32 %v5615, 4294901760
        %v5884 = vsub.f32 %v5615, %v5883
        %5885 = vmatmul.mubr.f32.gmra.mxu0 %v5884
        %v5886 = vpop.f32.mrf.mxu0
        %v5887 = vadd.f32 %v5799, %v5886
        %v5888 = vpop.f32.mrf.mxu0
        %v5889 = vadd.f32 %v5801, %v5888
        %5890 = vmatprep.mubr.f32.mxu0 0.0
        %v5891 = vand.u32 %v5618, 4294901760
        %v5892 = vsub.f32 %v5618, %v5891
        %5893 = vmatmul.mubr.f32.gmra.mxu0 %v5892
        %v5894 = vpop.f32.mrf.mxu0
        %v5895 = vadd.f32 %v5806, %v5894
        %v5896 = vpop.f32.mrf.mxu0
        %v5897 = vadd.f32 %v5808, %v5896
        %5898 = vdwg.mxu0
        %5899 = vmatprep.subr.mxu0 0.0
        %5900 = vmatpush1.msra.mxu0 0.0
        %5901 = vmatprep.subr.mxu0 0.0
        %5902 = vmatpush1.msra.mxu0 0.0
        %5903 = vmatprep.subr.mxu0 0.0
        %5904 = vmatpush1.msra.mxu0 0.0
        %5905 = vmatprep.subr.mxu0 0.0
        %5906 = vmatpush1.msra.mxu0 0.0
        %5907 = vmatprep.subr.mxu0 0.0
        %5908 = vmatpush1.msra.mxu0 0.0
        %5909 = vmatprep.subr.mxu0 0.0
        %5910 = vmatpush1.msra.mxu0 0.0
        %5911 = vmatprep.subr.mxu0 0.0
        %5912 = vmatpush1.msra.mxu0 0.0
        %5913 = vmatprep.subr.mxu0 0.0
        %5914 = vmatpush1.msra.mxu0 0.0
        %5915 = vmatprep.subr.mxu0 0.0
        %5916 = vmatpush1.msra.mxu0 0.0
        %5917 = vmatprep.subr.mxu0 0.0
        %5918 = vmatpush1.msra.mxu0 0.0
        %5919 = vmatprep.subr.mxu0 0.0
        %5920 = vmatpush1.msra.mxu0 0.0
        %5921 = vmatprep.subr.mxu0 0.0
        %5922 = vmatpush1.msra.mxu0 0.0
        %5923 = vmatprep.subr.mxu0 0.0
        %5924 = vmatpush1.msra.mxu0 0.0
        %5925 = vmatprep.subr.mxu0 0.0
        %5926 = vmatpush1.msra.mxu0 0.0
        %v5927 = vand.u32 %v5613, 4294901760
        %5928 = vmatprep.subr.mxu0 %v5927
        %v5929 = vand.u32 %v5612, 4294901760
        %5930 = vmatpush1.msra.mxu0 %v5929
        %v5931 = vand.u32 %v5611, 4294901760
        %5932 = vmatprep.subr.mxu0 %v5931
        %v5933 = vand.u32 %v5610, 4294901760
        %5934 = vmatpush1.msra.mxu0 %v5933
        %5935 = vmatprep.subr.mxu0 0.0
        %5936 = vmatpush2.msra.mxu0 0.0
        %5937 = vmatprep.subr.mxu0 0.0
        %5938 = vmatpush2.msra.mxu0 0.0
        %5939 = vmatprep.subr.mxu0 0.0
        %5940 = vmatpush2.msra.mxu0 0.0
        %5941 = vmatprep.subr.mxu0 0.0
        %5942 = vmatpush2.msra.mxu0 0.0
        %5943 = vmatprep.subr.mxu0 0.0
        %5944 = vmatpush2.msra.mxu0 0.0
        %5945 = vmatprep.subr.mxu0 0.0
        %5946 = vmatpush2.msra.mxu0 0.0
        %5947 = vmatprep.subr.mxu0 0.0
        %5948 = vmatpush2.msra.mxu0 0.0
        %5949 = vmatprep.subr.mxu0 0.0
        %5950 = vmatpush2.msra.mxu0 0.0
        %5951 = vmatprep.subr.mxu0 0.0
        %5952 = vmatpush2.msra.mxu0 0.0
        %5953 = vmatprep.subr.mxu0 0.0
        %5954 = vmatpush2.msra.mxu0 0.0
        %5955 = vmatprep.subr.mxu0 0.0
        %5956 = vmatpush2.msra.mxu0 0.0
        %5957 = vmatprep.subr.mxu0 0.0
        %5958 = vmatpush2.msra.mxu0 0.0
        %5959 = vmatprep.subr.mxu0 0.0
        %5960 = vmatpush2.msra.mxu0 0.0
        %5961 = vmatprep.subr.mxu0 0.0
        %5962 = vmatpush2.msra.mxu0 0.0
        %5963 = vmatprep.subr.mxu0 0.0
        %5964 = vmatpush2.msra.mxu0 0.0
        %5965 = vmatprep.subr.mxu0 0.0
        %5966 = vmatpush2.msra.mxu0 0.0
        %5967 = vmatprep.mubr.f32.mxu0 0.0
        %v5968 = vand.u32 %v5615, 4294901760
        %v5969 = vsub.f32 %v5615, %v5968
        %v5970 = vand.u32 %v5969, 4294901760
        %5971 = vmatmul.mubr.f32.gmra.mxu0 %v5970
        %v5972 = vpop.f32.mrf.mxu0
        %v5973 = vadd.f32 %v5887, %v5972
        %v5974 = vpop.f32.mrf.mxu0
        %v5975 = vadd.f32 %v5889, %v5974
        %5976 = vmatprep.mubr.f32.mxu0 0.0
        %v5977 = vand.u32 %v5618, 4294901760
        %v5978 = vsub.f32 %v5618, %v5977
        %v5979 = vand.u32 %v5978, 4294901760
        %5980 = vmatmul.mubr.f32.gmra.mxu0 %v5979
        %v5981 = vpop.f32.mrf.mxu0
        %v5982 = vadd.f32 %v5895, %v5981
        %v5983 = vpop.f32.mrf.mxu0
        %v5984 = vadd.f32 %v5897, %v5983
        %5985 = vdwg.mxu0
        %5986 = vmatprep.subr.mxu0 0.0
        %5987 = vmatpush1.msra.mxu0 0.0
        %5988 = vmatprep.subr.mxu0 0.0
        %5989 = vmatpush1.msra.mxu0 0.0
        %5990 = vmatprep.subr.mxu0 0.0
        %5991 = vmatpush1.msra.mxu0 0.0
        %5992 = vmatprep.subr.mxu0 0.0
        %5993 = vmatpush1.msra.mxu0 0.0
        %5994 = vmatprep.subr.mxu0 0.0
        %5995 = vmatpush1.msra.mxu0 0.0
        %5996 = vmatprep.subr.mxu0 0.0
        %5997 = vmatpush1.msra.mxu0 0.0
        %5998 = vmatprep.subr.mxu0 0.0
        %5999 = vmatpush1.msra.mxu0 0.0
        %6000 = vmatprep.subr.mxu0 0.0
        %6001 = vmatpush1.msra.mxu0 0.0
        %6002 = vmatprep.subr.mxu0 0.0
        %6003 = vmatpush1.msra.mxu0 0.0
        %6004 = vmatprep.subr.mxu0 0.0
        %6005 = vmatpush1.msra.mxu0 0.0
        %6006 = vmatprep.subr.mxu0 0.0
        %6007 = vmatpush1.msra.mxu0 0.0
        %6008 = vmatprep.subr.mxu0 0.0
        %6009 = vmatpush1.msra.mxu0 0.0
        %6010 = vmatprep.subr.mxu0 0.0
        %6011 = vmatpush1.msra.mxu0 0.0
        %6012 = vmatprep.subr.mxu0 0.0
        %6013 = vmatpush1.msra.mxu0 0.0
        %v6014 = vand.u32 %v5613, 4294901760
        %v6015 = vsub.f32 %v5613, %v6014
        %v6016 = vand.u32 %v6015, 4294901760
        %6017 = vmatprep.subr.mxu0 %v6016
        %v6018 = vand.u32 %v5612, 4294901760
        %v6019 = vsub.f32 %v5612, %v6018
        %v6020 = vand.u32 %v6019, 4294901760
        %6021 = vmatpush1.msra.mxu0 %v6020
        %v6022 = vand.u32 %v5611, 4294901760
        %v6023 = vsub.f32 %v5611, %v6022
        %v6024 = vand.u32 %v6023, 4294901760
        %6025 = vmatprep.subr.mxu0 %v6024
        %v6026 = vand.u32 %v5610, 4294901760
        %v6027 = vsub.f32 %v5610, %v6026
        %v6028 = vand.u32 %v6027, 4294901760
        %6029 = vmatpush1.msra.mxu0 %v6028
        %6030 = vmatprep.subr.mxu0 0.0
        %6031 = vmatpush2.msra.mxu0 0.0
        %6032 = vmatprep.subr.mxu0 0.0
        %6033 = vmatpush2.msra.mxu0 0.0
        %6034 = vmatprep.subr.mxu0 0.0
        %6035 = vmatpush2.msra.mxu0 0.0
        %6036 = vmatprep.subr.mxu0 0.0
        %6037 = vmatpush2.msra.mxu0 0.0
        %6038 = vmatprep.subr.mxu0 0.0
        %6039 = vmatpush2.msra.mxu0 0.0
        %6040 = vmatprep.subr.mxu0 0.0
        %6041 = vmatpush2.msra.mxu0 0.0
        %6042 = vmatprep.subr.mxu0 0.0
        %6043 = vmatpush2.msra.mxu0 0.0
        %6044 = vmatprep.subr.mxu0 0.0
        %6045 = vmatpush2.msra.mxu0 0.0
        %6046 = vmatprep.subr.mxu0 0.0
        %6047 = vmatpush2.msra.mxu0 0.0
        %6048 = vmatprep.subr.mxu0 0.0
        %6049 = vmatpush2.msra.mxu0 0.0
        %6050 = vmatprep.subr.mxu0 0.0
        %6051 = vmatpush2.msra.mxu0 0.0
        %6052 = vmatprep.subr.mxu0 0.0
        %6053 = vmatpush2.msra.mxu0 0.0
        %6054 = vmatprep.subr.mxu0 0.0
        %6055 = vmatpush2.msra.mxu0 0.0
        %6056 = vmatprep.subr.mxu0 0.0
        %6057 = vmatpush2.msra.mxu0 0.0
        %6058 = vmatprep.subr.mxu0 0.0
        %6059 = vmatpush2.msra.mxu0 0.0
        %6060 = vmatprep.subr.mxu0 0.0
        %6061 = vmatpush2.msra.mxu0 0.0
        %6062 = vmatprep.mubr.f32.mxu0 0.0
        %v6063 = vand.u32 %v5615, 4294901760
        %6064 = vmatmul.mubr.f32.gmra.mxu0 %v6063
        %v6065 = vpop.f32.mrf.mxu0
        %v6066 = vadd.f32 %v5973, %v6065
        %v6067 = vpop.f32.mrf.mxu0
        %v6068 = vadd.f32 %v5975, %v6067
        %6069 = vmatprep.mubr.f32.mxu0 0.0
        %v6070 = vand.u32 %v5618, 4294901760
        %6071 = vmatmul.mubr.f32.gmra.mxu0 %v6070
        %v6072 = vpop.f32.mrf.mxu0
        %v6073 = vadd.f32 %v5982, %v6072
        %v6074 = vpop.f32.mrf.mxu0
        %v6075 = vadd.f32 %v5984, %v6074
        %6076 = vdwg.mxu0
        %6077 = vmatprep.subr.mxu0 0.0
        %6078 = vmatpush1.msra.mxu0 0.0
        %6079 = vmatprep.subr.mxu0 0.0
        %6080 = vmatpush1.msra.mxu0 0.0
        %6081 = vmatprep.subr.mxu0 0.0
        %6082 = vmatpush1.msra.mxu0 0.0
        %6083 = vmatprep.subr.mxu0 0.0
        %6084 = vmatpush1.msra.mxu0 0.0
        %6085 = vmatprep.subr.mxu0 0.0
        %6086 = vmatpush1.msra.mxu0 0.0
        %6087 = vmatprep.subr.mxu0 0.0
        %6088 = vmatpush1.msra.mxu0 0.0
        %6089 = vmatprep.subr.mxu0 0.0
        %6090 = vmatpush1.msra.mxu0 0.0
        %6091 = vmatprep.subr.mxu0 0.0
        %6092 = vmatpush1.msra.mxu0 0.0
        %6093 = vmatprep.subr.mxu0 0.0
        %6094 = vmatpush1.msra.mxu0 0.0
        %6095 = vmatprep.subr.mxu0 0.0
        %6096 = vmatpush1.msra.mxu0 0.0
        %6097 = vmatprep.subr.mxu0 0.0
        %6098 = vmatpush1.msra.mxu0 0.0
        %6099 = vmatprep.subr.mxu0 0.0
        %6100 = vmatpush1.msra.mxu0 0.0
        %6101 = vmatprep.subr.mxu0 0.0
        %6102 = vmatpush1.msra.mxu0 0.0
        %6103 = vmatprep.subr.mxu0 0.0
        %6104 = vmatpush1.msra.mxu0 0.0
        %v6105 = vand.u32 %v5613, 4294901760
        %6106 = vmatprep.subr.mxu0 %v6105
        %v6107 = vand.u32 %v5612, 4294901760
        %6108 = vmatpush1.msra.mxu0 %v6107
        %v6109 = vand.u32 %v5611, 4294901760
        %6110 = vmatprep.subr.mxu0 %v6109
        %v6111 = vand.u32 %v5610, 4294901760
        %6112 = vmatpush1.msra.mxu0 %v6111
        %6113 = vmatprep.subr.mxu0 0.0
        %6114 = vmatpush2.msra.mxu0 0.0
        %6115 = vmatprep.subr.mxu0 0.0
        %6116 = vmatpush2.msra.mxu0 0.0
        %6117 = vmatprep.subr.mxu0 0.0
        %6118 = vmatpush2.msra.mxu0 0.0
        %6119 = vmatprep.subr.mxu0 0.0
        %6120 = vmatpush2.msra.mxu0 0.0
        %6121 = vmatprep.subr.mxu0 0.0
        %6122 = vmatpush2.msra.mxu0 0.0
        %6123 = vmatprep.subr.mxu0 0.0
        %6124 = vmatpush2.msra.mxu0 0.0
        %6125 = vmatprep.subr.mxu0 0.0
        %6126 = vmatpush2.msra.mxu0 0.0
        %6127 = vmatprep.subr.mxu0 0.0
        %6128 = vmatpush2.msra.mxu0 0.0
        %6129 = vmatprep.subr.mxu0 0.0
        %6130 = vmatpush2.msra.mxu0 0.0
        %6131 = vmatprep.subr.mxu0 0.0
        %6132 = vmatpush2.msra.mxu0 0.0
        %6133 = vmatprep.subr.mxu0 0.0
        %6134 = vmatpush2.msra.mxu0 0.0
        %6135 = vmatprep.subr.mxu0 0.0
        %6136 = vmatpush2.msra.mxu0 0.0
        %6137 = vmatprep.subr.mxu0 0.0
        %6138 = vmatpush2.msra.mxu0 0.0
        %6139 = vmatprep.subr.mxu0 0.0
        %6140 = vmatpush2.msra.mxu0 0.0
        %6141 = vmatprep.subr.mxu0 0.0
        %6142 = vmatpush2.msra.mxu0 0.0
        %6143 = vmatprep.subr.mxu0 0.0
        %6144 = vmatpush2.msra.mxu0 0.0
        %6145 = vmatprep.mubr.f32.mxu0 0.0
        %v6146 = vand.u32 %v5615, 4294901760
        %6147 = vmatmul.mubr.f32.gmra.mxu0 %v6146
        %v6148 = vpop.f32.mrf.mxu0
        %v6149 = vadd.f32 %v6066, %v6148
        %v6150 = vpop.f32.mrf.mxu0
        %v6151 = vadd.f32 %v6068, %v6150
        %6152 = vmatprep.mubr.f32.mxu0 0.0
        %v6153 = vand.u32 %v5618, 4294901760
        %6154 = vmatmul.mubr.f32.gmra.mxu0 %v6153
        %v6155 = vpop.f32.mrf.mxu0
        %v6156 = vadd.f32 %v6073, %v6155
        %v6157 = vpop.f32.mrf.mxu0
        %v6158 = vadd.f32 %v6075, %v6157
        %6159 = vdwg.mxu0
        %v6160 = vadd.f32 %v5604, %v6149
        %v6161 = vadd.f32 %v5605, %v6151
        %v6162 = vadd.f32 %v5606, %v6156
        %v6163 = vadd.f32 %v5607, %v6158
        %v6164 = vld [vmem:[%s2 + $0x10] sm:$0xff]
        %v6165 = vld [vmem:[%s2 + $0x18] sm:$0xff]
        %6167 = vset.pattern.permute.xlu0 0
        %6168 = vperm.xlu0 %6167, %v6164
        %v6169 = vpop.permute.xlu0 %6168
        %6172 = vset.pattern.permute.xlu0 0
        %6173 = vperm.xlu0 %6172, %v6165
        %v6174 = vpop.permute.xlu0 %6173
        %v6176 = vadd.f32 %v6160, %v6169
        %v6177 = vadd.f32 %v6161, %v6169
        %v6178 = vadd.f32 %v6162, %v6174
        %v6179 = vadd.f32 %v6163, %v6174
        %6180 = vst [vmem:[%s215] sm:$0xff] %v6176
        %6181 = vst [vmem:[%s215 + $0x8] sm:$0xff] %v6177
        %6182 = vst [vmem:[%s215 + $0x10] sm:$0xff] %v6178
        %6183 = vst [vmem:[%s215 + $0x18] sm:$0xff] %v6179
        %s6184 = sand.u32 %s118, 1
        %s6185 = scalar_lea.sflag [#allocation5], %s6184
        %s6186 = sand.u32 %s118, 1
        %s6187 = smul.addr %s6186, 32
        %s6188 = scalar_lea.vmem [#allocation6], %s6187
        // Predicated region
        $region41: #{tpu_custom_call.1} parent=35 // pred_check
          %p6189 = pneg %p128
        $region42: #{tpu_custom_call.1} parent=35 // pred_check_branch
          %6191 = sbr.rel (%p6189) target = $region44
        $region43: #{tpu_custom_call.1} parent=35 // pred_region
          %s6193 = ssub.s32 512, 512
          %6194 = vsyncadd %s6185, %s6193
          %s6195 = smul.addr %s21, 4
          %s6196 = smul.addr %s6195, 128
          %s6197 = scalar_lea.hbm %s4, %s6196
          %s6198 = sshll.u32 %s6188, 4
          %s6199 = int_to_ptr.vmem [resolvable:$true] %s6198
          %6204 = dma.vmem_to_hbm [thread:$0]  %s6199, 512, %s6197, %s6185, 256, 256, 16
        $region44: #{tpu_custom_call.1} parent=35 // pred_fallthru
          _
      $region36: #{tpu_custom_call.1} parent=5 // pred_fallthru
        _
      %p6205 = scmp.le.s32.totalorder 2, %s16
      // Predicated region
      $region45: #{tpu_custom_call.1} parent=5 // pred_check
        %p6206 = pneg %p6205
      $region46: #{tpu_custom_call.1} parent=5 // pred_check_branch
        %6208 = sbr.rel (%p6206) target = $region48
      $region47: #{tpu_custom_call.1} parent=5 // pred_region
        %s6209 = ssub.s32 %s16, 2
        // Predicated region
        $region49: #{tpu_custom_call.1} parent=47 // pred_check
          %p6210 = pneg %p134
        $region50: #{tpu_custom_call.1} parent=47 // pred_check_branch
          %6212 = sbr.rel (%p6210) target = $region52
        $region51: #{tpu_custom_call.1} parent=47 // pred_region
          %s6213 = sand.u32 %s119, 1
          %s6214 = scalar_lea.sflag [#allocation5], %s6213
          %s6215 = sand.u32 %s119, 1
          %s6216 = smul.addr %s6215, 32
          %s6217 = scalar_lea.vmem [#allocation6], %s6216
          %6218 = dma.done %s6214, 512
        $region52: #{tpu_custom_call.1} parent=47 // pred_fallthru
          _
      $region48: #{tpu_custom_call.1} parent=5 // pred_fallthru
        _
    $region6: #{tpu_custom_call.1} parent=1 // loop_footer
      %s20 = sadd.s32 1, %s16
    $region7: #{tpu_custom_call.1} parent=1 // loop_footer_branch
      %15 = sbr.rel target = $region3
    $region8: #{tpu_custom_call.1} parent=1 // loop_exit
      _
    %6219 = vsyncpa [#allocation4], 1
    %s6220 = scalar_lea.sflag [#allocation4], 1
    %6221 = vsyncpa %s6220, 1
    %6222 = vsyncpa [#allocation5], 1
    %s6223 = scalar_lea.sflag [#allocation5], 1
    %6224 = vsyncpa %s6223, 1

</llo_original>
